<compile_context>
chip_gen: v7x
topology: tpu7x:2x2x1
jax: 0.10.0
libtpu: 0.0.40
codegen_flags: <defaults>
</compile_context>

<pallas_src>
import math

import jax
import jax.numpy as jnp
from jax.experimental import pallas as pl
from jax.experimental.pallas import tpu as pltpu

_EPS = 1e-5
_P_DROP = 0.3
_KEEP_SCALE = 1.0 / (1.0 - _P_DROP)
_DROP_THRESH = int(round(_P_DROP * (1 << 32)))   # drop iff uint32 bits < threshold
_LANE = 128                                      # channel padding target (lane width)
_VMEM_LIMIT = 32 * 1024 * 1024                   # sized for v7x's smaller VMEM


# ---------------------------------------------------------------- small helpers
def _rup(x, m):
    return (x + m - 1) // m * m


def _tile_m(m):
    # Row tile over M = N*Ho*Wo: big enough to amortize per-step overhead, small enough
    # that double-buffered (tile_m, C) blocks stay far below the VMEM limit.
    return 256 if m >= 256 else max(8, _rup(m, 8))


def _mosaic(*semantics):
    return pltpu.CompilerParams(dimension_semantics=tuple(semantics),
                                vmem_limit_bytes=_VMEM_LIMIT)


# ---------------------------------------------------------------- kernels
def _conv3x3_stats_kernel(x_ref, w_ref, y_ref, stats_ref):
    # x_ref:     (1, P, Hs, Ws, Ci)  one image, phase-decomposed, bf16
    # w_ref:     (9, Ci, Co)         bf16 taps (t = kh*3 + kw)
    # y_ref:     (1, Ho*Wo, Co)      f32 conv output (pre-BN) for this image
    # stats_ref: (1, 2, Co)          per-image BN partials: row0 = sum, row1 = sum of squares
    _, P, Hs, Ws, Ci = x_ref.shape
    Co = w_ref.shape[-1]
    if P == 1:
        stride, Ho, Wo = 1, Hs - 2, Ws - 2
    else:
        stride, Ho, Wo = 2, Hs - 1, Ws - 1

    x = x_ref[0]                                     # (P, Hs, Ws, Ci)
    acc = jnp.zeros((Ho * Wo, Co), jnp.float32)
    for t in range(9):                               # static unroll: 9 MXU matmuls
        kh, kw = divmod(t, 3)
        if stride == 1:
            p, ro, co = 0, kh, kw
        else:
            p, ro, co = (kh % 2) * 2 + (kw % 2), kh // 2, kw // 2
        tap = x[p, ro:ro + Ho, co:co + Wo, :].reshape(Ho * Wo, Ci)
        acc += jnp.dot(tap, w_ref[t], preferred_element_type=jnp.float32)

    y_ref[0] = acc
    stats_ref[0] = jnp.concatenate(
        [jnp.sum(acc, axis=0, keepdims=True),
         jnp.sum(acc * acc, axis=0, keepdims=True)], axis=0)


def _matmul_stats_kernel(x_ref, w_ref, y_ref, stats_ref):
    # 1x1 projection shortcut: y = x @ w, plus per-tile BN sum / sumsq.
    y = jnp.dot(x_ref[...], w_ref[...], preferred_element_type=jnp.float32)
    y_ref[...] = y
    stats_ref[0] = jnp.concatenate(
        [jnp.sum(y, axis=0, keepdims=True),
         jnp.sum(y * y, axis=0, keepdims=True)], axis=0)


def _bn_relu_kernel(y_ref, a_ref, b_ref, o_ref):
    # stem epilogue: out = relu(y * scale + shift)
    o_ref[...] = jnp.maximum(y_ref[...] * a_ref[...] + b_ref[...], 0.0)


def _bn_relu_drop_kernel(y_ref, a_ref, b_ref, bits_ref, o_ref):
    # out = dropout(relu(y * scale + shift)), dropout decided in integer domain.
    z = jnp.maximum(y_ref[...] * a_ref[...] + b_ref[...], 0.0)
    keep = bits_ref[...] >= jnp.uint32(_DROP_THRESH)
    o_ref[...] = jnp.where(keep, z * _KEEP_SCALE, 0.0)


def _bn_drop_add_relu_kernel(y_ref, a_ref, b_ref, bits_ref, s_ref, sa_ref, sb_ref, o_ref):
    # out = relu( dropout(y * scale + shift) + (shortcut * sc_scale + sc_shift) )
    z = y_ref[...] * a_ref[...] + b_ref[...]
    keep = bits_ref[...] >= jnp.uint32(_DROP_THRESH)
    z = jnp.where(keep, z * _KEEP_SCALE, 0.0)
    sc = s_ref[...].astype(jnp.float32) * sa_ref[...] + sb_ref[...]
    o_ref[...] = jnp.maximum(z + sc, 0.0)


def _avgpool_kernel(x_ref, o_ref):
    # x_ref: (1, k*k, C) one pooling window, o_ref: (1, 1, C)
    o_ref[0] = jnp.mean(x_ref[0], axis=0, keepdims=True)


def _transformer_layer_kernel(x_ref, wq_ref, bq_ref, wk_ref, bk_ref,
                              w1_ref, b1_ref, w2_ref, b2_ref, o_ref):
    # One Transformer3 layer (heads=1): Residual(Attention3) then Residual(MLP_Block3).
    # x_ref: (L, Bp) tokens (dim == batch, lane-padded); weights (Bp, Bp), biases (1, Bp).
    x = x_ref[...]
    q = jnp.dot(x, wq_ref[...], preferred_element_type=jnp.float32) + bq_ref[...]
    k = jnp.dot(x, wk_ref[...], preferred_element_type=jnp.float32) + bk_ref[...]
    dots = jax.lax.dot_general(q, k, (((1,), (1,)), ((), ())),
                               preferred_element_type=jnp.float32)        # (L, L)
    dots = dots - jnp.max(dots, axis=-1, keepdims=True)
    e = jnp.exp(dots)
    attn = e / jnp.sum(e, axis=-1, keepdims=True)
    a = jnp.dot(attn, x, preferred_element_type=jnp.float32) + x          # attention residual
    h = jnp.maximum(jnp.dot(a, w1_ref[...], preferred_element_type=jnp.float32)
                    + b1_ref[...], 0.0)
    o_ref[...] = (jnp.dot(h, w2_ref[...], preferred_element_type=jnp.float32)
                  + b2_ref[...] + a)                                      # MLP residual


def _linear_kernel(x_ref, w_ref, b_ref, o_ref):
    o_ref[...] = jnp.dot(x_ref[...], w_ref[...],
                         preferred_element_type=jnp.float32) + b_ref[...]


# ---------------------------------------------------------------- pallas_call wrappers
def _conv3x3_stats(x_phases, w_taps):
    N, P, Hs, Ws, Ci = x_phases.shape
    Co = w_taps.shape[-1]
    Ho, Wo = (Hs - 2, Ws - 2) if P == 1 else (Hs - 1, Ws - 1)
    flops = 2 * N * Ho * Wo * 9 * Ci * Co
    bytes_accessed = int(x_phases.size * 2 + w_taps.size * 2
                         + N * Ho * Wo * Co * 4 + N * 2 * Co * 4)
    y, stats = pl.pallas_call(
        _conv3x3_stats_kernel,
        grid=(N,),
        in_specs=[pl.BlockSpec((1, P, Hs, Ws, Ci), lambda n: (n, 0, 0, 0, 0)),
                  pl.BlockSpec((9, Ci, Co), lambda n: (0, 0, 0))],
        out_specs=(pl.BlockSpec((1, Ho * Wo, Co), lambda n: (n, 0, 0)),
                   pl.BlockSpec((1, 2, Co), lambda n: (n, 0, 0))),
        out_shape=(jax.ShapeDtypeStruct((N, Ho * Wo, Co), jnp.float32),
                   jax.ShapeDtypeStruct((N, 2, Co), jnp.float32)),
        compiler_params=_mosaic("parallel"),     # per-image blocks, no revisits
        cost_estimate=pl.CostEstimate(flops=int(flops), transcendentals=0,
                                      bytes_accessed=bytes_accessed),
    )(x_phases, w_taps)
    return y, jnp.sum(stats, axis=0)             # (N,HoWo,Co), (2,Co)


def _matmul_stats(x, w):
    M, Ci = x.shape
    Co = w.shape[1]
    tm = _tile_m(M)
    Mp = _rup(M, tm)
    xpad = jnp.pad(x, ((0, Mp - M), (0, 0)))
    y, stats = pl.pallas_call(
        _matmul_stats_kernel,
        grid=(Mp // tm,),
        in_specs=[pl.BlockSpec((tm, Ci), lambda i: (i, 0)),
                  pl.BlockSpec((Ci, Co), lambda i: (0, 0))],
        out_specs=(pl.BlockSpec((tm, Co), lambda i: (i, 0)),
                   pl.BlockSpec((1, 2, Co), lambda i: (i, 0, 0))),
        out_shape=(jax.ShapeDtypeStruct((Mp, Co), jnp.float32),
                   jax.ShapeDtypeStruct((Mp // tm, 2, Co), jnp.float32)),
        compiler_params=_mosaic("parallel"),
        cost_estimate=pl.CostEstimate(flops=int(2 * Mp * Ci * Co), transcendentals=0,
                                      bytes_accessed=int(2 * Mp * Ci + 2 * Ci * Co
                                                         + 4 * Mp * Co + 8 * Co)),
    )(xpad, w)
    return y[:M], jnp.sum(stats, axis=0)


def _row_vec_specs(tm, Co):
    row = pl.BlockSpec((tm, Co), lambda i: (i, 0))
    vec = pl.BlockSpec((1, Co), lambda i: (0, 0))
    return row, vec


def _bn_relu(y, a, b):
    M, Co = y.shape
    tm = _tile_m(M)
    Mp = _rup(M, tm)
    row, vec = _row_vec_specs(tm, Co)
    out = pl.pallas_call(
        _bn_relu_kernel,
        grid=(Mp // tm,),
        in_specs=[row, vec, vec],
        out_specs=row,
        out_shape=jax.ShapeDtypeStruct((Mp, Co), jnp.float32),
        compiler_params=_mosaic("parallel"),
        cost_estimate=pl.CostEstimate(flops=int(3 * Mp * Co), transcendentals=0,
                                      bytes_accessed=int(8 * Mp * Co)),
    )(jnp.pad(y, ((0, Mp - M), (0, 0))), a, b)
    return out[:M]


def _bn_relu_drop(y, a, b, bits):
    M, Co = y.shape
    tm = _tile_m(M)
    Mp = _rup(M, tm)
    pad = lambda v: jnp.pad(v, ((0, Mp - M), (0, 0)))
    row, vec = _row_vec_specs(tm, Co)
    out = pl.pallas_call(
        _bn_relu_drop_kernel,
        grid=(Mp // tm,),
        in_specs=[row, vec, vec, row],
        out_specs=row,
        out_shape=jax.ShapeDtypeStruct((Mp, Co), jnp.float32),
        compiler_params=_mosaic("parallel"),
        cost_estimate=pl.CostEstimate(flops=int(6 * Mp * Co), transcendentals=0,
                                      bytes_accessed=int(12 * Mp * Co)),
    )(pad(y), a, b, pad(bits))
    return out[:M]


def _bn_drop_add_relu(y, a, b, bits, sc, sa, sb):
    M, Co = y.shape
    tm = _tile_m(M)
    Mp = _rup(M, tm)
    pad = lambda v: jnp.pad(v, ((0, Mp - M), (0, 0)))
    row, vec = _row_vec_specs(tm, Co)
    out = pl.pallas_call(
        _bn_drop_add_relu_kernel,
        grid=(Mp // tm,),
        in_specs=[row, vec, vec, row, row, vec, vec],
        out_specs=row,
        out_shape=jax.ShapeDtypeStruct((Mp, Co), jnp.float32),
        compiler_params=_mosaic("parallel"),
        cost_estimate=pl.CostEstimate(flops=int(9 * Mp * Co), transcendentals=0,
                                      bytes_accessed=int(16 * Mp * Co)),
    )(pad(y), a, b, pad(bits), pad(sc), sa, sb)
    return out[:M]


def _avg_pool(x, k):
    # Non-overlapping k x k average pooling (F.avg_pool2d(x, k)), NHWC.
    N, H, W, C = x.shape
    Cp = _rup(C, _LANE)
    nh, nw = H // k, W // k
    xc = jnp.pad(x, ((0, 0), (0, 0), (0, 0), (0, Cp - C)))
    xw = xc.reshape(N, nh, k, nw, k, Cp).transpose(0, 1, 3, 2, 4, 5)
    xw = xw.reshape(N * nh * nw, k * k, Cp)
    out = pl.pallas_call(
        _avgpool_kernel,
        grid=(N * nh * nw,),
        in_specs=[pl.BlockSpec((1, k * k, Cp), lambda i: (i, 0, 0))],
        out_specs=pl.BlockSpec((1, 1, Cp), lambda i: (i, 0, 0)),
        out_shape=jax.ShapeDtypeStruct((N * nh * nw, 1, Cp), jnp.float32),
        compiler_params=_mosaic("parallel"),
        cost_estimate=pl.CostEstimate(flops=int(N * nh * nw * k * k * Cp), transcendentals=0,
                                      bytes_accessed=int(4 * N * nh * nw * (k * k + 1) * Cp)),
    )(xw)
    return out.reshape(N, nh, nw, Cp)[..., :C]


def _transformer_layer(x_in, lp):
    # One Transformer3 layer on tokens x_in of shape (L, B) with dim == B (the module's
    # peculiar "(c h w) b" token layout); heads == 1.
    L, B = x_in.shape
    assert L % 8 == 0, "token count must be sublane-aligned"
    Bp = _rup(B, _LANE)

    def pad_mat(m):
        return jnp.pad(m, ((0, Bp - m.shape[0]), (0, Bp - m.shape[1]))).astype(jnp.float32)

    def pad_row(v):
        return jnp.pad(v, (0, Bp - v.shape[0]))[None].astype(jnp.float32)

    wqk, bqk = lp["w_qk"], lp["b_qk"]                 # torch layout: (2B, B), (2B,)
    wq, wk = pad_mat(wqk[:B].T), pad_mat(wqk[B:].T)
    bq, bk = pad_row(bqk[:B]), pad_row(bqk[B:])
    w1, b1 = pad_mat(lp["w1"].T), pad_row(lp["b1"])
    w2, b2 = pad_mat(lp["w2"].T), pad_row(lp["b2"])
    xpad = jnp.pad(x_in, ((0, 0), (0, Bp - B))).astype(jnp.float32)

    row = pl.BlockSpec((L, Bp), lambda i: (0, 0))
    mat = pl.BlockSpec((Bp, Bp), lambda i: (0, 0))
    vec = pl.BlockSpec((1, Bp), lambda i: (0, 0))
    flops = 2 * L * Bp * Bp * 4 + 2 * L * L * Bp * 2
    out = pl.pallas_call(
        _transformer_layer_kernel,
        grid=(1,),
        in_specs=[row, mat, vec, mat, vec, mat, vec, mat, vec],
        out_specs=row,
        out_shape=jax.ShapeDtypeStruct((L, Bp), jnp.float32),
        compiler_params=_mosaic("arbitrary"),
        cost_estimate=pl.CostEstimate(flops=int(flops), transcendentals=int(L * L),
                                      bytes_accessed=int(4 * (2 * L * Bp + 4 * Bp * Bp
                                                              + 4 * Bp + L * L))),
    )(xpad, wq, bq, wk, bk, w1, b1, w2, b2)
    return out[:, :B]


def _linear(x, w, b):
    # y = x @ w + b    (classifier head)
    M, D = x.shape
    K = w.shape[1]
    Dp, Kp, Mp = _rup(D, _LANE), _rup(K, _LANE), _rup(M, 8)
    xp = jnp.pad(x, ((0, Mp - M), (0, Dp - D))).astype(jnp.float32)
    wp = jnp.pad(w, ((0, Dp - D), (0, Kp - K))).astype(jnp.float32)
    bp = jnp.pad(b, (0, Kp - K))[None].astype(jnp.float32)
    out = pl.pallas_call(
        _linear_kernel,
        grid=(1,),
        in_specs=[pl.BlockSpec((Mp, Dp), lambda i: (0, 0)),
                  pl.BlockSpec((Dp, Kp), lambda i: (0, 0)),
                  pl.BlockSpec((1, Kp), lambda i: (0, 0))],
        out_specs=pl.BlockSpec((Mp, Kp), lambda i: (0, 0)),
        out_shape=jax.ShapeDtypeStruct((Mp, Kp), jnp.float32),
        compiler_params=_mosaic("arbitrary"),
        cost_estimate=pl.CostEstimate(flops=int(2 * Mp * Dp * Kp), transcendentals=0,
                                      bytes_accessed=int(4 * (Mp * Dp + Dp * Kp + Mp * Kp))),
    )(xp, wp, bp)
    return out[:M, :K]


# ---------------------------------------------------------------- plain-JAX glue
def _make_phases(xp, stride):
    # xp: (N, H+2, W+2, C) spatially padded input.
    # stride 1 -> single phase; stride 2 -> 4-phase space-to-depth (same total size, no 9x
    # im2col blowup); every 3x3 tap then becomes a static contiguous slice in-kernel.
    if stride == 1:
        return xp[:, None]
    assert stride == 2
    phases = [xp[:, a::2, b::2, :] for a in (0, 1) for b in (0, 1)]
    return jnp.stack(phases, axis=1)


def _pad_w3x3(w, ci_pad, co_pad):
    kh, kw, ci, co = w.shape
    wp = jnp.pad(w, ((0, 0), (0, 0), (0, ci_pad - ci), (0, co_pad - co)))
    return wp.reshape(9, ci_pad, co_pad)


def _pad_vec(v, c_pad, fill):
    return jnp.pad(v, (0, c_pad - v.shape[0]), constant_values=fill)


def _bn_fold(stats, gamma, beta, m_valid):
    # Fold training-mode batch stats (biased variance) into per-channel scale / shift.
    mean = stats[0] / m_valid
    var = jnp.maximum(stats[1] / m_valid - mean * mean, 0.0)
    inv = jax.lax.rsqrt(var + _EPS)
    scale = gamma * inv
    shift = beta - mean * scale
    return scale[None, :].astype(jnp.float32), shift[None, :].astype(jnp.float32)


# ---------------------------------------------------------------- model pieces
def stem_forward(x, sp):
    # x: (N, H, W, Cin) f32 -> relu(bn(conv3x3 s1(x)))
    N, H, W, Cin = x.shape
    planes = sp["w"].shape[-1]
    Ci, Co = _rup(Cin, _LANE), _rup(planes, _LANE)
    xc = jnp.pad(x, ((0, 0), (0, 0), (0, 0), (0, Ci - Cin)))
    xp = jnp.pad(xc, ((0, 0), (1, 1), (1, 1), (0, 0)))
    ph = _make_phases(xp, 1).astype(jnp.bfloat16)
    w = _pad_w3x3(sp["w"], Ci, Co).astype(jnp.bfloat16)
    y, st = _conv3x3_stats(ph, w)
    M = N * H * W
    a, b = _bn_fold(st, _pad_vec(sp["g"], Co, 1.0), _pad_vec(sp["b"], Co, 0.0), M)
    h = _bn_relu(y.reshape(M, Co), a, b)
    return h.reshape(N, H, W, Co)[..., :planes]


def basic_block_forward(x, params, stride, bits1, bits2):
    # out = relu( dropout(bn2(conv2( dropout(relu(bn1(conv1(x)))) ))) + shortcut(x) )
    N, H, W, Cin = x.shape
    planes = params["w1"].shape[-1]
    Ci = _rup(Cin, _LANE)
    Co = _rup(planes, _LANE)
    Ho, Wo = H // stride, W // stride
    M = N * Ho * Wo

    xc = jnp.pad(x, ((0, 0), (0, 0), (0, 0), (0, Ci - Cin)))          # lane-pad channels

    # -------- stage 1: conv1(3x3, stride) -> bn1 -> relu -> dropout
    xp = jnp.pad(xc, ((0, 0), (1, 1), (1, 1), (0, 0)))
    ph1 = _make_phases(xp, stride).astype(jnp.bfloat16)
    w1 = _pad_w3x3(params["w1"], Ci, Co).astype(jnp.bfloat16)
    y1, st1 = _conv3x3_stats(ph1, w1)
    y1 = y1.reshape(M, Co)
    a1, b1 = _bn_fold(st1, _pad_vec(params["g1"], Co, 1.0), _pad_vec(params["b1"], Co, 0.0), M)
    h = _bn_relu_drop(y1, a1, b1, bits1)                              # (M, Co)

    # -------- stage 2: conv2(3x3, 1) -> bn2 -> dropout ; + shortcut ; relu
    hp = jnp.pad(h.reshape(N, Ho, Wo, Co), ((0, 0), (1, 1), (1, 1), (0, 0)))
    ph2 = _make_phases(hp, 1).astype(jnp.bfloat16)
    w2 = _pad_w3x3(params["w2"], Co, Co).astype(jnp.bfloat16)
    y2, st2 = _conv3x3_stats(ph2, w2)
    y2 = y2.reshape(M, Co)
    a2, b2 = _bn_fold(st2, _pad_vec(params["g2"], Co, 1.0), _pad_vec(params["b2"], Co, 0.0), M)

    if "ws" in params:   # projection shortcut: 1x1 conv (stride s) + BN
        xs = xc[:, ::stride, ::stride, :].reshape(M, Ci).astype(jnp.bfloat16)
        ws = jnp.pad(params["ws"], ((0, Ci - Cin), (0, Co - planes))).astype(jnp.bfloat16)
        sc, sts = _matmul_stats(xs, ws)
        sa, sb = _bn_fold(sts, _pad_vec(params["gs"], Co, 1.0),
                          _pad_vec(params["bs"], Co, 0.0), M)
    else:                # identity shortcut (stride == 1, Cin == planes => Ci == Co)
        sc = xc.reshape(M, Co)
        sa = jnp.ones((1, Co), jnp.float32)
        sb = jnp.zeros((1, Co), jnp.float32)

    out = _bn_drop_add_relu(y2, a2, b2, bits2, sc, sa, sb)            # (M, Co)
    return out.reshape(N, Ho, Wo, Co)[..., :planes]


def vitresnet_forward(img_nchw, params, drop_bits, pool_k=4):
    x = jnp.transpose(img_nchw, (0, 2, 3, 1))                         # NHWC internally
    x = stem_forward(x, params["stem"])                               # relu(bn1(conv1))
    for blk, stride, (ba, bb) in zip(params["blocks"], params["strides"], drop_bits):
        x = basic_block_forward(x, blk, stride, ba, bb)               # layer1..layer4

    N = x.shape[0]
    pooled = _avg_pool(x, pool_k)                                     # F.avg_pool2d(x, 4)
    pooled_flat = jnp.transpose(pooled, (0, 3, 1, 2)).reshape(N, -1)  # torch NCHW flatten
    tokens = pooled_flat.T                                            # '(c h w) b'

    x_in = tokens
    for lp in params["transformer"]:                                  # Transformer3
        x_in = _transformer_layer(x_in, lp)
    feat = x_in.T                                                     # 'b (c h w)'
    logits = _linear(feat, params["head_w"], params["head_b"])        # nn2

    aux = {"layer4": x, "pooled": pooled, "tokens": tokens}
    return (logits, feat, pooled_flat), aux


# ---------------------------------------------------------------- parameter init
def init_block_params(key, in_planes, planes, stride):
    ks = jax.random.split(key, 3)
    params = {
        "w1": jax.random.normal(ks[0], (3, 3, in_planes, planes), jnp.float32)
              * math.sqrt(2.0 / (9 * in_planes)),
        "g1": jnp.ones((planes,), jnp.float32),
        "b1": jnp.zeros((planes,), jnp.float32),
        "w2": jax.random.normal(ks[1], (3, 3, planes, planes), jnp.float32)
              * math.sqrt(2.0 / (9 * planes)),
        "g2": jnp.ones((planes,), jnp.float32),
        "b2": jnp.zeros((planes,), jnp.float32),
    }
    if stride != 1 or in_planes != planes:
        params["ws"] = jax.random.normal(ks[2], (in_planes, planes), jnp.float32) \
                       * math.sqrt(2.0 / in_planes)
        params["gs"] = jnp.ones((planes,), jnp.float32)
        params["bs"] = jnp.zeros((planes,), jnp.float32)
    return params


def init_vitresnet_params(key, *, in_ch, stem_planes, layer_planes, num_blocks,
                          batch, depth, dim, num_classes):
    n_blk = sum(num_blocks)
    keys = jax.random.split(key, 3 + n_blk + depth)
    kidx = iter(range(len(keys)))
    kn = lambda: keys[next(kidx)]

    def kaiming(k, shape, fan_in):
        return jax.random.normal(k, shape, jnp.float32) * math.sqrt(2.0 / fan_in)

    def xavier(k, shape):
        fan_out, fan_in = shape
        bound = math.sqrt(6.0 / (fan_in + fan_out))
        return jax.random.uniform(k, shape, jnp.float32, -bound, bound)

    params = {"stem": {"w": kaiming(kn(), (3, 3, in_ch, stem_planes), 9 * in_ch),
                       "g": jnp.ones((stem_planes,), jnp.float32),
                       "b": jnp.zeros((stem_planes,), jnp.float32)}}

    blocks, strides = [], []
    in_planes = stem_planes
    for li, (planes, nb) in enumerate(zip(layer_planes, num_blocks)):
        for bi in range(nb):
            stride = (1 if li == 0 else 2) if bi == 0 else 1
            blocks.append(init_block_params(kn(), in_planes, planes, stride))
            strides.append(stride)
            in_planes = planes
    params["blocks"], params["strides"] = blocks, strides

    tlayers = []
    for _ in range(depth):
        k1, k2, k3, k4, k5 = jax.random.split(kn(), 5)
        tlayers.append({"w_qk": xavier(k1, (2 * batch, batch)),
                        "b_qk": jnp.zeros((2 * batch,), jnp.float32),
                        "w1": xavier(k2, (batch, batch)),
                        "b1": 1e-6 * jax.random.normal(k3, (batch,), jnp.float32),
                        "w2": xavier(k4, (batch, batch)),
                        "b2": 1e-6 * jax.random.normal(k5, (batch,), jnp.float32)})
    params["transformer"] = tlayers

    params["head_w"] = kaiming(kn(), (dim, num_classes), dim)
    params["head_b"] = jnp.zeros((num_classes,), jnp.float32)
    return params


# ---------------------------------------------------------------- pure-JAX reference
def _reference_block(x, params, stride, bits1, bits2):
    N, H, W, _ = x.shape
    planes = params["w1"].shape[-1]
    Ho, Wo = H // stride, W // stride

    def conv3x3(v, w, s):
        return jax.lax.conv_general_dilated(
            v, w, window_strides=(s, s), padding=((1, 1), (1, 1)),
            dimension_numbers=("NHWC", "HWIO", "NHWC"))

    def bn(v, g, b):
        mean = jnp.mean(v, axis=(0, 1, 2))
        var = jnp.mean(jnp.square(v - mean), axis=(0, 1, 2))
        return (v - mean) * jax.lax.rsqrt(var + _EPS) * g + b

    def drop(v, bits):
        keep = bits >= jnp.uint32(_DROP_THRESH)
        return jnp.where(keep, v * _KEEP_SCALE, 0.0)

    d1 = bits1[:, :planes].reshape(N, Ho, Wo, planes)
    d2 = bits2[:, :planes].reshape(N, Ho, Wo, planes)

    h = drop(jax.nn.relu(bn(conv3x3(x, params["w1"], stride), params["g1"], params["b1"])), d1)
    y = drop(bn(conv3x3(h, params["w2"], 1), params["g2"], params["b2"]), d2)
    if "ws" in params:
        xs = x[:, ::stride, ::stride, :]
        sc = bn(jnp.einsum("nhwc,cd->nhwd", xs, params["ws"]), params["gs"], params["bs"])
    else:
        sc = x
    return jax.nn.relu(y + sc)


def _reference_transformer_head(tokens, tparams, head_w, head_b, batch):
    x_in = tokens
    for lp in tparams:
        q = x_in @ lp["w_qk"][:batch].T + lp["b_qk"][:batch]
        k = x_in @ lp["w_qk"][batch:].T + lp["b_qk"][batch:]
        attn = jax.nn.softmax(q @ k.T, axis=-1)
        a = attn @ x_in + x_in                        # Residual(Attention3)
        h = jax.nn.relu(a @ lp["w1"].T + lp["b1"])
        x_in = h @ lp["w2"].T + lp["b2"] + a          # Residual(MLP_Block3)
    feat = x_in.T
    return feat @ head_w + head_b, feat


def _reference_vitresnet(img_nchw, params, drop_bits, pool_k=4):
    x = jnp.transpose(img_nchw, (0, 2, 3, 1))

    def conv3x3(v, w, s):
        return jax.lax.conv_general_dilated(
            v, w, window_strides=(s, s), padding=((1, 1), (1, 1)),
            dimension_numbers=("NHWC", "HWIO", "NHWC"))

    def bn(v, g, b):
        mean = jnp.mean(v, axis=(0, 1, 2))
        var = jnp.mean(jnp.square(v - mean), axis=(0, 1, 2))
        return (v - mean) * jax.lax.rsqrt(var + _EPS) * g + b

    x = jax.nn.relu(bn(conv3x3(x, params["stem"]["w"], 1),
                       params["stem"]["g"], params["stem"]["b"]))
    for blk, stride, (ba, bb) in zip(params["blocks"], params["strides"], drop_bits):
        x = _reference_block(x, blk, stride, ba, bb)

    N, Hf, Wf, Cf = x.shape
    pooled = jnp.mean(x.reshape(N, Hf // pool_k, pool_k, Wf // pool_k, pool_k, Cf), axis=(2, 4))
    pooled_flat = jnp.transpose(pooled, (0, 3, 1, 2)).reshape(N, -1)
    tokens = pooled_flat.T
    logits, feat = _reference_transformer_head(tokens, params["transformer"],
                                               params["head_w"], params["head_b"], N)
    return (logits, feat, pooled_flat), {"layer4": x, "pooled": pooled, "tokens": tokens}


def _assert_close(out, ref, name, frac):
    err = float(jnp.max(jnp.abs(out - ref)))
    bound = frac * float(jnp.max(jnp.abs(ref))) + frac
    assert err <= bound, f"{name}: max|diff|={err:.4f} > bound={bound:.4f}"


# ---------------------------------------------------------------- main
if __name__ == "__main__":
    key = jax.random.PRNGKey(0)
    k_img, k_par, k_drop = jax.random.split(key, 3)

    # Small ViTResNet config: CIFAR-style 32x32 RGB input, channel widths 1/8 of the
    # original (stem 8, layers [8,16,32,64], one BasicBlock per layer), depth-1 / heads-1
    # Transformer3 (dim == batch, as in the PyTorch module), 10-way head.
    N, IN_CH, HW = 2, 3, 32
    LAYER_PLANES = (8, 16, 32, 64)
    NUM_BLOCKS = (1, 1, 1, 1)
    NUM_CLASSES = 10
    POOL = 4
    DIM = LAYER_PLANES[-1] * (HW // 8 // POOL) ** 2       # = c*h*w after avg-pool = 64

    img = jax.random.normal(k_img, (N, IN_CH, HW, HW), jnp.float32)   # PyTorch NCHW input
    params = init_vitresnet_params(k_par, in_ch=IN_CH, stem_planes=LAYER_PLANES[0],
                                   layer_planes=LAYER_PLANES, num_blocks=NUM_BLOCKS,
                                   batch=N, depth=1, dim=DIM, num_classes=NUM_CLASSES)

    # Host-generated dropout bits (two per BasicBlock), shared by kernels & reference.
    drop_bits = []
    h = HW
    dkeys = jax.random.split(k_drop, 2 * len(params["strides"]))
    for i, (blk, s) in enumerate(zip(params["blocks"], params["strides"])):
        h //= s
        co = _rup(blk["w1"].shape[-1], _LANE)
        m = N * h * h
        drop_bits.append((jax.random.bits(dkeys[2 * i], (m, co), dtype=jnp.uint32),
                          jax.random.bits(dkeys[2 * i + 1], (m, co), dtype=jnp.uint32)))

    (logits, feat, pooled_flat), aux = vitresnet_forward(img, params, drop_bits, POOL)
    jax.block_until_ready((logits, feat, pooled_flat))

    (ref_logits, ref_feat, ref_pflat), ref_aux = _reference_vitresnet(img, params,
                                                                      drop_bits, POOL)

    # Shapes / sanity (mirrors the PyTorch return: (y, feat, pooled.reshape(B, -1))).
    assert logits.shape == (N, NUM_CLASSES) and feat.shape == (N, DIM)
    assert pooled_flat.shape == ref_pflat.shape
    for t in (logits, feat, pooled_flat, aux["layer4"]):
        assert bool(jnp.all(jnp.isfinite(t)))

    # 1) ResNet backbone (stem + 4 BasicBlocks) end-to-end vs f32 reference
    #    (kernels use bf16 MXU inputs -> loose bound).
    _assert_close(aux["layer4"], ref_aux["layer4"], "backbone(layer4)", 0.10)
    _assert_close(pooled_flat, ref_pflat, "avg_pool(flat)", 0.10)

    # 2) Pooling kernel vs direct mean on the kernel's own layer4 output (tight, f32).
    Hf, Wf, Cf = aux["layer4"].shape[1:]
    pool_chk = jnp.mean(aux["layer4"].reshape(N, Hf // POOL, POOL, Wf // POOL, POOL, Cf),
                        axis=(2, 4))
    _assert_close(aux["pooled"], pool_chk, "avg_pool(kernel)", 0.001)

    # 3) Transformer + head kernels vs reference applied to the SAME tokens (isolates the
    #    softmax's sensitivity to upstream bf16 drift from per-kernel correctness).
    st_logits, st_feat = _reference_transformer_head(aux["tokens"], params["transformer"],
                                                     params["head_w"], params["head_b"], N)
    _assert_close(feat, st_feat, "transformer(feat)", 0.10)
    _assert_close(logits, st_logits, "head(logits)", 0.10)

    print("KERNEL_OK")
</pallas_src>

<mosaic_0001>
module attributes {stable_mosaic.version = 11 : i64} {
  func.func @_conv3x3_stats_kernel(%arg0: i32, %arg1: memref<1x1x34x34x128xbf16, #tpu.memory_space<vmem>>, %arg2: memref<9x128x128xbf16, #tpu.memory_space<vmem>>, %arg3: memref<1x1024x128xf32, #tpu.memory_space<vmem>>, %arg4: memref<1x2x128xf32, #tpu.memory_space<vmem>>) attributes {dimension_semantics = [#tpu.dimension_semantics<parallel>], iteration_bounds = array<i64: 2>, scalar_prefetch = 0 : i64, scratch_operands = 0 : i64, tpu.core_type = #tpu.core_type<tc>, window_params = [{transform_indices = @transform_0, window_bounds = array<i64: 1, 1, 34, 34, 128>}, {pipeline_mode = #tpu.pipeline_mode<synchronous>, transform_indices = @transform_1, window_bounds = array<i64: 9, 128, 128>}, {transform_indices = @transform_2, window_bounds = array<i64: 1, 1024, 128>}, {transform_indices = @transform_3, window_bounds = array<i64: 1, 2, 128>}]} {
    %c0 = arith.constant 0 : index
    %c0_0 = arith.constant 0 : index
    %c0_1 = arith.constant 0 : index
    %c0_2 = arith.constant 0 : index
    %c0_3 = arith.constant 0 : index
    %0 = vector.load %arg1[%c0, %c0_0, %c0_1, %c0_2, %c0_3] : memref<1x1x34x34x128xbf16, #tpu.memory_space<vmem>>, vector<1x1x34x34x128xbf16>
    %1 = vector.shape_cast %0 : vector<1x1x34x34x128xbf16> to vector<1x34x34x128xbf16>
    %cst = arith.constant 0.000000e+00 : f32
    %2 = vector.broadcast %cst : f32 to vector<1024x128xf32>
    %3 = vector.extract_strided_slice %1 {offsets = [0, 0, 0, 0], sizes = [1, 32, 32, 128], strides = [1, 1, 1, 1]} : vector<1x34x34x128xbf16> to vector<1x32x32x128xbf16>
    %4 = vector.shape_cast %3 : vector<1x32x32x128xbf16> to vector<32x32x128xbf16>
    %5 = vector.shape_cast %4 : vector<32x32x128xbf16> to vector<1024x128xbf16>
    %c0_4 = arith.constant 0 : index
    %c0_5 = arith.constant 0 : index
    %c0_6 = arith.constant 0 : index
    %6 = vector.load %arg2[%c0_4, %c0_5, %c0_6] : memref<9x128x128xbf16, #tpu.memory_space<vmem>>, vector<1x128x128xbf16>
    %7 = vector.shape_cast %6 : vector<1x128x128xbf16> to vector<128x128xbf16>
    %cst_7 = arith.constant dense<0.000000e+00> : vector<1024x128xf32>
    %8 = tpu.matmul %5, %7, %cst_7 {dimension_numbers = #tpu.dot_dimension_numbers<[1], [0], [0], [1], [0, 0, 1, 1], [], []>} : vector<1024x128xbf16>, vector<128x128xbf16>, vector<1024x128xf32> -> vector<1024x128xf32>
    %9 = arith.addf %2, %8 : vector<1024x128xf32>
    %10 = vector.extract_strided_slice %1 {offsets = [0, 0, 1, 0], sizes = [1, 32, 32, 128], strides = [1, 1, 1, 1]} : vector<1x34x34x128xbf16> to vector<1x32x32x128xbf16>
    %11 = vector.shape_cast %10 : vector<1x32x32x128xbf16> to vector<32x32x128xbf16>
    %12 = vector.shape_cast %11 : vector<32x32x128xbf16> to vector<1024x128xbf16>
    %c1 = arith.constant 1 : index
    %c0_8 = arith.constant 0 : index
    %c0_9 = arith.constant 0 : index
    %13 = vector.load %arg2[%c1, %c0_8, %c0_9] : memref<9x128x128xbf16, #tpu.memory_space<vmem>>, vector<1x128x128xbf16>
    %14 = vector.shape_cast %13 : vector<1x128x128xbf16> to vector<128x128xbf16>
    %cst_10 = arith.constant dense<0.000000e+00> : vector<1024x128xf32>
    %15 = tpu.matmul %12, %14, %cst_10 {dimension_numbers = #tpu.dot_dimension_numbers<[1], [0], [0], [1], [0, 0, 1, 1], [], []>} : vector<1024x128xbf16>, vector<128x128xbf16>, vector<1024x128xf32> -> vector<1024x128xf32>
    %16 = arith.addf %9, %15 : vector<1024x128xf32>
    %17 = vector.extract_strided_slice %1 {offsets = [0, 0, 2, 0], sizes = [1, 32, 32, 128], strides = [1, 1, 1, 1]} : vector<1x34x34x128xbf16> to vector<1x32x32x128xbf16>
    %18 = vector.shape_cast %17 : vector<1x32x32x128xbf16> to vector<32x32x128xbf16>
    %19 = vector.shape_cast %18 : vector<32x32x128xbf16> to vector<1024x128xbf16>
    %c2 = arith.constant 2 : index
    %c0_11 = arith.constant 0 : index
    %c0_12 = arith.constant 0 : index
    %20 = vector.load %arg2[%c2, %c0_11, %c0_12] : memref<9x128x128xbf16, #tpu.memory_space<vmem>>, vector<1x128x128xbf16>
    %21 = vector.shape_cast %20 : vector<1x128x128xbf16> to vector<128x128xbf16>
    %cst_13 = arith.constant dense<0.000000e+00> : vector<1024x128xf32>
    %22 = tpu.matmul %19, %21, %cst_13 {dimension_numbers = #tpu.dot_dimension_numbers<[1], [0], [0], [1], [0, 0, 1, 1], [], []>} : vector<1024x128xbf16>, vector<128x128xbf16>, vector<1024x128xf32> -> vector<1024x128xf32>
    %23 = arith.addf %16, %22 : vector<1024x128xf32>
    %24 = vector.extract_strided_slice %1 {offsets = [0, 1, 0, 0], sizes = [1, 32, 32, 128], strides = [1, 1, 1, 1]} : vector<1x34x34x128xbf16> to vector<1x32x32x128xbf16>
    %25 = vector.shape_cast %24 : vector<1x32x32x128xbf16> to vector<32x32x128xbf16>
    %26 = vector.shape_cast %25 : vector<32x32x128xbf16> to vector<1024x128xbf16>
    %c3 = arith.constant 3 : index
    %c0_14 = arith.constant 0 : index
    %c0_15 = arith.constant 0 : index
    %27 = vector.load %arg2[%c3, %c0_14, %c0_15] : memref<9x128x128xbf16, #tpu.memory_space<vmem>>, vector<1x128x128xbf16>
    %28 = vector.shape_cast %27 : vector<1x128x128xbf16> to vector<128x128xbf16>
    %cst_16 = arith.constant dense<0.000000e+00> : vector<1024x128xf32>
    %29 = tpu.matmul %26, %28, %cst_16 {dimension_numbers = #tpu.dot_dimension_numbers<[1], [0], [0], [1], [0, 0, 1, 1], [], []>} : vector<1024x128xbf16>, vector<128x128xbf16>, vector<1024x128xf32> -> vector<1024x128xf32>
    %30 = arith.addf %23, %29 : vector<1024x128xf32>
    %31 = vector.extract_strided_slice %1 {offsets = [0, 1, 1, 0], sizes = [1, 32, 32, 128], strides = [1, 1, 1, 1]} : vector<1x34x34x128xbf16> to vector<1x32x32x128xbf16>
    %32 = vector.shape_cast %31 : vector<1x32x32x128xbf16> to vector<32x32x128xbf16>
    %33 = vector.shape_cast %32 : vector<32x32x128xbf16> to vector<1024x128xbf16>
    %c4 = arith.constant 4 : index
    %c0_17 = arith.constant 0 : index
    %c0_18 = arith.constant 0 : index
    %34 = vector.load %arg2[%c4, %c0_17, %c0_18] : memref<9x128x128xbf16, #tpu.memory_space<vmem>>, vector<1x128x128xbf16>
    %35 = vector.shape_cast %34 : vector<1x128x128xbf16> to vector<128x128xbf16>
    %cst_19 = arith.constant dense<0.000000e+00> : vector<1024x128xf32>
    %36 = tpu.matmul %33, %35, %cst_19 {dimension_numbers = #tpu.dot_dimension_numbers<[1], [0], [0], [1], [0, 0, 1, 1], [], []>} : vector<1024x128xbf16>, vector<128x128xbf16>, vector<1024x128xf32> -> vector<1024x128xf32>
    %37 = arith.addf %30, %36 : vector<1024x128xf32>
    %38 = vector.extract_strided_slice %1 {offsets = [0, 1, 2, 0], sizes = [1, 32, 32, 128], strides = [1, 1, 1, 1]} : vector<1x34x34x128xbf16> to vector<1x32x32x128xbf16>
    %39 = vector.shape_cast %38 : vector<1x32x32x128xbf16> to vector<32x32x128xbf16>
    %40 = vector.shape_cast %39 : vector<32x32x128xbf16> to vector<1024x128xbf16>
    %c5 = arith.constant 5 : index
    %c0_20 = arith.constant 0 : index
    %c0_21 = arith.constant 0 : index
    %41 = vector.load %arg2[%c5, %c0_20, %c0_21] : memref<9x128x128xbf16, #tpu.memory_space<vmem>>, vector<1x128x128xbf16>
    %42 = vector.shape_cast %41 : vector<1x128x128xbf16> to vector<128x128xbf16>
    %cst_22 = arith.constant dense<0.000000e+00> : vector<1024x128xf32>
    %43 = tpu.matmul %40, %42, %cst_22 {dimension_numbers = #tpu.dot_dimension_numbers<[1], [0], [0], [1], [0, 0, 1, 1], [], []>} : vector<1024x128xbf16>, vector<128x128xbf16>, vector<1024x128xf32> -> vector<1024x128xf32>
    %44 = arith.addf %37, %43 : vector<1024x128xf32>
    %45 = vector.extract_strided_slice %1 {offsets = [0, 2, 0, 0], sizes = [1, 32, 32, 128], strides = [1, 1, 1, 1]} : vector<1x34x34x128xbf16> to vector<1x32x32x128xbf16>
    %46 = vector.shape_cast %45 : vector<1x32x32x128xbf16> to vector<32x32x128xbf16>
    %47 = vector.shape_cast %46 : vector<32x32x128xbf16> to vector<1024x128xbf16>
    %c6 = arith.constant 6 : index
    %c0_23 = arith.constant 0 : index
    %c0_24 = arith.constant 0 : index
    %48 = vector.load %arg2[%c6, %c0_23, %c0_24] : memref<9x128x128xbf16, #tpu.memory_space<vmem>>, vector<1x128x128xbf16>
    %49 = vector.shape_cast %48 : vector<1x128x128xbf16> to vector<128x128xbf16>
    %cst_25 = arith.constant dense<0.000000e+00> : vector<1024x128xf32>
    %50 = tpu.matmul %47, %49, %cst_25 {dimension_numbers = #tpu.dot_dimension_numbers<[1], [0], [0], [1], [0, 0, 1, 1], [], []>} : vector<1024x128xbf16>, vector<128x128xbf16>, vector<1024x128xf32> -> vector<1024x128xf32>
    %51 = arith.addf %44, %50 : vector<1024x128xf32>
    %52 = vector.extract_strided_slice %1 {offsets = [0, 2, 1, 0], sizes = [1, 32, 32, 128], strides = [1, 1, 1, 1]} : vector<1x34x34x128xbf16> to vector<1x32x32x128xbf16>
    %53 = vector.shape_cast %52 : vector<1x32x32x128xbf16> to vector<32x32x128xbf16>
    %54 = vector.shape_cast %53 : vector<32x32x128xbf16> to vector<1024x128xbf16>
    %c7 = arith.constant 7 : index
    %c0_26 = arith.constant 0 : index
    %c0_27 = arith.constant 0 : index
    %55 = vector.load %arg2[%c7, %c0_26, %c0_27] : memref<9x128x128xbf16, #tpu.memory_space<vmem>>, vector<1x128x128xbf16>
    %56 = vector.shape_cast %55 : vector<1x128x128xbf16> to vector<128x128xbf16>
    %cst_28 = arith.constant dense<0.000000e+00> : vector<1024x128xf32>
    %57 = tpu.matmul %54, %56, %cst_28 {dimension_numbers = #tpu.dot_dimension_numbers<[1], [0], [0], [1], [0, 0, 1, 1], [], []>} : vector<1024x128xbf16>, vector<128x128xbf16>, vector<1024x128xf32> -> vector<1024x128xf32>
    %58 = arith.addf %51, %57 : vector<1024x128xf32>
    %59 = vector.extract_strided_slice %1 {offsets = [0, 2, 2, 0], sizes = [1, 32, 32, 128], strides = [1, 1, 1, 1]} : vector<1x34x34x128xbf16> to vector<1x32x32x128xbf16>
    %60 = vector.shape_cast %59 : vector<1x32x32x128xbf16> to vector<32x32x128xbf16>
    %61 = vector.shape_cast %60 : vector<32x32x128xbf16> to vector<1024x128xbf16>
    %c8 = arith.constant 8 : index
    %c0_29 = arith.constant 0 : index
    %c0_30 = arith.constant 0 : index
    %62 = vector.load %arg2[%c8, %c0_29, %c0_30] : memref<9x128x128xbf16, #tpu.memory_space<vmem>>, vector<1x128x128xbf16>
    %63 = vector.shape_cast %62 : vector<1x128x128xbf16> to vector<128x128xbf16>
    %cst_31 = arith.constant dense<0.000000e+00> : vector<1024x128xf32>
    %64 = tpu.matmul %61, %63, %cst_31 {dimension_numbers = #tpu.dot_dimension_numbers<[1], [0], [0], [1], [0, 0, 1, 1], [], []>} : vector<1024x128xbf16>, vector<128x128xbf16>, vector<1024x128xf32> -> vector<1024x128xf32>
    %65 = arith.addf %58, %64 : vector<1024x128xf32>
    %c0_32 = arith.constant 0 : index
    %c0_33 = arith.constant 0 : index
    %c0_34 = arith.constant 0 : index
    %66 = vector.load %arg3[%c0_32, %c0_33, %c0_34] : memref<1x1024x128xf32, #tpu.memory_space<vmem>>, vector<1x1024x128xf32>
    %67 = vector.shape_cast %66 : vector<1x1024x128xf32> to vector<1024x128xf32>
    %68 = vector.shape_cast %65 : vector<1024x128xf32> to vector<1x1024x128xf32>
    tpu.vector_store %arg3[%c0_32, %c0_33, %c0_34], %68 {strides = array<i32>} : memref<1x1024x128xf32, #tpu.memory_space<vmem>>, vector<1x1024x128xf32>,
    %cst_35 = arith.constant dense<0.000000e+00> : vector<128xf32>
    %69 = vector.multi_reduction <add>, %65, %cst_35 [0] : vector<1024x128xf32> to vector<128xf32>
    %70 = vector.shape_cast %69 : vector<128xf32> to vector<1x128xf32>
    %71 = arith.mulf %65, %65 : vector<1024x128xf32>
    %cst_36 = arith.constant dense<0.000000e+00> : vector<128xf32>
    %72 = vector.multi_reduction <add>, %71, %cst_36 [0] : vector<1024x128xf32> to vector<128xf32>
    %73 = vector.shape_cast %72 : vector<128xf32> to vector<1x128xf32>
    %74 = tpu.concatenate %70, %73 in 0 : vector<1x128xf32>, vector<1x128xf32> -> vector<2x128xf32>
    %c0_37 = arith.constant 0 : index
    %c0_38 = arith.constant 0 : index
    %c0_39 = arith.constant 0 : index
    %75 = vector.load %arg4[%c0_37, %c0_38, %c0_39] : memref<1x2x128xf32, #tpu.memory_space<vmem>>, vector<1x2x128xf32>
    %76 = vector.shape_cast %75 : vector<1x2x128xf32> to vector<2x128xf32>
    %77 = vector.shape_cast %74 : vector<2x128xf32> to vector<1x2x128xf32>
    tpu.vector_store %arg4[%c0_37, %c0_38, %c0_39], %77 {strides = array<i32>} : memref<1x2x128xf32, #tpu.memory_space<vmem>>, vector<1x2x128xf32>,
    return
  }
  func.func @transform_0(%arg0: i32) -> (i32, i32, i32, i32, i32) {
    %c0_i32 = arith.constant 0 : i32
    %c0_i32_0 = arith.constant 0 : i32
    %c0_i32_1 = arith.constant 0 : i32
    %c0_i32_2 = arith.constant 0 : i32
    %c0_i32_3 = arith.constant 0 : i32
    return %arg0, %c0_i32, %c0_i32_0, %c0_i32_1, %c0_i32_2 : i32, i32, i32, i32, i32
  }
  func.func @transform_1(%arg0: i32) -> (i32, i32, i32) {
    %c0_i32 = arith.constant 0 : i32
    %c0_i32_0 = arith.constant 0 : i32
    %c0_i32_1 = arith.constant 0 : i32
    %c0_i32_2 = arith.constant 0 : i32
    return %c0_i32, %c0_i32_0, %c0_i32_1 : i32, i32, i32
  }
  func.func @transform_2(%arg0: i32) -> (i32, i32, i32) {
    %c0_i32 = arith.constant 0 : i32
    %c0_i32_0 = arith.constant 0 : i32
    %c0_i32_1 = arith.constant 0 : i32
    return %arg0, %c0_i32, %c0_i32_0 : i32, i32, i32
  }
  func.func @transform_3(%arg0: i32) -> (i32, i32, i32) {
    %c0_i32 = arith.constant 0 : i32
    %c0_i32_0 = arith.constant 0 : i32
    %c0_i32_1 = arith.constant 0 : i32
    return %arg0, %c0_i32, %c0_i32_0 : i32, i32, i32
  }
}

</mosaic_0001>

<llo_original>
// kernel: tpu_custom_call.1
$region0: #{tpu_custom_call.1}
  #allocation0 [shape = 'u32[]', space=smem, size = 0x4, offset = 0x4, fixed_abs, tag = 'smem constant byte address 0x4 - core index']
  #allocation1 [shape = 'u32[144,128]{1,0:T(1,128)}', space=vmem, size = 0x12000, scoped, tag = 'internal scratch']
  %s0 = inlined_call_operand.vmem [shape: bf16[2,1,34,34,128], index: 0, kind: input, shape index: {}]
  %s1 = inlined_call_operand.vmem [shape: bf16[9,128,128], index: 1, kind: input, shape index: {}]
  %s2 = inlined_call_operand.hbm [shape: f32[2,1024,128], index: 2, kind: output, shape index: {0}]
  %s3 = inlined_call_operand.hbm [shape: f32[2,2,128], index: 3, kind: output, shape index: {1}]
  %4 = xla_tuple %s2, %s3
  %s5 = sld [smem:[#allocation0]]
  $region49: #{tpu_custom_call.1} parent=0
    _
  %s7 = ssub.s32 1, %s5
  %s8 = scalar_select 0, %s7, %s5
  $region1: #{tpu_custom_call.1} parent=0
    #allocation2 [shape = 'u8[1048576]{0}', space=vmem, size = 0x100000, scoped, tag = 'output window, operand 0']
    #allocation3 [shape = 's32[2]{0}', space=sflag, size = 0x8, scoped, tag = 'scoped memory for tpu_custom_call.1']
    #allocation4 [shape = 'u8[2048]{0}', space=vmem, size = 0x800, scoped, tag = 'output window, operand 1']
    #allocation5 [shape = 's32[2]{0}', space=sflag, size = 0x8, scoped, tag = 'scoped memory for tpu_custom_call.1']
    %9 = vsyncpa [#allocation3], 0
    %s10 = scalar_lea.sflag [#allocation3], 1
    %11 = vsyncpa %s10, 0
    %12 = vsyncpa [#allocation5], 0
    %s13 = scalar_lea.sflag [#allocation5], 1
    %14 = vsyncpa %s13, 0
    loop: start=0, step=1, limit=4
    $region2: #{tpu_custom_call.1} parent=1 // loop_pre_header
      _
    $region3: #{tpu_custom_call.1} parent=1 // loop_header
      %s16 = sphi 0, %s20
      %p17 = scmp.ge.s32.totalorder %s16, 4
      %s26 = sphi 0, %s28
      %s29 = sphi 0, %s26
      %s30 = sphi 0, %s29
      %s46 = sphi 0, %s30
      %s50 = sphi 0, %s50
      %s52 = sphi 0, %s50
      %s53 = sphi 0, %s52
      %s67 = sphi 0, %s53
      %s73 = sphi 0, %s75
      %s76 = sphi 0, %s73
      %s77 = sphi 0, %s76
      %s93 = sphi 0, %s77
      %s99 = sphi 0, %s101
      %s102 = sphi 0, %s99
      %s103 = sphi 0, %s102
      %s119 = sphi 0, %s103
    $region4: #{tpu_custom_call.1} parent=1 // loop_header_branch
      %19 = sbr.rel (%p17) target = $region8
    $region5: #{tpu_custom_call.1} parent=1 // loop_body
      %s21 = ssub.s32 %s16, 1
      %s22 = ssub.s32 %s16, 2
      %s23 = sadd.s32 %s16, 1
      %s24 = ssub.s32 %s16, %s23
      %p25 = scmp.eq.s32.totalorder %s24, 0
      %s27 = sadd.s32 %s26, 1
      %s28 = scalar_select %p25, %s26, %s27
      %p31 = pneg %p25
      %p32 = scmp.eq.s32.totalorder %s16, 1
      %p33 = por %p31, %p32
      %p34 = scmp.ne.s32.totalorder %s26, %s29
      %p35 = scmp.eq.s32.totalorder %s16, 0
      %p36 = por %p34, %p35
      %p37 = scmp.ne.s32.totalorder %s26, %s29
      %p38 = scmp.eq.s32.totalorder %s21, 1
      %p39 = por %p37, %p38
      %p40 = scmp.ne.s32.totalorder %s29, %s30
      %p41 = scmp.eq.s32.totalorder %s21, 0
      %p42 = por %p40, %p41
      %p43 = scmp.ne.s32.totalorder %s29, %s30
      %p44 = scmp.eq.s32.totalorder %s22, 1
      %p45 = por %p43, %p44
      %p47 = scmp.ne.s32.totalorder %s30, %s46
      %p48 = scmp.eq.s32.totalorder %s22, 0
      %p49 = por %p47, %p48
      %s51 = sadd.s32 %s50, 1
      %p54 = scmp.eq.s32.totalorder %s16, 1
      %p55 = scmp.ne.s32.totalorder %s50, %s52
      %p56 = scmp.eq.s32.totalorder %s16, 0
      %p57 = por %p55, %p56
      %p58 = scmp.ne.s32.totalorder %s50, %s52
      %p59 = scmp.eq.s32.totalorder %s21, 1
      %p60 = por %p58, %p59
      %p61 = scmp.ne.s32.totalorder %s52, %s53
      %p62 = scmp.eq.s32.totalorder %s21, 0
      %p63 = por %p61, %p62
      %p64 = scmp.ne.s32.totalorder %s52, %s53
      %p65 = scmp.eq.s32.totalorder %s22, 1
      %p66 = por %p64, %p65
      %p68 = scmp.ne.s32.totalorder %s53, %s67
      %p69 = scmp.eq.s32.totalorder %s22, 0
      %p70 = por %p68, %p69
      %s71 = ssub.s32 %s16, %s23
      %p72 = scmp.eq.s32.totalorder %s71, 0
      %s74 = sadd.s32 %s73, 1
      %s75 = scalar_select %p72, %s73, %s74
      %p78 = pneg %p72
      %p79 = scmp.eq.s32.totalorder %s16, 1
      %p80 = por %p78, %p79
      %p81 = scmp.ne.s32.totalorder %s73, %s76
      %p82 = scmp.eq.s32.totalorder %s16, 0
      %p83 = por %p81, %p82
      %p84 = scmp.ne.s32.totalorder %s73, %s76
      %p85 = scmp.eq.s32.totalorder %s21, 1
      %p86 = por %p84, %p85
      %p87 = scmp.ne.s32.totalorder %s76, %s77
      %p88 = scmp.eq.s32.totalorder %s21, 0
      %p89 = por %p87, %p88
      %p90 = scmp.ne.s32.totalorder %s76, %s77
      %p91 = scmp.eq.s32.totalorder %s22, 1
      %p92 = por %p90, %p91
      %p94 = scmp.ne.s32.totalorder %s77, %s93
      %p95 = scmp.eq.s32.totalorder %s22, 0
      %p96 = por %p94, %p95
      %s97 = ssub.s32 %s16, %s23
      %p98 = scmp.eq.s32.totalorder %s97, 0
      %s100 = sadd.s32 %s99, 1
      %s101 = scalar_select %p98, %s99, %s100
      %p104 = pneg %p98
      %p105 = scmp.eq.s32.totalorder %s16, 1
      %p106 = por %p104, %p105
      %p107 = scmp.ne.s32.totalorder %s99, %s102
      %p108 = scmp.eq.s32.totalorder %s16, 0
      %p109 = por %p107, %p108
      %p110 = scmp.ne.s32.totalorder %s99, %s102
      %p111 = scmp.eq.s32.totalorder %s21, 1
      %p112 = por %p110, %p111
      %p113 = scmp.ne.s32.totalorder %s102, %s103
      %p114 = scmp.eq.s32.totalorder %s21, 0
      %p115 = por %p113, %p114
      %p116 = scmp.ne.s32.totalorder %s102, %s103
      %p117 = scmp.eq.s32.totalorder %s22, 1
      %p118 = por %p116, %p117
      %p120 = scmp.ne.s32.totalorder %s103, %s119
      %p121 = scmp.eq.s32.totalorder %s22, 0
      %p122 = por %p120, %p121
      %p123 = scmp.le.s32.totalorder 1, %s16
      %p124 = scmp.lt.s32.totalorder %s16, 3
      %p125 = pnand %p123, %p124
      %p126 = pneg %p125
      // Predicated region
      $region9: #{tpu_custom_call.1} parent=5 // pred_check
        _
      $region10: #{tpu_custom_call.1} parent=5 // pred_check_branch
        %128 = sbr.rel (%p125) target = $region12
      $region11: #{tpu_custom_call.1} parent=5 // pred_region
        %s129 = ssub.s32 %s16, 1
        // Predicated region
        $region13: #{tpu_custom_call.1} parent=11 // pred_check
          %p130 = pneg %p63
        $region14: #{tpu_custom_call.1} parent=11 // pred_check_branch
          %132 = sbr.rel (%p130) target = $region16
        $region15: #{tpu_custom_call.1} parent=11 // pred_region
          _
        $region16: #{tpu_custom_call.1} parent=11 // pred_fallthru
          _
      $region12: #{tpu_custom_call.1} parent=5 // pred_fallthru
        _
      %p133 = scmp.lt.s32.totalorder %s16, 2
      // Predicated region
      $region17: #{tpu_custom_call.1} parent=5 // pred_check
        %p134 = pneg %p133
      $region18: #{tpu_custom_call.1} parent=5 // pred_check_branch
        %136 = sbr.rel (%p134) target = $region20
      $region19: #{tpu_custom_call.1} parent=5 // pred_region
        // Predicated region
        $region21: #{tpu_custom_call.1} parent=19 // pred_check
          %p137 = pneg %p36
        $region22: #{tpu_custom_call.1} parent=19 // pred_check_branch
          %139 = sbr.rel (%p137) target = $region24
        $region23: #{tpu_custom_call.1} parent=19 // pred_region
          %p140 = scmp.lt.s32.totalorder %s16, 1
          %s141 = scalar_select %p140, %s16, 1
          %s142 = smul.addr %s141, 170
          %s143 = smul.addr %s142, 4
          %s144 = scalar_lea.vmem %s0, %s143
        $region24: #{tpu_custom_call.1} parent=19 // pred_fallthru
          _
      $region20: #{tpu_custom_call.1} parent=5 // pred_fallthru
        _
      %p145 = scmp.le.s32.totalorder 1, %s16
      %p146 = scmp.lt.s32.totalorder %s16, 3
      %p147 = pnand %p145, %p146
      %p148 = pneg %p147
      // Predicated region
      $region25: #{tpu_custom_call.1} parent=5 // pred_check
        _
      $region26: #{tpu_custom_call.1} parent=5 // pred_check_branch
        %150 = sbr.rel (%p147) target = $region28
      $region27: #{tpu_custom_call.1} parent=5 // pred_region
        %s151 = ssub.s32 %s16, 1
        %p152 = scmp.lt.s32.totalorder %s21, 1
        %s153 = scalar_select %p152, %s21, 1
        %s154 = smul.addr %s153, 170
        %s155 = smul.addr %s154, 4
        %s156 = scalar_lea.vmem %s0, %s155
        %p157 = pneg %p42
        %p158 = pneg %p39
        %p159 = pneg %p63
        %p160 = pneg %p60
        %p161 = pneg %p89
        %p162 = pneg %p86
        %s163 = sand.u32 %s76, 1
        %s164 = scalar_lea.sflag [#allocation3], %s163
        %s165 = sand.u32 %s76, 1
        %s166 = smul.addr %s165, 1024
        %s167 = scalar_lea.vmem [#allocation2], %s166
        %p168 = pneg %p115
        %p169 = pneg %p112
        %s170 = sand.u32 %s102, 1
        %s171 = scalar_lea.sflag [#allocation5], %s170
        %s172 = sand.u32 %s102, 1
        %s173 = smul.addr %s172, 2
        %s174 = scalar_lea.vmem [#allocation4], %s173
        %p175 = scmp.lt.s32.totalorder %s21, 1
        %s176 = scalar_select %p175, %s21, 1
        %s177 = smul.addr %s176, 170
        %s178 = smul.addr %s177, 4
        %s179 = scalar_lea.vmem %s0, %s178
        %v181 = vld [vmem:[%s179] sm:$0xf]
        %v182 = vld [vmem:[%s179 + $0x4] sm:$0xf]
        %v183 = vld [vmem:[%s179 + $0x8] sm:$0xf]
        %v184 = vld [vmem:[%s179 + $0xc] sm:$0xf]
        %v185 = vld [vmem:[%s179 + $0x10] sm:$0x1]
        %v186 = vld [vmem:[%s179 + $0x14] sm:$0xf]
        %v187 = vld [vmem:[%s179 + $0x18] sm:$0xf]
        %v188 = vld [vmem:[%s179 + $0x1c] sm:$0xf]
        %v189 = vld [vmem:[%s179 + $0x20] sm:$0xf]
        %v190 = vld [vmem:[%s179 + $0x24] sm:$0x1]
        %v191 = vld [vmem:[%s179 + $0x28] sm:$0xf]
        %v192 = vld [vmem:[%s179 + $0x2c] sm:$0xf]
        %v193 = vld [vmem:[%s179 + $0x30] sm:$0xf]
        %v194 = vld [vmem:[%s179 + $0x34] sm:$0xf]
        %v195 = vld [vmem:[%s179 + $0x38] sm:$0x1]
        %v196 = vld [vmem:[%s179 + $0x3c] sm:$0xf]
        %v197 = vld [vmem:[%s179 + $0x40] sm:$0xf]
        %v198 = vld [vmem:[%s179 + $0x44] sm:$0xf]
        %v199 = vld [vmem:[%s179 + $0x48] sm:$0xf]
        %v200 = vld [vmem:[%s179 + $0x4c] sm:$0x1]
        %v201 = vld [vmem:[%s179 + $0x50] sm:$0xf]
        %v202 = vld [vmem:[%s179 + $0x54] sm:$0xf]
        %v203 = vld [vmem:[%s179 + $0x58] sm:$0xf]
        %v204 = vld [vmem:[%s179 + $0x5c] sm:$0xf]
        %v205 = vld [vmem:[%s179 + $0x60] sm:$0x1]
        %v206 = vld [vmem:[%s179 + $0x64] sm:$0xf]
        %v207 = vld [vmem:[%s179 + $0x68] sm:$0xf]
        %v208 = vld [vmem:[%s179 + $0x6c] sm:$0xf]
        %v209 = vld [vmem:[%s179 + $0x70] sm:$0xf]
        %v210 = vld [vmem:[%s179 + $0x74] sm:$0x1]
        %v211 = vld [vmem:[%s179 + $0x78] sm:$0xf]
        %v212 = vld [vmem:[%s179 + $0x7c] sm:$0xf]
        %v213 = vld [vmem:[%s179 + $0x80] sm:$0xf]
        %v214 = vld [vmem:[%s179 + $0x84] sm:$0xf]
        %v215 = vld [vmem:[%s179 + $0x88] sm:$0x1]
        %v216 = vld [vmem:[%s179 + $0x8c] sm:$0xf]
        %v217 = vld [vmem:[%s179 + $0x90] sm:$0xf]
        %v218 = vld [vmem:[%s179 + $0x94] sm:$0xf]
        %v219 = vld [vmem:[%s179 + $0x98] sm:$0xf]
        %v220 = vld [vmem:[%s179 + $0x9c] sm:$0x1]
        %v221 = vld [vmem:[%s179 + $0xa0] sm:$0xf]
        %v222 = vld [vmem:[%s179 + $0xa4] sm:$0xf]
        %v223 = vld [vmem:[%s179 + $0xa8] sm:$0xf]
        %v224 = vld [vmem:[%s179 + $0xac] sm:$0xf]
        %v225 = vld [vmem:[%s179 + $0xb0] sm:$0x1]
        %v226 = vld [vmem:[%s179 + $0xb4] sm:$0xf]
        %v227 = vld [vmem:[%s179 + $0xb8] sm:$0xf]
        %v228 = vld [vmem:[%s179 + $0xbc] sm:$0xf]
        %v229 = vld [vmem:[%s179 + $0xc0] sm:$0xf]
        %v230 = vld [vmem:[%s179 + $0xc4] sm:$0x1]
        %v231 = vld [vmem:[%s179 + $0xc8] sm:$0xf]
        %v232 = vld [vmem:[%s179 + $0xcc] sm:$0xf]
        %v233 = vld [vmem:[%s179 + $0xd0] sm:$0xf]
        %v234 = vld [vmem:[%s179 + $0xd4] sm:$0xf]
        %v235 = vld [vmem:[%s179 + $0xd8] sm:$0x1]
        %v236 = vld [vmem:[%s179 + $0xdc] sm:$0xf]
        %v237 = vld [vmem:[%s179 + $0xe0] sm:$0xf]
        %v238 = vld [vmem:[%s179 + $0xe4] sm:$0xf]
        %v239 = vld [vmem:[%s179 + $0xe8] sm:$0xf]
        %v240 = vld [vmem:[%s179 + $0xec] sm:$0x1]
        %v241 = vld [vmem:[%s179 + $0xf0] sm:$0xf]
        %v242 = vld [vmem:[%s179 + $0xf4] sm:$0xf]
        %v243 = vld [vmem:[%s179 + $0xf8] sm:$0xf]
        %v244 = vld [vmem:[%s179 + $0xfc] sm:$0xf]
        %v245 = vld [vmem:[%s179 + $0x100] sm:$0x1]
        %v246 = vld [vmem:[%s179 + $0x104] sm:$0xf]
        %v247 = vld [vmem:[%s179 + $0x108] sm:$0xf]
        %v248 = vld [vmem:[%s179 + $0x10c] sm:$0xf]
        %v249 = vld [vmem:[%s179 + $0x110] sm:$0xf]
        %v250 = vld [vmem:[%s179 + $0x114] sm:$0x1]
        %v251 = vld [vmem:[%s179 + $0x118] sm:$0xf]
        %v252 = vld [vmem:[%s179 + $0x11c] sm:$0xf]
        %v253 = vld [vmem:[%s179 + $0x120] sm:$0xf]
        %v254 = vld [vmem:[%s179 + $0x124] sm:$0xf]
        %v255 = vld [vmem:[%s179 + $0x128] sm:$0x1]
        %v256 = vld [vmem:[%s179 + $0x12c] sm:$0xf]
        %v257 = vld [vmem:[%s179 + $0x130] sm:$0xf]
        %v258 = vld [vmem:[%s179 + $0x134] sm:$0xf]
        %v259 = vld [vmem:[%s179 + $0x138] sm:$0xf]
        %v260 = vld [vmem:[%s179 + $0x13c] sm:$0x1]
        %v261 = vld [vmem:[%s179 + $0x140] sm:$0xf]
        %v262 = vld [vmem:[%s179 + $0x144] sm:$0xf]
        %v263 = vld [vmem:[%s179 + $0x148] sm:$0xf]
        %v264 = vld [vmem:[%s179 + $0x14c] sm:$0xf]
        %v265 = vld [vmem:[%s179 + $0x150] sm:$0x1]
        %v266 = vld [vmem:[%s179 + $0x154] sm:$0xf]
        %v267 = vld [vmem:[%s179 + $0x158] sm:$0xf]
        %v268 = vld [vmem:[%s179 + $0x15c] sm:$0xf]
        %v269 = vld [vmem:[%s179 + $0x160] sm:$0xf]
        %v270 = vld [vmem:[%s179 + $0x164] sm:$0x1]
        %v271 = vld [vmem:[%s179 + $0x168] sm:$0xf]
        %v272 = vld [vmem:[%s179 + $0x16c] sm:$0xf]
        %v273 = vld [vmem:[%s179 + $0x170] sm:$0xf]
        %v274 = vld [vmem:[%s179 + $0x174] sm:$0xf]
        %v275 = vld [vmem:[%s179 + $0x178] sm:$0x1]
        %v276 = vld [vmem:[%s179 + $0x17c] sm:$0xf]
        %v277 = vld [vmem:[%s179 + $0x180] sm:$0xf]
        %v278 = vld [vmem:[%s179 + $0x184] sm:$0xf]
        %v279 = vld [vmem:[%s179 + $0x188] sm:$0xf]
        %v280 = vld [vmem:[%s179 + $0x18c] sm:$0x1]
        %v281 = vld [vmem:[%s179 + $0x190] sm:$0xf]
        %v282 = vld [vmem:[%s179 + $0x194] sm:$0xf]
        %v283 = vld [vmem:[%s179 + $0x198] sm:$0xf]
        %v284 = vld [vmem:[%s179 + $0x19c] sm:$0xf]
        %v285 = vld [vmem:[%s179 + $0x1a0] sm:$0x1]
        %v286 = vld [vmem:[%s179 + $0x1a4] sm:$0xf]
        %v287 = vld [vmem:[%s179 + $0x1a8] sm:$0xf]
        %v288 = vld [vmem:[%s179 + $0x1ac] sm:$0xf]
        %v289 = vld [vmem:[%s179 + $0x1b0] sm:$0xf]
        %v290 = vld [vmem:[%s179 + $0x1b4] sm:$0x1]
        %v291 = vld [vmem:[%s179 + $0x1b8] sm:$0xf]
        %v292 = vld [vmem:[%s179 + $0x1bc] sm:$0xf]
        %v293 = vld [vmem:[%s179 + $0x1c0] sm:$0xf]
        %v294 = vld [vmem:[%s179 + $0x1c4] sm:$0xf]
        %v295 = vld [vmem:[%s179 + $0x1c8] sm:$0x1]
        %v296 = vld [vmem:[%s179 + $0x1cc] sm:$0xf]
        %v297 = vld [vmem:[%s179 + $0x1d0] sm:$0xf]
        %v298 = vld [vmem:[%s179 + $0x1d4] sm:$0xf]
        %v299 = vld [vmem:[%s179 + $0x1d8] sm:$0xf]
        %v300 = vld [vmem:[%s179 + $0x1dc] sm:$0x1]
        %v301 = vld [vmem:[%s179 + $0x1e0] sm:$0xf]
        %v302 = vld [vmem:[%s179 + $0x1e4] sm:$0xf]
        %v303 = vld [vmem:[%s179 + $0x1e8] sm:$0xf]
        %v304 = vld [vmem:[%s179 + $0x1ec] sm:$0xf]
        %v305 = vld [vmem:[%s179 + $0x1f0] sm:$0x1]
        %v306 = vld [vmem:[%s179 + $0x1f4] sm:$0xf]
        %v307 = vld [vmem:[%s179 + $0x1f8] sm:$0xf]
        %v308 = vld [vmem:[%s179 + $0x1fc] sm:$0xf]
        %v309 = vld [vmem:[%s179 + $0x200] sm:$0xf]
        %v310 = vld [vmem:[%s179 + $0x204] sm:$0x1]
        %v311 = vld [vmem:[%s179 + $0x208] sm:$0xf]
        %v312 = vld [vmem:[%s179 + $0x20c] sm:$0xf]
        %v313 = vld [vmem:[%s179 + $0x210] sm:$0xf]
        %v314 = vld [vmem:[%s179 + $0x214] sm:$0xf]
        %v315 = vld [vmem:[%s179 + $0x218] sm:$0x1]
        %v316 = vld [vmem:[%s179 + $0x21c] sm:$0xf]
        %v317 = vld [vmem:[%s179 + $0x220] sm:$0xf]
        %v318 = vld [vmem:[%s179 + $0x224] sm:$0xf]
        %v319 = vld [vmem:[%s179 + $0x228] sm:$0xf]
        %v320 = vld [vmem:[%s179 + $0x22c] sm:$0x1]
        %v321 = vld [vmem:[%s179 + $0x230] sm:$0xf]
        %v322 = vld [vmem:[%s179 + $0x234] sm:$0xf]
        %v323 = vld [vmem:[%s179 + $0x238] sm:$0xf]
        %v324 = vld [vmem:[%s179 + $0x23c] sm:$0xf]
        %v325 = vld [vmem:[%s179 + $0x240] sm:$0x1]
        %v326 = vld [vmem:[%s179 + $0x244] sm:$0xf]
        %v327 = vld [vmem:[%s179 + $0x248] sm:$0xf]
        %v328 = vld [vmem:[%s179 + $0x24c] sm:$0xf]
        %v329 = vld [vmem:[%s179 + $0x250] sm:$0xf]
        %v330 = vld [vmem:[%s179 + $0x254] sm:$0x1]
        %v331 = vld [vmem:[%s179 + $0x258] sm:$0xf]
        %v332 = vld [vmem:[%s179 + $0x25c] sm:$0xf]
        %v333 = vld [vmem:[%s179 + $0x260] sm:$0xf]
        %v334 = vld [vmem:[%s179 + $0x264] sm:$0xf]
        %v335 = vld [vmem:[%s179 + $0x268] sm:$0x1]
        %v336 = vld [vmem:[%s179 + $0x26c] sm:$0xf]
        %v337 = vld [vmem:[%s179 + $0x270] sm:$0xf]
        %v338 = vld [vmem:[%s179 + $0x274] sm:$0xf]
        %v339 = vld [vmem:[%s179 + $0x278] sm:$0xf]
        %v340 = vld [vmem:[%s179 + $0x27c] sm:$0x1]
        %v341 = vld [vmem:[%s179 + $0x280] sm:$0xf]
        %v342 = vld [vmem:[%s179 + $0x284] sm:$0xf]
        %v343 = vld [vmem:[%s179 + $0x288] sm:$0xf]
        %v344 = vld [vmem:[%s179 + $0x28c] sm:$0xf]
        %v345 = vld [vmem:[%s179 + $0x290] sm:$0x1]
        %v346 = vld [vmem:[%s179 + $0x294] sm:$0xf]
        %v347 = vld [vmem:[%s179 + $0x298] sm:$0xf]
        %v348 = vld [vmem:[%s179 + $0x29c] sm:$0xf]
        %v349 = vld [vmem:[%s179 + $0x2a0] sm:$0xf]
        %v350 = vld [vmem:[%s179 + $0x2a4] sm:$0x1]
        %v351 = vld [vmem:[%s1] sm:$0xf]
        %v352 = vld [vmem:[%s1 + $0x4] sm:$0xf]
        %v353 = vld [vmem:[%s1 + $0x8] sm:$0xf]
        %v354 = vld [vmem:[%s1 + $0xc] sm:$0xf]
        %v355 = vld [vmem:[%s1 + $0x10] sm:$0xf]
        %v356 = vld [vmem:[%s1 + $0x14] sm:$0xf]
        %v357 = vld [vmem:[%s1 + $0x18] sm:$0xf]
        %v358 = vld [vmem:[%s1 + $0x1c] sm:$0xf]
        %v359 = vld [vmem:[%s1 + $0x20] sm:$0xf]
        %v360 = vld [vmem:[%s1 + $0x24] sm:$0xf]
        %v361 = vld [vmem:[%s1 + $0x28] sm:$0xf]
        %v362 = vld [vmem:[%s1 + $0x2c] sm:$0xf]
        %v363 = vld [vmem:[%s1 + $0x30] sm:$0xf]
        %v364 = vld [vmem:[%s1 + $0x34] sm:$0xf]
        %v365 = vld [vmem:[%s1 + $0x38] sm:$0xf]
        %v366 = vld [vmem:[%s1 + $0x3c] sm:$0xf]
        %vm367 = vsmask.f32 3328
        %vm368 = vsmask.f32 7440
        %vm369 = vmor %vm367, %vm368
        %v371 = vshrl.u32 %v181, 16
        %v373 = vrot.slane %v371, 4
        %v374 = vshll.u32 %v181, 16
        %v376 = vrot.slane %v374, 5
        %v377 = vor.u32 %v373, %v376
        %v378 = vrot.slane %v377, 4
        %v380 = vshll.u32 %v182, 16
        %v382 = vrot.slane %v380, 5
        %v383 = vsel %vm369, %v378, %v382
        %v384 = vshrl.u32 %v182, 16
        %v386 = vrot.slane %v384, 4
        %v387 = vor.u32 %v386, %v382
        %v388 = vrot.slane %v387, 4
        %v390 = vshll.u32 %v183, 16
        %v392 = vrot.slane %v390, 5
        %v393 = vsel %vm369, %v388, %v392
        %v394 = vshrl.u32 %v183, 16
        %v396 = vrot.slane %v394, 4
        %v397 = vor.u32 %v396, %v392
        %v398 = vrot.slane %v397, 4
        %v400 = vshll.u32 %v184, 16
        %v402 = vrot.slane %v400, 5
        %v403 = vsel %vm369, %v398, %v402
        %v404 = vshrl.u32 %v184, 16
        %v406 = vrot.slane %v404, 4
        %v407 = vor.u32 %v406, %v402
        %v408 = vrot.slane %v407, 4
        %v410 = vshll.u32 %v185, 16
        %v412 = vrot.slane %v410, 5
        %v413 = vsel %vm369, %v408, %v412
        %v415 = vshrl.u32 %v186, 16
        %v417 = vrot.slane %v415, 4
        %v418 = vshll.u32 %v186, 16
        %v420 = vrot.slane %v418, 5
        %v421 = vor.u32 %v417, %v420
        %v422 = vrot.slane %v421, 4
        %v424 = vshll.u32 %v187, 16
        %v426 = vrot.slane %v424, 5
        %v427 = vsel %vm369, %v422, %v426
        %v428 = vshrl.u32 %v187, 16
        %v430 = vrot.slane %v428, 4
        %v431 = vor.u32 %v430, %v426
        %v432 = vrot.slane %v431, 4
        %v434 = vshll.u32 %v188, 16
        %v436 = vrot.slane %v434, 5
        %v437 = vsel %vm369, %v432, %v436
        %v438 = vshrl.u32 %v188, 16
        %v440 = vrot.slane %v438, 4
        %v441 = vor.u32 %v440, %v436
        %v442 = vrot.slane %v441, 4
        %v444 = vshll.u32 %v189, 16
        %v446 = vrot.slane %v444, 5
        %v447 = vsel %vm369, %v442, %v446
        %v448 = vshrl.u32 %v189, 16
        %v450 = vrot.slane %v448, 4
        %v451 = vor.u32 %v450, %v446
        %v452 = vrot.slane %v451, 4
        %v454 = vshll.u32 %v190, 16
        %v456 = vrot.slane %v454, 5
        %v457 = vsel %vm369, %v452, %v456
        %v459 = vshrl.u32 %v191, 16
        %v461 = vrot.slane %v459, 4
        %v462 = vshll.u32 %v191, 16
        %v464 = vrot.slane %v462, 5
        %v465 = vor.u32 %v461, %v464
        %v466 = vrot.slane %v465, 4
        %v468 = vshll.u32 %v192, 16
        %v470 = vrot.slane %v468, 5
        %v471 = vsel %vm369, %v466, %v470
        %v472 = vshrl.u32 %v192, 16
        %v474 = vrot.slane %v472, 4
        %v475 = vor.u32 %v474, %v470
        %v476 = vrot.slane %v475, 4
        %v478 = vshll.u32 %v193, 16
        %v480 = vrot.slane %v478, 5
        %v481 = vsel %vm369, %v476, %v480
        %v482 = vshrl.u32 %v193, 16
        %v484 = vrot.slane %v482, 4
        %v485 = vor.u32 %v484, %v480
        %v486 = vrot.slane %v485, 4
        %v488 = vshll.u32 %v194, 16
        %v490 = vrot.slane %v488, 5
        %v491 = vsel %vm369, %v486, %v490
        %v492 = vshrl.u32 %v194, 16
        %v494 = vrot.slane %v492, 4
        %v495 = vor.u32 %v494, %v490
        %v496 = vrot.slane %v495, 4
        %v498 = vshll.u32 %v195, 16
        %v500 = vrot.slane %v498, 5
        %v501 = vsel %vm369, %v496, %v500
        %v503 = vshrl.u32 %v196, 16
        %v505 = vrot.slane %v503, 4
        %v506 = vshll.u32 %v196, 16
        %v508 = vrot.slane %v506, 5
        %v509 = vor.u32 %v505, %v508
        %v510 = vrot.slane %v509, 4
        %v512 = vshll.u32 %v197, 16
        %v514 = vrot.slane %v512, 5
        %v515 = vsel %vm369, %v510, %v514
        %v516 = vshrl.u32 %v197, 16
        %v518 = vrot.slane %v516, 4
        %v519 = vor.u32 %v518, %v514
        %v520 = vrot.slane %v519, 4
        %v522 = vshll.u32 %v198, 16
        %v524 = vrot.slane %v522, 5
        %v525 = vsel %vm369, %v520, %v524
        %v526 = vshrl.u32 %v198, 16
        %v528 = vrot.slane %v526, 4
        %v529 = vor.u32 %v528, %v524
        %v530 = vrot.slane %v529, 4
        %v532 = vshll.u32 %v199, 16
        %v534 = vrot.slane %v532, 5
        %v535 = vsel %vm369, %v530, %v534
        %v536 = vshrl.u32 %v199, 16
        %v538 = vrot.slane %v536, 4
        %v539 = vor.u32 %v538, %v534
        %v540 = vrot.slane %v539, 4
        %v542 = vshll.u32 %v200, 16
        %v544 = vrot.slane %v542, 5
        %v545 = vsel %vm369, %v540, %v544
        %v547 = vshrl.u32 %v201, 16
        %v549 = vrot.slane %v547, 4
        %v550 = vshll.u32 %v201, 16
        %v552 = vrot.slane %v550, 5
        %v553 = vor.u32 %v549, %v552
        %v554 = vrot.slane %v553, 4
        %v556 = vshll.u32 %v202, 16
        %v558 = vrot.slane %v556, 5
        %v559 = vsel %vm369, %v554, %v558
        %v560 = vshrl.u32 %v202, 16
        %v562 = vrot.slane %v560, 4
        %v563 = vor.u32 %v562, %v558
        %v564 = vrot.slane %v563, 4
        %v566 = vshll.u32 %v203, 16
        %v568 = vrot.slane %v566, 5
        %v569 = vsel %vm369, %v564, %v568
        %v570 = vshrl.u32 %v203, 16
        %v572 = vrot.slane %v570, 4
        %v573 = vor.u32 %v572, %v568
        %v574 = vrot.slane %v573, 4
        %v576 = vshll.u32 %v204, 16
        %v578 = vrot.slane %v576, 5
        %v579 = vsel %vm369, %v574, %v578
        %v580 = vshrl.u32 %v204, 16
        %v582 = vrot.slane %v580, 4
        %v583 = vor.u32 %v582, %v578
        %v584 = vrot.slane %v583, 4
        %v586 = vshll.u32 %v205, 16
        %v588 = vrot.slane %v586, 5
        %v589 = vsel %vm369, %v584, %v588
        %v591 = vshrl.u32 %v206, 16
        %v593 = vrot.slane %v591, 4
        %v594 = vshll.u32 %v206, 16
        %v596 = vrot.slane %v594, 5
        %v597 = vor.u32 %v593, %v596
        %v598 = vrot.slane %v597, 4
        %v600 = vshll.u32 %v207, 16
        %v602 = vrot.slane %v600, 5
        %v603 = vsel %vm369, %v598, %v602
        %v604 = vshrl.u32 %v207, 16
        %v606 = vrot.slane %v604, 4
        %v607 = vor.u32 %v606, %v602
        %v608 = vrot.slane %v607, 4
        %v610 = vshll.u32 %v208, 16
        %v612 = vrot.slane %v610, 5
        %v613 = vsel %vm369, %v608, %v612
        %v614 = vshrl.u32 %v208, 16
        %v616 = vrot.slane %v614, 4
        %v617 = vor.u32 %v616, %v612
        %v618 = vrot.slane %v617, 4
        %v620 = vshll.u32 %v209, 16
        %v622 = vrot.slane %v620, 5
        %v623 = vsel %vm369, %v618, %v622
        %v624 = vshrl.u32 %v209, 16
        %v626 = vrot.slane %v624, 4
        %v627 = vor.u32 %v626, %v622
        %v628 = vrot.slane %v627, 4
        %v630 = vshll.u32 %v210, 16
        %v632 = vrot.slane %v630, 5
        %v633 = vsel %vm369, %v628, %v632
        %v635 = vshrl.u32 %v211, 16
        %v637 = vrot.slane %v635, 4
        %v638 = vshll.u32 %v211, 16
        %v640 = vrot.slane %v638, 5
        %v641 = vor.u32 %v637, %v640
        %v642 = vrot.slane %v641, 4
        %v644 = vshll.u32 %v212, 16
        %v646 = vrot.slane %v644, 5
        %v647 = vsel %vm369, %v642, %v646
        %v648 = vshrl.u32 %v212, 16
        %v650 = vrot.slane %v648, 4
        %v651 = vor.u32 %v650, %v646
        %v652 = vrot.slane %v651, 4
        %v654 = vshll.u32 %v213, 16
        %v656 = vrot.slane %v654, 5
        %v657 = vsel %vm369, %v652, %v656
        %v658 = vshrl.u32 %v213, 16
        %v660 = vrot.slane %v658, 4
        %v661 = vor.u32 %v660, %v656
        %v662 = vrot.slane %v661, 4
        %v664 = vshll.u32 %v214, 16
        %v666 = vrot.slane %v664, 5
        %v667 = vsel %vm369, %v662, %v666
        %v668 = vshrl.u32 %v214, 16
        %v670 = vrot.slane %v668, 4
        %v671 = vor.u32 %v670, %v666
        %v672 = vrot.slane %v671, 4
        %v674 = vshll.u32 %v215, 16
        %v676 = vrot.slane %v674, 5
        %v677 = vsel %vm369, %v672, %v676
        %v679 = vshrl.u32 %v216, 16
        %v681 = vrot.slane %v679, 4
        %v682 = vshll.u32 %v216, 16
        %v684 = vrot.slane %v682, 5
        %v685 = vor.u32 %v681, %v684
        %v686 = vrot.slane %v685, 4
        %v688 = vshll.u32 %v217, 16
        %v690 = vrot.slane %v688, 5
        %v691 = vsel %vm369, %v686, %v690
        %v692 = vshrl.u32 %v217, 16
        %v694 = vrot.slane %v692, 4
        %v695 = vor.u32 %v694, %v690
        %v696 = vrot.slane %v695, 4
        %v698 = vshll.u32 %v218, 16
        %v700 = vrot.slane %v698, 5
        %v701 = vsel %vm369, %v696, %v700
        %v702 = vshrl.u32 %v218, 16
        %v704 = vrot.slane %v702, 4
        %v705 = vor.u32 %v704, %v700
        %v706 = vrot.slane %v705, 4
        %v708 = vshll.u32 %v219, 16
        %v710 = vrot.slane %v708, 5
        %v711 = vsel %vm369, %v706, %v710
        %v712 = vshrl.u32 %v219, 16
        %v714 = vrot.slane %v712, 4
        %v715 = vor.u32 %v714, %v710
        %v716 = vrot.slane %v715, 4
        %v718 = vshll.u32 %v220, 16
        %v720 = vrot.slane %v718, 5
        %v721 = vsel %vm369, %v716, %v720
        %v723 = vshrl.u32 %v221, 16
        %v725 = vrot.slane %v723, 4
        %v726 = vshll.u32 %v221, 16
        %v728 = vrot.slane %v726, 5
        %v729 = vor.u32 %v725, %v728
        %v730 = vrot.slane %v729, 4
        %v732 = vshll.u32 %v222, 16
        %v734 = vrot.slane %v732, 5
        %v735 = vsel %vm369, %v730, %v734
        %v736 = vshrl.u32 %v222, 16
        %v738 = vrot.slane %v736, 4
        %v739 = vor.u32 %v738, %v734
        %v740 = vrot.slane %v739, 4
        %v742 = vshll.u32 %v223, 16
        %v744 = vrot.slane %v742, 5
        %v745 = vsel %vm369, %v740, %v744
        %v746 = vshrl.u32 %v223, 16
        %v748 = vrot.slane %v746, 4
        %v749 = vor.u32 %v748, %v744
        %v750 = vrot.slane %v749, 4
        %v752 = vshll.u32 %v224, 16
        %v754 = vrot.slane %v752, 5
        %v755 = vsel %vm369, %v750, %v754
        %v756 = vshrl.u32 %v224, 16
        %v758 = vrot.slane %v756, 4
        %v759 = vor.u32 %v758, %v754
        %v760 = vrot.slane %v759, 4
        %v762 = vshll.u32 %v225, 16
        %v764 = vrot.slane %v762, 5
        %v765 = vsel %vm369, %v760, %v764
        %v767 = vshrl.u32 %v226, 16
        %v769 = vrot.slane %v767, 4
        %v770 = vshll.u32 %v226, 16
        %v772 = vrot.slane %v770, 5
        %v773 = vor.u32 %v769, %v772
        %v774 = vrot.slane %v773, 4
        %v776 = vshll.u32 %v227, 16
        %v778 = vrot.slane %v776, 5
        %v779 = vsel %vm369, %v774, %v778
        %v780 = vshrl.u32 %v227, 16
        %v782 = vrot.slane %v780, 4
        %v783 = vor.u32 %v782, %v778
        %v784 = vrot.slane %v783, 4
        %v786 = vshll.u32 %v228, 16
        %v788 = vrot.slane %v786, 5
        %v789 = vsel %vm369, %v784, %v788
        %v790 = vshrl.u32 %v228, 16
        %v792 = vrot.slane %v790, 4
        %v793 = vor.u32 %v792, %v788
        %v794 = vrot.slane %v793, 4
        %v796 = vshll.u32 %v229, 16
        %v798 = vrot.slane %v796, 5
        %v799 = vsel %vm369, %v794, %v798
        %v800 = vshrl.u32 %v229, 16
        %v802 = vrot.slane %v800, 4
        %v803 = vor.u32 %v802, %v798
        %v804 = vrot.slane %v803, 4
        %v806 = vshll.u32 %v230, 16
        %v808 = vrot.slane %v806, 5
        %v809 = vsel %vm369, %v804, %v808
        %v811 = vshrl.u32 %v231, 16
        %v813 = vrot.slane %v811, 4
        %v814 = vshll.u32 %v231, 16
        %v816 = vrot.slane %v814, 5
        %v817 = vor.u32 %v813, %v816
        %v818 = vrot.slane %v817, 4
        %v820 = vshll.u32 %v232, 16
        %v822 = vrot.slane %v820, 5
        %v823 = vsel %vm369, %v818, %v822
        %v824 = vshrl.u32 %v232, 16
        %v826 = vrot.slane %v824, 4
        %v827 = vor.u32 %v826, %v822
        %v828 = vrot.slane %v827, 4
        %v830 = vshll.u32 %v233, 16
        %v832 = vrot.slane %v830, 5
        %v833 = vsel %vm369, %v828, %v832
        %v834 = vshrl.u32 %v233, 16
        %v836 = vrot.slane %v834, 4
        %v837 = vor.u32 %v836, %v832
        %v838 = vrot.slane %v837, 4
        %v840 = vshll.u32 %v234, 16
        %v842 = vrot.slane %v840, 5
        %v843 = vsel %vm369, %v838, %v842
        %v844 = vshrl.u32 %v234, 16
        %v846 = vrot.slane %v844, 4
        %v847 = vor.u32 %v846, %v842
        %v848 = vrot.slane %v847, 4
        %v850 = vshll.u32 %v235, 16
        %v852 = vrot.slane %v850, 5
        %v853 = vsel %vm369, %v848, %v852
        %v855 = vshrl.u32 %v236, 16
        %v857 = vrot.slane %v855, 4
        %v858 = vshll.u32 %v236, 16
        %v860 = vrot.slane %v858, 5
        %v861 = vor.u32 %v857, %v860
        %v862 = vrot.slane %v861, 4
        %v864 = vshll.u32 %v237, 16
        %v866 = vrot.slane %v864, 5
        %v867 = vsel %vm369, %v862, %v866
        %v868 = vshrl.u32 %v237, 16
        %v870 = vrot.slane %v868, 4
        %v871 = vor.u32 %v870, %v866
        %v872 = vrot.slane %v871, 4
        %v874 = vshll.u32 %v238, 16
        %v876 = vrot.slane %v874, 5
        %v877 = vsel %vm369, %v872, %v876
        %v878 = vshrl.u32 %v238, 16
        %v880 = vrot.slane %v878, 4
        %v881 = vor.u32 %v880, %v876
        %v882 = vrot.slane %v881, 4
        %v884 = vshll.u32 %v239, 16
        %v886 = vrot.slane %v884, 5
        %v887 = vsel %vm369, %v882, %v886
        %v888 = vshrl.u32 %v239, 16
        %v890 = vrot.slane %v888, 4
        %v891 = vor.u32 %v890, %v886
        %v892 = vrot.slane %v891, 4
        %v894 = vshll.u32 %v240, 16
        %v896 = vrot.slane %v894, 5
        %v897 = vsel %vm369, %v892, %v896
        %v899 = vshrl.u32 %v241, 16
        %v901 = vrot.slane %v899, 4
        %v902 = vshll.u32 %v241, 16
        %v904 = vrot.slane %v902, 5
        %v905 = vor.u32 %v901, %v904
        %v906 = vrot.slane %v905, 4
        %v908 = vshll.u32 %v242, 16
        %v910 = vrot.slane %v908, 5
        %v911 = vsel %vm369, %v906, %v910
        %v912 = vshrl.u32 %v242, 16
        %v914 = vrot.slane %v912, 4
        %v915 = vor.u32 %v914, %v910
        %v916 = vrot.slane %v915, 4
        %v918 = vshll.u32 %v243, 16
        %v920 = vrot.slane %v918, 5
        %v921 = vsel %vm369, %v916, %v920
        %v922 = vshrl.u32 %v243, 16
        %v924 = vrot.slane %v922, 4
        %v925 = vor.u32 %v924, %v920
        %v926 = vrot.slane %v925, 4
        %v928 = vshll.u32 %v244, 16
        %v930 = vrot.slane %v928, 5
        %v931 = vsel %vm369, %v926, %v930
        %v932 = vshrl.u32 %v244, 16
        %v934 = vrot.slane %v932, 4
        %v935 = vor.u32 %v934, %v930
        %v936 = vrot.slane %v935, 4
        %v938 = vshll.u32 %v245, 16
        %v940 = vrot.slane %v938, 5
        %v941 = vsel %vm369, %v936, %v940
        %v943 = vshrl.u32 %v246, 16
        %v945 = vrot.slane %v943, 4
        %v946 = vshll.u32 %v246, 16
        %v948 = vrot.slane %v946, 5
        %v949 = vor.u32 %v945, %v948
        %v950 = vrot.slane %v949, 4
        %v952 = vshll.u32 %v247, 16
        %v954 = vrot.slane %v952, 5
        %v955 = vsel %vm369, %v950, %v954
        %v956 = vshrl.u32 %v247, 16
        %v958 = vrot.slane %v956, 4
        %v959 = vor.u32 %v958, %v954
        %v960 = vrot.slane %v959, 4
        %v962 = vshll.u32 %v248, 16
        %v964 = vrot.slane %v962, 5
        %v965 = vsel %vm369, %v960, %v964
        %v966 = vshrl.u32 %v248, 16
        %v968 = vrot.slane %v966, 4
        %v969 = vor.u32 %v968, %v964
        %v970 = vrot.slane %v969, 4
        %v972 = vshll.u32 %v249, 16
        %v974 = vrot.slane %v972, 5
        %v975 = vsel %vm369, %v970, %v974
        %v976 = vshrl.u32 %v249, 16
        %v978 = vrot.slane %v976, 4
        %v979 = vor.u32 %v978, %v974
        %v980 = vrot.slane %v979, 4
        %v982 = vshll.u32 %v250, 16
        %v984 = vrot.slane %v982, 5
        %v985 = vsel %vm369, %v980, %v984
        %v987 = vshrl.u32 %v251, 16
        %v989 = vrot.slane %v987, 4
        %v990 = vshll.u32 %v251, 16
        %v992 = vrot.slane %v990, 5
        %v993 = vor.u32 %v989, %v992
        %v994 = vrot.slane %v993, 4
        %v996 = vshll.u32 %v252, 16
        %v998 = vrot.slane %v996, 5
        %v999 = vsel %vm369, %v994, %v998
        %v1000 = vshrl.u32 %v252, 16
        %v1002 = vrot.slane %v1000, 4
        %v1003 = vor.u32 %v1002, %v998
        %v1004 = vrot.slane %v1003, 4
        %v1006 = vshll.u32 %v253, 16
        %v1008 = vrot.slane %v1006, 5
        %v1009 = vsel %vm369, %v1004, %v1008
        %v1010 = vshrl.u32 %v253, 16
        %v1012 = vrot.slane %v1010, 4
        %v1013 = vor.u32 %v1012, %v1008
        %v1014 = vrot.slane %v1013, 4
        %v1016 = vshll.u32 %v254, 16
        %v1018 = vrot.slane %v1016, 5
        %v1019 = vsel %vm369, %v1014, %v1018
        %v1020 = vshrl.u32 %v254, 16
        %v1022 = vrot.slane %v1020, 4
        %v1023 = vor.u32 %v1022, %v1018
        %v1024 = vrot.slane %v1023, 4
        %v1026 = vshll.u32 %v255, 16
        %v1028 = vrot.slane %v1026, 5
        %v1029 = vsel %vm369, %v1024, %v1028
        %v1031 = vshrl.u32 %v256, 16
        %v1033 = vrot.slane %v1031, 4
        %v1034 = vshll.u32 %v256, 16
        %v1036 = vrot.slane %v1034, 5
        %v1037 = vor.u32 %v1033, %v1036
        %v1038 = vrot.slane %v1037, 4
        %v1040 = vshll.u32 %v257, 16
        %v1042 = vrot.slane %v1040, 5
        %v1043 = vsel %vm369, %v1038, %v1042
        %v1044 = vshrl.u32 %v257, 16
        %v1046 = vrot.slane %v1044, 4
        %v1047 = vor.u32 %v1046, %v1042
        %v1048 = vrot.slane %v1047, 4
        %v1050 = vshll.u32 %v258, 16
        %v1052 = vrot.slane %v1050, 5
        %v1053 = vsel %vm369, %v1048, %v1052
        %v1054 = vshrl.u32 %v258, 16
        %v1056 = vrot.slane %v1054, 4
        %v1057 = vor.u32 %v1056, %v1052
        %v1058 = vrot.slane %v1057, 4
        %v1060 = vshll.u32 %v259, 16
        %v1062 = vrot.slane %v1060, 5
        %v1063 = vsel %vm369, %v1058, %v1062
        %v1064 = vshrl.u32 %v259, 16
        %v1066 = vrot.slane %v1064, 4
        %v1067 = vor.u32 %v1066, %v1062
        %v1068 = vrot.slane %v1067, 4
        %v1070 = vshll.u32 %v260, 16
        %v1072 = vrot.slane %v1070, 5
        %v1073 = vsel %vm369, %v1068, %v1072
        %v1075 = vshrl.u32 %v261, 16
        %v1077 = vrot.slane %v1075, 4
        %v1078 = vshll.u32 %v261, 16
        %v1080 = vrot.slane %v1078, 5
        %v1081 = vor.u32 %v1077, %v1080
        %v1082 = vrot.slane %v1081, 4
        %v1084 = vshll.u32 %v262, 16
        %v1086 = vrot.slane %v1084, 5
        %v1087 = vsel %vm369, %v1082, %v1086
        %v1088 = vshrl.u32 %v262, 16
        %v1090 = vrot.slane %v1088, 4
        %v1091 = vor.u32 %v1090, %v1086
        %v1092 = vrot.slane %v1091, 4
        %v1094 = vshll.u32 %v263, 16
        %v1096 = vrot.slane %v1094, 5
        %v1097 = vsel %vm369, %v1092, %v1096
        %v1098 = vshrl.u32 %v263, 16
        %v1100 = vrot.slane %v1098, 4
        %v1101 = vor.u32 %v1100, %v1096
        %v1102 = vrot.slane %v1101, 4
        %v1104 = vshll.u32 %v264, 16
        %v1106 = vrot.slane %v1104, 5
        %v1107 = vsel %vm369, %v1102, %v1106
        %v1108 = vshrl.u32 %v264, 16
        %v1110 = vrot.slane %v1108, 4
        %v1111 = vor.u32 %v1110, %v1106
        %v1112 = vrot.slane %v1111, 4
        %v1114 = vshll.u32 %v265, 16
        %v1116 = vrot.slane %v1114, 5
        %v1117 = vsel %vm369, %v1112, %v1116
        %v1119 = vshrl.u32 %v266, 16
        %v1121 = vrot.slane %v1119, 4
        %v1122 = vshll.u32 %v266, 16
        %v1124 = vrot.slane %v1122, 5
        %v1125 = vor.u32 %v1121, %v1124
        %v1126 = vrot.slane %v1125, 4
        %v1128 = vshll.u32 %v267, 16
        %v1130 = vrot.slane %v1128, 5
        %v1131 = vsel %vm369, %v1126, %v1130
        %v1132 = vshrl.u32 %v267, 16
        %v1134 = vrot.slane %v1132, 4
        %v1135 = vor.u32 %v1134, %v1130
        %v1136 = vrot.slane %v1135, 4
        %v1138 = vshll.u32 %v268, 16
        %v1140 = vrot.slane %v1138, 5
        %v1141 = vsel %vm369, %v1136, %v1140
        %v1142 = vshrl.u32 %v268, 16
        %v1144 = vrot.slane %v1142, 4
        %v1145 = vor.u32 %v1144, %v1140
        %v1146 = vrot.slane %v1145, 4
        %v1148 = vshll.u32 %v269, 16
        %v1150 = vrot.slane %v1148, 5
        %v1151 = vsel %vm369, %v1146, %v1150
        %v1152 = vshrl.u32 %v269, 16
        %v1154 = vrot.slane %v1152, 4
        %v1155 = vor.u32 %v1154, %v1150
        %v1156 = vrot.slane %v1155, 4
        %v1158 = vshll.u32 %v270, 16
        %v1160 = vrot.slane %v1158, 5
        %v1161 = vsel %vm369, %v1156, %v1160
        %v1163 = vshrl.u32 %v271, 16
        %v1165 = vrot.slane %v1163, 4
        %v1166 = vshll.u32 %v271, 16
        %v1168 = vrot.slane %v1166, 5
        %v1169 = vor.u32 %v1165, %v1168
        %v1170 = vrot.slane %v1169, 4
        %v1172 = vshll.u32 %v272, 16
        %v1174 = vrot.slane %v1172, 5
        %v1175 = vsel %vm369, %v1170, %v1174
        %v1176 = vshrl.u32 %v272, 16
        %v1178 = vrot.slane %v1176, 4
        %v1179 = vor.u32 %v1178, %v1174
        %v1180 = vrot.slane %v1179, 4
        %v1182 = vshll.u32 %v273, 16
        %v1184 = vrot.slane %v1182, 5
        %v1185 = vsel %vm369, %v1180, %v1184
        %v1186 = vshrl.u32 %v273, 16
        %v1188 = vrot.slane %v1186, 4
        %v1189 = vor.u32 %v1188, %v1184
        %v1190 = vrot.slane %v1189, 4
        %v1192 = vshll.u32 %v274, 16
        %v1194 = vrot.slane %v1192, 5
        %v1195 = vsel %vm369, %v1190, %v1194
        %v1196 = vshrl.u32 %v274, 16
        %v1198 = vrot.slane %v1196, 4
        %v1199 = vor.u32 %v1198, %v1194
        %v1200 = vrot.slane %v1199, 4
        %v1202 = vshll.u32 %v275, 16
        %v1204 = vrot.slane %v1202, 5
        %v1205 = vsel %vm369, %v1200, %v1204
        %v1207 = vshrl.u32 %v276, 16
        %v1209 = vrot.slane %v1207, 4
        %v1210 = vshll.u32 %v276, 16
        %v1212 = vrot.slane %v1210, 5
        %v1213 = vor.u32 %v1209, %v1212
        %v1214 = vrot.slane %v1213, 4
        %v1216 = vshll.u32 %v277, 16
        %v1218 = vrot.slane %v1216, 5
        %v1219 = vsel %vm369, %v1214, %v1218
        %v1220 = vshrl.u32 %v277, 16
        %v1222 = vrot.slane %v1220, 4
        %v1223 = vor.u32 %v1222, %v1218
        %v1224 = vrot.slane %v1223, 4
        %v1226 = vshll.u32 %v278, 16
        %v1228 = vrot.slane %v1226, 5
        %v1229 = vsel %vm369, %v1224, %v1228
        %v1230 = vshrl.u32 %v278, 16
        %v1232 = vrot.slane %v1230, 4
        %v1233 = vor.u32 %v1232, %v1228
        %v1234 = vrot.slane %v1233, 4
        %v1236 = vshll.u32 %v279, 16
        %v1238 = vrot.slane %v1236, 5
        %v1239 = vsel %vm369, %v1234, %v1238
        %v1240 = vshrl.u32 %v279, 16
        %v1242 = vrot.slane %v1240, 4
        %v1243 = vor.u32 %v1242, %v1238
        %v1244 = vrot.slane %v1243, 4
        %v1246 = vshll.u32 %v280, 16
        %v1248 = vrot.slane %v1246, 5
        %v1249 = vsel %vm369, %v1244, %v1248
        %v1251 = vshrl.u32 %v281, 16
        %v1253 = vrot.slane %v1251, 4
        %v1254 = vshll.u32 %v281, 16
        %v1256 = vrot.slane %v1254, 5
        %v1257 = vor.u32 %v1253, %v1256
        %v1258 = vrot.slane %v1257, 4
        %v1260 = vshll.u32 %v282, 16
        %v1262 = vrot.slane %v1260, 5
        %v1263 = vsel %vm369, %v1258, %v1262
        %v1264 = vshrl.u32 %v282, 16
        %v1266 = vrot.slane %v1264, 4
        %v1267 = vor.u32 %v1266, %v1262
        %v1268 = vrot.slane %v1267, 4
        %v1270 = vshll.u32 %v283, 16
        %v1272 = vrot.slane %v1270, 5
        %v1273 = vsel %vm369, %v1268, %v1272
        %v1274 = vshrl.u32 %v283, 16
        %v1276 = vrot.slane %v1274, 4
        %v1277 = vor.u32 %v1276, %v1272
        %v1278 = vrot.slane %v1277, 4
        %v1280 = vshll.u32 %v284, 16
        %v1282 = vrot.slane %v1280, 5
        %v1283 = vsel %vm369, %v1278, %v1282
        %v1284 = vshrl.u32 %v284, 16
        %v1286 = vrot.slane %v1284, 4
        %v1287 = vor.u32 %v1286, %v1282
        %v1288 = vrot.slane %v1287, 4
        %v1290 = vshll.u32 %v285, 16
        %v1292 = vrot.slane %v1290, 5
        %v1293 = vsel %vm369, %v1288, %v1292
        %v1295 = vshrl.u32 %v286, 16
        %v1297 = vrot.slane %v1295, 4
        %v1298 = vshll.u32 %v286, 16
        %v1300 = vrot.slane %v1298, 5
        %v1301 = vor.u32 %v1297, %v1300
        %v1302 = vrot.slane %v1301, 4
        %v1304 = vshll.u32 %v287, 16
        %v1306 = vrot.slane %v1304, 5
        %v1307 = vsel %vm369, %v1302, %v1306
        %v1308 = vshrl.u32 %v287, 16
        %v1310 = vrot.slane %v1308, 4
        %v1311 = vor.u32 %v1310, %v1306
        %v1312 = vrot.slane %v1311, 4
        %v1314 = vshll.u32 %v288, 16
        %v1316 = vrot.slane %v1314, 5
        %v1317 = vsel %vm369, %v1312, %v1316
        %v1318 = vshrl.u32 %v288, 16
        %v1320 = vrot.slane %v1318, 4
        %v1321 = vor.u32 %v1320, %v1316
        %v1322 = vrot.slane %v1321, 4
        %v1324 = vshll.u32 %v289, 16
        %v1326 = vrot.slane %v1324, 5
        %v1327 = vsel %vm369, %v1322, %v1326
        %v1328 = vshrl.u32 %v289, 16
        %v1330 = vrot.slane %v1328, 4
        %v1331 = vor.u32 %v1330, %v1326
        %v1332 = vrot.slane %v1331, 4
        %v1334 = vshll.u32 %v290, 16
        %v1336 = vrot.slane %v1334, 5
        %v1337 = vsel %vm369, %v1332, %v1336
        %v1339 = vshrl.u32 %v291, 16
        %v1341 = vrot.slane %v1339, 4
        %v1342 = vshll.u32 %v291, 16
        %v1344 = vrot.slane %v1342, 5
        %v1345 = vor.u32 %v1341, %v1344
        %v1346 = vrot.slane %v1345, 4
        %v1348 = vshll.u32 %v292, 16
        %v1350 = vrot.slane %v1348, 5
        %v1351 = vsel %vm369, %v1346, %v1350
        %v1352 = vshrl.u32 %v292, 16
        %v1354 = vrot.slane %v1352, 4
        %v1355 = vor.u32 %v1354, %v1350
        %v1356 = vrot.slane %v1355, 4
        %v1358 = vshll.u32 %v293, 16
        %v1360 = vrot.slane %v1358, 5
        %v1361 = vsel %vm369, %v1356, %v1360
        %v1362 = vshrl.u32 %v293, 16
        %v1364 = vrot.slane %v1362, 4
        %v1365 = vor.u32 %v1364, %v1360
        %v1366 = vrot.slane %v1365, 4
        %v1368 = vshll.u32 %v294, 16
        %v1370 = vrot.slane %v1368, 5
        %v1371 = vsel %vm369, %v1366, %v1370
        %v1372 = vshrl.u32 %v294, 16
        %v1374 = vrot.slane %v1372, 4
        %v1375 = vor.u32 %v1374, %v1370
        %v1376 = vrot.slane %v1375, 4
        %v1378 = vshll.u32 %v295, 16
        %v1380 = vrot.slane %v1378, 5
        %v1381 = vsel %vm369, %v1376, %v1380
        %v1383 = vshrl.u32 %v296, 16
        %v1385 = vrot.slane %v1383, 4
        %v1386 = vshll.u32 %v296, 16
        %v1388 = vrot.slane %v1386, 5
        %v1389 = vor.u32 %v1385, %v1388
        %v1390 = vrot.slane %v1389, 4
        %v1392 = vshll.u32 %v297, 16
        %v1394 = vrot.slane %v1392, 5
        %v1395 = vsel %vm369, %v1390, %v1394
        %v1396 = vshrl.u32 %v297, 16
        %v1398 = vrot.slane %v1396, 4
        %v1399 = vor.u32 %v1398, %v1394
        %v1400 = vrot.slane %v1399, 4
        %v1402 = vshll.u32 %v298, 16
        %v1404 = vrot.slane %v1402, 5
        %v1405 = vsel %vm369, %v1400, %v1404
        %v1406 = vshrl.u32 %v298, 16
        %v1408 = vrot.slane %v1406, 4
        %v1409 = vor.u32 %v1408, %v1404
        %v1410 = vrot.slane %v1409, 4
        %v1412 = vshll.u32 %v299, 16
        %v1414 = vrot.slane %v1412, 5
        %v1415 = vsel %vm369, %v1410, %v1414
        %v1416 = vshrl.u32 %v299, 16
        %v1418 = vrot.slane %v1416, 4
        %v1419 = vor.u32 %v1418, %v1414
        %v1420 = vrot.slane %v1419, 4
        %v1422 = vshll.u32 %v300, 16
        %v1424 = vrot.slane %v1422, 5
        %v1425 = vsel %vm369, %v1420, %v1424
        %v1427 = vshrl.u32 %v301, 16
        %v1429 = vrot.slane %v1427, 4
        %v1430 = vshll.u32 %v301, 16
        %v1432 = vrot.slane %v1430, 5
        %v1433 = vor.u32 %v1429, %v1432
        %v1434 = vrot.slane %v1433, 4
        %v1436 = vshll.u32 %v302, 16
        %v1438 = vrot.slane %v1436, 5
        %v1439 = vsel %vm369, %v1434, %v1438
        %v1440 = vshrl.u32 %v302, 16
        %v1442 = vrot.slane %v1440, 4
        %v1443 = vor.u32 %v1442, %v1438
        %v1444 = vrot.slane %v1443, 4
        %v1446 = vshll.u32 %v303, 16
        %v1448 = vrot.slane %v1446, 5
        %v1449 = vsel %vm369, %v1444, %v1448
        %v1450 = vshrl.u32 %v303, 16
        %v1452 = vrot.slane %v1450, 4
        %v1453 = vor.u32 %v1452, %v1448
        %v1454 = vrot.slane %v1453, 4
        %v1456 = vshll.u32 %v304, 16
        %v1458 = vrot.slane %v1456, 5
        %v1459 = vsel %vm369, %v1454, %v1458
        %v1460 = vshrl.u32 %v304, 16
        %v1462 = vrot.slane %v1460, 4
        %v1463 = vor.u32 %v1462, %v1458
        %v1464 = vrot.slane %v1463, 4
        %v1466 = vshll.u32 %v305, 16
        %v1468 = vrot.slane %v1466, 5
        %v1469 = vsel %vm369, %v1464, %v1468
        %v1471 = vshrl.u32 %v306, 16
        %v1473 = vrot.slane %v1471, 4
        %v1474 = vshll.u32 %v306, 16
        %v1476 = vrot.slane %v1474, 5
        %v1477 = vor.u32 %v1473, %v1476
        %v1478 = vrot.slane %v1477, 4
        %v1480 = vshll.u32 %v307, 16
        %v1482 = vrot.slane %v1480, 5
        %v1483 = vsel %vm369, %v1478, %v1482
        %v1484 = vshrl.u32 %v307, 16
        %v1486 = vrot.slane %v1484, 4
        %v1487 = vor.u32 %v1486, %v1482
        %v1488 = vrot.slane %v1487, 4
        %v1490 = vshll.u32 %v308, 16
        %v1492 = vrot.slane %v1490, 5
        %v1493 = vsel %vm369, %v1488, %v1492
        %v1494 = vshrl.u32 %v308, 16
        %v1496 = vrot.slane %v1494, 4
        %v1497 = vor.u32 %v1496, %v1492
        %v1498 = vrot.slane %v1497, 4
        %v1500 = vshll.u32 %v309, 16
        %v1502 = vrot.slane %v1500, 5
        %v1503 = vsel %vm369, %v1498, %v1502
        %v1504 = vshrl.u32 %v309, 16
        %v1506 = vrot.slane %v1504, 4
        %v1507 = vor.u32 %v1506, %v1502
        %v1508 = vrot.slane %v1507, 4
        %v1510 = vshll.u32 %v310, 16
        %v1512 = vrot.slane %v1510, 5
        %v1513 = vsel %vm369, %v1508, %v1512
        %v1515 = vshrl.u32 %v311, 16
        %v1517 = vrot.slane %v1515, 4
        %v1518 = vshll.u32 %v311, 16
        %v1520 = vrot.slane %v1518, 5
        %v1521 = vor.u32 %v1517, %v1520
        %v1522 = vrot.slane %v1521, 4
        %v1524 = vshll.u32 %v312, 16
        %v1526 = vrot.slane %v1524, 5
        %v1527 = vsel %vm369, %v1522, %v1526
        %v1528 = vshrl.u32 %v312, 16
        %v1530 = vrot.slane %v1528, 4
        %v1531 = vor.u32 %v1530, %v1526
        %v1532 = vrot.slane %v1531, 4
        %v1534 = vshll.u32 %v313, 16
        %v1536 = vrot.slane %v1534, 5
        %v1537 = vsel %vm369, %v1532, %v1536
        %v1538 = vshrl.u32 %v313, 16
        %v1540 = vrot.slane %v1538, 4
        %v1541 = vor.u32 %v1540, %v1536
        %v1542 = vrot.slane %v1541, 4
        %v1544 = vshll.u32 %v314, 16
        %v1546 = vrot.slane %v1544, 5
        %v1547 = vsel %vm369, %v1542, %v1546
        %v1548 = vshrl.u32 %v314, 16
        %v1550 = vrot.slane %v1548, 4
        %v1551 = vor.u32 %v1550, %v1546
        %v1552 = vrot.slane %v1551, 4
        %v1554 = vshll.u32 %v315, 16
        %v1556 = vrot.slane %v1554, 5
        %v1557 = vsel %vm369, %v1552, %v1556
        %v1559 = vshrl.u32 %v316, 16
        %v1561 = vrot.slane %v1559, 4
        %v1562 = vshll.u32 %v316, 16
        %v1564 = vrot.slane %v1562, 5
        %v1565 = vor.u32 %v1561, %v1564
        %v1566 = vrot.slane %v1565, 4
        %v1568 = vshll.u32 %v317, 16
        %v1570 = vrot.slane %v1568, 5
        %v1571 = vsel %vm369, %v1566, %v1570
        %v1572 = vshrl.u32 %v317, 16
        %v1574 = vrot.slane %v1572, 4
        %v1575 = vor.u32 %v1574, %v1570
        %v1576 = vrot.slane %v1575, 4
        %v1578 = vshll.u32 %v318, 16
        %v1580 = vrot.slane %v1578, 5
        %v1581 = vsel %vm369, %v1576, %v1580
        %v1582 = vshrl.u32 %v318, 16
        %v1584 = vrot.slane %v1582, 4
        %v1585 = vor.u32 %v1584, %v1580
        %v1586 = vrot.slane %v1585, 4
        %v1588 = vshll.u32 %v319, 16
        %v1590 = vrot.slane %v1588, 5
        %v1591 = vsel %vm369, %v1586, %v1590
        %v1592 = vshrl.u32 %v319, 16
        %v1594 = vrot.slane %v1592, 4
        %v1595 = vor.u32 %v1594, %v1590
        %v1596 = vrot.slane %v1595, 4
        %v1598 = vshll.u32 %v320, 16
        %v1600 = vrot.slane %v1598, 5
        %v1601 = vsel %vm369, %v1596, %v1600
        %v1603 = vshrl.u32 %v321, 16
        %v1605 = vrot.slane %v1603, 4
        %v1606 = vshll.u32 %v321, 16
        %v1608 = vrot.slane %v1606, 5
        %v1609 = vor.u32 %v1605, %v1608
        %v1610 = vrot.slane %v1609, 4
        %v1612 = vshll.u32 %v322, 16
        %v1614 = vrot.slane %v1612, 5
        %v1615 = vsel %vm369, %v1610, %v1614
        %v1616 = vshrl.u32 %v322, 16
        %v1618 = vrot.slane %v1616, 4
        %v1619 = vor.u32 %v1618, %v1614
        %v1620 = vrot.slane %v1619, 4
        %v1622 = vshll.u32 %v323, 16
        %v1624 = vrot.slane %v1622, 5
        %v1625 = vsel %vm369, %v1620, %v1624
        %v1626 = vshrl.u32 %v323, 16
        %v1628 = vrot.slane %v1626, 4
        %v1629 = vor.u32 %v1628, %v1624
        %v1630 = vrot.slane %v1629, 4
        %v1632 = vshll.u32 %v324, 16
        %v1634 = vrot.slane %v1632, 5
        %v1635 = vsel %vm369, %v1630, %v1634
        %v1636 = vshrl.u32 %v324, 16
        %v1638 = vrot.slane %v1636, 4
        %v1639 = vor.u32 %v1638, %v1634
        %v1640 = vrot.slane %v1639, 4
        %v1642 = vshll.u32 %v325, 16
        %v1644 = vrot.slane %v1642, 5
        %v1645 = vsel %vm369, %v1640, %v1644
        %v1647 = vshrl.u32 %v326, 16
        %v1649 = vrot.slane %v1647, 4
        %v1650 = vshll.u32 %v326, 16
        %v1652 = vrot.slane %v1650, 5
        %v1653 = vor.u32 %v1649, %v1652
        %v1654 = vrot.slane %v1653, 4
        %v1656 = vshll.u32 %v327, 16
        %v1658 = vrot.slane %v1656, 5
        %v1659 = vsel %vm369, %v1654, %v1658
        %v1660 = vshrl.u32 %v327, 16
        %v1662 = vrot.slane %v1660, 4
        %v1663 = vor.u32 %v1662, %v1658
        %v1664 = vrot.slane %v1663, 4
        %v1666 = vshll.u32 %v328, 16
        %v1668 = vrot.slane %v1666, 5
        %v1669 = vsel %vm369, %v1664, %v1668
        %v1670 = vshrl.u32 %v328, 16
        %v1672 = vrot.slane %v1670, 4
        %v1673 = vor.u32 %v1672, %v1668
        %v1674 = vrot.slane %v1673, 4
        %v1676 = vshll.u32 %v329, 16
        %v1678 = vrot.slane %v1676, 5
        %v1679 = vsel %vm369, %v1674, %v1678
        %v1680 = vshrl.u32 %v329, 16
        %v1682 = vrot.slane %v1680, 4
        %v1683 = vor.u32 %v1682, %v1678
        %v1684 = vrot.slane %v1683, 4
        %v1686 = vshll.u32 %v330, 16
        %v1688 = vrot.slane %v1686, 5
        %v1689 = vsel %vm369, %v1684, %v1688
        %v1691 = vshrl.u32 %v331, 16
        %v1693 = vrot.slane %v1691, 4
        %v1694 = vshll.u32 %v331, 16
        %v1696 = vrot.slane %v1694, 5
        %v1697 = vor.u32 %v1693, %v1696
        %v1698 = vrot.slane %v1697, 4
        %v1700 = vshll.u32 %v332, 16
        %v1702 = vrot.slane %v1700, 5
        %v1703 = vsel %vm369, %v1698, %v1702
        %v1704 = vshrl.u32 %v332, 16
        %v1706 = vrot.slane %v1704, 4
        %v1707 = vor.u32 %v1706, %v1702
        %v1708 = vrot.slane %v1707, 4
        %v1710 = vshll.u32 %v333, 16
        %v1712 = vrot.slane %v1710, 5
        %v1713 = vsel %vm369, %v1708, %v1712
        %v1714 = vshrl.u32 %v333, 16
        %v1716 = vrot.slane %v1714, 4
        %v1717 = vor.u32 %v1716, %v1712
        %v1718 = vrot.slane %v1717, 4
        %v1720 = vshll.u32 %v334, 16
        %v1722 = vrot.slane %v1720, 5
        %v1723 = vsel %vm369, %v1718, %v1722
        %v1724 = vshrl.u32 %v334, 16
        %v1726 = vrot.slane %v1724, 4
        %v1727 = vor.u32 %v1726, %v1722
        %v1728 = vrot.slane %v1727, 4
        %v1730 = vshll.u32 %v335, 16
        %v1732 = vrot.slane %v1730, 5
        %v1733 = vsel %vm369, %v1728, %v1732
        %v1735 = vshrl.u32 %v336, 16
        %v1737 = vrot.slane %v1735, 4
        %v1738 = vshll.u32 %v336, 16
        %v1740 = vrot.slane %v1738, 5
        %v1741 = vor.u32 %v1737, %v1740
        %v1742 = vrot.slane %v1741, 4
        %v1744 = vshll.u32 %v337, 16
        %v1746 = vrot.slane %v1744, 5
        %v1747 = vsel %vm369, %v1742, %v1746
        %v1748 = vshrl.u32 %v337, 16
        %v1750 = vrot.slane %v1748, 4
        %v1751 = vor.u32 %v1750, %v1746
        %v1752 = vrot.slane %v1751, 4
        %v1754 = vshll.u32 %v338, 16
        %v1756 = vrot.slane %v1754, 5
        %v1757 = vsel %vm369, %v1752, %v1756
        %v1758 = vshrl.u32 %v338, 16
        %v1760 = vrot.slane %v1758, 4
        %v1761 = vor.u32 %v1760, %v1756
        %v1762 = vrot.slane %v1761, 4
        %v1764 = vshll.u32 %v339, 16
        %v1766 = vrot.slane %v1764, 5
        %v1767 = vsel %vm369, %v1762, %v1766
        %v1768 = vshrl.u32 %v339, 16
        %v1770 = vrot.slane %v1768, 4
        %v1771 = vor.u32 %v1770, %v1766
        %v1772 = vrot.slane %v1771, 4
        %v1774 = vshll.u32 %v340, 16
        %v1776 = vrot.slane %v1774, 5
        %v1777 = vsel %vm369, %v1772, %v1776
        %s1778 = scalar_lea.vmem %s1, 64
        %v1779 = vld [vmem:[%s1778] sm:$0xf]
        %v1780 = vld [vmem:[%s1778 + $0x4] sm:$0xf]
        %v1781 = vld [vmem:[%s1778 + $0x8] sm:$0xf]
        %v1782 = vld [vmem:[%s1778 + $0xc] sm:$0xf]
        %v1783 = vld [vmem:[%s1778 + $0x10] sm:$0xf]
        %v1784 = vld [vmem:[%s1778 + $0x14] sm:$0xf]
        %v1785 = vld [vmem:[%s1778 + $0x18] sm:$0xf]
        %v1786 = vld [vmem:[%s1778 + $0x1c] sm:$0xf]
        %v1787 = vld [vmem:[%s1778 + $0x20] sm:$0xf]
        %v1788 = vld [vmem:[%s1778 + $0x24] sm:$0xf]
        %v1789 = vld [vmem:[%s1778 + $0x28] sm:$0xf]
        %v1790 = vld [vmem:[%s1778 + $0x2c] sm:$0xf]
        %v1791 = vld [vmem:[%s1778 + $0x30] sm:$0xf]
        %v1792 = vld [vmem:[%s1778 + $0x34] sm:$0xf]
        %v1793 = vld [vmem:[%s1778 + $0x38] sm:$0xf]
        %v1794 = vld [vmem:[%s1778 + $0x3c] sm:$0xf]
        %v1795 = vunpack.c.l.b16 %v383
        %v1796 = vunpack.c.l.b16 %v393
        %v1797 = vunpack.c.l.b16 %v403
        %v1798 = vunpack.c.l.b16 %v413
        %v1799 = vunpack.c.l.b16 %v427
        %v1800 = vunpack.c.l.b16 %v437
        %v1801 = vunpack.c.l.b16 %v447
        %v1802 = vunpack.c.l.b16 %v457
        %v1803 = vunpack.c.l.b16 %v471
        %v1804 = vunpack.c.l.b16 %v481
        %v1805 = vunpack.c.l.b16 %v491
        %v1806 = vunpack.c.l.b16 %v501
        %v1807 = vunpack.c.l.b16 %v515
        %v1808 = vunpack.c.l.b16 %v525
        %v1809 = vunpack.c.l.b16 %v535
        %v1810 = vunpack.c.l.b16 %v545
        %v1811 = vunpack.c.l.b16 %v559
        %v1812 = vunpack.c.l.b16 %v569
        %v1813 = vunpack.c.l.b16 %v579
        %v1814 = vunpack.c.l.b16 %v589
        %v1815 = vunpack.c.l.b16 %v603
        %v1816 = vunpack.c.l.b16 %v613
        %v1817 = vunpack.c.l.b16 %v623
        %v1818 = vunpack.c.l.b16 %v633
        %v1819 = vunpack.c.l.b16 %v647
        %v1820 = vunpack.c.l.b16 %v657
        %v1821 = vunpack.c.l.b16 %v667
        %v1822 = vunpack.c.l.b16 %v677
        %v1823 = vunpack.c.l.b16 %v691
        %v1824 = vunpack.c.l.b16 %v701
        %v1825 = vunpack.c.l.b16 %v711
        %v1826 = vunpack.c.l.b16 %v721
        %v1827 = vunpack.c.l.b16 %v735
        %v1828 = vunpack.c.l.b16 %v745
        %v1829 = vunpack.c.l.b16 %v755
        %v1830 = vunpack.c.l.b16 %v765
        %v1831 = vunpack.c.l.b16 %v779
        %v1832 = vunpack.c.l.b16 %v789
        %v1833 = vunpack.c.l.b16 %v799
        %v1834 = vunpack.c.l.b16 %v809
        %v1835 = vunpack.c.l.b16 %v823
        %v1836 = vunpack.c.l.b16 %v833
        %v1837 = vunpack.c.l.b16 %v843
        %v1838 = vunpack.c.l.b16 %v853
        %v1839 = vunpack.c.l.b16 %v867
        %v1840 = vunpack.c.l.b16 %v877
        %v1841 = vunpack.c.l.b16 %v887
        %v1842 = vunpack.c.l.b16 %v897
        %v1843 = vunpack.c.l.b16 %v911
        %v1844 = vunpack.c.l.b16 %v921
        %v1845 = vunpack.c.l.b16 %v931
        %v1846 = vunpack.c.l.b16 %v941
        %v1847 = vunpack.c.l.b16 %v955
        %v1848 = vunpack.c.l.b16 %v965
        %v1849 = vunpack.c.l.b16 %v975
        %v1850 = vunpack.c.l.b16 %v985
        %v1851 = vunpack.c.l.b16 %v999
        %v1852 = vunpack.c.l.b16 %v1009
        %v1853 = vunpack.c.l.b16 %v1019
        %v1854 = vunpack.c.l.b16 %v1029
        %v1855 = vunpack.c.l.b16 %v1043
        %v1856 = vunpack.c.l.b16 %v1053
        %v1857 = vunpack.c.l.b16 %v1063
        %v1858 = vunpack.c.l.b16 %v1073
        %v1859 = vunpack.c.l.b16 %v1087
        %v1860 = vunpack.c.l.b16 %v1097
        %v1861 = vunpack.c.l.b16 %v1107
        %v1862 = vunpack.c.l.b16 %v1117
        %v1863 = vunpack.c.l.b16 %v1131
        %v1864 = vunpack.c.l.b16 %v1141
        %v1865 = vunpack.c.l.b16 %v1151
        %v1866 = vunpack.c.l.b16 %v1161
        %v1867 = vunpack.c.l.b16 %v1175
        %v1868 = vunpack.c.l.b16 %v1185
        %v1869 = vunpack.c.l.b16 %v1195
        %v1870 = vunpack.c.l.b16 %v1205
        %v1871 = vunpack.c.l.b16 %v1219
        %v1872 = vunpack.c.l.b16 %v1229
        %v1873 = vunpack.c.l.b16 %v1239
        %v1874 = vunpack.c.l.b16 %v1249
        %v1875 = vunpack.c.l.b16 %v1263
        %v1876 = vunpack.c.l.b16 %v1273
        %v1877 = vunpack.c.l.b16 %v1283
        %v1878 = vunpack.c.l.b16 %v1293
        %v1879 = vunpack.c.l.b16 %v1307
        %v1880 = vunpack.c.l.b16 %v1317
        %v1881 = vunpack.c.l.b16 %v1327
        %v1882 = vunpack.c.l.b16 %v1337
        %v1883 = vunpack.c.l.b16 %v1351
        %v1884 = vunpack.c.l.b16 %v1361
        %v1885 = vunpack.c.l.b16 %v1371
        %v1886 = vunpack.c.l.b16 %v1381
        %v1887 = vunpack.c.l.b16 %v1395
        %v1888 = vunpack.c.l.b16 %v1405
        %v1889 = vunpack.c.l.b16 %v1415
        %v1890 = vunpack.c.l.b16 %v1425
        %v1891 = vunpack.c.l.b16 %v1439
        %v1892 = vunpack.c.l.b16 %v1449
        %v1893 = vunpack.c.l.b16 %v1459
        %v1894 = vunpack.c.l.b16 %v1469
        %v1895 = vunpack.c.l.b16 %v1483
        %v1896 = vunpack.c.l.b16 %v1493
        %v1897 = vunpack.c.l.b16 %v1503
        %v1898 = vunpack.c.l.b16 %v1513
        %v1899 = vunpack.c.l.b16 %v1527
        %v1900 = vunpack.c.l.b16 %v1537
        %v1901 = vunpack.c.l.b16 %v1547
        %v1902 = vunpack.c.l.b16 %v1557
        %v1903 = vunpack.c.l.b16 %v1571
        %v1904 = vunpack.c.l.b16 %v1581
        %v1905 = vunpack.c.l.b16 %v1591
        %v1906 = vunpack.c.l.b16 %v1601
        %v1907 = vunpack.c.l.b16 %v1615
        %v1908 = vunpack.c.l.b16 %v1625
        %v1909 = vunpack.c.l.b16 %v1635
        %v1910 = vunpack.c.l.b16 %v1645
        %v1911 = vunpack.c.l.b16 %v1659
        %v1912 = vunpack.c.l.b16 %v1669
        %v1913 = vunpack.c.l.b16 %v1679
        %v1914 = vunpack.c.l.b16 %v1689
        %v1915 = vunpack.c.l.b16 %v1703
        %v1916 = vunpack.c.l.b16 %v1713
        %v1917 = vunpack.c.l.b16 %v1723
        %v1918 = vunpack.c.l.b16 %v1733
        %v1919 = vunpack.c.l.b16 %v1747
        %v1920 = vunpack.c.l.b16 %v1757
        %v1921 = vunpack.c.l.b16 %v1767
        %v1922 = vunpack.c.l.b16 %v1777
        %v1923 = vpack.c.b16 %v1796, %v1795
        %v1924 = vpack.c.b16 %v1798, %v1797
        %v1925 = vpack.c.b16 %v1800, %v1799
        %v1926 = vpack.c.b16 %v1802, %v1801
        %v1927 = vpack.c.b16 %v1804, %v1803
        %v1928 = vpack.c.b16 %v1806, %v1805
        %v1929 = vpack.c.b16 %v1808, %v1807
        %v1930 = vpack.c.b16 %v1810, %v1809
        %v1931 = vpack.c.b16 %v1812, %v1811
        %v1932 = vpack.c.b16 %v1814, %v1813
        %v1933 = vpack.c.b16 %v1816, %v1815
        %v1934 = vpack.c.b16 %v1818, %v1817
        %v1935 = vpack.c.b16 %v1820, %v1819
        %v1936 = vpack.c.b16 %v1822, %v1821
        %v1937 = vpack.c.b16 %v1824, %v1823
        %v1938 = vpack.c.b16 %v1826, %v1825
        %v1939 = vpack.c.b16 %v1828, %v1827
        %v1940 = vpack.c.b16 %v1830, %v1829
        %v1941 = vpack.c.b16 %v1832, %v1831
        %v1942 = vpack.c.b16 %v1834, %v1833
        %v1943 = vpack.c.b16 %v1836, %v1835
        %v1944 = vpack.c.b16 %v1838, %v1837
        %v1945 = vpack.c.b16 %v1840, %v1839
        %v1946 = vpack.c.b16 %v1842, %v1841
        %v1947 = vpack.c.b16 %v1844, %v1843
        %v1948 = vpack.c.b16 %v1846, %v1845
        %v1949 = vpack.c.b16 %v1848, %v1847
        %v1950 = vpack.c.b16 %v1850, %v1849
        %v1951 = vpack.c.b16 %v1852, %v1851
        %v1952 = vpack.c.b16 %v1854, %v1853
        %v1953 = vpack.c.b16 %v1856, %v1855
        %v1954 = vpack.c.b16 %v1858, %v1857
        %v1955 = vpack.c.b16 %v1860, %v1859
        %v1956 = vpack.c.b16 %v1862, %v1861
        %v1957 = vpack.c.b16 %v1864, %v1863
        %v1958 = vpack.c.b16 %v1866, %v1865
        %v1959 = vpack.c.b16 %v1868, %v1867
        %v1960 = vpack.c.b16 %v1870, %v1869
        %v1961 = vpack.c.b16 %v1872, %v1871
        %v1962 = vpack.c.b16 %v1874, %v1873
        %v1963 = vpack.c.b16 %v1876, %v1875
        %v1964 = vpack.c.b16 %v1878, %v1877
        %v1965 = vpack.c.b16 %v1880, %v1879
        %v1966 = vpack.c.b16 %v1882, %v1881
        %v1967 = vpack.c.b16 %v1884, %v1883
        %v1968 = vpack.c.b16 %v1886, %v1885
        %v1969 = vpack.c.b16 %v1888, %v1887
        %v1970 = vpack.c.b16 %v1890, %v1889
        %v1971 = vpack.c.b16 %v1892, %v1891
        %v1972 = vpack.c.b16 %v1894, %v1893
        %v1973 = vpack.c.b16 %v1896, %v1895
        %v1974 = vpack.c.b16 %v1898, %v1897
        %v1975 = vpack.c.b16 %v1900, %v1899
        %v1976 = vpack.c.b16 %v1902, %v1901
        %v1977 = vpack.c.b16 %v1904, %v1903
        %v1978 = vpack.c.b16 %v1906, %v1905
        %v1979 = vpack.c.b16 %v1908, %v1907
        %v1980 = vpack.c.b16 %v1910, %v1909
        %v1981 = vpack.c.b16 %v1912, %v1911
        %v1982 = vpack.c.b16 %v1914, %v1913
        %v1983 = vpack.c.b16 %v1916, %v1915
        %v1984 = vpack.c.b16 %v1918, %v1917
        %v1985 = vpack.c.b16 %v1920, %v1919
        %v1986 = vpack.c.b16 %v1922, %v1921
        %v2067 = vunpack.c.l.b16 %v1779
        %v2068 = vunpack.c.l.b16 %v1780
        %v2069 = vunpack.c.l.b16 %v1781
        %v2070 = vunpack.c.l.b16 %v1782
        %v2071 = vunpack.c.l.b16 %v1783
        %v2072 = vunpack.c.l.b16 %v1784
        %v2073 = vunpack.c.l.b16 %v1785
        %v2074 = vunpack.c.l.b16 %v1786
        %v2075 = vunpack.c.l.b16 %v1787
        %v2076 = vunpack.c.l.b16 %v1788
        %v2077 = vunpack.c.l.b16 %v1789
        %v2078 = vunpack.c.l.b16 %v1790
        %v2079 = vunpack.c.l.b16 %v1791
        %v2080 = vunpack.c.l.b16 %v1792
        %v2081 = vunpack.c.l.b16 %v1793
        %v2082 = vunpack.c.l.b16 %v1794
        %v2083 = vpack.c.b16 %v2068, %v2067
        %v2084 = vpack.c.b16 %v2070, %v2069
        %v2085 = vpack.c.b16 %v2072, %v2071
        %v2086 = vpack.c.b16 %v2074, %v2073
        %v2087 = vpack.c.b16 %v2076, %v2075
        %v2088 = vpack.c.b16 %v2078, %v2077
        %v2089 = vpack.c.b16 %v2080, %v2079
        %v2090 = vpack.c.b16 %v2082, %v2081
        %2099 = vmatprep.subr.bf16.mxu0 0
        %2100 = vmatpush1.bf16.msra.mxu0 %v2083
        %2101 = vmatprep.subr.bf16.mxu0 0
        %2102 = vmatpush1.bf16.msra.mxu0 %v2084
        %2103 = vmatprep.subr.bf16.mxu0 0
        %2104 = vmatpush1.bf16.msra.mxu0 %v2085
        %2105 = vmatprep.subr.bf16.mxu0 0
        %2106 = vmatpush1.bf16.msra.mxu0 %v2086
        %2107 = vmatprep.subr.bf16.mxu0 0
        %2108 = vmatpush1.bf16.msra.mxu0 %v2087
        %2109 = vmatprep.subr.bf16.mxu0 0
        %2110 = vmatpush1.bf16.msra.mxu0 %v2088
        %2111 = vmatprep.subr.bf16.mxu0 0
        %2112 = vmatpush1.bf16.msra.mxu0 %v2089
        %2113 = vmatprep.subr.bf16.mxu0 0
        %2114 = vmatpush1.bf16.msra.mxu0 %v2090
        %2115 = vmatprep.subr.bf16.mxu0 0
        %2116 = vmatpush1.bf16.msra.mxu0 0
        %2117 = vmatprep.subr.bf16.mxu0 0
        %2118 = vmatpush1.bf16.msra.mxu0 0
        %2119 = vmatprep.subr.bf16.mxu0 0
        %2120 = vmatpush1.bf16.msra.mxu0 0
        %2121 = vmatprep.subr.bf16.mxu0 0
        %2122 = vmatpush1.bf16.msra.mxu0 0
        %2123 = vmatprep.subr.bf16.mxu0 0
        %2124 = vmatpush1.bf16.msra.mxu0 0
        %2125 = vmatprep.subr.bf16.mxu0 0
        %2126 = vmatpush1.bf16.msra.mxu0 0
        %2127 = vmatprep.subr.bf16.mxu0 0
        %2128 = vmatpush1.bf16.msra.mxu0 0
        %2129 = vmatprep.subr.bf16.mxu0 0
        %2130 = vmatpush1.bf16.msra.mxu0 0
        %2131 = vmatprep.mubr.bf16.mxu0 0
        %2132 = vmatmul.mubr.bf16.gmra.mrb[0].mxu0 %v1923
        %v2133 = vpop.f32.mrb[0].mxu0
        %v2134 = vadd.f32 0.0, %v2133
        %v2135 = vpop.f32.mrb[0].mxu0
        %v2136 = vpop.f32.mrb[0].mxu0
        %v2137 = vadd.f32 0.0, %v2136
        %v2138 = vpop.f32.mrb[0].mxu0
        %2139 = vmatprep.mubr.bf16.mxu0 0
        %2140 = vmatmul.mubr.bf16.gmra.mrb[0].mxu0 %v1924
        %v2141 = vpop.f32.mrb[0].mxu0
        %v2142 = vadd.f32 0.0, %v2141
        %v2143 = vpop.f32.mrb[0].mxu0
        %v2144 = vpop.f32.mrb[0].mxu0
        %v2145 = vadd.f32 0.0, %v2144
        %v2146 = vpop.f32.mrb[0].mxu0
        %2147 = vmatprep.mubr.bf16.mxu0 0
        %2148 = vmatmul.mubr.bf16.gmra.mrb[0].mxu0 %v1925
        %v2149 = vpop.f32.mrb[0].mxu0
        %v2150 = vadd.f32 0.0, %v2149
        %v2151 = vpop.f32.mrb[0].mxu0
        %v2152 = vpop.f32.mrb[0].mxu0
        %v2153 = vadd.f32 0.0, %v2152
        %v2154 = vpop.f32.mrb[0].mxu0
        %2155 = vmatprep.mubr.bf16.mxu0 0
        %2156 = vmatmul.mubr.bf16.gmra.mrb[0].mxu0 %v1926
        %v2157 = vpop.f32.mrb[0].mxu0
        %v2158 = vadd.f32 0.0, %v2157
        %v2159 = vpop.f32.mrb[0].mxu0
        %v2160 = vpop.f32.mrb[0].mxu0
        %v2161 = vadd.f32 0.0, %v2160
        %v2162 = vpop.f32.mrb[0].mxu0
        %2163 = vmatprep.mubr.bf16.mxu0 0
        %2164 = vmatmul.mubr.bf16.gmra.mrb[0].mxu0 %v1927
        %v2165 = vpop.f32.mrb[0].mxu0
        %v2166 = vadd.f32 0.0, %v2165
        %v2167 = vpop.f32.mrb[0].mxu0
        %v2168 = vpop.f32.mrb[0].mxu0
        %v2169 = vadd.f32 0.0, %v2168
        %v2170 = vpop.f32.mrb[0].mxu0
        %2171 = vmatprep.mubr.bf16.mxu0 0
        %2172 = vmatmul.mubr.bf16.gmra.mrb[0].mxu0 %v1928
        %v2173 = vpop.f32.mrb[0].mxu0
        %v2174 = vadd.f32 0.0, %v2173
        %v2175 = vpop.f32.mrb[0].mxu0
        %v2176 = vpop.f32.mrb[0].mxu0
        %v2177 = vadd.f32 0.0, %v2176
        %v2178 = vpop.f32.mrb[0].mxu0
        %2179 = vmatprep.mubr.bf16.mxu0 0
        %2180 = vmatmul.mubr.bf16.gmra.mrb[0].mxu0 %v1929
        %v2181 = vpop.f32.mrb[0].mxu0
        %v2182 = vadd.f32 0.0, %v2181
        %v2183 = vpop.f32.mrb[0].mxu0
        %v2184 = vpop.f32.mrb[0].mxu0
        %v2185 = vadd.f32 0.0, %v2184
        %v2186 = vpop.f32.mrb[0].mxu0
        %2187 = vmatprep.mubr.bf16.mxu0 0
        %2188 = vmatmul.mubr.bf16.gmra.mrb[0].mxu0 %v1930
        %v2189 = vpop.f32.mrb[0].mxu0
        %v2190 = vadd.f32 0.0, %v2189
        %v2191 = vpop.f32.mrb[0].mxu0
        %v2192 = vpop.f32.mrb[0].mxu0
        %v2193 = vadd.f32 0.0, %v2192
        %v2194 = vpop.f32.mrb[0].mxu0
        %2195 = vmatprep.mubr.bf16.mxu0 0
        %2196 = vmatmul.mubr.bf16.gmra.mrb[0].mxu0 %v1931
        %v2197 = vpop.f32.mrb[0].mxu0
        %v2198 = vadd.f32 0.0, %v2197
        %v2199 = vpop.f32.mrb[0].mxu0
        %v2200 = vpop.f32.mrb[0].mxu0
        %v2201 = vadd.f32 0.0, %v2200
        %v2202 = vpop.f32.mrb[0].mxu0
        %2203 = vmatprep.mubr.bf16.mxu0 0
        %2204 = vmatmul.mubr.bf16.gmra.mrb[0].mxu0 %v1932
        %v2205 = vpop.f32.mrb[0].mxu0
        %v2206 = vadd.f32 0.0, %v2205
        %v2207 = vpop.f32.mrb[0].mxu0
        %v2208 = vpop.f32.mrb[0].mxu0
        %v2209 = vadd.f32 0.0, %v2208
        %v2210 = vpop.f32.mrb[0].mxu0
        %2211 = vmatprep.mubr.bf16.mxu0 0
        %2212 = vmatmul.mubr.bf16.gmra.mrb[0].mxu0 %v1933
        %v2213 = vpop.f32.mrb[0].mxu0
        %v2214 = vadd.f32 0.0, %v2213
        %v2215 = vpop.f32.mrb[0].mxu0
        %v2216 = vpop.f32.mrb[0].mxu0
        %v2217 = vadd.f32 0.0, %v2216
        %v2218 = vpop.f32.mrb[0].mxu0
        %2219 = vmatprep.mubr.bf16.mxu0 0
        %2220 = vmatmul.mubr.bf16.gmra.mrb[0].mxu0 %v1934
        %v2221 = vpop.f32.mrb[0].mxu0
        %v2222 = vadd.f32 0.0, %v2221
        %v2223 = vpop.f32.mrb[0].mxu0
        %v2224 = vpop.f32.mrb[0].mxu0
        %v2225 = vadd.f32 0.0, %v2224
        %v2226 = vpop.f32.mrb[0].mxu0
        %2227 = vmatprep.mubr.bf16.mxu0 0
        %2228 = vmatmul.mubr.bf16.gmra.mrb[0].mxu0 %v1935
        %v2229 = vpop.f32.mrb[0].mxu0
        %v2230 = vadd.f32 0.0, %v2229
        %v2231 = vpop.f32.mrb[0].mxu0
        %v2232 = vpop.f32.mrb[0].mxu0
        %v2233 = vadd.f32 0.0, %v2232
        %v2234 = vpop.f32.mrb[0].mxu0
        %2235 = vmatprep.mubr.bf16.mxu0 0
        %2236 = vmatmul.mubr.bf16.gmra.mrb[0].mxu0 %v1936
        %v2237 = vpop.f32.mrb[0].mxu0
        %v2238 = vadd.f32 0.0, %v2237
        %v2239 = vpop.f32.mrb[0].mxu0
        %v2240 = vpop.f32.mrb[0].mxu0
        %v2241 = vadd.f32 0.0, %v2240
        %v2242 = vpop.f32.mrb[0].mxu0
        %2243 = vmatprep.mubr.bf16.mxu0 0
        %2244 = vmatmul.mubr.bf16.gmra.mrb[0].mxu0 %v1937
        %v2245 = vpop.f32.mrb[0].mxu0
        %v2246 = vadd.f32 0.0, %v2245
        %v2247 = vpop.f32.mrb[0].mxu0
        %v2248 = vpop.f32.mrb[0].mxu0
        %v2249 = vadd.f32 0.0, %v2248
        %v2250 = vpop.f32.mrb[0].mxu0
        %2251 = vmatprep.mubr.bf16.mxu0 0
        %2252 = vmatmul.mubr.bf16.gmra.mrb[0].mxu0 %v1938
        %v2253 = vpop.f32.mrb[0].mxu0
        %v2254 = vadd.f32 0.0, %v2253
        %v2255 = vpop.f32.mrb[0].mxu0
        %v2256 = vpop.f32.mrb[0].mxu0
        %v2257 = vadd.f32 0.0, %v2256
        %v2258 = vpop.f32.mrb[0].mxu0
        %2259 = vmatprep.mubr.bf16.mxu0 0
        %2260 = vmatmul.mubr.bf16.gmra.mrb[0].mxu0 %v1939
        %v2261 = vpop.f32.mrb[0].mxu0
        %v2262 = vadd.f32 0.0, %v2261
        %v2263 = vpop.f32.mrb[0].mxu0
        %v2264 = vpop.f32.mrb[0].mxu0
        %v2265 = vadd.f32 0.0, %v2264
        %v2266 = vpop.f32.mrb[0].mxu0
        %2267 = vmatprep.mubr.bf16.mxu0 0
        %2268 = vmatmul.mubr.bf16.gmra.mrb[0].mxu0 %v1940
        %v2269 = vpop.f32.mrb[0].mxu0
        %v2270 = vadd.f32 0.0, %v2269
        %v2271 = vpop.f32.mrb[0].mxu0
        %v2272 = vpop.f32.mrb[0].mxu0
        %v2273 = vadd.f32 0.0, %v2272
        %v2274 = vpop.f32.mrb[0].mxu0
        %2275 = vmatprep.mubr.bf16.mxu0 0
        %2276 = vmatmul.mubr.bf16.gmra.mrb[0].mxu0 %v1941
        %v2277 = vpop.f32.mrb[0].mxu0
        %v2278 = vadd.f32 0.0, %v2277
        %v2279 = vpop.f32.mrb[0].mxu0
        %v2280 = vpop.f32.mrb[0].mxu0
        %v2281 = vadd.f32 0.0, %v2280
        %v2282 = vpop.f32.mrb[0].mxu0
        %2283 = vmatprep.mubr.bf16.mxu0 0
        %2284 = vmatmul.mubr.bf16.gmra.mrb[0].mxu0 %v1942
        %v2285 = vpop.f32.mrb[0].mxu0
        %v2286 = vadd.f32 0.0, %v2285
        %v2287 = vpop.f32.mrb[0].mxu0
        %v2288 = vpop.f32.mrb[0].mxu0
        %v2289 = vadd.f32 0.0, %v2288
        %v2290 = vpop.f32.mrb[0].mxu0
        %2291 = vmatprep.mubr.bf16.mxu0 0
        %2292 = vmatmul.mubr.bf16.gmra.mrb[0].mxu0 %v1943
        %v2293 = vpop.f32.mrb[0].mxu0
        %v2294 = vadd.f32 0.0, %v2293
        %v2295 = vpop.f32.mrb[0].mxu0
        %v2296 = vpop.f32.mrb[0].mxu0
        %v2297 = vadd.f32 0.0, %v2296
        %v2298 = vpop.f32.mrb[0].mxu0
        %2299 = vmatprep.mubr.bf16.mxu0 0
        %2300 = vmatmul.mubr.bf16.gmra.mrb[0].mxu0 %v1944
        %v2301 = vpop.f32.mrb[0].mxu0
        %v2302 = vadd.f32 0.0, %v2301
        %v2303 = vpop.f32.mrb[0].mxu0
        %v2304 = vpop.f32.mrb[0].mxu0
        %v2305 = vadd.f32 0.0, %v2304
        %v2306 = vpop.f32.mrb[0].mxu0
        %2307 = vmatprep.mubr.bf16.mxu0 0
        %2308 = vmatmul.mubr.bf16.gmra.mrb[0].mxu0 %v1945
        %v2309 = vpop.f32.mrb[0].mxu0
        %v2310 = vadd.f32 0.0, %v2309
        %v2311 = vpop.f32.mrb[0].mxu0
        %v2312 = vpop.f32.mrb[0].mxu0
        %v2313 = vadd.f32 0.0, %v2312
        %v2314 = vpop.f32.mrb[0].mxu0
        %2315 = vmatprep.mubr.bf16.mxu0 0
        %2316 = vmatmul.mubr.bf16.gmra.mrb[0].mxu0 %v1946
        %v2317 = vpop.f32.mrb[0].mxu0
        %v2318 = vadd.f32 0.0, %v2317
        %v2319 = vpop.f32.mrb[0].mxu0
        %v2320 = vpop.f32.mrb[0].mxu0
        %v2321 = vadd.f32 0.0, %v2320
        %v2322 = vpop.f32.mrb[0].mxu0
        %2323 = vmatprep.mubr.bf16.mxu0 0
        %2324 = vmatmul.mubr.bf16.gmra.mrb[0].mxu0 %v1947
        %v2325 = vpop.f32.mrb[0].mxu0
        %v2326 = vadd.f32 0.0, %v2325
        %v2327 = vpop.f32.mrb[0].mxu0
        %v2328 = vpop.f32.mrb[0].mxu0
        %v2329 = vadd.f32 0.0, %v2328
        %v2330 = vpop.f32.mrb[0].mxu0
        %2331 = vmatprep.mubr.bf16.mxu0 0
        %2332 = vmatmul.mubr.bf16.gmra.mrb[0].mxu0 %v1948
        %v2333 = vpop.f32.mrb[0].mxu0
        %v2334 = vadd.f32 0.0, %v2333
        %v2335 = vpop.f32.mrb[0].mxu0
        %v2336 = vpop.f32.mrb[0].mxu0
        %v2337 = vadd.f32 0.0, %v2336
        %v2338 = vpop.f32.mrb[0].mxu0
        %2339 = vmatprep.mubr.bf16.mxu0 0
        %2340 = vmatmul.mubr.bf16.gmra.mrb[0].mxu0 %v1949
        %v2341 = vpop.f32.mrb[0].mxu0
        %v2342 = vadd.f32 0.0, %v2341
        %v2343 = vpop.f32.mrb[0].mxu0
        %v2344 = vpop.f32.mrb[0].mxu0
        %v2345 = vadd.f32 0.0, %v2344
        %v2346 = vpop.f32.mrb[0].mxu0
        %2347 = vmatprep.mubr.bf16.mxu0 0
        %2348 = vmatmul.mubr.bf16.gmra.mrb[0].mxu0 %v1950
        %v2349 = vpop.f32.mrb[0].mxu0
        %v2350 = vadd.f32 0.0, %v2349
        %v2351 = vpop.f32.mrb[0].mxu0
        %v2352 = vpop.f32.mrb[0].mxu0
        %v2353 = vadd.f32 0.0, %v2352
        %v2354 = vpop.f32.mrb[0].mxu0
        %2355 = vmatprep.mubr.bf16.mxu0 0
        %2356 = vmatmul.mubr.bf16.gmra.mrb[0].mxu0 %v1951
        %v2357 = vpop.f32.mrb[0].mxu0
        %v2358 = vadd.f32 0.0, %v2357
        %v2359 = vpop.f32.mrb[0].mxu0
        %v2360 = vpop.f32.mrb[0].mxu0
        %v2361 = vadd.f32 0.0, %v2360
        %v2362 = vpop.f32.mrb[0].mxu0
        %2363 = vmatprep.mubr.bf16.mxu0 0
        %2364 = vmatmul.mubr.bf16.gmra.mrb[0].mxu0 %v1952
        %v2365 = vpop.f32.mrb[0].mxu0
        %v2366 = vadd.f32 0.0, %v2365
        %v2367 = vpop.f32.mrb[0].mxu0
        %v2368 = vpop.f32.mrb[0].mxu0
        %v2369 = vadd.f32 0.0, %v2368
        %v2370 = vpop.f32.mrb[0].mxu0
        %2371 = vmatprep.mubr.bf16.mxu0 0
        %2372 = vmatmul.mubr.bf16.gmra.mrb[0].mxu0 %v1953
        %v2373 = vpop.f32.mrb[0].mxu0
        %v2374 = vadd.f32 0.0, %v2373
        %v2375 = vpop.f32.mrb[0].mxu0
        %v2376 = vpop.f32.mrb[0].mxu0
        %v2377 = vadd.f32 0.0, %v2376
        %v2378 = vpop.f32.mrb[0].mxu0
        %2379 = vmatprep.mubr.bf16.mxu0 0
        %2380 = vmatmul.mubr.bf16.gmra.mrb[0].mxu0 %v1954
        %v2381 = vpop.f32.mrb[0].mxu0
        %v2382 = vadd.f32 0.0, %v2381
        %v2383 = vpop.f32.mrb[0].mxu0
        %v2384 = vpop.f32.mrb[0].mxu0
        %v2385 = vadd.f32 0.0, %v2384
        %v2386 = vpop.f32.mrb[0].mxu0
        %2387 = vmatprep.mubr.bf16.mxu0 0
        %2388 = vmatmul.mubr.bf16.gmra.mrb[0].mxu0 %v1955
        %v2389 = vpop.f32.mrb[0].mxu0
        %v2390 = vadd.f32 0.0, %v2389
        %v2391 = vpop.f32.mrb[0].mxu0
        %v2392 = vpop.f32.mrb[0].mxu0
        %v2393 = vadd.f32 0.0, %v2392
        %v2394 = vpop.f32.mrb[0].mxu0
        %2395 = vmatprep.mubr.bf16.mxu0 0
        %2396 = vmatmul.mubr.bf16.gmra.mrb[0].mxu0 %v1956
        %v2397 = vpop.f32.mrb[0].mxu0
        %v2398 = vadd.f32 0.0, %v2397
        %v2399 = vpop.f32.mrb[0].mxu0
        %v2400 = vpop.f32.mrb[0].mxu0
        %v2401 = vadd.f32 0.0, %v2400
        %v2402 = vpop.f32.mrb[0].mxu0
        %2403 = vmatprep.mubr.bf16.mxu0 0
        %2404 = vmatmul.mubr.bf16.gmra.mrb[0].mxu0 %v1957
        %v2405 = vpop.f32.mrb[0].mxu0
        %v2406 = vadd.f32 0.0, %v2405
        %v2407 = vpop.f32.mrb[0].mxu0
        %v2408 = vpop.f32.mrb[0].mxu0
        %v2409 = vadd.f32 0.0, %v2408
        %v2410 = vpop.f32.mrb[0].mxu0
        %2411 = vmatprep.mubr.bf16.mxu0 0
        %2412 = vmatmul.mubr.bf16.gmra.mrb[0].mxu0 %v1958
        %v2413 = vpop.f32.mrb[0].mxu0
        %v2414 = vadd.f32 0.0, %v2413
        %v2415 = vpop.f32.mrb[0].mxu0
        %v2416 = vpop.f32.mrb[0].mxu0
        %v2417 = vadd.f32 0.0, %v2416
        %v2418 = vpop.f32.mrb[0].mxu0
        %2419 = vmatprep.mubr.bf16.mxu0 0
        %2420 = vmatmul.mubr.bf16.gmra.mrb[0].mxu0 %v1959
        %v2421 = vpop.f32.mrb[0].mxu0
        %v2422 = vadd.f32 0.0, %v2421
        %v2423 = vpop.f32.mrb[0].mxu0
        %v2424 = vpop.f32.mrb[0].mxu0
        %v2425 = vadd.f32 0.0, %v2424
        %v2426 = vpop.f32.mrb[0].mxu0
        %2427 = vmatprep.mubr.bf16.mxu0 0
        %2428 = vmatmul.mubr.bf16.gmra.mrb[0].mxu0 %v1960
        %v2429 = vpop.f32.mrb[0].mxu0
        %v2430 = vadd.f32 0.0, %v2429
        %v2431 = vpop.f32.mrb[0].mxu0
        %v2432 = vpop.f32.mrb[0].mxu0
        %v2433 = vadd.f32 0.0, %v2432
        %v2434 = vpop.f32.mrb[0].mxu0
        %2435 = vmatprep.mubr.bf16.mxu0 0
        %2436 = vmatmul.mubr.bf16.gmra.mrb[0].mxu0 %v1961
        %v2437 = vpop.f32.mrb[0].mxu0
        %v2438 = vadd.f32 0.0, %v2437
        %v2439 = vpop.f32.mrb[0].mxu0
        %v2440 = vpop.f32.mrb[0].mxu0
        %v2441 = vadd.f32 0.0, %v2440
        %v2442 = vpop.f32.mrb[0].mxu0
        %2443 = vmatprep.mubr.bf16.mxu0 0
        %2444 = vmatmul.mubr.bf16.gmra.mrb[0].mxu0 %v1962
        %v2445 = vpop.f32.mrb[0].mxu0
        %v2446 = vadd.f32 0.0, %v2445
        %v2447 = vpop.f32.mrb[0].mxu0
        %v2448 = vpop.f32.mrb[0].mxu0
        %v2449 = vadd.f32 0.0, %v2448
        %v2450 = vpop.f32.mrb[0].mxu0
        %2451 = vmatprep.mubr.bf16.mxu0 0
        %2452 = vmatmul.mubr.bf16.gmra.mrb[0].mxu0 %v1963
        %v2453 = vpop.f32.mrb[0].mxu0
        %v2454 = vadd.f32 0.0, %v2453
        %v2455 = vpop.f32.mrb[0].mxu0
        %v2456 = vpop.f32.mrb[0].mxu0
        %v2457 = vadd.f32 0.0, %v2456
        %v2458 = vpop.f32.mrb[0].mxu0
        %2459 = vmatprep.mubr.bf16.mxu0 0
        %2460 = vmatmul.mubr.bf16.gmra.mrb[0].mxu0 %v1964
        %v2461 = vpop.f32.mrb[0].mxu0
        %v2462 = vadd.f32 0.0, %v2461
        %v2463 = vpop.f32.mrb[0].mxu0
        %v2464 = vpop.f32.mrb[0].mxu0
        %v2465 = vadd.f32 0.0, %v2464
        %v2466 = vpop.f32.mrb[0].mxu0
        %2467 = vmatprep.mubr.bf16.mxu0 0
        %2468 = vmatmul.mubr.bf16.gmra.mrb[0].mxu0 %v1965
        %v2469 = vpop.f32.mrb[0].mxu0
        %v2470 = vadd.f32 0.0, %v2469
        %v2471 = vpop.f32.mrb[0].mxu0
        %v2472 = vpop.f32.mrb[0].mxu0
        %v2473 = vadd.f32 0.0, %v2472
        %v2474 = vpop.f32.mrb[0].mxu0
        %2475 = vmatprep.mubr.bf16.mxu0 0
        %2476 = vmatmul.mubr.bf16.gmra.mrb[0].mxu0 %v1966
        %v2477 = vpop.f32.mrb[0].mxu0
        %v2478 = vadd.f32 0.0, %v2477
        %v2479 = vpop.f32.mrb[0].mxu0
        %v2480 = vpop.f32.mrb[0].mxu0
        %v2481 = vadd.f32 0.0, %v2480
        %v2482 = vpop.f32.mrb[0].mxu0
        %2483 = vmatprep.mubr.bf16.mxu0 0
        %2484 = vmatmul.mubr.bf16.gmra.mrb[0].mxu0 %v1967
        %v2485 = vpop.f32.mrb[0].mxu0
        %v2486 = vadd.f32 0.0, %v2485
        %v2487 = vpop.f32.mrb[0].mxu0
        %v2488 = vpop.f32.mrb[0].mxu0
        %v2489 = vadd.f32 0.0, %v2488
        %v2490 = vpop.f32.mrb[0].mxu0
        %2491 = vmatprep.mubr.bf16.mxu0 0
        %2492 = vmatmul.mubr.bf16.gmra.mrb[0].mxu0 %v1968
        %v2493 = vpop.f32.mrb[0].mxu0
        %v2494 = vadd.f32 0.0, %v2493
        %v2495 = vpop.f32.mrb[0].mxu0
        %v2496 = vpop.f32.mrb[0].mxu0
        %v2497 = vadd.f32 0.0, %v2496
        %v2498 = vpop.f32.mrb[0].mxu0
        %2499 = vmatprep.mubr.bf16.mxu0 0
        %2500 = vmatmul.mubr.bf16.gmra.mrb[0].mxu0 %v1969
        %v2501 = vpop.f32.mrb[0].mxu0
        %v2502 = vadd.f32 0.0, %v2501
        %v2503 = vpop.f32.mrb[0].mxu0
        %v2504 = vpop.f32.mrb[0].mxu0
        %v2505 = vadd.f32 0.0, %v2504
        %v2506 = vpop.f32.mrb[0].mxu0
        %2507 = vmatprep.mubr.bf16.mxu0 0
        %2508 = vmatmul.mubr.bf16.gmra.mrb[0].mxu0 %v1970
        %v2509 = vpop.f32.mrb[0].mxu0
        %v2510 = vadd.f32 0.0, %v2509
        %v2511 = vpop.f32.mrb[0].mxu0
        %v2512 = vpop.f32.mrb[0].mxu0
        %v2513 = vadd.f32 0.0, %v2512
        %v2514 = vpop.f32.mrb[0].mxu0
        %2515 = vmatprep.mubr.bf16.mxu0 0
        %2516 = vmatmul.mubr.bf16.gmra.mrb[0].mxu0 %v1971
        %v2517 = vpop.f32.mrb[0].mxu0
        %v2518 = vadd.f32 0.0, %v2517
        %v2519 = vpop.f32.mrb[0].mxu0
        %v2520 = vpop.f32.mrb[0].mxu0
        %v2521 = vadd.f32 0.0, %v2520
        %v2522 = vpop.f32.mrb[0].mxu0
        %2523 = vmatprep.mubr.bf16.mxu0 0
        %2524 = vmatmul.mubr.bf16.gmra.mrb[0].mxu0 %v1972
        %v2525 = vpop.f32.mrb[0].mxu0
        %v2526 = vadd.f32 0.0, %v2525
        %v2527 = vpop.f32.mrb[0].mxu0
        %v2528 = vpop.f32.mrb[0].mxu0
        %v2529 = vadd.f32 0.0, %v2528
        %v2530 = vpop.f32.mrb[0].mxu0
        %2531 = vmatprep.mubr.bf16.mxu0 0
        %2532 = vmatmul.mubr.bf16.gmra.mrb[0].mxu0 %v1973
        %v2533 = vpop.f32.mrb[0].mxu0
        %v2534 = vadd.f32 0.0, %v2533
        %v2535 = vpop.f32.mrb[0].mxu0
        %v2536 = vpop.f32.mrb[0].mxu0
        %v2537 = vadd.f32 0.0, %v2536
        %v2538 = vpop.f32.mrb[0].mxu0
        %2539 = vmatprep.mubr.bf16.mxu0 0
        %2540 = vmatmul.mubr.bf16.gmra.mrb[0].mxu0 %v1974
        %v2541 = vpop.f32.mrb[0].mxu0
        %v2542 = vadd.f32 0.0, %v2541
        %v2543 = vpop.f32.mrb[0].mxu0
        %v2544 = vpop.f32.mrb[0].mxu0
        %v2545 = vadd.f32 0.0, %v2544
        %v2546 = vpop.f32.mrb[0].mxu0
        %2547 = vmatprep.mubr.bf16.mxu0 0
        %2548 = vmatmul.mubr.bf16.gmra.mrb[0].mxu0 %v1975
        %v2549 = vpop.f32.mrb[0].mxu0
        %v2550 = vadd.f32 0.0, %v2549
        %v2551 = vpop.f32.mrb[0].mxu0
        %v2552 = vpop.f32.mrb[0].mxu0
        %v2553 = vadd.f32 0.0, %v2552
        %v2554 = vpop.f32.mrb[0].mxu0
        %2555 = vmatprep.mubr.bf16.mxu0 0
        %2556 = vmatmul.mubr.bf16.gmra.mrb[0].mxu0 %v1976
        %v2557 = vpop.f32.mrb[0].mxu0
        %v2558 = vadd.f32 0.0, %v2557
        %v2559 = vpop.f32.mrb[0].mxu0
        %v2560 = vpop.f32.mrb[0].mxu0
        %v2561 = vadd.f32 0.0, %v2560
        %v2562 = vpop.f32.mrb[0].mxu0
        %2563 = vmatprep.mubr.bf16.mxu0 0
        %2564 = vmatmul.mubr.bf16.gmra.mrb[0].mxu0 %v1977
        %v2565 = vpop.f32.mrb[0].mxu0
        %v2566 = vadd.f32 0.0, %v2565
        %v2567 = vpop.f32.mrb[0].mxu0
        %v2568 = vpop.f32.mrb[0].mxu0
        %v2569 = vadd.f32 0.0, %v2568
        %v2570 = vpop.f32.mrb[0].mxu0
        %2571 = vmatprep.mubr.bf16.mxu0 0
        %2572 = vmatmul.mubr.bf16.gmra.mrb[0].mxu0 %v1978
        %v2573 = vpop.f32.mrb[0].mxu0
        %v2574 = vadd.f32 0.0, %v2573
        %v2575 = vpop.f32.mrb[0].mxu0
        %v2576 = vpop.f32.mrb[0].mxu0
        %v2577 = vadd.f32 0.0, %v2576
        %v2578 = vpop.f32.mrb[0].mxu0
        %2579 = vmatprep.mubr.bf16.mxu0 0
        %2580 = vmatmul.mubr.bf16.gmra.mrb[0].mxu0 %v1979
        %v2581 = vpop.f32.mrb[0].mxu0
        %v2582 = vadd.f32 0.0, %v2581
        %v2583 = vpop.f32.mrb[0].mxu0
        %v2584 = vpop.f32.mrb[0].mxu0
        %v2585 = vadd.f32 0.0, %v2584
        %v2586 = vpop.f32.mrb[0].mxu0
        %2587 = vmatprep.mubr.bf16.mxu0 0
        %2588 = vmatmul.mubr.bf16.gmra.mrb[0].mxu0 %v1980
        %v2589 = vpop.f32.mrb[0].mxu0
        %v2590 = vadd.f32 0.0, %v2589
        %v2591 = vpop.f32.mrb[0].mxu0
        %v2592 = vpop.f32.mrb[0].mxu0
        %v2593 = vadd.f32 0.0, %v2592
        %v2594 = vpop.f32.mrb[0].mxu0
        %2595 = vmatprep.mubr.bf16.mxu0 0
        %2596 = vmatmul.mubr.bf16.gmra.mrb[0].mxu0 %v1981
        %v2597 = vpop.f32.mrb[0].mxu0
        %v2598 = vadd.f32 0.0, %v2597
        %v2599 = vpop.f32.mrb[0].mxu0
        %v2600 = vpop.f32.mrb[0].mxu0
        %v2601 = vadd.f32 0.0, %v2600
        %v2602 = vpop.f32.mrb[0].mxu0
        %2603 = vmatprep.mubr.bf16.mxu0 0
        %2604 = vmatmul.mubr.bf16.gmra.mrb[0].mxu0 %v1982
        %v2605 = vpop.f32.mrb[0].mxu0
        %v2606 = vadd.f32 0.0, %v2605
        %v2607 = vpop.f32.mrb[0].mxu0
        %v2608 = vpop.f32.mrb[0].mxu0
        %v2609 = vadd.f32 0.0, %v2608
        %v2610 = vpop.f32.mrb[0].mxu0
        %2611 = vmatprep.mubr.bf16.mxu0 0
        %2612 = vmatmul.mubr.bf16.gmra.mrb[0].mxu0 %v1983
        %v2613 = vpop.f32.mrb[0].mxu0
        %v2614 = vadd.f32 0.0, %v2613
        %v2615 = vpop.f32.mrb[0].mxu0
        %v2616 = vpop.f32.mrb[0].mxu0
        %v2617 = vadd.f32 0.0, %v2616
        %v2618 = vpop.f32.mrb[0].mxu0
        %2619 = vmatprep.mubr.bf16.mxu0 0
        %2620 = vmatmul.mubr.bf16.gmra.mrb[0].mxu0 %v1984
        %v2621 = vpop.f32.mrb[0].mxu0
        %v2622 = vadd.f32 0.0, %v2621
        %v2623 = vpop.f32.mrb[0].mxu0
        %v2624 = vpop.f32.mrb[0].mxu0
        %v2625 = vadd.f32 0.0, %v2624
        %v2626 = vpop.f32.mrb[0].mxu0
        %2627 = vmatprep.mubr.bf16.mxu0 0
        %2628 = vmatmul.mubr.bf16.gmra.mrb[0].mxu0 %v1985
        %v2629 = vpop.f32.mrb[0].mxu0
        %v2630 = vadd.f32 0.0, %v2629
        %v2631 = vpop.f32.mrb[0].mxu0
        %v2632 = vpop.f32.mrb[0].mxu0
        %v2633 = vadd.f32 0.0, %v2632
        %v2634 = vpop.f32.mrb[0].mxu0
        %2635 = vmatprep.mubr.bf16.mxu0 0
        %2636 = vmatmul.mubr.bf16.gmra.mrb[0].mxu0 %v1986
        %v2637 = vpop.f32.mrb[0].mxu0
        %v2638 = vadd.f32 0.0, %v2637
        %v2639 = vpop.f32.mrb[0].mxu0
        %v2640 = vpop.f32.mrb[0].mxu0
        %v2641 = vadd.f32 0.0, %v2640
        %v2642 = vpop.f32.mrb[0].mxu0
        %2643 = vdwg.mxu0
        %v2772 = vunpack.c.l.b16 %v181
        %v2773 = vunpack.c.l.b16 %v182
        %v2774 = vunpack.c.l.b16 %v183
        %v2775 = vunpack.c.l.b16 %v184
        %v2776 = vunpack.c.l.b16 %v186
        %v2777 = vunpack.c.l.b16 %v187
        %v2778 = vunpack.c.l.b16 %v188
        %v2779 = vunpack.c.l.b16 %v189
        %v2780 = vunpack.c.l.b16 %v191
        %v2781 = vunpack.c.l.b16 %v192
        %v2782 = vunpack.c.l.b16 %v193
        %v2783 = vunpack.c.l.b16 %v194
        %v2784 = vunpack.c.l.b16 %v196
        %v2785 = vunpack.c.l.b16 %v197
        %v2786 = vunpack.c.l.b16 %v198
        %v2787 = vunpack.c.l.b16 %v199
        %v2788 = vunpack.c.l.b16 %v201
        %v2789 = vunpack.c.l.b16 %v202
        %v2790 = vunpack.c.l.b16 %v203
        %v2791 = vunpack.c.l.b16 %v204
        %v2792 = vunpack.c.l.b16 %v206
        %v2793 = vunpack.c.l.b16 %v207
        %v2794 = vunpack.c.l.b16 %v208
        %v2795 = vunpack.c.l.b16 %v209
        %v2796 = vunpack.c.l.b16 %v211
        %v2797 = vunpack.c.l.b16 %v212
        %v2798 = vunpack.c.l.b16 %v213
        %v2799 = vunpack.c.l.b16 %v214
        %v2800 = vunpack.c.l.b16 %v216
        %v2801 = vunpack.c.l.b16 %v217
        %v2802 = vunpack.c.l.b16 %v218
        %v2803 = vunpack.c.l.b16 %v219
        %v2804 = vunpack.c.l.b16 %v221
        %v2805 = vunpack.c.l.b16 %v222
        %v2806 = vunpack.c.l.b16 %v223
        %v2807 = vunpack.c.l.b16 %v224
        %v2808 = vunpack.c.l.b16 %v226
        %v2809 = vunpack.c.l.b16 %v227
        %v2810 = vunpack.c.l.b16 %v228
        %v2811 = vunpack.c.l.b16 %v229
        %v2812 = vunpack.c.l.b16 %v231
        %v2813 = vunpack.c.l.b16 %v232
        %v2814 = vunpack.c.l.b16 %v233
        %v2815 = vunpack.c.l.b16 %v234
        %v2816 = vunpack.c.l.b16 %v236
        %v2817 = vunpack.c.l.b16 %v237
        %v2818 = vunpack.c.l.b16 %v238
        %v2819 = vunpack.c.l.b16 %v239
        %v2820 = vunpack.c.l.b16 %v241
        %v2821 = vunpack.c.l.b16 %v242
        %v2822 = vunpack.c.l.b16 %v243
        %v2823 = vunpack.c.l.b16 %v244
        %v2824 = vunpack.c.l.b16 %v246
        %v2825 = vunpack.c.l.b16 %v247
        %v2826 = vunpack.c.l.b16 %v248
        %v2827 = vunpack.c.l.b16 %v249
        %v2828 = vunpack.c.l.b16 %v251
        %v2829 = vunpack.c.l.b16 %v252
        %v2830 = vunpack.c.l.b16 %v253
        %v2831 = vunpack.c.l.b16 %v254
        %v2832 = vunpack.c.l.b16 %v256
        %v2833 = vunpack.c.l.b16 %v257
        %v2834 = vunpack.c.l.b16 %v258
        %v2835 = vunpack.c.l.b16 %v259
        %v2836 = vunpack.c.l.b16 %v261
        %v2837 = vunpack.c.l.b16 %v262
        %v2838 = vunpack.c.l.b16 %v263
        %v2839 = vunpack.c.l.b16 %v264
        %v2840 = vunpack.c.l.b16 %v266
        %v2841 = vunpack.c.l.b16 %v267
        %v2842 = vunpack.c.l.b16 %v268
        %v2843 = vunpack.c.l.b16 %v269
        %v2844 = vunpack.c.l.b16 %v271
        %v2845 = vunpack.c.l.b16 %v272
        %v2846 = vunpack.c.l.b16 %v273
        %v2847 = vunpack.c.l.b16 %v274
        %v2848 = vunpack.c.l.b16 %v276
        %v2849 = vunpack.c.l.b16 %v277
        %v2850 = vunpack.c.l.b16 %v278
        %v2851 = vunpack.c.l.b16 %v279
        %v2852 = vunpack.c.l.b16 %v281
        %v2853 = vunpack.c.l.b16 %v282
        %v2854 = vunpack.c.l.b16 %v283
        %v2855 = vunpack.c.l.b16 %v284
        %v2856 = vunpack.c.l.b16 %v286
        %v2857 = vunpack.c.l.b16 %v287
        %v2858 = vunpack.c.l.b16 %v288
        %v2859 = vunpack.c.l.b16 %v289
        %v2860 = vunpack.c.l.b16 %v291
        %v2861 = vunpack.c.l.b16 %v292
        %v2862 = vunpack.c.l.b16 %v293
        %v2863 = vunpack.c.l.b16 %v294
        %v2864 = vunpack.c.l.b16 %v296
        %v2865 = vunpack.c.l.b16 %v297
        %v2866 = vunpack.c.l.b16 %v298
        %v2867 = vunpack.c.l.b16 %v299
        %v2868 = vunpack.c.l.b16 %v301
        %v2869 = vunpack.c.l.b16 %v302
        %v2870 = vunpack.c.l.b16 %v303
        %v2871 = vunpack.c.l.b16 %v304
        %v2872 = vunpack.c.l.b16 %v306
        %v2873 = vunpack.c.l.b16 %v307
        %v2874 = vunpack.c.l.b16 %v308
        %v2875 = vunpack.c.l.b16 %v309
        %v2876 = vunpack.c.l.b16 %v311
        %v2877 = vunpack.c.l.b16 %v312
        %v2878 = vunpack.c.l.b16 %v313
        %v2879 = vunpack.c.l.b16 %v314
        %v2880 = vunpack.c.l.b16 %v316
        %v2881 = vunpack.c.l.b16 %v317
        %v2882 = vunpack.c.l.b16 %v318
        %v2883 = vunpack.c.l.b16 %v319
        %v2884 = vunpack.c.l.b16 %v321
        %v2885 = vunpack.c.l.b16 %v322
        %v2886 = vunpack.c.l.b16 %v323
        %v2887 = vunpack.c.l.b16 %v324
        %v2888 = vunpack.c.l.b16 %v326
        %v2889 = vunpack.c.l.b16 %v327
        %v2890 = vunpack.c.l.b16 %v328
        %v2891 = vunpack.c.l.b16 %v329
        %v2892 = vunpack.c.l.b16 %v331
        %v2893 = vunpack.c.l.b16 %v332
        %v2894 = vunpack.c.l.b16 %v333
        %v2895 = vunpack.c.l.b16 %v334
        %v2896 = vunpack.c.l.b16 %v336
        %v2897 = vunpack.c.l.b16 %v337
        %v2898 = vunpack.c.l.b16 %v338
        %v2899 = vunpack.c.l.b16 %v339
        %v2900 = vpack.c.b16 %v2773, %v2772
        %v2901 = vpack.c.b16 %v2775, %v2774
        %v2902 = vpack.c.b16 %v2777, %v2776
        %v2903 = vpack.c.b16 %v2779, %v2778
        %v2904 = vpack.c.b16 %v2781, %v2780
        %v2905 = vpack.c.b16 %v2783, %v2782
        %v2906 = vpack.c.b16 %v2785, %v2784
        %v2907 = vpack.c.b16 %v2787, %v2786
        %v2908 = vpack.c.b16 %v2789, %v2788
        %v2909 = vpack.c.b16 %v2791, %v2790
        %v2910 = vpack.c.b16 %v2793, %v2792
        %v2911 = vpack.c.b16 %v2795, %v2794
        %v2912 = vpack.c.b16 %v2797, %v2796
        %v2913 = vpack.c.b16 %v2799, %v2798
        %v2914 = vpack.c.b16 %v2801, %v2800
        %v2915 = vpack.c.b16 %v2803, %v2802
        %v2916 = vpack.c.b16 %v2805, %v2804
        %v2917 = vpack.c.b16 %v2807, %v2806
        %v2918 = vpack.c.b16 %v2809, %v2808
        %v2919 = vpack.c.b16 %v2811, %v2810
        %v2920 = vpack.c.b16 %v2813, %v2812
        %v2921 = vpack.c.b16 %v2815, %v2814
        %v2922 = vpack.c.b16 %v2817, %v2816
        %v2923 = vpack.c.b16 %v2819, %v2818
        %v2924 = vpack.c.b16 %v2821, %v2820
        %v2925 = vpack.c.b16 %v2823, %v2822
        %v2926 = vpack.c.b16 %v2825, %v2824
        %v2927 = vpack.c.b16 %v2827, %v2826
        %v2928 = vpack.c.b16 %v2829, %v2828
        %v2929 = vpack.c.b16 %v2831, %v2830
        %v2930 = vpack.c.b16 %v2833, %v2832
        %v2931 = vpack.c.b16 %v2835, %v2834
        %v2932 = vpack.c.b16 %v2837, %v2836
        %v2933 = vpack.c.b16 %v2839, %v2838
        %v2934 = vpack.c.b16 %v2841, %v2840
        %v2935 = vpack.c.b16 %v2843, %v2842
        %v2936 = vpack.c.b16 %v2845, %v2844
        %v2937 = vpack.c.b16 %v2847, %v2846
        %v2938 = vpack.c.b16 %v2849, %v2848
        %v2939 = vpack.c.b16 %v2851, %v2850
        %v2940 = vpack.c.b16 %v2853, %v2852
        %v2941 = vpack.c.b16 %v2855, %v2854
        %v2942 = vpack.c.b16 %v2857, %v2856
        %v2943 = vpack.c.b16 %v2859, %v2858
        %v2944 = vpack.c.b16 %v2861, %v2860
        %v2945 = vpack.c.b16 %v2863, %v2862
        %v2946 = vpack.c.b16 %v2865, %v2864
        %v2947 = vpack.c.b16 %v2867, %v2866
        %v2948 = vpack.c.b16 %v2869, %v2868
        %v2949 = vpack.c.b16 %v2871, %v2870
        %v2950 = vpack.c.b16 %v2873, %v2872
        %v2951 = vpack.c.b16 %v2875, %v2874
        %v2952 = vpack.c.b16 %v2877, %v2876
        %v2953 = vpack.c.b16 %v2879, %v2878
        %v2954 = vpack.c.b16 %v2881, %v2880
        %v2955 = vpack.c.b16 %v2883, %v2882
        %v2956 = vpack.c.b16 %v2885, %v2884
        %v2957 = vpack.c.b16 %v2887, %v2886
        %v2958 = vpack.c.b16 %v2889, %v2888
        %v2959 = vpack.c.b16 %v2891, %v2890
        %v2960 = vpack.c.b16 %v2893, %v2892
        %v2961 = vpack.c.b16 %v2895, %v2894
        %v2962 = vpack.c.b16 %v2897, %v2896
        %v2963 = vpack.c.b16 %v2899, %v2898
        %v3044 = vunpack.c.l.b16 %v351
        %v3045 = vunpack.c.l.b16 %v352
        %v3046 = vunpack.c.l.b16 %v353
        %v3047 = vunpack.c.l.b16 %v354
        %v3048 = vunpack.c.l.b16 %v355
        %v3049 = vunpack.c.l.b16 %v356
        %v3050 = vunpack.c.l.b16 %v357
        %v3051 = vunpack.c.l.b16 %v358
        %v3052 = vunpack.c.l.b16 %v359
        %v3053 = vunpack.c.l.b16 %v360
        %v3054 = vunpack.c.l.b16 %v361
        %v3055 = vunpack.c.l.b16 %v362
        %v3056 = vunpack.c.l.b16 %v363
        %v3057 = vunpack.c.l.b16 %v364
        %v3058 = vunpack.c.l.b16 %v365
        %v3059 = vunpack.c.l.b16 %v366
        %v3060 = vpack.c.b16 %v3045, %v3044
        %v3061 = vpack.c.b16 %v3047, %v3046
        %v3062 = vpack.c.b16 %v3049, %v3048
        %v3063 = vpack.c.b16 %v3051, %v3050
        %v3064 = vpack.c.b16 %v3053, %v3052
        %v3065 = vpack.c.b16 %v3055, %v3054
        %v3066 = vpack.c.b16 %v3057, %v3056
        %v3067 = vpack.c.b16 %v3059, %v3058
        %3076 = vmatprep.subr.bf16.mxu0 0
        %3077 = vmatpush1.bf16.msra.mxu0 %v3060
        %3078 = vmatprep.subr.bf16.mxu0 0
        %3079 = vmatpush1.bf16.msra.mxu0 %v3061
        %3080 = vmatprep.subr.bf16.mxu0 0
        %3081 = vmatpush1.bf16.msra.mxu0 %v3062
        %3082 = vmatprep.subr.bf16.mxu0 0
        %3083 = vmatpush1.bf16.msra.mxu0 %v3063
        %3084 = vmatprep.subr.bf16.mxu0 0
        %3085 = vmatpush1.bf16.msra.mxu0 %v3064
        %3086 = vmatprep.subr.bf16.mxu0 0
        %3087 = vmatpush1.bf16.msra.mxu0 %v3065
        %3088 = vmatprep.subr.bf16.mxu0 0
        %3089 = vmatpush1.bf16.msra.mxu0 %v3066
        %3090 = vmatprep.subr.bf16.mxu0 0
        %3091 = vmatpush1.bf16.msra.mxu0 %v3067
        %3092 = vmatprep.subr.bf16.mxu0 0
        %3093 = vmatpush1.bf16.msra.mxu0 0
        %3094 = vmatprep.subr.bf16.mxu0 0
        %3095 = vmatpush1.bf16.msra.mxu0 0
        %3096 = vmatprep.subr.bf16.mxu0 0
        %3097 = vmatpush1.bf16.msra.mxu0 0
        %3098 = vmatprep.subr.bf16.mxu0 0
        %3099 = vmatpush1.bf16.msra.mxu0 0
        %3100 = vmatprep.subr.bf16.mxu0 0
        %3101 = vmatpush1.bf16.msra.mxu0 0
        %3102 = vmatprep.subr.bf16.mxu0 0
        %3103 = vmatpush1.bf16.msra.mxu0 0
        %3104 = vmatprep.subr.bf16.mxu0 0
        %3105 = vmatpush1.bf16.msra.mxu0 0
        %3106 = vmatprep.subr.bf16.mxu0 0
        %3107 = vmatpush1.bf16.msra.mxu0 0
        %3108 = vmatprep.mubr.bf16.mxu0 0
        %3109 = vmatmul.mubr.bf16.gmra.mrb[0].mxu0 %v2900
        %v3110 = vpop.f32.mrb[0].mxu0
        %v3111 = vadd.f32 %v2134, %v3110
        %v3112 = vpop.f32.mrb[0].mxu0
        %v3113 = vpop.f32.mrb[0].mxu0
        %v3114 = vadd.f32 %v2137, %v3113
        %v3115 = vpop.f32.mrb[0].mxu0
        %3116 = vmatprep.mubr.bf16.mxu0 0
        %3117 = vmatmul.mubr.bf16.gmra.mrb[0].mxu0 %v2901
        %v3118 = vpop.f32.mrb[0].mxu0
        %v3119 = vadd.f32 %v2142, %v3118
        %v3120 = vpop.f32.mrb[0].mxu0
        %v3121 = vpop.f32.mrb[0].mxu0
        %v3122 = vadd.f32 %v2145, %v3121
        %v3123 = vpop.f32.mrb[0].mxu0
        %3124 = vmatprep.mubr.bf16.mxu0 0
        %3125 = vmatmul.mubr.bf16.gmra.mrb[0].mxu0 %v2902
        %v3126 = vpop.f32.mrb[0].mxu0
        %v3127 = vadd.f32 %v2150, %v3126
        %v3128 = vpop.f32.mrb[0].mxu0
        %v3129 = vpop.f32.mrb[0].mxu0
        %v3130 = vadd.f32 %v2153, %v3129
        %v3131 = vpop.f32.mrb[0].mxu0
        %3132 = vmatprep.mubr.bf16.mxu0 0
        %3133 = vmatmul.mubr.bf16.gmra.mrb[0].mxu0 %v2903
        %v3134 = vpop.f32.mrb[0].mxu0
        %v3135 = vadd.f32 %v2158, %v3134
        %v3136 = vpop.f32.mrb[0].mxu0
        %v3137 = vpop.f32.mrb[0].mxu0
        %v3138 = vadd.f32 %v2161, %v3137
        %v3139 = vpop.f32.mrb[0].mxu0
        %3140 = vmatprep.mubr.bf16.mxu0 0
        %3141 = vmatmul.mubr.bf16.gmra.mrb[0].mxu0 %v2904
        %v3142 = vpop.f32.mrb[0].mxu0
        %v3143 = vadd.f32 %v2166, %v3142
        %v3144 = vpop.f32.mrb[0].mxu0
        %v3145 = vpop.f32.mrb[0].mxu0
        %v3146 = vadd.f32 %v2169, %v3145
        %v3147 = vpop.f32.mrb[0].mxu0
        %3148 = vmatprep.mubr.bf16.mxu0 0
        %3149 = vmatmul.mubr.bf16.gmra.mrb[0].mxu0 %v2905
        %v3150 = vpop.f32.mrb[0].mxu0
        %v3151 = vadd.f32 %v2174, %v3150
        %v3152 = vpop.f32.mrb[0].mxu0
        %v3153 = vpop.f32.mrb[0].mxu0
        %v3154 = vadd.f32 %v2177, %v3153
        %v3155 = vpop.f32.mrb[0].mxu0
        %3156 = vmatprep.mubr.bf16.mxu0 0
        %3157 = vmatmul.mubr.bf16.gmra.mrb[0].mxu0 %v2906
        %v3158 = vpop.f32.mrb[0].mxu0
        %v3159 = vadd.f32 %v2182, %v3158
        %v3160 = vpop.f32.mrb[0].mxu0
        %v3161 = vpop.f32.mrb[0].mxu0
        %v3162 = vadd.f32 %v2185, %v3161
        %v3163 = vpop.f32.mrb[0].mxu0
        %3164 = vmatprep.mubr.bf16.mxu0 0
        %3165 = vmatmul.mubr.bf16.gmra.mrb[0].mxu0 %v2907
        %v3166 = vpop.f32.mrb[0].mxu0
        %v3167 = vadd.f32 %v2190, %v3166
        %v3168 = vpop.f32.mrb[0].mxu0
        %v3169 = vpop.f32.mrb[0].mxu0
        %v3170 = vadd.f32 %v2193, %v3169
        %v3171 = vpop.f32.mrb[0].mxu0
        %3172 = vmatprep.mubr.bf16.mxu0 0
        %3173 = vmatmul.mubr.bf16.gmra.mrb[0].mxu0 %v2908
        %v3174 = vpop.f32.mrb[0].mxu0
        %v3175 = vadd.f32 %v2198, %v3174
        %v3176 = vpop.f32.mrb[0].mxu0
        %v3177 = vpop.f32.mrb[0].mxu0
        %v3178 = vadd.f32 %v2201, %v3177
        %v3179 = vpop.f32.mrb[0].mxu0
        %3180 = vmatprep.mubr.bf16.mxu0 0
        %3181 = vmatmul.mubr.bf16.gmra.mrb[0].mxu0 %v2909
        %v3182 = vpop.f32.mrb[0].mxu0
        %v3183 = vadd.f32 %v2206, %v3182
        %v3184 = vpop.f32.mrb[0].mxu0
        %v3185 = vpop.f32.mrb[0].mxu0
        %v3186 = vadd.f32 %v2209, %v3185
        %v3187 = vpop.f32.mrb[0].mxu0
        %3188 = vmatprep.mubr.bf16.mxu0 0
        %3189 = vmatmul.mubr.bf16.gmra.mrb[0].mxu0 %v2910
        %v3190 = vpop.f32.mrb[0].mxu0
        %v3191 = vadd.f32 %v2214, %v3190
        %v3192 = vpop.f32.mrb[0].mxu0
        %v3193 = vpop.f32.mrb[0].mxu0
        %v3194 = vadd.f32 %v2217, %v3193
        %v3195 = vpop.f32.mrb[0].mxu0
        %3196 = vmatprep.mubr.bf16.mxu0 0
        %3197 = vmatmul.mubr.bf16.gmra.mrb[0].mxu0 %v2911
        %v3198 = vpop.f32.mrb[0].mxu0
        %v3199 = vadd.f32 %v2222, %v3198
        %v3200 = vpop.f32.mrb[0].mxu0
        %v3201 = vpop.f32.mrb[0].mxu0
        %v3202 = vadd.f32 %v2225, %v3201
        %v3203 = vpop.f32.mrb[0].mxu0
        %3204 = vmatprep.mubr.bf16.mxu0 0
        %3205 = vmatmul.mubr.bf16.gmra.mrb[0].mxu0 %v2912
        %v3206 = vpop.f32.mrb[0].mxu0
        %v3207 = vadd.f32 %v2230, %v3206
        %v3208 = vpop.f32.mrb[0].mxu0
        %v3209 = vpop.f32.mrb[0].mxu0
        %v3210 = vadd.f32 %v2233, %v3209
        %v3211 = vpop.f32.mrb[0].mxu0
        %3212 = vmatprep.mubr.bf16.mxu0 0
        %3213 = vmatmul.mubr.bf16.gmra.mrb[0].mxu0 %v2913
        %v3214 = vpop.f32.mrb[0].mxu0
        %v3215 = vadd.f32 %v2238, %v3214
        %v3216 = vpop.f32.mrb[0].mxu0
        %v3217 = vpop.f32.mrb[0].mxu0
        %v3218 = vadd.f32 %v2241, %v3217
        %v3219 = vpop.f32.mrb[0].mxu0
        %3220 = vmatprep.mubr.bf16.mxu0 0
        %3221 = vmatmul.mubr.bf16.gmra.mrb[0].mxu0 %v2914
        %v3222 = vpop.f32.mrb[0].mxu0
        %v3223 = vadd.f32 %v2246, %v3222
        %v3224 = vpop.f32.mrb[0].mxu0
        %v3225 = vpop.f32.mrb[0].mxu0
        %v3226 = vadd.f32 %v2249, %v3225
        %v3227 = vpop.f32.mrb[0].mxu0
        %3228 = vmatprep.mubr.bf16.mxu0 0
        %3229 = vmatmul.mubr.bf16.gmra.mrb[0].mxu0 %v2915
        %v3230 = vpop.f32.mrb[0].mxu0
        %v3231 = vadd.f32 %v2254, %v3230
        %v3232 = vpop.f32.mrb[0].mxu0
        %v3233 = vpop.f32.mrb[0].mxu0
        %v3234 = vadd.f32 %v2257, %v3233
        %v3235 = vpop.f32.mrb[0].mxu0
        %3236 = vmatprep.mubr.bf16.mxu0 0
        %3237 = vmatmul.mubr.bf16.gmra.mrb[0].mxu0 %v2916
        %v3238 = vpop.f32.mrb[0].mxu0
        %v3239 = vadd.f32 %v2262, %v3238
        %v3240 = vpop.f32.mrb[0].mxu0
        %v3241 = vpop.f32.mrb[0].mxu0
        %v3242 = vadd.f32 %v2265, %v3241
        %v3243 = vpop.f32.mrb[0].mxu0
        %3244 = vmatprep.mubr.bf16.mxu0 0
        %3245 = vmatmul.mubr.bf16.gmra.mrb[0].mxu0 %v2917
        %v3246 = vpop.f32.mrb[0].mxu0
        %v3247 = vadd.f32 %v2270, %v3246
        %v3248 = vpop.f32.mrb[0].mxu0
        %v3249 = vpop.f32.mrb[0].mxu0
        %v3250 = vadd.f32 %v2273, %v3249
        %v3251 = vpop.f32.mrb[0].mxu0
        %3252 = vmatprep.mubr.bf16.mxu0 0
        %3253 = vmatmul.mubr.bf16.gmra.mrb[0].mxu0 %v2918
        %v3254 = vpop.f32.mrb[0].mxu0
        %v3255 = vadd.f32 %v2278, %v3254
        %v3256 = vpop.f32.mrb[0].mxu0
        %v3257 = vpop.f32.mrb[0].mxu0
        %v3258 = vadd.f32 %v2281, %v3257
        %v3259 = vpop.f32.mrb[0].mxu0
        %3260 = vmatprep.mubr.bf16.mxu0 0
        %3261 = vmatmul.mubr.bf16.gmra.mrb[0].mxu0 %v2919
        %v3262 = vpop.f32.mrb[0].mxu0
        %v3263 = vadd.f32 %v2286, %v3262
        %v3264 = vpop.f32.mrb[0].mxu0
        %v3265 = vpop.f32.mrb[0].mxu0
        %v3266 = vadd.f32 %v2289, %v3265
        %v3267 = vpop.f32.mrb[0].mxu0
        %3268 = vmatprep.mubr.bf16.mxu0 0
        %3269 = vmatmul.mubr.bf16.gmra.mrb[0].mxu0 %v2920
        %v3270 = vpop.f32.mrb[0].mxu0
        %v3271 = vadd.f32 %v2294, %v3270
        %v3272 = vpop.f32.mrb[0].mxu0
        %v3273 = vpop.f32.mrb[0].mxu0
        %v3274 = vadd.f32 %v2297, %v3273
        %v3275 = vpop.f32.mrb[0].mxu0
        %3276 = vmatprep.mubr.bf16.mxu0 0
        %3277 = vmatmul.mubr.bf16.gmra.mrb[0].mxu0 %v2921
        %v3278 = vpop.f32.mrb[0].mxu0
        %v3279 = vadd.f32 %v2302, %v3278
        %v3280 = vpop.f32.mrb[0].mxu0
        %v3281 = vpop.f32.mrb[0].mxu0
        %v3282 = vadd.f32 %v2305, %v3281
        %v3283 = vpop.f32.mrb[0].mxu0
        %3284 = vmatprep.mubr.bf16.mxu0 0
        %3285 = vmatmul.mubr.bf16.gmra.mrb[0].mxu0 %v2922
        %v3286 = vpop.f32.mrb[0].mxu0
        %v3287 = vadd.f32 %v2310, %v3286
        %v3288 = vpop.f32.mrb[0].mxu0
        %v3289 = vpop.f32.mrb[0].mxu0
        %v3290 = vadd.f32 %v2313, %v3289
        %v3291 = vpop.f32.mrb[0].mxu0
        %3292 = vmatprep.mubr.bf16.mxu0 0
        %3293 = vmatmul.mubr.bf16.gmra.mrb[0].mxu0 %v2923
        %v3294 = vpop.f32.mrb[0].mxu0
        %v3295 = vadd.f32 %v2318, %v3294
        %v3296 = vpop.f32.mrb[0].mxu0
        %v3297 = vpop.f32.mrb[0].mxu0
        %v3298 = vadd.f32 %v2321, %v3297
        %v3299 = vpop.f32.mrb[0].mxu0
        %3300 = vmatprep.mubr.bf16.mxu0 0
        %3301 = vmatmul.mubr.bf16.gmra.mrb[0].mxu0 %v2924
        %v3302 = vpop.f32.mrb[0].mxu0
        %v3303 = vadd.f32 %v2326, %v3302
        %v3304 = vpop.f32.mrb[0].mxu0
        %v3305 = vpop.f32.mrb[0].mxu0
        %v3306 = vadd.f32 %v2329, %v3305
        %v3307 = vpop.f32.mrb[0].mxu0
        %3308 = vmatprep.mubr.bf16.mxu0 0
        %3309 = vmatmul.mubr.bf16.gmra.mrb[0].mxu0 %v2925
        %v3310 = vpop.f32.mrb[0].mxu0
        %v3311 = vadd.f32 %v2334, %v3310
        %v3312 = vpop.f32.mrb[0].mxu0
        %v3313 = vpop.f32.mrb[0].mxu0
        %v3314 = vadd.f32 %v2337, %v3313
        %v3315 = vpop.f32.mrb[0].mxu0
        %3316 = vmatprep.mubr.bf16.mxu0 0
        %3317 = vmatmul.mubr.bf16.gmra.mrb[0].mxu0 %v2926
        %v3318 = vpop.f32.mrb[0].mxu0
        %v3319 = vadd.f32 %v2342, %v3318
        %v3320 = vpop.f32.mrb[0].mxu0
        %v3321 = vpop.f32.mrb[0].mxu0
        %v3322 = vadd.f32 %v2345, %v3321
        %v3323 = vpop.f32.mrb[0].mxu0
        %3324 = vmatprep.mubr.bf16.mxu0 0
        %3325 = vmatmul.mubr.bf16.gmra.mrb[0].mxu0 %v2927
        %v3326 = vpop.f32.mrb[0].mxu0
        %v3327 = vadd.f32 %v2350, %v3326
        %v3328 = vpop.f32.mrb[0].mxu0
        %v3329 = vpop.f32.mrb[0].mxu0
        %v3330 = vadd.f32 %v2353, %v3329
        %v3331 = vpop.f32.mrb[0].mxu0
        %3332 = vmatprep.mubr.bf16.mxu0 0
        %3333 = vmatmul.mubr.bf16.gmra.mrb[0].mxu0 %v2928
        %v3334 = vpop.f32.mrb[0].mxu0
        %v3335 = vadd.f32 %v2358, %v3334
        %v3336 = vpop.f32.mrb[0].mxu0
        %v3337 = vpop.f32.mrb[0].mxu0
        %v3338 = vadd.f32 %v2361, %v3337
        %v3339 = vpop.f32.mrb[0].mxu0
        %3340 = vmatprep.mubr.bf16.mxu0 0
        %3341 = vmatmul.mubr.bf16.gmra.mrb[0].mxu0 %v2929
        %v3342 = vpop.f32.mrb[0].mxu0
        %v3343 = vadd.f32 %v2366, %v3342
        %v3344 = vpop.f32.mrb[0].mxu0
        %v3345 = vpop.f32.mrb[0].mxu0
        %v3346 = vadd.f32 %v2369, %v3345
        %v3347 = vpop.f32.mrb[0].mxu0
        %3348 = vmatprep.mubr.bf16.mxu0 0
        %3349 = vmatmul.mubr.bf16.gmra.mrb[0].mxu0 %v2930
        %v3350 = vpop.f32.mrb[0].mxu0
        %v3351 = vadd.f32 %v2374, %v3350
        %v3352 = vpop.f32.mrb[0].mxu0
        %v3353 = vpop.f32.mrb[0].mxu0
        %v3354 = vadd.f32 %v2377, %v3353
        %v3355 = vpop.f32.mrb[0].mxu0
        %3356 = vmatprep.mubr.bf16.mxu0 0
        %3357 = vmatmul.mubr.bf16.gmra.mrb[0].mxu0 %v2931
        %v3358 = vpop.f32.mrb[0].mxu0
        %v3359 = vadd.f32 %v2382, %v3358
        %v3360 = vpop.f32.mrb[0].mxu0
        %v3361 = vpop.f32.mrb[0].mxu0
        %v3362 = vadd.f32 %v2385, %v3361
        %v3363 = vpop.f32.mrb[0].mxu0
        %3364 = vmatprep.mubr.bf16.mxu0 0
        %3365 = vmatmul.mubr.bf16.gmra.mrb[0].mxu0 %v2932
        %v3366 = vpop.f32.mrb[0].mxu0
        %v3367 = vadd.f32 %v2390, %v3366
        %v3368 = vpop.f32.mrb[0].mxu0
        %v3369 = vpop.f32.mrb[0].mxu0
        %v3370 = vadd.f32 %v2393, %v3369
        %v3371 = vpop.f32.mrb[0].mxu0
        %3372 = vmatprep.mubr.bf16.mxu0 0
        %3373 = vmatmul.mubr.bf16.gmra.mrb[0].mxu0 %v2933
        %v3374 = vpop.f32.mrb[0].mxu0
        %v3375 = vadd.f32 %v2398, %v3374
        %v3376 = vpop.f32.mrb[0].mxu0
        %v3377 = vpop.f32.mrb[0].mxu0
        %v3378 = vadd.f32 %v2401, %v3377
        %v3379 = vpop.f32.mrb[0].mxu0
        %3380 = vmatprep.mubr.bf16.mxu0 0
        %3381 = vmatmul.mubr.bf16.gmra.mrb[0].mxu0 %v2934
        %v3382 = vpop.f32.mrb[0].mxu0
        %v3383 = vadd.f32 %v2406, %v3382
        %v3384 = vpop.f32.mrb[0].mxu0
        %v3385 = vpop.f32.mrb[0].mxu0
        %v3386 = vadd.f32 %v2409, %v3385
        %v3387 = vpop.f32.mrb[0].mxu0
        %3388 = vmatprep.mubr.bf16.mxu0 0
        %3389 = vmatmul.mubr.bf16.gmra.mrb[0].mxu0 %v2935
        %v3390 = vpop.f32.mrb[0].mxu0
        %v3391 = vadd.f32 %v2414, %v3390
        %v3392 = vpop.f32.mrb[0].mxu0
        %v3393 = vpop.f32.mrb[0].mxu0
        %v3394 = vadd.f32 %v2417, %v3393
        %v3395 = vpop.f32.mrb[0].mxu0
        %3396 = vmatprep.mubr.bf16.mxu0 0
        %3397 = vmatmul.mubr.bf16.gmra.mrb[0].mxu0 %v2936
        %v3398 = vpop.f32.mrb[0].mxu0
        %v3399 = vadd.f32 %v2422, %v3398
        %v3400 = vpop.f32.mrb[0].mxu0
        %v3401 = vpop.f32.mrb[0].mxu0
        %v3402 = vadd.f32 %v2425, %v3401
        %v3403 = vpop.f32.mrb[0].mxu0
        %3404 = vmatprep.mubr.bf16.mxu0 0
        %3405 = vmatmul.mubr.bf16.gmra.mrb[0].mxu0 %v2937
        %v3406 = vpop.f32.mrb[0].mxu0
        %v3407 = vadd.f32 %v2430, %v3406
        %v3408 = vpop.f32.mrb[0].mxu0
        %v3409 = vpop.f32.mrb[0].mxu0
        %v3410 = vadd.f32 %v2433, %v3409
        %v3411 = vpop.f32.mrb[0].mxu0
        %3412 = vmatprep.mubr.bf16.mxu0 0
        %3413 = vmatmul.mubr.bf16.gmra.mrb[0].mxu0 %v2938
        %v3414 = vpop.f32.mrb[0].mxu0
        %v3415 = vadd.f32 %v2438, %v3414
        %v3416 = vpop.f32.mrb[0].mxu0
        %v3417 = vpop.f32.mrb[0].mxu0
        %v3418 = vadd.f32 %v2441, %v3417
        %v3419 = vpop.f32.mrb[0].mxu0
        %3420 = vmatprep.mubr.bf16.mxu0 0
        %3421 = vmatmul.mubr.bf16.gmra.mrb[0].mxu0 %v2939
        %v3422 = vpop.f32.mrb[0].mxu0
        %v3423 = vadd.f32 %v2446, %v3422
        %v3424 = vpop.f32.mrb[0].mxu0
        %v3425 = vpop.f32.mrb[0].mxu0
        %v3426 = vadd.f32 %v2449, %v3425
        %v3427 = vpop.f32.mrb[0].mxu0
        %3428 = vmatprep.mubr.bf16.mxu0 0
        %3429 = vmatmul.mubr.bf16.gmra.mrb[0].mxu0 %v2940
        %v3430 = vpop.f32.mrb[0].mxu0
        %v3431 = vadd.f32 %v2454, %v3430
        %v3432 = vpop.f32.mrb[0].mxu0
        %v3433 = vpop.f32.mrb[0].mxu0
        %v3434 = vadd.f32 %v2457, %v3433
        %v3435 = vpop.f32.mrb[0].mxu0
        %3436 = vmatprep.mubr.bf16.mxu0 0
        %3437 = vmatmul.mubr.bf16.gmra.mrb[0].mxu0 %v2941
        %v3438 = vpop.f32.mrb[0].mxu0
        %v3439 = vadd.f32 %v2462, %v3438
        %v3440 = vpop.f32.mrb[0].mxu0
        %v3441 = vpop.f32.mrb[0].mxu0
        %v3442 = vadd.f32 %v2465, %v3441
        %v3443 = vpop.f32.mrb[0].mxu0
        %3444 = vmatprep.mubr.bf16.mxu0 0
        %3445 = vmatmul.mubr.bf16.gmra.mrb[0].mxu0 %v2942
        %v3446 = vpop.f32.mrb[0].mxu0
        %v3447 = vadd.f32 %v2470, %v3446
        %v3448 = vpop.f32.mrb[0].mxu0
        %v3449 = vpop.f32.mrb[0].mxu0
        %v3450 = vadd.f32 %v2473, %v3449
        %v3451 = vpop.f32.mrb[0].mxu0
        %3452 = vmatprep.mubr.bf16.mxu0 0
        %3453 = vmatmul.mubr.bf16.gmra.mrb[0].mxu0 %v2943
        %v3454 = vpop.f32.mrb[0].mxu0
        %v3455 = vadd.f32 %v2478, %v3454
        %v3456 = vpop.f32.mrb[0].mxu0
        %v3457 = vpop.f32.mrb[0].mxu0
        %v3458 = vadd.f32 %v2481, %v3457
        %v3459 = vpop.f32.mrb[0].mxu0
        %3460 = vmatprep.mubr.bf16.mxu0 0
        %3461 = vmatmul.mubr.bf16.gmra.mrb[0].mxu0 %v2944
        %v3462 = vpop.f32.mrb[0].mxu0
        %v3463 = vadd.f32 %v2486, %v3462
        %v3464 = vpop.f32.mrb[0].mxu0
        %v3465 = vpop.f32.mrb[0].mxu0
        %v3466 = vadd.f32 %v2489, %v3465
        %v3467 = vpop.f32.mrb[0].mxu0
        %3468 = vmatprep.mubr.bf16.mxu0 0
        %3469 = vmatmul.mubr.bf16.gmra.mrb[0].mxu0 %v2945
        %v3470 = vpop.f32.mrb[0].mxu0
        %v3471 = vadd.f32 %v2494, %v3470
        %v3472 = vpop.f32.mrb[0].mxu0
        %v3473 = vpop.f32.mrb[0].mxu0
        %v3474 = vadd.f32 %v2497, %v3473
        %v3475 = vpop.f32.mrb[0].mxu0
        %3476 = vmatprep.mubr.bf16.mxu0 0
        %3477 = vmatmul.mubr.bf16.gmra.mrb[0].mxu0 %v2946
        %v3478 = vpop.f32.mrb[0].mxu0
        %v3479 = vadd.f32 %v2502, %v3478
        %v3480 = vpop.f32.mrb[0].mxu0
        %v3481 = vpop.f32.mrb[0].mxu0
        %v3482 = vadd.f32 %v2505, %v3481
        %v3483 = vpop.f32.mrb[0].mxu0
        %3484 = vmatprep.mubr.bf16.mxu0 0
        %3485 = vmatmul.mubr.bf16.gmra.mrb[0].mxu0 %v2947
        %v3486 = vpop.f32.mrb[0].mxu0
        %v3487 = vadd.f32 %v2510, %v3486
        %v3488 = vpop.f32.mrb[0].mxu0
        %v3489 = vpop.f32.mrb[0].mxu0
        %v3490 = vadd.f32 %v2513, %v3489
        %v3491 = vpop.f32.mrb[0].mxu0
        %3492 = vmatprep.mubr.bf16.mxu0 0
        %3493 = vmatmul.mubr.bf16.gmra.mrb[0].mxu0 %v2948
        %v3494 = vpop.f32.mrb[0].mxu0
        %v3495 = vadd.f32 %v2518, %v3494
        %v3496 = vpop.f32.mrb[0].mxu0
        %v3497 = vpop.f32.mrb[0].mxu0
        %v3498 = vadd.f32 %v2521, %v3497
        %v3499 = vpop.f32.mrb[0].mxu0
        %3500 = vmatprep.mubr.bf16.mxu0 0
        %3501 = vmatmul.mubr.bf16.gmra.mrb[0].mxu0 %v2949
        %v3502 = vpop.f32.mrb[0].mxu0
        %v3503 = vadd.f32 %v2526, %v3502
        %v3504 = vpop.f32.mrb[0].mxu0
        %v3505 = vpop.f32.mrb[0].mxu0
        %v3506 = vadd.f32 %v2529, %v3505
        %v3507 = vpop.f32.mrb[0].mxu0
        %3508 = vmatprep.mubr.bf16.mxu0 0
        %3509 = vmatmul.mubr.bf16.gmra.mrb[0].mxu0 %v2950
        %v3510 = vpop.f32.mrb[0].mxu0
        %v3511 = vadd.f32 %v2534, %v3510
        %v3512 = vpop.f32.mrb[0].mxu0
        %v3513 = vpop.f32.mrb[0].mxu0
        %v3514 = vadd.f32 %v2537, %v3513
        %v3515 = vpop.f32.mrb[0].mxu0
        %3516 = vmatprep.mubr.bf16.mxu0 0
        %3517 = vmatmul.mubr.bf16.gmra.mrb[0].mxu0 %v2951
        %v3518 = vpop.f32.mrb[0].mxu0
        %v3519 = vadd.f32 %v2542, %v3518
        %v3520 = vpop.f32.mrb[0].mxu0
        %v3521 = vpop.f32.mrb[0].mxu0
        %v3522 = vadd.f32 %v2545, %v3521
        %v3523 = vpop.f32.mrb[0].mxu0
        %3524 = vmatprep.mubr.bf16.mxu0 0
        %3525 = vmatmul.mubr.bf16.gmra.mrb[0].mxu0 %v2952
        %v3526 = vpop.f32.mrb[0].mxu0
        %v3527 = vadd.f32 %v2550, %v3526
        %v3528 = vpop.f32.mrb[0].mxu0
        %v3529 = vpop.f32.mrb[0].mxu0
        %v3530 = vadd.f32 %v2553, %v3529
        %v3531 = vpop.f32.mrb[0].mxu0
        %3532 = vmatprep.mubr.bf16.mxu0 0
        %3533 = vmatmul.mubr.bf16.gmra.mrb[0].mxu0 %v2953
        %v3534 = vpop.f32.mrb[0].mxu0
        %v3535 = vadd.f32 %v2558, %v3534
        %v3536 = vpop.f32.mrb[0].mxu0
        %v3537 = vpop.f32.mrb[0].mxu0
        %v3538 = vadd.f32 %v2561, %v3537
        %v3539 = vpop.f32.mrb[0].mxu0
        %3540 = vmatprep.mubr.bf16.mxu0 0
        %3541 = vmatmul.mubr.bf16.gmra.mrb[0].mxu0 %v2954
        %v3542 = vpop.f32.mrb[0].mxu0
        %v3543 = vadd.f32 %v2566, %v3542
        %v3544 = vpop.f32.mrb[0].mxu0
        %v3545 = vpop.f32.mrb[0].mxu0
        %v3546 = vadd.f32 %v2569, %v3545
        %v3547 = vpop.f32.mrb[0].mxu0
        %3548 = vmatprep.mubr.bf16.mxu0 0
        %3549 = vmatmul.mubr.bf16.gmra.mrb[0].mxu0 %v2955
        %v3550 = vpop.f32.mrb[0].mxu0
        %v3551 = vadd.f32 %v2574, %v3550
        %v3552 = vpop.f32.mrb[0].mxu0
        %v3553 = vpop.f32.mrb[0].mxu0
        %v3554 = vadd.f32 %v2577, %v3553
        %v3555 = vpop.f32.mrb[0].mxu0
        %3556 = vmatprep.mubr.bf16.mxu0 0
        %3557 = vmatmul.mubr.bf16.gmra.mrb[0].mxu0 %v2956
        %v3558 = vpop.f32.mrb[0].mxu0
        %v3559 = vadd.f32 %v2582, %v3558
        %v3560 = vpop.f32.mrb[0].mxu0
        %v3561 = vpop.f32.mrb[0].mxu0
        %v3562 = vadd.f32 %v2585, %v3561
        %v3563 = vpop.f32.mrb[0].mxu0
        %3564 = vmatprep.mubr.bf16.mxu0 0
        %3565 = vmatmul.mubr.bf16.gmra.mrb[0].mxu0 %v2957
        %v3566 = vpop.f32.mrb[0].mxu0
        %v3567 = vadd.f32 %v2590, %v3566
        %v3568 = vpop.f32.mrb[0].mxu0
        %v3569 = vpop.f32.mrb[0].mxu0
        %v3570 = vadd.f32 %v2593, %v3569
        %v3571 = vpop.f32.mrb[0].mxu0
        %3572 = vmatprep.mubr.bf16.mxu0 0
        %3573 = vmatmul.mubr.bf16.gmra.mrb[0].mxu0 %v2958
        %v3574 = vpop.f32.mrb[0].mxu0
        %v3575 = vadd.f32 %v2598, %v3574
        %v3576 = vpop.f32.mrb[0].mxu0
        %v3577 = vpop.f32.mrb[0].mxu0
        %v3578 = vadd.f32 %v2601, %v3577
        %v3579 = vpop.f32.mrb[0].mxu0
        %3580 = vmatprep.mubr.bf16.mxu0 0
        %3581 = vmatmul.mubr.bf16.gmra.mrb[0].mxu0 %v2959
        %v3582 = vpop.f32.mrb[0].mxu0
        %v3583 = vadd.f32 %v2606, %v3582
        %v3584 = vpop.f32.mrb[0].mxu0
        %v3585 = vpop.f32.mrb[0].mxu0
        %v3586 = vadd.f32 %v2609, %v3585
        %v3587 = vpop.f32.mrb[0].mxu0
        %3588 = vmatprep.mubr.bf16.mxu0 0
        %3589 = vmatmul.mubr.bf16.gmra.mrb[0].mxu0 %v2960
        %v3590 = vpop.f32.mrb[0].mxu0
        %v3591 = vadd.f32 %v2614, %v3590
        %v3592 = vpop.f32.mrb[0].mxu0
        %v3593 = vpop.f32.mrb[0].mxu0
        %v3594 = vadd.f32 %v2617, %v3593
        %v3595 = vpop.f32.mrb[0].mxu0
        %3596 = vmatprep.mubr.bf16.mxu0 0
        %3597 = vmatmul.mubr.bf16.gmra.mrb[0].mxu0 %v2961
        %v3598 = vpop.f32.mrb[0].mxu0
        %v3599 = vadd.f32 %v2622, %v3598
        %v3600 = vpop.f32.mrb[0].mxu0
        %v3601 = vpop.f32.mrb[0].mxu0
        %v3602 = vadd.f32 %v2625, %v3601
        %v3603 = vpop.f32.mrb[0].mxu0
        %3604 = vmatprep.mubr.bf16.mxu0 0
        %3605 = vmatmul.mubr.bf16.gmra.mrb[0].mxu0 %v2962
        %v3606 = vpop.f32.mrb[0].mxu0
        %v3607 = vadd.f32 %v2630, %v3606
        %v3608 = vpop.f32.mrb[0].mxu0
        %v3609 = vpop.f32.mrb[0].mxu0
        %v3610 = vadd.f32 %v2633, %v3609
        %v3611 = vpop.f32.mrb[0].mxu0
        %3612 = vmatprep.mubr.bf16.mxu0 0
        %3613 = vmatmul.mubr.bf16.gmra.mrb[0].mxu0 %v2963
        %v3614 = vpop.f32.mrb[0].mxu0
        %v3615 = vadd.f32 %v2638, %v3614
        %v3616 = vpop.f32.mrb[0].mxu0
        %v3617 = vpop.f32.mrb[0].mxu0
        %v3618 = vadd.f32 %v2641, %v3617
        %v3619 = vpop.f32.mrb[0].mxu0
        %3620 = vdwg.mxu0
        %vm3653 = vcmask 1042432
        %vm3654 = vcmask 1046532
        %vm3655 = vmor %vm3653, %vm3654
        %v3656 = vrot.slane %v181, 5
        %v3657 = vrot.slane %v3656, 4
        %v3658 = vrot.slane %v182, 5
        %v3659 = vsel %vm3655, %v3657, %v3658
        %v3660 = vrot.slane %v3658, 4
        %v3661 = vrot.slane %v183, 5
        %v3662 = vsel %vm3655, %v3660, %v3661
        %v3663 = vrot.slane %v3661, 4
        %v3664 = vrot.slane %v184, 5
        %v3665 = vsel %vm3655, %v3663, %v3664
        %v3666 = vrot.slane %v3664, 4
        %v3667 = vrot.slane %v185, 5
        %v3668 = vsel %vm3655, %v3666, %v3667
        %v3669 = vrot.slane %v186, 5
        %v3670 = vrot.slane %v3669, 4
        %v3671 = vrot.slane %v187, 5
        %v3672 = vsel %vm3655, %v3670, %v3671
        %v3673 = vrot.slane %v3671, 4
        %v3674 = vrot.slane %v188, 5
        %v3675 = vsel %vm3655, %v3673, %v3674
        %v3676 = vrot.slane %v3674, 4
        %v3677 = vrot.slane %v189, 5
        %v3678 = vsel %vm3655, %v3676, %v3677
        %v3679 = vrot.slane %v3677, 4
        %v3680 = vrot.slane %v190, 5
        %v3681 = vsel %vm3655, %v3679, %v3680
        %v3682 = vrot.slane %v191, 5
        %v3683 = vrot.slane %v3682, 4
        %v3684 = vrot.slane %v192, 5
        %v3685 = vsel %vm3655, %v3683, %v3684
        %v3686 = vrot.slane %v3684, 4
        %v3687 = vrot.slane %v193, 5
        %v3688 = vsel %vm3655, %v3686, %v3687
        %v3689 = vrot.slane %v3687, 4
        %v3690 = vrot.slane %v194, 5
        %v3691 = vsel %vm3655, %v3689, %v3690
        %v3692 = vrot.slane %v3690, 4
        %v3693 = vrot.slane %v195, 5
        %v3694 = vsel %vm3655, %v3692, %v3693
        %v3695 = vrot.slane %v196, 5
        %v3696 = vrot.slane %v3695, 4
        %v3697 = vrot.slane %v197, 5
        %v3698 = vsel %vm3655, %v3696, %v3697
        %v3699 = vrot.slane %v3697, 4
        %v3700 = vrot.slane %v198, 5
        %v3701 = vsel %vm3655, %v3699, %v3700
        %v3702 = vrot.slane %v3700, 4
        %v3703 = vrot.slane %v199, 5
        %v3704 = vsel %vm3655, %v3702, %v3703
        %v3705 = vrot.slane %v3703, 4
        %v3706 = vrot.slane %v200, 5
        %v3707 = vsel %vm3655, %v3705, %v3706
        %v3708 = vrot.slane %v201, 5
        %v3709 = vrot.slane %v3708, 4
        %v3710 = vrot.slane %v202, 5
        %v3711 = vsel %vm3655, %v3709, %v3710
        %v3712 = vrot.slane %v3710, 4
        %v3713 = vrot.slane %v203, 5
        %v3714 = vsel %vm3655, %v3712, %v3713
        %v3715 = vrot.slane %v3713, 4
        %v3716 = vrot.slane %v204, 5
        %v3717 = vsel %vm3655, %v3715, %v3716
        %v3718 = vrot.slane %v3716, 4
        %v3719 = vrot.slane %v205, 5
        %v3720 = vsel %vm3655, %v3718, %v3719
        %v3721 = vrot.slane %v206, 5
        %v3722 = vrot.slane %v3721, 4
        %v3723 = vrot.slane %v207, 5
        %v3724 = vsel %vm3655, %v3722, %v3723
        %v3725 = vrot.slane %v3723, 4
        %v3726 = vrot.slane %v208, 5
        %v3727 = vsel %vm3655, %v3725, %v3726
        %v3728 = vrot.slane %v3726, 4
        %v3729 = vrot.slane %v209, 5
        %v3730 = vsel %vm3655, %v3728, %v3729
        %v3731 = vrot.slane %v3729, 4
        %v3732 = vrot.slane %v210, 5
        %v3733 = vsel %vm3655, %v3731, %v3732
        %v3734 = vrot.slane %v211, 5
        %v3735 = vrot.slane %v3734, 4
        %v3736 = vrot.slane %v212, 5
        %v3737 = vsel %vm3655, %v3735, %v3736
        %v3738 = vrot.slane %v3736, 4
        %v3739 = vrot.slane %v213, 5
        %v3740 = vsel %vm3655, %v3738, %v3739
        %v3741 = vrot.slane %v3739, 4
        %v3742 = vrot.slane %v214, 5
        %v3743 = vsel %vm3655, %v3741, %v3742
        %v3744 = vrot.slane %v3742, 4
        %v3745 = vrot.slane %v215, 5
        %v3746 = vsel %vm3655, %v3744, %v3745
        %v3747 = vrot.slane %v216, 5
        %v3748 = vrot.slane %v3747, 4
        %v3749 = vrot.slane %v217, 5
        %v3750 = vsel %vm3655, %v3748, %v3749
        %v3751 = vrot.slane %v3749, 4
        %v3752 = vrot.slane %v218, 5
        %v3753 = vsel %vm3655, %v3751, %v3752
        %v3754 = vrot.slane %v3752, 4
        %v3755 = vrot.slane %v219, 5
        %v3756 = vsel %vm3655, %v3754, %v3755
        %v3757 = vrot.slane %v3755, 4
        %v3758 = vrot.slane %v220, 5
        %v3759 = vsel %vm3655, %v3757, %v3758
        %v3760 = vrot.slane %v221, 5
        %v3761 = vrot.slane %v3760, 4
        %v3762 = vrot.slane %v222, 5
        %v3763 = vsel %vm3655, %v3761, %v3762
        %v3764 = vrot.slane %v3762, 4
        %v3765 = vrot.slane %v223, 5
        %v3766 = vsel %vm3655, %v3764, %v3765
        %v3767 = vrot.slane %v3765, 4
        %v3768 = vrot.slane %v224, 5
        %v3769 = vsel %vm3655, %v3767, %v3768
        %v3770 = vrot.slane %v3768, 4
        %v3771 = vrot.slane %v225, 5
        %v3772 = vsel %vm3655, %v3770, %v3771
        %v3773 = vrot.slane %v226, 5
        %v3774 = vrot.slane %v3773, 4
        %v3775 = vrot.slane %v227, 5
        %v3776 = vsel %vm3655, %v3774, %v3775
        %v3777 = vrot.slane %v3775, 4
        %v3778 = vrot.slane %v228, 5
        %v3779 = vsel %vm3655, %v3777, %v3778
        %v3780 = vrot.slane %v3778, 4
        %v3781 = vrot.slane %v229, 5
        %v3782 = vsel %vm3655, %v3780, %v3781
        %v3783 = vrot.slane %v3781, 4
        %v3784 = vrot.slane %v230, 5
        %v3785 = vsel %vm3655, %v3783, %v3784
        %v3786 = vrot.slane %v231, 5
        %v3787 = vrot.slane %v3786, 4
        %v3788 = vrot.slane %v232, 5
        %v3789 = vsel %vm3655, %v3787, %v3788
        %v3790 = vrot.slane %v3788, 4
        %v3791 = vrot.slane %v233, 5
        %v3792 = vsel %vm3655, %v3790, %v3791
        %v3793 = vrot.slane %v3791, 4
        %v3794 = vrot.slane %v234, 5
        %v3795 = vsel %vm3655, %v3793, %v3794
        %v3796 = vrot.slane %v3794, 4
        %v3797 = vrot.slane %v235, 5
        %v3798 = vsel %vm3655, %v3796, %v3797
        %v3799 = vrot.slane %v236, 5
        %v3800 = vrot.slane %v3799, 4
        %v3801 = vrot.slane %v237, 5
        %v3802 = vsel %vm3655, %v3800, %v3801
        %v3803 = vrot.slane %v3801, 4
        %v3804 = vrot.slane %v238, 5
        %v3805 = vsel %vm3655, %v3803, %v3804
        %v3806 = vrot.slane %v3804, 4
        %v3807 = vrot.slane %v239, 5
        %v3808 = vsel %vm3655, %v3806, %v3807
        %v3809 = vrot.slane %v3807, 4
        %v3810 = vrot.slane %v240, 5
        %v3811 = vsel %vm3655, %v3809, %v3810
        %v3812 = vrot.slane %v241, 5
        %v3813 = vrot.slane %v3812, 4
        %v3814 = vrot.slane %v242, 5
        %v3815 = vsel %vm3655, %v3813, %v3814
        %v3816 = vrot.slane %v3814, 4
        %v3817 = vrot.slane %v243, 5
        %v3818 = vsel %vm3655, %v3816, %v3817
        %v3819 = vrot.slane %v3817, 4
        %v3820 = vrot.slane %v244, 5
        %v3821 = vsel %vm3655, %v3819, %v3820
        %v3822 = vrot.slane %v3820, 4
        %v3823 = vrot.slane %v245, 5
        %v3824 = vsel %vm3655, %v3822, %v3823
        %v3825 = vrot.slane %v246, 5
        %v3826 = vrot.slane %v3825, 4
        %v3827 = vrot.slane %v247, 5
        %v3828 = vsel %vm3655, %v3826, %v3827
        %v3829 = vrot.slane %v3827, 4
        %v3830 = vrot.slane %v248, 5
        %v3831 = vsel %vm3655, %v3829, %v3830
        %v3832 = vrot.slane %v3830, 4
        %v3833 = vrot.slane %v249, 5
        %v3834 = vsel %vm3655, %v3832, %v3833
        %v3835 = vrot.slane %v3833, 4
        %v3836 = vrot.slane %v250, 5
        %v3837 = vsel %vm3655, %v3835, %v3836
        %v3838 = vrot.slane %v251, 5
        %v3839 = vrot.slane %v3838, 4
        %v3840 = vrot.slane %v252, 5
        %v3841 = vsel %vm3655, %v3839, %v3840
        %v3842 = vrot.slane %v3840, 4
        %v3843 = vrot.slane %v253, 5
        %v3844 = vsel %vm3655, %v3842, %v3843
        %v3845 = vrot.slane %v3843, 4
        %v3846 = vrot.slane %v254, 5
        %v3847 = vsel %vm3655, %v3845, %v3846
        %v3848 = vrot.slane %v3846, 4
        %v3849 = vrot.slane %v255, 5
        %v3850 = vsel %vm3655, %v3848, %v3849
        %v3851 = vrot.slane %v256, 5
        %v3852 = vrot.slane %v3851, 4
        %v3853 = vrot.slane %v257, 5
        %v3854 = vsel %vm3655, %v3852, %v3853
        %v3855 = vrot.slane %v3853, 4
        %v3856 = vrot.slane %v258, 5
        %v3857 = vsel %vm3655, %v3855, %v3856
        %v3858 = vrot.slane %v3856, 4
        %v3859 = vrot.slane %v259, 5
        %v3860 = vsel %vm3655, %v3858, %v3859
        %v3861 = vrot.slane %v3859, 4
        %v3862 = vrot.slane %v260, 5
        %v3863 = vsel %vm3655, %v3861, %v3862
        %v3864 = vrot.slane %v261, 5
        %v3865 = vrot.slane %v3864, 4
        %v3866 = vrot.slane %v262, 5
        %v3867 = vsel %vm3655, %v3865, %v3866
        %v3868 = vrot.slane %v3866, 4
        %v3869 = vrot.slane %v263, 5
        %v3870 = vsel %vm3655, %v3868, %v3869
        %v3871 = vrot.slane %v3869, 4
        %v3872 = vrot.slane %v264, 5
        %v3873 = vsel %vm3655, %v3871, %v3872
        %v3874 = vrot.slane %v3872, 4
        %v3875 = vrot.slane %v265, 5
        %v3876 = vsel %vm3655, %v3874, %v3875
        %v3877 = vrot.slane %v266, 5
        %v3878 = vrot.slane %v3877, 4
        %v3879 = vrot.slane %v267, 5
        %v3880 = vsel %vm3655, %v3878, %v3879
        %v3881 = vrot.slane %v3879, 4
        %v3882 = vrot.slane %v268, 5
        %v3883 = vsel %vm3655, %v3881, %v3882
        %v3884 = vrot.slane %v3882, 4
        %v3885 = vrot.slane %v269, 5
        %v3886 = vsel %vm3655, %v3884, %v3885
        %v3887 = vrot.slane %v3885, 4
        %v3888 = vrot.slane %v270, 5
        %v3889 = vsel %vm3655, %v3887, %v3888
        %v3890 = vrot.slane %v271, 5
        %v3891 = vrot.slane %v3890, 4
        %v3892 = vrot.slane %v272, 5
        %v3893 = vsel %vm3655, %v3891, %v3892
        %v3894 = vrot.slane %v3892, 4
        %v3895 = vrot.slane %v273, 5
        %v3896 = vsel %vm3655, %v3894, %v3895
        %v3897 = vrot.slane %v3895, 4
        %v3898 = vrot.slane %v274, 5
        %v3899 = vsel %vm3655, %v3897, %v3898
        %v3900 = vrot.slane %v3898, 4
        %v3901 = vrot.slane %v275, 5
        %v3902 = vsel %vm3655, %v3900, %v3901
        %v3903 = vrot.slane %v276, 5
        %v3904 = vrot.slane %v3903, 4
        %v3905 = vrot.slane %v277, 5
        %v3906 = vsel %vm3655, %v3904, %v3905
        %v3907 = vrot.slane %v3905, 4
        %v3908 = vrot.slane %v278, 5
        %v3909 = vsel %vm3655, %v3907, %v3908
        %v3910 = vrot.slane %v3908, 4
        %v3911 = vrot.slane %v279, 5
        %v3912 = vsel %vm3655, %v3910, %v3911
        %v3913 = vrot.slane %v3911, 4
        %v3914 = vrot.slane %v280, 5
        %v3915 = vsel %vm3655, %v3913, %v3914
        %v3916 = vrot.slane %v281, 5
        %v3917 = vrot.slane %v3916, 4
        %v3918 = vrot.slane %v282, 5
        %v3919 = vsel %vm3655, %v3917, %v3918
        %v3920 = vrot.slane %v3918, 4
        %v3921 = vrot.slane %v283, 5
        %v3922 = vsel %vm3655, %v3920, %v3921
        %v3923 = vrot.slane %v3921, 4
        %v3924 = vrot.slane %v284, 5
        %v3925 = vsel %vm3655, %v3923, %v3924
        %v3926 = vrot.slane %v3924, 4
        %v3927 = vrot.slane %v285, 5
        %v3928 = vsel %vm3655, %v3926, %v3927
        %v3929 = vrot.slane %v286, 5
        %v3930 = vrot.slane %v3929, 4
        %v3931 = vrot.slane %v287, 5
        %v3932 = vsel %vm3655, %v3930, %v3931
        %v3933 = vrot.slane %v3931, 4
        %v3934 = vrot.slane %v288, 5
        %v3935 = vsel %vm3655, %v3933, %v3934
        %v3936 = vrot.slane %v3934, 4
        %v3937 = vrot.slane %v289, 5
        %v3938 = vsel %vm3655, %v3936, %v3937
        %v3939 = vrot.slane %v3937, 4
        %v3940 = vrot.slane %v290, 5
        %v3941 = vsel %vm3655, %v3939, %v3940
        %v3942 = vrot.slane %v291, 5
        %v3943 = vrot.slane %v3942, 4
        %v3944 = vrot.slane %v292, 5
        %v3945 = vsel %vm3655, %v3943, %v3944
        %v3946 = vrot.slane %v3944, 4
        %v3947 = vrot.slane %v293, 5
        %v3948 = vsel %vm3655, %v3946, %v3947
        %v3949 = vrot.slane %v3947, 4
        %v3950 = vrot.slane %v294, 5
        %v3951 = vsel %vm3655, %v3949, %v3950
        %v3952 = vrot.slane %v3950, 4
        %v3953 = vrot.slane %v295, 5
        %v3954 = vsel %vm3655, %v3952, %v3953
        %v3955 = vrot.slane %v296, 5
        %v3956 = vrot.slane %v3955, 4
        %v3957 = vrot.slane %v297, 5
        %v3958 = vsel %vm3655, %v3956, %v3957
        %v3959 = vrot.slane %v3957, 4
        %v3960 = vrot.slane %v298, 5
        %v3961 = vsel %vm3655, %v3959, %v3960
        %v3962 = vrot.slane %v3960, 4
        %v3963 = vrot.slane %v299, 5
        %v3964 = vsel %vm3655, %v3962, %v3963
        %v3965 = vrot.slane %v3963, 4
        %v3966 = vrot.slane %v300, 5
        %v3967 = vsel %vm3655, %v3965, %v3966
        %v3968 = vrot.slane %v301, 5
        %v3969 = vrot.slane %v3968, 4
        %v3970 = vrot.slane %v302, 5
        %v3971 = vsel %vm3655, %v3969, %v3970
        %v3972 = vrot.slane %v3970, 4
        %v3973 = vrot.slane %v303, 5
        %v3974 = vsel %vm3655, %v3972, %v3973
        %v3975 = vrot.slane %v3973, 4
        %v3976 = vrot.slane %v304, 5
        %v3977 = vsel %vm3655, %v3975, %v3976
        %v3978 = vrot.slane %v3976, 4
        %v3979 = vrot.slane %v305, 5
        %v3980 = vsel %vm3655, %v3978, %v3979
        %v3981 = vrot.slane %v306, 5
        %v3982 = vrot.slane %v3981, 4
        %v3983 = vrot.slane %v307, 5
        %v3984 = vsel %vm3655, %v3982, %v3983
        %v3985 = vrot.slane %v3983, 4
        %v3986 = vrot.slane %v308, 5
        %v3987 = vsel %vm3655, %v3985, %v3986
        %v3988 = vrot.slane %v3986, 4
        %v3989 = vrot.slane %v309, 5
        %v3990 = vsel %vm3655, %v3988, %v3989
        %v3991 = vrot.slane %v3989, 4
        %v3992 = vrot.slane %v310, 5
        %v3993 = vsel %vm3655, %v3991, %v3992
        %v3994 = vrot.slane %v311, 5
        %v3995 = vrot.slane %v3994, 4
        %v3996 = vrot.slane %v312, 5
        %v3997 = vsel %vm3655, %v3995, %v3996
        %v3998 = vrot.slane %v3996, 4
        %v3999 = vrot.slane %v313, 5
        %v4000 = vsel %vm3655, %v3998, %v3999
        %v4001 = vrot.slane %v3999, 4
        %v4002 = vrot.slane %v314, 5
        %v4003 = vsel %vm3655, %v4001, %v4002
        %v4004 = vrot.slane %v4002, 4
        %v4005 = vrot.slane %v315, 5
        %v4006 = vsel %vm3655, %v4004, %v4005
        %v4007 = vrot.slane %v316, 5
        %v4008 = vrot.slane %v4007, 4
        %v4009 = vrot.slane %v317, 5
        %v4010 = vsel %vm3655, %v4008, %v4009
        %v4011 = vrot.slane %v4009, 4
        %v4012 = vrot.slane %v318, 5
        %v4013 = vsel %vm3655, %v4011, %v4012
        %v4014 = vrot.slane %v4012, 4
        %v4015 = vrot.slane %v319, 5
        %v4016 = vsel %vm3655, %v4014, %v4015
        %v4017 = vrot.slane %v4015, 4
        %v4018 = vrot.slane %v320, 5
        %v4019 = vsel %vm3655, %v4017, %v4018
        %v4020 = vrot.slane %v321, 5
        %v4021 = vrot.slane %v4020, 4
        %v4022 = vrot.slane %v322, 5
        %v4023 = vsel %vm3655, %v4021, %v4022
        %v4024 = vrot.slane %v4022, 4
        %v4025 = vrot.slane %v323, 5
        %v4026 = vsel %vm3655, %v4024, %v4025
        %v4027 = vrot.slane %v4025, 4
        %v4028 = vrot.slane %v324, 5
        %v4029 = vsel %vm3655, %v4027, %v4028
        %v4030 = vrot.slane %v4028, 4
        %v4031 = vrot.slane %v325, 5
        %v4032 = vsel %vm3655, %v4030, %v4031
        %v4033 = vrot.slane %v326, 5
        %v4034 = vrot.slane %v4033, 4
        %v4035 = vrot.slane %v327, 5
        %v4036 = vsel %vm3655, %v4034, %v4035
        %v4037 = vrot.slane %v4035, 4
        %v4038 = vrot.slane %v328, 5
        %v4039 = vsel %vm3655, %v4037, %v4038
        %v4040 = vrot.slane %v4038, 4
        %v4041 = vrot.slane %v329, 5
        %v4042 = vsel %vm3655, %v4040, %v4041
        %v4043 = vrot.slane %v4041, 4
        %v4044 = vrot.slane %v330, 5
        %v4045 = vsel %vm3655, %v4043, %v4044
        %v4046 = vrot.slane %v331, 5
        %v4047 = vrot.slane %v4046, 4
        %v4048 = vrot.slane %v332, 5
        %v4049 = vsel %vm3655, %v4047, %v4048
        %v4050 = vrot.slane %v4048, 4
        %v4051 = vrot.slane %v333, 5
        %v4052 = vsel %vm3655, %v4050, %v4051
        %v4053 = vrot.slane %v4051, 4
        %v4054 = vrot.slane %v334, 5
        %v4055 = vsel %vm3655, %v4053, %v4054
        %v4056 = vrot.slane %v4054, 4
        %v4057 = vrot.slane %v335, 5
        %v4058 = vsel %vm3655, %v4056, %v4057
        %v4059 = vrot.slane %v336, 5
        %v4060 = vrot.slane %v4059, 4
        %v4061 = vrot.slane %v337, 5
        %v4062 = vsel %vm3655, %v4060, %v4061
        %v4063 = vrot.slane %v4061, 4
        %v4064 = vrot.slane %v338, 5
        %v4065 = vsel %vm3655, %v4063, %v4064
        %v4066 = vrot.slane %v4064, 4
        %v4067 = vrot.slane %v339, 5
        %v4068 = vsel %vm3655, %v4066, %v4067
        %v4069 = vrot.slane %v4067, 4
        %v4070 = vrot.slane %v340, 5
        %v4071 = vsel %vm3655, %v4069, %v4070
        %s4072 = scalar_lea.vmem %s1, 128
        %v4073 = vld [vmem:[%s4072] sm:$0xf]
        %v4074 = vld [vmem:[%s4072 + $0x4] sm:$0xf]
        %v4075 = vld [vmem:[%s4072 + $0x8] sm:$0xf]
        %v4076 = vld [vmem:[%s4072 + $0xc] sm:$0xf]
        %v4077 = vld [vmem:[%s4072 + $0x10] sm:$0xf]
        %v4078 = vld [vmem:[%s4072 + $0x14] sm:$0xf]
        %v4079 = vld [vmem:[%s4072 + $0x18] sm:$0xf]
        %v4080 = vld [vmem:[%s4072 + $0x1c] sm:$0xf]
        %v4081 = vld [vmem:[%s4072 + $0x20] sm:$0xf]
        %v4082 = vld [vmem:[%s4072 + $0x24] sm:$0xf]
        %v4083 = vld [vmem:[%s4072 + $0x28] sm:$0xf]
        %v4084 = vld [vmem:[%s4072 + $0x2c] sm:$0xf]
        %v4085 = vld [vmem:[%s4072 + $0x30] sm:$0xf]
        %v4086 = vld [vmem:[%s4072 + $0x34] sm:$0xf]
        %v4087 = vld [vmem:[%s4072 + $0x38] sm:$0xf]
        %v4088 = vld [vmem:[%s4072 + $0x3c] sm:$0xf]
        %v4089 = vunpack.c.l.b16 %v3659
        %v4090 = vunpack.c.l.b16 %v3662
        %v4091 = vunpack.c.l.b16 %v3665
        %v4092 = vunpack.c.l.b16 %v3668
        %v4093 = vunpack.c.l.b16 %v3672
        %v4094 = vunpack.c.l.b16 %v3675
        %v4095 = vunpack.c.l.b16 %v3678
        %v4096 = vunpack.c.l.b16 %v3681
        %v4097 = vunpack.c.l.b16 %v3685
        %v4098 = vunpack.c.l.b16 %v3688
        %v4099 = vunpack.c.l.b16 %v3691
        %v4100 = vunpack.c.l.b16 %v3694
        %v4101 = vunpack.c.l.b16 %v3698
        %v4102 = vunpack.c.l.b16 %v3701
        %v4103 = vunpack.c.l.b16 %v3704
        %v4104 = vunpack.c.l.b16 %v3707
        %v4105 = vunpack.c.l.b16 %v3711
        %v4106 = vunpack.c.l.b16 %v3714
        %v4107 = vunpack.c.l.b16 %v3717
        %v4108 = vunpack.c.l.b16 %v3720
        %v4109 = vunpack.c.l.b16 %v3724
        %v4110 = vunpack.c.l.b16 %v3727
        %v4111 = vunpack.c.l.b16 %v3730
        %v4112 = vunpack.c.l.b16 %v3733
        %v4113 = vunpack.c.l.b16 %v3737
        %v4114 = vunpack.c.l.b16 %v3740
        %v4115 = vunpack.c.l.b16 %v3743
        %v4116 = vunpack.c.l.b16 %v3746
        %v4117 = vunpack.c.l.b16 %v3750
        %v4118 = vunpack.c.l.b16 %v3753
        %v4119 = vunpack.c.l.b16 %v3756
        %v4120 = vunpack.c.l.b16 %v3759
        %v4121 = vunpack.c.l.b16 %v3763
        %v4122 = vunpack.c.l.b16 %v3766
        %v4123 = vunpack.c.l.b16 %v3769
        %v4124 = vunpack.c.l.b16 %v3772
        %v4125 = vunpack.c.l.b16 %v3776
        %v4126 = vunpack.c.l.b16 %v3779
        %v4127 = vunpack.c.l.b16 %v3782
        %v4128 = vunpack.c.l.b16 %v3785
        %v4129 = vunpack.c.l.b16 %v3789
        %v4130 = vunpack.c.l.b16 %v3792
        %v4131 = vunpack.c.l.b16 %v3795
        %v4132 = vunpack.c.l.b16 %v3798
        %v4133 = vunpack.c.l.b16 %v3802
        %v4134 = vunpack.c.l.b16 %v3805
        %v4135 = vunpack.c.l.b16 %v3808
        %v4136 = vunpack.c.l.b16 %v3811
        %v4137 = vunpack.c.l.b16 %v3815
        %v4138 = vunpack.c.l.b16 %v3818
        %v4139 = vunpack.c.l.b16 %v3821
        %v4140 = vunpack.c.l.b16 %v3824
        %v4141 = vunpack.c.l.b16 %v3828
        %v4142 = vunpack.c.l.b16 %v3831
        %v4143 = vunpack.c.l.b16 %v3834
        %v4144 = vunpack.c.l.b16 %v3837
        %v4145 = vunpack.c.l.b16 %v3841
        %v4146 = vunpack.c.l.b16 %v3844
        %v4147 = vunpack.c.l.b16 %v3847
        %v4148 = vunpack.c.l.b16 %v3850
        %v4149 = vunpack.c.l.b16 %v3854
        %v4150 = vunpack.c.l.b16 %v3857
        %v4151 = vunpack.c.l.b16 %v3860
        %v4152 = vunpack.c.l.b16 %v3863
        %v4153 = vunpack.c.l.b16 %v3867
        %v4154 = vunpack.c.l.b16 %v3870
        %v4155 = vunpack.c.l.b16 %v3873
        %v4156 = vunpack.c.l.b16 %v3876
        %v4157 = vunpack.c.l.b16 %v3880
        %v4158 = vunpack.c.l.b16 %v3883
        %v4159 = vunpack.c.l.b16 %v3886
        %v4160 = vunpack.c.l.b16 %v3889
        %v4161 = vunpack.c.l.b16 %v3893
        %v4162 = vunpack.c.l.b16 %v3896
        %v4163 = vunpack.c.l.b16 %v3899
        %v4164 = vunpack.c.l.b16 %v3902
        %v4165 = vunpack.c.l.b16 %v3906
        %v4166 = vunpack.c.l.b16 %v3909
        %v4167 = vunpack.c.l.b16 %v3912
        %v4168 = vunpack.c.l.b16 %v3915
        %v4169 = vunpack.c.l.b16 %v3919
        %v4170 = vunpack.c.l.b16 %v3922
        %v4171 = vunpack.c.l.b16 %v3925
        %v4172 = vunpack.c.l.b16 %v3928
        %v4173 = vunpack.c.l.b16 %v3932
        %v4174 = vunpack.c.l.b16 %v3935
        %v4175 = vunpack.c.l.b16 %v3938
        %v4176 = vunpack.c.l.b16 %v3941
        %v4177 = vunpack.c.l.b16 %v3945
        %v4178 = vunpack.c.l.b16 %v3948
        %v4179 = vunpack.c.l.b16 %v3951
        %v4180 = vunpack.c.l.b16 %v3954
        %v4181 = vunpack.c.l.b16 %v3958
        %v4182 = vunpack.c.l.b16 %v3961
        %v4183 = vunpack.c.l.b16 %v3964
        %v4184 = vunpack.c.l.b16 %v3967
        %v4185 = vunpack.c.l.b16 %v3971
        %v4186 = vunpack.c.l.b16 %v3974
        %v4187 = vunpack.c.l.b16 %v3977
        %v4188 = vunpack.c.l.b16 %v3980
        %v4189 = vunpack.c.l.b16 %v3984
        %v4190 = vunpack.c.l.b16 %v3987
        %v4191 = vunpack.c.l.b16 %v3990
        %v4192 = vunpack.c.l.b16 %v3993
        %v4193 = vunpack.c.l.b16 %v3997
        %v4194 = vunpack.c.l.b16 %v4000
        %v4195 = vunpack.c.l.b16 %v4003
        %v4196 = vunpack.c.l.b16 %v4006
        %v4197 = vunpack.c.l.b16 %v4010
        %v4198 = vunpack.c.l.b16 %v4013
        %v4199 = vunpack.c.l.b16 %v4016
        %v4200 = vunpack.c.l.b16 %v4019
        %v4201 = vunpack.c.l.b16 %v4023
        %v4202 = vunpack.c.l.b16 %v4026
        %v4203 = vunpack.c.l.b16 %v4029
        %v4204 = vunpack.c.l.b16 %v4032
        %v4205 = vunpack.c.l.b16 %v4036
        %v4206 = vunpack.c.l.b16 %v4039
        %v4207 = vunpack.c.l.b16 %v4042
        %v4208 = vunpack.c.l.b16 %v4045
        %v4209 = vunpack.c.l.b16 %v4049
        %v4210 = vunpack.c.l.b16 %v4052
        %v4211 = vunpack.c.l.b16 %v4055
        %v4212 = vunpack.c.l.b16 %v4058
        %v4213 = vunpack.c.l.b16 %v4062
        %v4214 = vunpack.c.l.b16 %v4065
        %v4215 = vunpack.c.l.b16 %v4068
        %v4216 = vunpack.c.l.b16 %v4071
        %v4217 = vpack.c.b16 %v4090, %v4089
        %v4218 = vpack.c.b16 %v4092, %v4091
        %v4219 = vpack.c.b16 %v4094, %v4093
        %v4220 = vpack.c.b16 %v4096, %v4095
        %v4221 = vpack.c.b16 %v4098, %v4097
        %v4222 = vpack.c.b16 %v4100, %v4099
        %v4223 = vpack.c.b16 %v4102, %v4101
        %v4224 = vpack.c.b16 %v4104, %v4103
        %v4225 = vpack.c.b16 %v4106, %v4105
        %v4226 = vpack.c.b16 %v4108, %v4107
        %v4227 = vpack.c.b16 %v4110, %v4109
        %v4228 = vpack.c.b16 %v4112, %v4111
        %v4229 = vpack.c.b16 %v4114, %v4113
        %v4230 = vpack.c.b16 %v4116, %v4115
        %v4231 = vpack.c.b16 %v4118, %v4117
        %v4232 = vpack.c.b16 %v4120, %v4119
        %v4233 = vpack.c.b16 %v4122, %v4121
        %v4234 = vpack.c.b16 %v4124, %v4123
        %v4235 = vpack.c.b16 %v4126, %v4125
        %v4236 = vpack.c.b16 %v4128, %v4127
        %v4237 = vpack.c.b16 %v4130, %v4129
        %v4238 = vpack.c.b16 %v4132, %v4131
        %v4239 = vpack.c.b16 %v4134, %v4133
        %v4240 = vpack.c.b16 %v4136, %v4135
        %v4241 = vpack.c.b16 %v4138, %v4137
        %v4242 = vpack.c.b16 %v4140, %v4139
        %v4243 = vpack.c.b16 %v4142, %v4141
        %v4244 = vpack.c.b16 %v4144, %v4143
        %v4245 = vpack.c.b16 %v4146, %v4145
        %v4246 = vpack.c.b16 %v4148, %v4147
        %v4247 = vpack.c.b16 %v4150, %v4149
        %v4248 = vpack.c.b16 %v4152, %v4151
        %v4249 = vpack.c.b16 %v4154, %v4153
        %v4250 = vpack.c.b16 %v4156, %v4155
        %v4251 = vpack.c.b16 %v4158, %v4157
        %v4252 = vpack.c.b16 %v4160, %v4159
        %v4253 = vpack.c.b16 %v4162, %v4161
        %v4254 = vpack.c.b16 %v4164, %v4163
        %v4255 = vpack.c.b16 %v4166, %v4165
        %v4256 = vpack.c.b16 %v4168, %v4167
        %v4257 = vpack.c.b16 %v4170, %v4169
        %v4258 = vpack.c.b16 %v4172, %v4171
        %v4259 = vpack.c.b16 %v4174, %v4173
        %v4260 = vpack.c.b16 %v4176, %v4175
        %v4261 = vpack.c.b16 %v4178, %v4177
        %v4262 = vpack.c.b16 %v4180, %v4179
        %v4263 = vpack.c.b16 %v4182, %v4181
        %v4264 = vpack.c.b16 %v4184, %v4183
        %v4265 = vpack.c.b16 %v4186, %v4185
        %v4266 = vpack.c.b16 %v4188, %v4187
        %v4267 = vpack.c.b16 %v4190, %v4189
        %v4268 = vpack.c.b16 %v4192, %v4191
        %v4269 = vpack.c.b16 %v4194, %v4193
        %v4270 = vpack.c.b16 %v4196, %v4195
        %v4271 = vpack.c.b16 %v4198, %v4197
        %v4272 = vpack.c.b16 %v4200, %v4199
        %v4273 = vpack.c.b16 %v4202, %v4201
        %v4274 = vpack.c.b16 %v4204, %v4203
        %v4275 = vpack.c.b16 %v4206, %v4205
        %v4276 = vpack.c.b16 %v4208, %v4207
        %v4277 = vpack.c.b16 %v4210, %v4209
        %v4278 = vpack.c.b16 %v4212, %v4211
        %v4279 = vpack.c.b16 %v4214, %v4213
        %v4280 = vpack.c.b16 %v4216, %v4215
        %v4361 = vunpack.c.l.b16 %v4073
        %v4362 = vunpack.c.l.b16 %v4074
        %v4363 = vunpack.c.l.b16 %v4075
        %v4364 = vunpack.c.l.b16 %v4076
        %v4365 = vunpack.c.l.b16 %v4077
        %v4366 = vunpack.c.l.b16 %v4078
        %v4367 = vunpack.c.l.b16 %v4079
        %v4368 = vunpack.c.l.b16 %v4080
        %v4369 = vunpack.c.l.b16 %v4081
        %v4370 = vunpack.c.l.b16 %v4082
        %v4371 = vunpack.c.l.b16 %v4083
        %v4372 = vunpack.c.l.b16 %v4084
        %v4373 = vunpack.c.l.b16 %v4085
        %v4374 = vunpack.c.l.b16 %v4086
        %v4375 = vunpack.c.l.b16 %v4087
        %v4376 = vunpack.c.l.b16 %v4088
        %v4377 = vpack.c.b16 %v4362, %v4361
        %v4378 = vpack.c.b16 %v4364, %v4363
        %v4379 = vpack.c.b16 %v4366, %v4365
        %v4380 = vpack.c.b16 %v4368, %v4367
        %v4381 = vpack.c.b16 %v4370, %v4369
        %v4382 = vpack.c.b16 %v4372, %v4371
        %v4383 = vpack.c.b16 %v4374, %v4373
        %v4384 = vpack.c.b16 %v4376, %v4375
        %4393 = vmatprep.subr.bf16.mxu0 0
        %4394 = vmatpush1.bf16.msra.mxu0 %v4377
        %4395 = vmatprep.subr.bf16.mxu0 0
        %4396 = vmatpush1.bf16.msra.mxu0 %v4378
        %4397 = vmatprep.subr.bf16.mxu0 0
        %4398 = vmatpush1.bf16.msra.mxu0 %v4379
        %4399 = vmatprep.subr.bf16.mxu0 0
        %4400 = vmatpush1.bf16.msra.mxu0 %v4380
        %4401 = vmatprep.subr.bf16.mxu0 0
        %4402 = vmatpush1.bf16.msra.mxu0 %v4381
        %4403 = vmatprep.subr.bf16.mxu0 0
        %4404 = vmatpush1.bf16.msra.mxu0 %v4382
        %4405 = vmatprep.subr.bf16.mxu0 0
        %4406 = vmatpush1.bf16.msra.mxu0 %v4383
        %4407 = vmatprep.subr.bf16.mxu0 0
        %4408 = vmatpush1.bf16.msra.mxu0 %v4384
        %4409 = vmatprep.subr.bf16.mxu0 0
        %4410 = vmatpush1.bf16.msra.mxu0 0
        %4411 = vmatprep.subr.bf16.mxu0 0
        %4412 = vmatpush1.bf16.msra.mxu0 0
        %4413 = vmatprep.subr.bf16.mxu0 0
        %4414 = vmatpush1.bf16.msra.mxu0 0
        %4415 = vmatprep.subr.bf16.mxu0 0
        %4416 = vmatpush1.bf16.msra.mxu0 0
        %4417 = vmatprep.subr.bf16.mxu0 0
        %4418 = vmatpush1.bf16.msra.mxu0 0
        %4419 = vmatprep.subr.bf16.mxu0 0
        %4420 = vmatpush1.bf16.msra.mxu0 0
        %4421 = vmatprep.subr.bf16.mxu0 0
        %4422 = vmatpush1.bf16.msra.mxu0 0
        %4423 = vmatprep.subr.bf16.mxu0 0
        %4424 = vmatpush1.bf16.msra.mxu0 0
        %4425 = vmatprep.mubr.bf16.mxu0 0
        %4426 = vmatmul.mubr.bf16.gmra.mrb[0].mxu0 %v4217
        %v4427 = vpop.f32.mrb[0].mxu0
        %v4428 = vadd.f32 0.0, %v4427
        %v4429 = vpop.f32.mrb[0].mxu0
        %v4430 = vpop.f32.mrb[0].mxu0
        %v4431 = vadd.f32 0.0, %v4430
        %v4432 = vpop.f32.mrb[0].mxu0
        %4433 = vmatprep.mubr.bf16.mxu0 0
        %4434 = vmatmul.mubr.bf16.gmra.mrb[0].mxu0 %v4218
        %v4435 = vpop.f32.mrb[0].mxu0
        %v4436 = vadd.f32 0.0, %v4435
        %v4437 = vpop.f32.mrb[0].mxu0
        %v4438 = vpop.f32.mrb[0].mxu0
        %v4439 = vadd.f32 0.0, %v4438
        %v4440 = vpop.f32.mrb[0].mxu0
        %4441 = vmatprep.mubr.bf16.mxu0 0
        %4442 = vmatmul.mubr.bf16.gmra.mrb[0].mxu0 %v4219
        %v4443 = vpop.f32.mrb[0].mxu0
        %v4444 = vadd.f32 0.0, %v4443
        %v4445 = vpop.f32.mrb[0].mxu0
        %v4446 = vpop.f32.mrb[0].mxu0
        %v4447 = vadd.f32 0.0, %v4446
        %v4448 = vpop.f32.mrb[0].mxu0
        %4449 = vmatprep.mubr.bf16.mxu0 0
        %4450 = vmatmul.mubr.bf16.gmra.mrb[0].mxu0 %v4220
        %v4451 = vpop.f32.mrb[0].mxu0
        %v4452 = vadd.f32 0.0, %v4451
        %v4453 = vpop.f32.mrb[0].mxu0
        %v4454 = vpop.f32.mrb[0].mxu0
        %v4455 = vadd.f32 0.0, %v4454
        %v4456 = vpop.f32.mrb[0].mxu0
        %4457 = vmatprep.mubr.bf16.mxu0 0
        %4458 = vmatmul.mubr.bf16.gmra.mrb[0].mxu0 %v4221
        %v4459 = vpop.f32.mrb[0].mxu0
        %v4460 = vadd.f32 0.0, %v4459
        %v4461 = vpop.f32.mrb[0].mxu0
        %v4462 = vpop.f32.mrb[0].mxu0
        %v4463 = vadd.f32 0.0, %v4462
        %v4464 = vpop.f32.mrb[0].mxu0
        %4465 = vmatprep.mubr.bf16.mxu0 0
        %4466 = vmatmul.mubr.bf16.gmra.mrb[0].mxu0 %v4222
        %v4467 = vpop.f32.mrb[0].mxu0
        %v4468 = vadd.f32 0.0, %v4467
        %v4469 = vpop.f32.mrb[0].mxu0
        %v4470 = vpop.f32.mrb[0].mxu0
        %v4471 = vadd.f32 0.0, %v4470
        %v4472 = vpop.f32.mrb[0].mxu0
        %4473 = vmatprep.mubr.bf16.mxu0 0
        %4474 = vmatmul.mubr.bf16.gmra.mrb[0].mxu0 %v4223
        %v4475 = vpop.f32.mrb[0].mxu0
        %v4476 = vadd.f32 0.0, %v4475
        %v4477 = vpop.f32.mrb[0].mxu0
        %v4478 = vpop.f32.mrb[0].mxu0
        %v4479 = vadd.f32 0.0, %v4478
        %v4480 = vpop.f32.mrb[0].mxu0
        %4481 = vmatprep.mubr.bf16.mxu0 0
        %4482 = vmatmul.mubr.bf16.gmra.mrb[0].mxu0 %v4224
        %v4483 = vpop.f32.mrb[0].mxu0
        %v4484 = vadd.f32 0.0, %v4483
        %v4485 = vpop.f32.mrb[0].mxu0
        %v4486 = vpop.f32.mrb[0].mxu0
        %v4487 = vadd.f32 0.0, %v4486
        %v4488 = vpop.f32.mrb[0].mxu0
        %4489 = vmatprep.mubr.bf16.mxu0 0
        %4490 = vmatmul.mubr.bf16.gmra.mrb[0].mxu0 %v4225
        %v4491 = vpop.f32.mrb[0].mxu0
        %v4492 = vadd.f32 0.0, %v4491
        %v4493 = vpop.f32.mrb[0].mxu0
        %v4494 = vpop.f32.mrb[0].mxu0
        %v4495 = vadd.f32 0.0, %v4494
        %v4496 = vpop.f32.mrb[0].mxu0
        %4497 = vmatprep.mubr.bf16.mxu0 0
        %4498 = vmatmul.mubr.bf16.gmra.mrb[0].mxu0 %v4226
        %v4499 = vpop.f32.mrb[0].mxu0
        %v4500 = vadd.f32 0.0, %v4499
        %v4501 = vpop.f32.mrb[0].mxu0
        %v4502 = vpop.f32.mrb[0].mxu0
        %v4503 = vadd.f32 0.0, %v4502
        %v4504 = vpop.f32.mrb[0].mxu0
        %4505 = vmatprep.mubr.bf16.mxu0 0
        %4506 = vmatmul.mubr.bf16.gmra.mrb[0].mxu0 %v4227
        %v4507 = vpop.f32.mrb[0].mxu0
        %v4508 = vadd.f32 0.0, %v4507
        %v4509 = vpop.f32.mrb[0].mxu0
        %v4510 = vpop.f32.mrb[0].mxu0
        %v4511 = vadd.f32 0.0, %v4510
        %v4512 = vpop.f32.mrb[0].mxu0
        %4513 = vmatprep.mubr.bf16.mxu0 0
        %4514 = vmatmul.mubr.bf16.gmra.mrb[0].mxu0 %v4228
        %v4515 = vpop.f32.mrb[0].mxu0
        %v4516 = vadd.f32 0.0, %v4515
        %v4517 = vpop.f32.mrb[0].mxu0
        %v4518 = vpop.f32.mrb[0].mxu0
        %v4519 = vadd.f32 0.0, %v4518
        %v4520 = vpop.f32.mrb[0].mxu0
        %4521 = vmatprep.mubr.bf16.mxu0 0
        %4522 = vmatmul.mubr.bf16.gmra.mrb[0].mxu0 %v4229
        %v4523 = vpop.f32.mrb[0].mxu0
        %v4524 = vadd.f32 0.0, %v4523
        %v4525 = vpop.f32.mrb[0].mxu0
        %v4526 = vpop.f32.mrb[0].mxu0
        %v4527 = vadd.f32 0.0, %v4526
        %v4528 = vpop.f32.mrb[0].mxu0
        %4529 = vmatprep.mubr.bf16.mxu0 0
        %4530 = vmatmul.mubr.bf16.gmra.mrb[0].mxu0 %v4230
        %v4531 = vpop.f32.mrb[0].mxu0
        %v4532 = vadd.f32 0.0, %v4531
        %v4533 = vpop.f32.mrb[0].mxu0
        %v4534 = vpop.f32.mrb[0].mxu0
        %v4535 = vadd.f32 0.0, %v4534
        %v4536 = vpop.f32.mrb[0].mxu0
        %4537 = vmatprep.mubr.bf16.mxu0 0
        %4538 = vmatmul.mubr.bf16.gmra.mrb[0].mxu0 %v4231
        %v4539 = vpop.f32.mrb[0].mxu0
        %v4540 = vadd.f32 0.0, %v4539
        %v4541 = vpop.f32.mrb[0].mxu0
        %v4542 = vpop.f32.mrb[0].mxu0
        %v4543 = vadd.f32 0.0, %v4542
        %v4544 = vpop.f32.mrb[0].mxu0
        %4545 = vmatprep.mubr.bf16.mxu0 0
        %4546 = vmatmul.mubr.bf16.gmra.mrb[0].mxu0 %v4232
        %v4547 = vpop.f32.mrb[0].mxu0
        %v4548 = vadd.f32 0.0, %v4547
        %v4549 = vpop.f32.mrb[0].mxu0
        %v4550 = vpop.f32.mrb[0].mxu0
        %v4551 = vadd.f32 0.0, %v4550
        %v4552 = vpop.f32.mrb[0].mxu0
        %4553 = vmatprep.mubr.bf16.mxu0 0
        %4554 = vmatmul.mubr.bf16.gmra.mrb[0].mxu0 %v4233
        %v4555 = vpop.f32.mrb[0].mxu0
        %v4556 = vadd.f32 0.0, %v4555
        %v4557 = vpop.f32.mrb[0].mxu0
        %v4558 = vpop.f32.mrb[0].mxu0
        %v4559 = vadd.f32 0.0, %v4558
        %v4560 = vpop.f32.mrb[0].mxu0
        %4561 = vmatprep.mubr.bf16.mxu0 0
        %4562 = vmatmul.mubr.bf16.gmra.mrb[0].mxu0 %v4234
        %v4563 = vpop.f32.mrb[0].mxu0
        %v4564 = vadd.f32 0.0, %v4563
        %v4565 = vpop.f32.mrb[0].mxu0
        %v4566 = vpop.f32.mrb[0].mxu0
        %v4567 = vadd.f32 0.0, %v4566
        %v4568 = vpop.f32.mrb[0].mxu0
        %4569 = vmatprep.mubr.bf16.mxu0 0
        %4570 = vmatmul.mubr.bf16.gmra.mrb[0].mxu0 %v4235
        %v4571 = vpop.f32.mrb[0].mxu0
        %v4572 = vadd.f32 0.0, %v4571
        %v4573 = vpop.f32.mrb[0].mxu0
        %v4574 = vpop.f32.mrb[0].mxu0
        %v4575 = vadd.f32 0.0, %v4574
        %v4576 = vpop.f32.mrb[0].mxu0
        %4577 = vmatprep.mubr.bf16.mxu0 0
        %4578 = vmatmul.mubr.bf16.gmra.mrb[0].mxu0 %v4236
        %v4579 = vpop.f32.mrb[0].mxu0
        %v4580 = vadd.f32 0.0, %v4579
        %v4581 = vpop.f32.mrb[0].mxu0
        %v4582 = vpop.f32.mrb[0].mxu0
        %v4583 = vadd.f32 0.0, %v4582
        %v4584 = vpop.f32.mrb[0].mxu0
        %4585 = vmatprep.mubr.bf16.mxu0 0
        %4586 = vmatmul.mubr.bf16.gmra.mrb[0].mxu0 %v4237
        %v4587 = vpop.f32.mrb[0].mxu0
        %v4588 = vadd.f32 0.0, %v4587
        %v4589 = vpop.f32.mrb[0].mxu0
        %v4590 = vpop.f32.mrb[0].mxu0
        %v4591 = vadd.f32 0.0, %v4590
        %v4592 = vpop.f32.mrb[0].mxu0
        %4593 = vmatprep.mubr.bf16.mxu0 0
        %4594 = vmatmul.mubr.bf16.gmra.mrb[0].mxu0 %v4238
        %v4595 = vpop.f32.mrb[0].mxu0
        %v4596 = vadd.f32 0.0, %v4595
        %v4597 = vpop.f32.mrb[0].mxu0
        %v4598 = vpop.f32.mrb[0].mxu0
        %v4599 = vadd.f32 0.0, %v4598
        %v4600 = vpop.f32.mrb[0].mxu0
        %4601 = vmatprep.mubr.bf16.mxu0 0
        %4602 = vmatmul.mubr.bf16.gmra.mrb[0].mxu0 %v4239
        %v4603 = vpop.f32.mrb[0].mxu0
        %v4604 = vadd.f32 0.0, %v4603
        %v4605 = vpop.f32.mrb[0].mxu0
        %v4606 = vpop.f32.mrb[0].mxu0
        %v4607 = vadd.f32 0.0, %v4606
        %v4608 = vpop.f32.mrb[0].mxu0
        %4609 = vmatprep.mubr.bf16.mxu0 0
        %4610 = vmatmul.mubr.bf16.gmra.mrb[0].mxu0 %v4240
        %v4611 = vpop.f32.mrb[0].mxu0
        %v4612 = vadd.f32 0.0, %v4611
        %v4613 = vpop.f32.mrb[0].mxu0
        %v4614 = vpop.f32.mrb[0].mxu0
        %v4615 = vadd.f32 0.0, %v4614
        %v4616 = vpop.f32.mrb[0].mxu0
        %4617 = vmatprep.mubr.bf16.mxu0 0
        %4618 = vmatmul.mubr.bf16.gmra.mrb[0].mxu0 %v4241
        %v4619 = vpop.f32.mrb[0].mxu0
        %v4620 = vadd.f32 0.0, %v4619
        %v4621 = vpop.f32.mrb[0].mxu0
        %v4622 = vpop.f32.mrb[0].mxu0
        %v4623 = vadd.f32 0.0, %v4622
        %v4624 = vpop.f32.mrb[0].mxu0
        %4625 = vmatprep.mubr.bf16.mxu0 0
        %4626 = vmatmul.mubr.bf16.gmra.mrb[0].mxu0 %v4242
        %v4627 = vpop.f32.mrb[0].mxu0
        %v4628 = vadd.f32 0.0, %v4627
        %v4629 = vpop.f32.mrb[0].mxu0
        %v4630 = vpop.f32.mrb[0].mxu0
        %v4631 = vadd.f32 0.0, %v4630
        %v4632 = vpop.f32.mrb[0].mxu0
        %4633 = vmatprep.mubr.bf16.mxu0 0
        %4634 = vmatmul.mubr.bf16.gmra.mrb[0].mxu0 %v4243
        %v4635 = vpop.f32.mrb[0].mxu0
        %v4636 = vadd.f32 0.0, %v4635
        %v4637 = vpop.f32.mrb[0].mxu0
        %v4638 = vpop.f32.mrb[0].mxu0
        %v4639 = vadd.f32 0.0, %v4638
        %v4640 = vpop.f32.mrb[0].mxu0
        %4641 = vmatprep.mubr.bf16.mxu0 0
        %4642 = vmatmul.mubr.bf16.gmra.mrb[0].mxu0 %v4244
        %v4643 = vpop.f32.mrb[0].mxu0
        %v4644 = vadd.f32 0.0, %v4643
        %v4645 = vpop.f32.mrb[0].mxu0
        %v4646 = vpop.f32.mrb[0].mxu0
        %v4647 = vadd.f32 0.0, %v4646
        %v4648 = vpop.f32.mrb[0].mxu0
        %4649 = vmatprep.mubr.bf16.mxu0 0
        %4650 = vmatmul.mubr.bf16.gmra.mrb[0].mxu0 %v4245
        %v4651 = vpop.f32.mrb[0].mxu0
        %v4652 = vadd.f32 0.0, %v4651
        %v4653 = vpop.f32.mrb[0].mxu0
        %v4654 = vpop.f32.mrb[0].mxu0
        %v4655 = vadd.f32 0.0, %v4654
        %v4656 = vpop.f32.mrb[0].mxu0
        %4657 = vmatprep.mubr.bf16.mxu0 0
        %4658 = vmatmul.mubr.bf16.gmra.mrb[0].mxu0 %v4246
        %v4659 = vpop.f32.mrb[0].mxu0
        %v4660 = vadd.f32 0.0, %v4659
        %v4661 = vpop.f32.mrb[0].mxu0
        %v4662 = vpop.f32.mrb[0].mxu0
        %v4663 = vadd.f32 0.0, %v4662
        %v4664 = vpop.f32.mrb[0].mxu0
        %4665 = vmatprep.mubr.bf16.mxu0 0
        %4666 = vmatmul.mubr.bf16.gmra.mrb[0].mxu0 %v4247
        %v4667 = vpop.f32.mrb[0].mxu0
        %v4668 = vadd.f32 0.0, %v4667
        %v4669 = vpop.f32.mrb[0].mxu0
        %v4670 = vpop.f32.mrb[0].mxu0
        %v4671 = vadd.f32 0.0, %v4670
        %v4672 = vpop.f32.mrb[0].mxu0
        %4673 = vmatprep.mubr.bf16.mxu0 0
        %4674 = vmatmul.mubr.bf16.gmra.mrb[0].mxu0 %v4248
        %v4675 = vpop.f32.mrb[0].mxu0
        %v4676 = vadd.f32 0.0, %v4675
        %v4677 = vpop.f32.mrb[0].mxu0
        %v4678 = vpop.f32.mrb[0].mxu0
        %v4679 = vadd.f32 0.0, %v4678
        %v4680 = vpop.f32.mrb[0].mxu0
        %4681 = vmatprep.mubr.bf16.mxu0 0
        %4682 = vmatmul.mubr.bf16.gmra.mrb[0].mxu0 %v4249
        %v4683 = vpop.f32.mrb[0].mxu0
        %v4684 = vadd.f32 0.0, %v4683
        %v4685 = vpop.f32.mrb[0].mxu0
        %v4686 = vpop.f32.mrb[0].mxu0
        %v4687 = vadd.f32 0.0, %v4686
        %v4688 = vpop.f32.mrb[0].mxu0
        %4689 = vmatprep.mubr.bf16.mxu0 0
        %4690 = vmatmul.mubr.bf16.gmra.mrb[0].mxu0 %v4250
        %v4691 = vpop.f32.mrb[0].mxu0
        %v4692 = vadd.f32 0.0, %v4691
        %v4693 = vpop.f32.mrb[0].mxu0
        %v4694 = vpop.f32.mrb[0].mxu0
        %v4695 = vadd.f32 0.0, %v4694
        %v4696 = vpop.f32.mrb[0].mxu0
        %4697 = vmatprep.mubr.bf16.mxu0 0
        %4698 = vmatmul.mubr.bf16.gmra.mrb[0].mxu0 %v4251
        %v4699 = vpop.f32.mrb[0].mxu0
        %v4700 = vadd.f32 0.0, %v4699
        %v4701 = vpop.f32.mrb[0].mxu0
        %v4702 = vpop.f32.mrb[0].mxu0
        %v4703 = vadd.f32 0.0, %v4702
        %v4704 = vpop.f32.mrb[0].mxu0
        %4705 = vmatprep.mubr.bf16.mxu0 0
        %4706 = vmatmul.mubr.bf16.gmra.mrb[0].mxu0 %v4252
        %v4707 = vpop.f32.mrb[0].mxu0
        %v4708 = vadd.f32 0.0, %v4707
        %v4709 = vpop.f32.mrb[0].mxu0
        %v4710 = vpop.f32.mrb[0].mxu0
        %v4711 = vadd.f32 0.0, %v4710
        %v4712 = vpop.f32.mrb[0].mxu0
        %4713 = vmatprep.mubr.bf16.mxu0 0
        %4714 = vmatmul.mubr.bf16.gmra.mrb[0].mxu0 %v4253
        %v4715 = vpop.f32.mrb[0].mxu0
        %v4716 = vadd.f32 0.0, %v4715
        %v4717 = vpop.f32.mrb[0].mxu0
        %v4718 = vpop.f32.mrb[0].mxu0
        %v4719 = vadd.f32 0.0, %v4718
        %v4720 = vpop.f32.mrb[0].mxu0
        %4721 = vmatprep.mubr.bf16.mxu0 0
        %4722 = vmatmul.mubr.bf16.gmra.mrb[0].mxu0 %v4254
        %v4723 = vpop.f32.mrb[0].mxu0
        %v4724 = vadd.f32 0.0, %v4723
        %v4725 = vpop.f32.mrb[0].mxu0
        %v4726 = vpop.f32.mrb[0].mxu0
        %v4727 = vadd.f32 0.0, %v4726
        %v4728 = vpop.f32.mrb[0].mxu0
        %4729 = vmatprep.mubr.bf16.mxu0 0
        %4730 = vmatmul.mubr.bf16.gmra.mrb[0].mxu0 %v4255
        %v4731 = vpop.f32.mrb[0].mxu0
        %v4732 = vadd.f32 0.0, %v4731
        %v4733 = vpop.f32.mrb[0].mxu0
        %v4734 = vpop.f32.mrb[0].mxu0
        %v4735 = vadd.f32 0.0, %v4734
        %v4736 = vpop.f32.mrb[0].mxu0
        %4737 = vmatprep.mubr.bf16.mxu0 0
        %4738 = vmatmul.mubr.bf16.gmra.mrb[0].mxu0 %v4256
        %v4739 = vpop.f32.mrb[0].mxu0
        %v4740 = vadd.f32 0.0, %v4739
        %v4741 = vpop.f32.mrb[0].mxu0
        %v4742 = vpop.f32.mrb[0].mxu0
        %v4743 = vadd.f32 0.0, %v4742
        %v4744 = vpop.f32.mrb[0].mxu0
        %4745 = vmatprep.mubr.bf16.mxu0 0
        %4746 = vmatmul.mubr.bf16.gmra.mrb[0].mxu0 %v4257
        %v4747 = vpop.f32.mrb[0].mxu0
        %v4748 = vadd.f32 0.0, %v4747
        %v4749 = vpop.f32.mrb[0].mxu0
        %v4750 = vpop.f32.mrb[0].mxu0
        %v4751 = vadd.f32 0.0, %v4750
        %v4752 = vpop.f32.mrb[0].mxu0
        %4753 = vmatprep.mubr.bf16.mxu0 0
        %4754 = vmatmul.mubr.bf16.gmra.mrb[0].mxu0 %v4258
        %v4755 = vpop.f32.mrb[0].mxu0
        %v4756 = vadd.f32 0.0, %v4755
        %v4757 = vpop.f32.mrb[0].mxu0
        %v4758 = vpop.f32.mrb[0].mxu0
        %v4759 = vadd.f32 0.0, %v4758
        %v4760 = vpop.f32.mrb[0].mxu0
        %4761 = vmatprep.mubr.bf16.mxu0 0
        %4762 = vmatmul.mubr.bf16.gmra.mrb[0].mxu0 %v4259
        %v4763 = vpop.f32.mrb[0].mxu0
        %v4764 = vadd.f32 0.0, %v4763
        %v4765 = vpop.f32.mrb[0].mxu0
        %v4766 = vpop.f32.mrb[0].mxu0
        %v4767 = vadd.f32 0.0, %v4766
        %v4768 = vpop.f32.mrb[0].mxu0
        %4769 = vmatprep.mubr.bf16.mxu0 0
        %4770 = vmatmul.mubr.bf16.gmra.mrb[0].mxu0 %v4260
        %v4771 = vpop.f32.mrb[0].mxu0
        %v4772 = vadd.f32 0.0, %v4771
        %v4773 = vpop.f32.mrb[0].mxu0
        %v4774 = vpop.f32.mrb[0].mxu0
        %v4775 = vadd.f32 0.0, %v4774
        %v4776 = vpop.f32.mrb[0].mxu0
        %4777 = vmatprep.mubr.bf16.mxu0 0
        %4778 = vmatmul.mubr.bf16.gmra.mrb[0].mxu0 %v4261
        %v4779 = vpop.f32.mrb[0].mxu0
        %v4780 = vadd.f32 0.0, %v4779
        %v4781 = vpop.f32.mrb[0].mxu0
        %v4782 = vpop.f32.mrb[0].mxu0
        %v4783 = vadd.f32 0.0, %v4782
        %v4784 = vpop.f32.mrb[0].mxu0
        %4785 = vmatprep.mubr.bf16.mxu0 0
        %4786 = vmatmul.mubr.bf16.gmra.mrb[0].mxu0 %v4262
        %v4787 = vpop.f32.mrb[0].mxu0
        %v4788 = vadd.f32 0.0, %v4787
        %v4789 = vpop.f32.mrb[0].mxu0
        %v4790 = vpop.f32.mrb[0].mxu0
        %v4791 = vadd.f32 0.0, %v4790
        %v4792 = vpop.f32.mrb[0].mxu0
        %4793 = vmatprep.mubr.bf16.mxu0 0
        %4794 = vmatmul.mubr.bf16.gmra.mrb[0].mxu0 %v4263
        %v4795 = vpop.f32.mrb[0].mxu0
        %v4796 = vadd.f32 0.0, %v4795
        %v4797 = vpop.f32.mrb[0].mxu0
        %v4798 = vpop.f32.mrb[0].mxu0
        %v4799 = vadd.f32 0.0, %v4798
        %v4800 = vpop.f32.mrb[0].mxu0
        %4801 = vmatprep.mubr.bf16.mxu0 0
        %4802 = vmatmul.mubr.bf16.gmra.mrb[0].mxu0 %v4264
        %v4803 = vpop.f32.mrb[0].mxu0
        %v4804 = vadd.f32 0.0, %v4803
        %v4805 = vpop.f32.mrb[0].mxu0
        %v4806 = vpop.f32.mrb[0].mxu0
        %v4807 = vadd.f32 0.0, %v4806
        %v4808 = vpop.f32.mrb[0].mxu0
        %4809 = vmatprep.mubr.bf16.mxu0 0
        %4810 = vmatmul.mubr.bf16.gmra.mrb[0].mxu0 %v4265
        %v4811 = vpop.f32.mrb[0].mxu0
        %v4812 = vadd.f32 0.0, %v4811
        %v4813 = vpop.f32.mrb[0].mxu0
        %v4814 = vpop.f32.mrb[0].mxu0
        %v4815 = vadd.f32 0.0, %v4814
        %v4816 = vpop.f32.mrb[0].mxu0
        %4817 = vmatprep.mubr.bf16.mxu0 0
        %4818 = vmatmul.mubr.bf16.gmra.mrb[0].mxu0 %v4266
        %v4819 = vpop.f32.mrb[0].mxu0
        %v4820 = vadd.f32 0.0, %v4819
        %v4821 = vpop.f32.mrb[0].mxu0
        %v4822 = vpop.f32.mrb[0].mxu0
        %v4823 = vadd.f32 0.0, %v4822
        %v4824 = vpop.f32.mrb[0].mxu0
        %4825 = vmatprep.mubr.bf16.mxu0 0
        %4826 = vmatmul.mubr.bf16.gmra.mrb[0].mxu0 %v4267
        %v4827 = vpop.f32.mrb[0].mxu0
        %v4828 = vadd.f32 0.0, %v4827
        %v4829 = vpop.f32.mrb[0].mxu0
        %v4830 = vpop.f32.mrb[0].mxu0
        %v4831 = vadd.f32 0.0, %v4830
        %v4832 = vpop.f32.mrb[0].mxu0
        %4833 = vmatprep.mubr.bf16.mxu0 0
        %4834 = vmatmul.mubr.bf16.gmra.mrb[0].mxu0 %v4268
        %v4835 = vpop.f32.mrb[0].mxu0
        %v4836 = vadd.f32 0.0, %v4835
        %v4837 = vpop.f32.mrb[0].mxu0
        %v4838 = vpop.f32.mrb[0].mxu0
        %v4839 = vadd.f32 0.0, %v4838
        %v4840 = vpop.f32.mrb[0].mxu0
        %4841 = vmatprep.mubr.bf16.mxu0 0
        %4842 = vmatmul.mubr.bf16.gmra.mrb[0].mxu0 %v4269
        %v4843 = vpop.f32.mrb[0].mxu0
        %v4844 = vadd.f32 0.0, %v4843
        %v4845 = vpop.f32.mrb[0].mxu0
        %v4846 = vpop.f32.mrb[0].mxu0
        %v4847 = vadd.f32 0.0, %v4846
        %v4848 = vpop.f32.mrb[0].mxu0
        %4849 = vmatprep.mubr.bf16.mxu0 0
        %4850 = vmatmul.mubr.bf16.gmra.mrb[0].mxu0 %v4270
        %v4851 = vpop.f32.mrb[0].mxu0
        %v4852 = vadd.f32 0.0, %v4851
        %v4853 = vpop.f32.mrb[0].mxu0
        %v4854 = vpop.f32.mrb[0].mxu0
        %v4855 = vadd.f32 0.0, %v4854
        %v4856 = vpop.f32.mrb[0].mxu0
        %4857 = vmatprep.mubr.bf16.mxu0 0
        %4858 = vmatmul.mubr.bf16.gmra.mrb[0].mxu0 %v4271
        %v4859 = vpop.f32.mrb[0].mxu0
        %v4860 = vadd.f32 0.0, %v4859
        %v4861 = vpop.f32.mrb[0].mxu0
        %v4862 = vpop.f32.mrb[0].mxu0
        %v4863 = vadd.f32 0.0, %v4862
        %v4864 = vpop.f32.mrb[0].mxu0
        %4865 = vmatprep.mubr.bf16.mxu0 0
        %4866 = vmatmul.mubr.bf16.gmra.mrb[0].mxu0 %v4272
        %v4867 = vpop.f32.mrb[0].mxu0
        %v4868 = vadd.f32 0.0, %v4867
        %v4869 = vpop.f32.mrb[0].mxu0
        %v4870 = vpop.f32.mrb[0].mxu0
        %v4871 = vadd.f32 0.0, %v4870
        %v4872 = vpop.f32.mrb[0].mxu0
        %4873 = vmatprep.mubr.bf16.mxu0 0
        %4874 = vmatmul.mubr.bf16.gmra.mrb[0].mxu0 %v4273
        %v4875 = vpop.f32.mrb[0].mxu0
        %v4876 = vadd.f32 0.0, %v4875
        %v4877 = vpop.f32.mrb[0].mxu0
        %v4878 = vpop.f32.mrb[0].mxu0
        %v4879 = vadd.f32 0.0, %v4878
        %v4880 = vpop.f32.mrb[0].mxu0
        %4881 = vmatprep.mubr.bf16.mxu0 0
        %4882 = vmatmul.mubr.bf16.gmra.mrb[0].mxu0 %v4274
        %v4883 = vpop.f32.mrb[0].mxu0
        %v4884 = vadd.f32 0.0, %v4883
        %v4885 = vpop.f32.mrb[0].mxu0
        %v4886 = vpop.f32.mrb[0].mxu0
        %v4887 = vadd.f32 0.0, %v4886
        %v4888 = vpop.f32.mrb[0].mxu0
        %4889 = vmatprep.mubr.bf16.mxu0 0
        %4890 = vmatmul.mubr.bf16.gmra.mrb[0].mxu0 %v4275
        %v4891 = vpop.f32.mrb[0].mxu0
        %v4892 = vadd.f32 0.0, %v4891
        %v4893 = vpop.f32.mrb[0].mxu0
        %v4894 = vpop.f32.mrb[0].mxu0
        %v4895 = vadd.f32 0.0, %v4894
        %v4896 = vpop.f32.mrb[0].mxu0
        %4897 = vmatprep.mubr.bf16.mxu0 0
        %4898 = vmatmul.mubr.bf16.gmra.mrb[0].mxu0 %v4276
        %v4899 = vpop.f32.mrb[0].mxu0
        %v4900 = vadd.f32 0.0, %v4899
        %v4901 = vpop.f32.mrb[0].mxu0
        %v4902 = vpop.f32.mrb[0].mxu0
        %v4903 = vadd.f32 0.0, %v4902
        %v4904 = vpop.f32.mrb[0].mxu0
        %4905 = vmatprep.mubr.bf16.mxu0 0
        %4906 = vmatmul.mubr.bf16.gmra.mrb[0].mxu0 %v4277
        %v4907 = vpop.f32.mrb[0].mxu0
        %v4908 = vadd.f32 0.0, %v4907
        %v4909 = vpop.f32.mrb[0].mxu0
        %v4910 = vpop.f32.mrb[0].mxu0
        %v4911 = vadd.f32 0.0, %v4910
        %v4912 = vpop.f32.mrb[0].mxu0
        %4913 = vmatprep.mubr.bf16.mxu0 0
        %4914 = vmatmul.mubr.bf16.gmra.mrb[0].mxu0 %v4278
        %v4915 = vpop.f32.mrb[0].mxu0
        %v4916 = vadd.f32 0.0, %v4915
        %v4917 = vpop.f32.mrb[0].mxu0
        %v4918 = vpop.f32.mrb[0].mxu0
        %v4919 = vadd.f32 0.0, %v4918
        %v4920 = vpop.f32.mrb[0].mxu0
        %4921 = vmatprep.mubr.bf16.mxu0 0
        %4922 = vmatmul.mubr.bf16.gmra.mrb[0].mxu0 %v4279
        %v4923 = vpop.f32.mrb[0].mxu0
        %v4924 = vadd.f32 0.0, %v4923
        %v4925 = vpop.f32.mrb[0].mxu0
        %v4926 = vpop.f32.mrb[0].mxu0
        %v4927 = vadd.f32 0.0, %v4926
        %v4928 = vpop.f32.mrb[0].mxu0
        %4929 = vmatprep.mubr.bf16.mxu0 0
        %4930 = vmatmul.mubr.bf16.gmra.mrb[0].mxu0 %v4280
        %v4931 = vpop.f32.mrb[0].mxu0
        %v4932 = vadd.f32 0.0, %v4931
        %v4933 = vpop.f32.mrb[0].mxu0
        %v4934 = vpop.f32.mrb[0].mxu0
        %v4935 = vadd.f32 0.0, %v4934
        %v4936 = vpop.f32.mrb[0].mxu0
        %4937 = vdwg.mxu0
        %v4938 = vadd.f32 %v3111, %v4428
        %v4939 = vadd.f32 %v3114, %v4431
        %v4940 = vadd.f32 %v3119, %v4436
        %v4941 = vadd.f32 %v3122, %v4439
        %v4942 = vadd.f32 %v3127, %v4444
        %v4943 = vadd.f32 %v3130, %v4447
        %v4944 = vadd.f32 %v3135, %v4452
        %v4945 = vadd.f32 %v3138, %v4455
        %v4946 = vadd.f32 %v3143, %v4460
        %v4947 = vadd.f32 %v3146, %v4463
        %v4948 = vadd.f32 %v3151, %v4468
        %v4949 = vadd.f32 %v3154, %v4471
        %v4950 = vadd.f32 %v3159, %v4476
        %v4951 = vadd.f32 %v3162, %v4479
        %v4952 = vadd.f32 %v3167, %v4484
        %v4953 = vadd.f32 %v3170, %v4487
        %v4954 = vadd.f32 %v3175, %v4492
        %v4955 = vadd.f32 %v3178, %v4495
        %v4956 = vadd.f32 %v3183, %v4500
        %v4957 = vadd.f32 %v3186, %v4503
        %v4958 = vadd.f32 %v3191, %v4508
        %v4959 = vadd.f32 %v3194, %v4511
        %v4960 = vadd.f32 %v3199, %v4516
        %v4961 = vadd.f32 %v3202, %v4519
        %v4962 = vadd.f32 %v3207, %v4524
        %v4963 = vadd.f32 %v3210, %v4527
        %v4964 = vadd.f32 %v3215, %v4532
        %v4965 = vadd.f32 %v3218, %v4535
        %v4966 = vadd.f32 %v3223, %v4540
        %v4967 = vadd.f32 %v3226, %v4543
        %v4968 = vadd.f32 %v3231, %v4548
        %v4969 = vadd.f32 %v3234, %v4551
        %v4970 = vadd.f32 %v3239, %v4556
        %v4971 = vadd.f32 %v3242, %v4559
        %v4972 = vadd.f32 %v3247, %v4564
        %v4973 = vadd.f32 %v3250, %v4567
        %v4974 = vadd.f32 %v3255, %v4572
        %v4975 = vadd.f32 %v3258, %v4575
        %v4976 = vadd.f32 %v3263, %v4580
        %v4977 = vadd.f32 %v3266, %v4583
        %v4978 = vadd.f32 %v3271, %v4588
        %v4979 = vadd.f32 %v3274, %v4591
        %v4980 = vadd.f32 %v3279, %v4596
        %v4981 = vadd.f32 %v3282, %v4599
        %v4982 = vadd.f32 %v3287, %v4604
        %v4983 = vadd.f32 %v3290, %v4607
        %v4984 = vadd.f32 %v3295, %v4612
        %v4985 = vadd.f32 %v3298, %v4615
        %v4986 = vadd.f32 %v3303, %v4620
        %v4987 = vadd.f32 %v3306, %v4623
        %v4988 = vadd.f32 %v3311, %v4628
        %v4989 = vadd.f32 %v3314, %v4631
        %v4990 = vadd.f32 %v3319, %v4636
        %v4991 = vadd.f32 %v3322, %v4639
        %v4992 = vadd.f32 %v3327, %v4644
        %v4993 = vadd.f32 %v3330, %v4647
        %v4994 = vadd.f32 %v3335, %v4652
        %v4995 = vadd.f32 %v3338, %v4655
        %v4996 = vadd.f32 %v3343, %v4660
        %v4997 = vadd.f32 %v3346, %v4663
        %v4998 = vadd.f32 %v3351, %v4668
        %v4999 = vadd.f32 %v3354, %v4671
        %v5000 = vadd.f32 %v3359, %v4676
        %v5001 = vadd.f32 %v3362, %v4679
        %v5002 = vadd.f32 %v3367, %v4684
        %v5003 = vadd.f32 %v3370, %v4687
        %v5004 = vadd.f32 %v3375, %v4692
        %v5005 = vadd.f32 %v3378, %v4695
        %v5006 = vadd.f32 %v3383, %v4700
        %v5007 = vadd.f32 %v3386, %v4703
        %v5008 = vadd.f32 %v3391, %v4708
        %v5009 = vadd.f32 %v3394, %v4711
        %v5010 = vadd.f32 %v3399, %v4716
        %v5011 = vadd.f32 %v3402, %v4719
        %v5012 = vadd.f32 %v3407, %v4724
        %v5013 = vadd.f32 %v3410, %v4727
        %v5014 = vadd.f32 %v3415, %v4732
        %v5015 = vadd.f32 %v3418, %v4735
        %v5016 = vadd.f32 %v3423, %v4740
        %v5017 = vadd.f32 %v3426, %v4743
        %v5018 = vadd.f32 %v3431, %v4748
        %v5019 = vadd.f32 %v3434, %v4751
        %v5020 = vadd.f32 %v3439, %v4756
        %v5021 = vadd.f32 %v3442, %v4759
        %v5022 = vadd.f32 %v3447, %v4764
        %v5023 = vadd.f32 %v3450, %v4767
        %v5024 = vadd.f32 %v3455, %v4772
        %v5025 = vadd.f32 %v3458, %v4775
        %v5026 = vadd.f32 %v3463, %v4780
        %v5027 = vadd.f32 %v3466, %v4783
        %v5028 = vadd.f32 %v3471, %v4788
        %v5029 = vadd.f32 %v3474, %v4791
        %v5030 = vadd.f32 %v3479, %v4796
        %v5031 = vadd.f32 %v3482, %v4799
        %v5032 = vadd.f32 %v3487, %v4804
        %v5033 = vadd.f32 %v3490, %v4807
        %v5034 = vadd.f32 %v3495, %v4812
        %v5035 = vadd.f32 %v3498, %v4815
        %v5036 = vadd.f32 %v3503, %v4820
        %v5037 = vadd.f32 %v3506, %v4823
        %v5038 = vadd.f32 %v3511, %v4828
        %v5039 = vadd.f32 %v3514, %v4831
        %v5040 = vadd.f32 %v3519, %v4836
        %v5041 = vadd.f32 %v3522, %v4839
        %v5042 = vadd.f32 %v3527, %v4844
        %v5043 = vadd.f32 %v3530, %v4847
        %v5044 = vadd.f32 %v3535, %v4852
        %v5045 = vadd.f32 %v3538, %v4855
        %v5046 = vadd.f32 %v3543, %v4860
        %v5047 = vadd.f32 %v3546, %v4863
        %v5048 = vadd.f32 %v3551, %v4868
        %v5049 = vadd.f32 %v3554, %v4871
        %v5050 = vadd.f32 %v3559, %v4876
        %v5051 = vadd.f32 %v3562, %v4879
        %v5052 = vadd.f32 %v3567, %v4884
        %v5053 = vadd.f32 %v3570, %v4887
        %v5054 = vadd.f32 %v3575, %v4892
        %v5055 = vadd.f32 %v3578, %v4895
        %v5056 = vadd.f32 %v3583, %v4900
        %v5057 = vadd.f32 %v3586, %v4903
        %v5058 = vadd.f32 %v3591, %v4908
        %v5059 = vadd.f32 %v3594, %v4911
        %v5060 = vadd.f32 %v3599, %v4916
        %v5061 = vadd.f32 %v3602, %v4919
        %v5062 = vadd.f32 %v3607, %v4924
        %v5063 = vadd.f32 %v3610, %v4927
        %v5064 = vadd.f32 %v3615, %v4932
        %v5065 = vadd.f32 %v3618, %v4935
        %s5066 = scalar_lea.vmem %s1, 192
        %v5067 = vld [vmem:[%s5066] sm:$0xf]
        %v5068 = vld [vmem:[%s5066 + $0x4] sm:$0xf]
        %v5069 = vld [vmem:[%s5066 + $0x8] sm:$0xf]
        %v5070 = vld [vmem:[%s5066 + $0xc] sm:$0xf]
        %v5071 = vld [vmem:[%s5066 + $0x10] sm:$0xf]
        %v5072 = vld [vmem:[%s5066 + $0x14] sm:$0xf]
        %v5073 = vld [vmem:[%s5066 + $0x18] sm:$0xf]
        %v5074 = vld [vmem:[%s5066 + $0x1c] sm:$0xf]
        %v5075 = vld [vmem:[%s5066 + $0x20] sm:$0xf]
        %v5076 = vld [vmem:[%s5066 + $0x24] sm:$0xf]
        %v5077 = vld [vmem:[%s5066 + $0x28] sm:$0xf]
        %v5078 = vld [vmem:[%s5066 + $0x2c] sm:$0xf]
        %v5079 = vld [vmem:[%s5066 + $0x30] sm:$0xf]
        %v5080 = vld [vmem:[%s5066 + $0x34] sm:$0xf]
        %v5081 = vld [vmem:[%s5066 + $0x38] sm:$0xf]
        %v5082 = vld [vmem:[%s5066 + $0x3c] sm:$0xf]
        %v5087 = vunpack.c.l.b16 %v341
        %v5088 = vunpack.c.l.b16 %v342
        %v5089 = vunpack.c.l.b16 %v343
        %v5090 = vunpack.c.l.b16 %v344
        %v5091 = vpack.c.b16 %v5088, %v5087
        %v5092 = vpack.c.b16 %v5090, %v5089
        %v5111 = vunpack.c.l.b16 %v5067
        %v5112 = vunpack.c.l.b16 %v5068
        %v5113 = vunpack.c.l.b16 %v5069
        %v5114 = vunpack.c.l.b16 %v5070
        %v5115 = vunpack.c.l.b16 %v5071
        %v5116 = vunpack.c.l.b16 %v5072
        %v5117 = vunpack.c.l.b16 %v5073
        %v5118 = vunpack.c.l.b16 %v5074
        %v5119 = vunpack.c.l.b16 %v5075
        %v5120 = vunpack.c.l.b16 %v5076
        %v5121 = vunpack.c.l.b16 %v5077
        %v5122 = vunpack.c.l.b16 %v5078
        %v5123 = vunpack.c.l.b16 %v5079
        %v5124 = vunpack.c.l.b16 %v5080
        %v5125 = vunpack.c.l.b16 %v5081
        %v5126 = vunpack.c.l.b16 %v5082
        %v5127 = vpack.c.b16 %v5112, %v5111
        %v5128 = vpack.c.b16 %v5114, %v5113
        %v5129 = vpack.c.b16 %v5116, %v5115
        %v5130 = vpack.c.b16 %v5118, %v5117
        %v5131 = vpack.c.b16 %v5120, %v5119
        %v5132 = vpack.c.b16 %v5122, %v5121
        %v5133 = vpack.c.b16 %v5124, %v5123
        %v5134 = vpack.c.b16 %v5126, %v5125
        %5143 = vmatprep.subr.bf16.mxu0 0
        %5144 = vmatpush1.bf16.msra.mxu0 %v5127
        %5145 = vmatprep.subr.bf16.mxu0 0
        %5146 = vmatpush1.bf16.msra.mxu0 %v5128
        %5147 = vmatprep.subr.bf16.mxu0 0
        %5148 = vmatpush1.bf16.msra.mxu0 %v5129
        %5149 = vmatprep.subr.bf16.mxu0 0
        %5150 = vmatpush1.bf16.msra.mxu0 %v5130
        %5151 = vmatprep.subr.bf16.mxu0 0
        %5152 = vmatpush1.bf16.msra.mxu0 %v5131
        %5153 = vmatprep.subr.bf16.mxu0 0
        %5154 = vmatpush1.bf16.msra.mxu0 %v5132
        %5155 = vmatprep.subr.bf16.mxu0 0
        %5156 = vmatpush1.bf16.msra.mxu0 %v5133
        %5157 = vmatprep.subr.bf16.mxu0 0
        %5158 = vmatpush1.bf16.msra.mxu0 %v5134
        %5159 = vmatprep.subr.bf16.mxu0 0
        %5160 = vmatpush1.bf16.msra.mxu0 0
        %5161 = vmatprep.subr.bf16.mxu0 0
        %5162 = vmatpush1.bf16.msra.mxu0 0
        %5163 = vmatprep.subr.bf16.mxu0 0
        %5164 = vmatpush1.bf16.msra.mxu0 0
        %5165 = vmatprep.subr.bf16.mxu0 0
        %5166 = vmatpush1.bf16.msra.mxu0 0
        %5167 = vmatprep.subr.bf16.mxu0 0
        %5168 = vmatpush1.bf16.msra.mxu0 0
        %5169 = vmatprep.subr.bf16.mxu0 0
        %5170 = vmatpush1.bf16.msra.mxu0 0
        %5171 = vmatprep.subr.bf16.mxu0 0
        %5172 = vmatpush1.bf16.msra.mxu0 0
        %5173 = vmatprep.subr.bf16.mxu0 0
        %5174 = vmatpush1.bf16.msra.mxu0 0
        %5175 = vmatprep.mubr.bf16.mxu0 0
        %5176 = vmatmul.mubr.bf16.gmra.mrb[0].mxu0 %v2902
        %v5177 = vpop.f32.mrb[0].mxu0
        %v5178 = vadd.f32 0.0, %v5177
        %v5179 = vpop.f32.mrb[0].mxu0
        %v5180 = vpop.f32.mrb[0].mxu0
        %v5181 = vadd.f32 0.0, %v5180
        %v5182 = vpop.f32.mrb[0].mxu0
        %5183 = vmatprep.mubr.bf16.mxu0 0
        %5184 = vmatmul.mubr.bf16.gmra.mrb[0].mxu0 %v2903
        %v5185 = vpop.f32.mrb[0].mxu0
        %v5186 = vadd.f32 0.0, %v5185
        %v5187 = vpop.f32.mrb[0].mxu0
        %v5188 = vpop.f32.mrb[0].mxu0
        %v5189 = vadd.f32 0.0, %v5188
        %v5190 = vpop.f32.mrb[0].mxu0
        %5191 = vmatprep.mubr.bf16.mxu0 0
        %5192 = vmatmul.mubr.bf16.gmra.mrb[0].mxu0 %v2904
        %v5193 = vpop.f32.mrb[0].mxu0
        %v5194 = vadd.f32 0.0, %v5193
        %v5195 = vpop.f32.mrb[0].mxu0
        %v5196 = vpop.f32.mrb[0].mxu0
        %v5197 = vadd.f32 0.0, %v5196
        %v5198 = vpop.f32.mrb[0].mxu0
        %5199 = vmatprep.mubr.bf16.mxu0 0
        %5200 = vmatmul.mubr.bf16.gmra.mrb[0].mxu0 %v2905
        %v5201 = vpop.f32.mrb[0].mxu0
        %v5202 = vadd.f32 0.0, %v5201
        %v5203 = vpop.f32.mrb[0].mxu0
        %v5204 = vpop.f32.mrb[0].mxu0
        %v5205 = vadd.f32 0.0, %v5204
        %v5206 = vpop.f32.mrb[0].mxu0
        %5207 = vmatprep.mubr.bf16.mxu0 0
        %5208 = vmatmul.mubr.bf16.gmra.mrb[0].mxu0 %v2906
        %v5209 = vpop.f32.mrb[0].mxu0
        %v5210 = vadd.f32 0.0, %v5209
        %v5211 = vpop.f32.mrb[0].mxu0
        %v5212 = vpop.f32.mrb[0].mxu0
        %v5213 = vadd.f32 0.0, %v5212
        %v5214 = vpop.f32.mrb[0].mxu0
        %5215 = vmatprep.mubr.bf16.mxu0 0
        %5216 = vmatmul.mubr.bf16.gmra.mrb[0].mxu0 %v2907
        %v5217 = vpop.f32.mrb[0].mxu0
        %v5218 = vadd.f32 0.0, %v5217
        %v5219 = vpop.f32.mrb[0].mxu0
        %v5220 = vpop.f32.mrb[0].mxu0
        %v5221 = vadd.f32 0.0, %v5220
        %v5222 = vpop.f32.mrb[0].mxu0
        %5223 = vmatprep.mubr.bf16.mxu0 0
        %5224 = vmatmul.mubr.bf16.gmra.mrb[0].mxu0 %v2908
        %v5225 = vpop.f32.mrb[0].mxu0
        %v5226 = vadd.f32 0.0, %v5225
        %v5227 = vpop.f32.mrb[0].mxu0
        %v5228 = vpop.f32.mrb[0].mxu0
        %v5229 = vadd.f32 0.0, %v5228
        %v5230 = vpop.f32.mrb[0].mxu0
        %5231 = vmatprep.mubr.bf16.mxu0 0
        %5232 = vmatmul.mubr.bf16.gmra.mrb[0].mxu0 %v2909
        %v5233 = vpop.f32.mrb[0].mxu0
        %v5234 = vadd.f32 0.0, %v5233
        %v5235 = vpop.f32.mrb[0].mxu0
        %v5236 = vpop.f32.mrb[0].mxu0
        %v5237 = vadd.f32 0.0, %v5236
        %v5238 = vpop.f32.mrb[0].mxu0
        %5239 = vmatprep.mubr.bf16.mxu0 0
        %5240 = vmatmul.mubr.bf16.gmra.mrb[0].mxu0 %v2910
        %v5241 = vpop.f32.mrb[0].mxu0
        %v5242 = vadd.f32 0.0, %v5241
        %v5243 = vpop.f32.mrb[0].mxu0
        %v5244 = vpop.f32.mrb[0].mxu0
        %v5245 = vadd.f32 0.0, %v5244
        %v5246 = vpop.f32.mrb[0].mxu0
        %5247 = vmatprep.mubr.bf16.mxu0 0
        %5248 = vmatmul.mubr.bf16.gmra.mrb[0].mxu0 %v2911
        %v5249 = vpop.f32.mrb[0].mxu0
        %v5250 = vadd.f32 0.0, %v5249
        %v5251 = vpop.f32.mrb[0].mxu0
        %v5252 = vpop.f32.mrb[0].mxu0
        %v5253 = vadd.f32 0.0, %v5252
        %v5254 = vpop.f32.mrb[0].mxu0
        %5255 = vmatprep.mubr.bf16.mxu0 0
        %5256 = vmatmul.mubr.bf16.gmra.mrb[0].mxu0 %v2912
        %v5257 = vpop.f32.mrb[0].mxu0
        %v5258 = vadd.f32 0.0, %v5257
        %v5259 = vpop.f32.mrb[0].mxu0
        %v5260 = vpop.f32.mrb[0].mxu0
        %v5261 = vadd.f32 0.0, %v5260
        %v5262 = vpop.f32.mrb[0].mxu0
        %5263 = vmatprep.mubr.bf16.mxu0 0
        %5264 = vmatmul.mubr.bf16.gmra.mrb[0].mxu0 %v2913
        %v5265 = vpop.f32.mrb[0].mxu0
        %v5266 = vadd.f32 0.0, %v5265
        %v5267 = vpop.f32.mrb[0].mxu0
        %v5268 = vpop.f32.mrb[0].mxu0
        %v5269 = vadd.f32 0.0, %v5268
        %v5270 = vpop.f32.mrb[0].mxu0
        %5271 = vmatprep.mubr.bf16.mxu0 0
        %5272 = vmatmul.mubr.bf16.gmra.mrb[0].mxu0 %v2914
        %v5273 = vpop.f32.mrb[0].mxu0
        %v5274 = vadd.f32 0.0, %v5273
        %v5275 = vpop.f32.mrb[0].mxu0
        %v5276 = vpop.f32.mrb[0].mxu0
        %v5277 = vadd.f32 0.0, %v5276
        %v5278 = vpop.f32.mrb[0].mxu0
        %5279 = vmatprep.mubr.bf16.mxu0 0
        %5280 = vmatmul.mubr.bf16.gmra.mrb[0].mxu0 %v2915
        %v5281 = vpop.f32.mrb[0].mxu0
        %v5282 = vadd.f32 0.0, %v5281
        %v5283 = vpop.f32.mrb[0].mxu0
        %v5284 = vpop.f32.mrb[0].mxu0
        %v5285 = vadd.f32 0.0, %v5284
        %v5286 = vpop.f32.mrb[0].mxu0
        %5287 = vmatprep.mubr.bf16.mxu0 0
        %5288 = vmatmul.mubr.bf16.gmra.mrb[0].mxu0 %v2916
        %v5289 = vpop.f32.mrb[0].mxu0
        %v5290 = vadd.f32 0.0, %v5289
        %v5291 = vpop.f32.mrb[0].mxu0
        %v5292 = vpop.f32.mrb[0].mxu0
        %v5293 = vadd.f32 0.0, %v5292
        %v5294 = vpop.f32.mrb[0].mxu0
        %5295 = vmatprep.mubr.bf16.mxu0 0
        %5296 = vmatmul.mubr.bf16.gmra.mrb[0].mxu0 %v2917
        %v5297 = vpop.f32.mrb[0].mxu0
        %v5298 = vadd.f32 0.0, %v5297
        %v5299 = vpop.f32.mrb[0].mxu0
        %v5300 = vpop.f32.mrb[0].mxu0
        %v5301 = vadd.f32 0.0, %v5300
        %v5302 = vpop.f32.mrb[0].mxu0
        %5303 = vmatprep.mubr.bf16.mxu0 0
        %5304 = vmatmul.mubr.bf16.gmra.mrb[0].mxu0 %v2918
        %v5305 = vpop.f32.mrb[0].mxu0
        %v5306 = vadd.f32 0.0, %v5305
        %v5307 = vpop.f32.mrb[0].mxu0
        %v5308 = vpop.f32.mrb[0].mxu0
        %v5309 = vadd.f32 0.0, %v5308
        %v5310 = vpop.f32.mrb[0].mxu0
        %5311 = vmatprep.mubr.bf16.mxu0 0
        %5312 = vmatmul.mubr.bf16.gmra.mrb[0].mxu0 %v2919
        %v5313 = vpop.f32.mrb[0].mxu0
        %v5314 = vadd.f32 0.0, %v5313
        %v5315 = vpop.f32.mrb[0].mxu0
        %v5316 = vpop.f32.mrb[0].mxu0
        %v5317 = vadd.f32 0.0, %v5316
        %v5318 = vpop.f32.mrb[0].mxu0
        %5319 = vmatprep.mubr.bf16.mxu0 0
        %5320 = vmatmul.mubr.bf16.gmra.mrb[0].mxu0 %v2920
        %v5321 = vpop.f32.mrb[0].mxu0
        %v5322 = vadd.f32 0.0, %v5321
        %v5323 = vpop.f32.mrb[0].mxu0
        %v5324 = vpop.f32.mrb[0].mxu0
        %v5325 = vadd.f32 0.0, %v5324
        %v5326 = vpop.f32.mrb[0].mxu0
        %5327 = vmatprep.mubr.bf16.mxu0 0
        %5328 = vmatmul.mubr.bf16.gmra.mrb[0].mxu0 %v2921
        %v5329 = vpop.f32.mrb[0].mxu0
        %v5330 = vadd.f32 0.0, %v5329
        %v5331 = vpop.f32.mrb[0].mxu0
        %v5332 = vpop.f32.mrb[0].mxu0
        %v5333 = vadd.f32 0.0, %v5332
        %v5334 = vpop.f32.mrb[0].mxu0
        %5335 = vmatprep.mubr.bf16.mxu0 0
        %5336 = vmatmul.mubr.bf16.gmra.mrb[0].mxu0 %v2922
        %v5337 = vpop.f32.mrb[0].mxu0
        %v5338 = vadd.f32 0.0, %v5337
        %v5339 = vpop.f32.mrb[0].mxu0
        %v5340 = vpop.f32.mrb[0].mxu0
        %v5341 = vadd.f32 0.0, %v5340
        %v5342 = vpop.f32.mrb[0].mxu0
        %5343 = vmatprep.mubr.bf16.mxu0 0
        %5344 = vmatmul.mubr.bf16.gmra.mrb[0].mxu0 %v2923
        %v5345 = vpop.f32.mrb[0].mxu0
        %v5346 = vadd.f32 0.0, %v5345
        %v5347 = vpop.f32.mrb[0].mxu0
        %v5348 = vpop.f32.mrb[0].mxu0
        %v5349 = vadd.f32 0.0, %v5348
        %v5350 = vpop.f32.mrb[0].mxu0
        %5351 = vmatprep.mubr.bf16.mxu0 0
        %5352 = vmatmul.mubr.bf16.gmra.mrb[0].mxu0 %v2924
        %v5353 = vpop.f32.mrb[0].mxu0
        %v5354 = vadd.f32 0.0, %v5353
        %v5355 = vpop.f32.mrb[0].mxu0
        %v5356 = vpop.f32.mrb[0].mxu0
        %v5357 = vadd.f32 0.0, %v5356
        %v5358 = vpop.f32.mrb[0].mxu0
        %5359 = vmatprep.mubr.bf16.mxu0 0
        %5360 = vmatmul.mubr.bf16.gmra.mrb[0].mxu0 %v2925
        %v5361 = vpop.f32.mrb[0].mxu0
        %v5362 = vadd.f32 0.0, %v5361
        %v5363 = vpop.f32.mrb[0].mxu0
        %v5364 = vpop.f32.mrb[0].mxu0
        %v5365 = vadd.f32 0.0, %v5364
        %v5366 = vpop.f32.mrb[0].mxu0
        %5367 = vmatprep.mubr.bf16.mxu0 0
        %5368 = vmatmul.mubr.bf16.gmra.mrb[0].mxu0 %v2926
        %v5369 = vpop.f32.mrb[0].mxu0
        %v5370 = vadd.f32 0.0, %v5369
        %v5371 = vpop.f32.mrb[0].mxu0
        %v5372 = vpop.f32.mrb[0].mxu0
        %v5373 = vadd.f32 0.0, %v5372
        %v5374 = vpop.f32.mrb[0].mxu0
        %5375 = vmatprep.mubr.bf16.mxu0 0
        %5376 = vmatmul.mubr.bf16.gmra.mrb[0].mxu0 %v2927
        %v5377 = vpop.f32.mrb[0].mxu0
        %v5378 = vadd.f32 0.0, %v5377
        %v5379 = vpop.f32.mrb[0].mxu0
        %v5380 = vpop.f32.mrb[0].mxu0
        %v5381 = vadd.f32 0.0, %v5380
        %v5382 = vpop.f32.mrb[0].mxu0
        %5383 = vmatprep.mubr.bf16.mxu0 0
        %5384 = vmatmul.mubr.bf16.gmra.mrb[0].mxu0 %v2928
        %v5385 = vpop.f32.mrb[0].mxu0
        %v5386 = vadd.f32 0.0, %v5385
        %v5387 = vpop.f32.mrb[0].mxu0
        %v5388 = vpop.f32.mrb[0].mxu0
        %v5389 = vadd.f32 0.0, %v5388
        %v5390 = vpop.f32.mrb[0].mxu0
        %5391 = vmatprep.mubr.bf16.mxu0 0
        %5392 = vmatmul.mubr.bf16.gmra.mrb[0].mxu0 %v2929
        %v5393 = vpop.f32.mrb[0].mxu0
        %v5394 = vadd.f32 0.0, %v5393
        %v5395 = vpop.f32.mrb[0].mxu0
        %v5396 = vpop.f32.mrb[0].mxu0
        %v5397 = vadd.f32 0.0, %v5396
        %v5398 = vpop.f32.mrb[0].mxu0
        %5399 = vmatprep.mubr.bf16.mxu0 0
        %5400 = vmatmul.mubr.bf16.gmra.mrb[0].mxu0 %v2930
        %v5401 = vpop.f32.mrb[0].mxu0
        %v5402 = vadd.f32 0.0, %v5401
        %v5403 = vpop.f32.mrb[0].mxu0
        %v5404 = vpop.f32.mrb[0].mxu0
        %v5405 = vadd.f32 0.0, %v5404
        %v5406 = vpop.f32.mrb[0].mxu0
        %5407 = vmatprep.mubr.bf16.mxu0 0
        %5408 = vmatmul.mubr.bf16.gmra.mrb[0].mxu0 %v2931
        %v5409 = vpop.f32.mrb[0].mxu0
        %v5410 = vadd.f32 0.0, %v5409
        %v5411 = vpop.f32.mrb[0].mxu0
        %v5412 = vpop.f32.mrb[0].mxu0
        %v5413 = vadd.f32 0.0, %v5412
        %v5414 = vpop.f32.mrb[0].mxu0
        %5415 = vmatprep.mubr.bf16.mxu0 0
        %5416 = vmatmul.mubr.bf16.gmra.mrb[0].mxu0 %v2932
        %v5417 = vpop.f32.mrb[0].mxu0
        %v5418 = vadd.f32 0.0, %v5417
        %v5419 = vpop.f32.mrb[0].mxu0
        %v5420 = vpop.f32.mrb[0].mxu0
        %v5421 = vadd.f32 0.0, %v5420
        %v5422 = vpop.f32.mrb[0].mxu0
        %5423 = vmatprep.mubr.bf16.mxu0 0
        %5424 = vmatmul.mubr.bf16.gmra.mrb[0].mxu0 %v2933
        %v5425 = vpop.f32.mrb[0].mxu0
        %v5426 = vadd.f32 0.0, %v5425
        %v5427 = vpop.f32.mrb[0].mxu0
        %v5428 = vpop.f32.mrb[0].mxu0
        %v5429 = vadd.f32 0.0, %v5428
        %v5430 = vpop.f32.mrb[0].mxu0
        %5431 = vmatprep.mubr.bf16.mxu0 0
        %5432 = vmatmul.mubr.bf16.gmra.mrb[0].mxu0 %v2934
        %v5433 = vpop.f32.mrb[0].mxu0
        %v5434 = vadd.f32 0.0, %v5433
        %v5435 = vpop.f32.mrb[0].mxu0
        %v5436 = vpop.f32.mrb[0].mxu0
        %v5437 = vadd.f32 0.0, %v5436
        %v5438 = vpop.f32.mrb[0].mxu0
        %5439 = vmatprep.mubr.bf16.mxu0 0
        %5440 = vmatmul.mubr.bf16.gmra.mrb[0].mxu0 %v2935
        %v5441 = vpop.f32.mrb[0].mxu0
        %v5442 = vadd.f32 0.0, %v5441
        %v5443 = vpop.f32.mrb[0].mxu0
        %v5444 = vpop.f32.mrb[0].mxu0
        %v5445 = vadd.f32 0.0, %v5444
        %v5446 = vpop.f32.mrb[0].mxu0
        %5447 = vmatprep.mubr.bf16.mxu0 0
        %5448 = vmatmul.mubr.bf16.gmra.mrb[0].mxu0 %v2936
        %v5449 = vpop.f32.mrb[0].mxu0
        %v5450 = vadd.f32 0.0, %v5449
        %v5451 = vpop.f32.mrb[0].mxu0
        %v5452 = vpop.f32.mrb[0].mxu0
        %v5453 = vadd.f32 0.0, %v5452
        %v5454 = vpop.f32.mrb[0].mxu0
        %5455 = vmatprep.mubr.bf16.mxu0 0
        %5456 = vmatmul.mubr.bf16.gmra.mrb[0].mxu0 %v2937
        %v5457 = vpop.f32.mrb[0].mxu0
        %v5458 = vadd.f32 0.0, %v5457
        %v5459 = vpop.f32.mrb[0].mxu0
        %v5460 = vpop.f32.mrb[0].mxu0
        %v5461 = vadd.f32 0.0, %v5460
        %v5462 = vpop.f32.mrb[0].mxu0
        %5463 = vmatprep.mubr.bf16.mxu0 0
        %5464 = vmatmul.mubr.bf16.gmra.mrb[0].mxu0 %v2938
        %v5465 = vpop.f32.mrb[0].mxu0
        %v5466 = vadd.f32 0.0, %v5465
        %v5467 = vpop.f32.mrb[0].mxu0
        %v5468 = vpop.f32.mrb[0].mxu0
        %v5469 = vadd.f32 0.0, %v5468
        %v5470 = vpop.f32.mrb[0].mxu0
        %5471 = vmatprep.mubr.bf16.mxu0 0
        %5472 = vmatmul.mubr.bf16.gmra.mrb[0].mxu0 %v2939
        %v5473 = vpop.f32.mrb[0].mxu0
        %v5474 = vadd.f32 0.0, %v5473
        %v5475 = vpop.f32.mrb[0].mxu0
        %v5476 = vpop.f32.mrb[0].mxu0
        %v5477 = vadd.f32 0.0, %v5476
        %v5478 = vpop.f32.mrb[0].mxu0
        %5479 = vmatprep.mubr.bf16.mxu0 0
        %5480 = vmatmul.mubr.bf16.gmra.mrb[0].mxu0 %v2940
        %v5481 = vpop.f32.mrb[0].mxu0
        %v5482 = vadd.f32 0.0, %v5481
        %v5483 = vpop.f32.mrb[0].mxu0
        %v5484 = vpop.f32.mrb[0].mxu0
        %v5485 = vadd.f32 0.0, %v5484
        %v5486 = vpop.f32.mrb[0].mxu0
        %5487 = vmatprep.mubr.bf16.mxu0 0
        %5488 = vmatmul.mubr.bf16.gmra.mrb[0].mxu0 %v2941
        %v5489 = vpop.f32.mrb[0].mxu0
        %v5490 = vadd.f32 0.0, %v5489
        %v5491 = vpop.f32.mrb[0].mxu0
        %v5492 = vpop.f32.mrb[0].mxu0
        %v5493 = vadd.f32 0.0, %v5492
        %v5494 = vpop.f32.mrb[0].mxu0
        %5495 = vmatprep.mubr.bf16.mxu0 0
        %5496 = vmatmul.mubr.bf16.gmra.mrb[0].mxu0 %v2942
        %v5497 = vpop.f32.mrb[0].mxu0
        %v5498 = vadd.f32 0.0, %v5497
        %v5499 = vpop.f32.mrb[0].mxu0
        %v5500 = vpop.f32.mrb[0].mxu0
        %v5501 = vadd.f32 0.0, %v5500
        %v5502 = vpop.f32.mrb[0].mxu0
        %5503 = vmatprep.mubr.bf16.mxu0 0
        %5504 = vmatmul.mubr.bf16.gmra.mrb[0].mxu0 %v2943
        %v5505 = vpop.f32.mrb[0].mxu0
        %v5506 = vadd.f32 0.0, %v5505
        %v5507 = vpop.f32.mrb[0].mxu0
        %v5508 = vpop.f32.mrb[0].mxu0
        %v5509 = vadd.f32 0.0, %v5508
        %v5510 = vpop.f32.mrb[0].mxu0
        %5511 = vmatprep.mubr.bf16.mxu0 0
        %5512 = vmatmul.mubr.bf16.gmra.mrb[0].mxu0 %v2944
        %v5513 = vpop.f32.mrb[0].mxu0
        %v5514 = vadd.f32 0.0, %v5513
        %v5515 = vpop.f32.mrb[0].mxu0
        %v5516 = vpop.f32.mrb[0].mxu0
        %v5517 = vadd.f32 0.0, %v5516
        %v5518 = vpop.f32.mrb[0].mxu0
        %5519 = vmatprep.mubr.bf16.mxu0 0
        %5520 = vmatmul.mubr.bf16.gmra.mrb[0].mxu0 %v2945
        %v5521 = vpop.f32.mrb[0].mxu0
        %v5522 = vadd.f32 0.0, %v5521
        %v5523 = vpop.f32.mrb[0].mxu0
        %v5524 = vpop.f32.mrb[0].mxu0
        %v5525 = vadd.f32 0.0, %v5524
        %v5526 = vpop.f32.mrb[0].mxu0
        %5527 = vmatprep.mubr.bf16.mxu0 0
        %5528 = vmatmul.mubr.bf16.gmra.mrb[0].mxu0 %v2946
        %v5529 = vpop.f32.mrb[0].mxu0
        %v5530 = vadd.f32 0.0, %v5529
        %v5531 = vpop.f32.mrb[0].mxu0
        %v5532 = vpop.f32.mrb[0].mxu0
        %v5533 = vadd.f32 0.0, %v5532
        %v5534 = vpop.f32.mrb[0].mxu0
        %5535 = vmatprep.mubr.bf16.mxu0 0
        %5536 = vmatmul.mubr.bf16.gmra.mrb[0].mxu0 %v2947
        %v5537 = vpop.f32.mrb[0].mxu0
        %v5538 = vadd.f32 0.0, %v5537
        %v5539 = vpop.f32.mrb[0].mxu0
        %v5540 = vpop.f32.mrb[0].mxu0
        %v5541 = vadd.f32 0.0, %v5540
        %v5542 = vpop.f32.mrb[0].mxu0
        %5543 = vmatprep.mubr.bf16.mxu0 0
        %5544 = vmatmul.mubr.bf16.gmra.mrb[0].mxu0 %v2948
        %v5545 = vpop.f32.mrb[0].mxu0
        %v5546 = vadd.f32 0.0, %v5545
        %v5547 = vpop.f32.mrb[0].mxu0
        %v5548 = vpop.f32.mrb[0].mxu0
        %v5549 = vadd.f32 0.0, %v5548
        %v5550 = vpop.f32.mrb[0].mxu0
        %5551 = vmatprep.mubr.bf16.mxu0 0
        %5552 = vmatmul.mubr.bf16.gmra.mrb[0].mxu0 %v2949
        %v5553 = vpop.f32.mrb[0].mxu0
        %v5554 = vadd.f32 0.0, %v5553
        %v5555 = vpop.f32.mrb[0].mxu0
        %v5556 = vpop.f32.mrb[0].mxu0
        %v5557 = vadd.f32 0.0, %v5556
        %v5558 = vpop.f32.mrb[0].mxu0
        %5559 = vmatprep.mubr.bf16.mxu0 0
        %5560 = vmatmul.mubr.bf16.gmra.mrb[0].mxu0 %v2950
        %v5561 = vpop.f32.mrb[0].mxu0
        %v5562 = vadd.f32 0.0, %v5561
        %v5563 = vpop.f32.mrb[0].mxu0
        %v5564 = vpop.f32.mrb[0].mxu0
        %v5565 = vadd.f32 0.0, %v5564
        %v5566 = vpop.f32.mrb[0].mxu0
        %5567 = vmatprep.mubr.bf16.mxu0 0
        %5568 = vmatmul.mubr.bf16.gmra.mrb[0].mxu0 %v2951
        %v5569 = vpop.f32.mrb[0].mxu0
        %v5570 = vadd.f32 0.0, %v5569
        %v5571 = vpop.f32.mrb[0].mxu0
        %v5572 = vpop.f32.mrb[0].mxu0
        %v5573 = vadd.f32 0.0, %v5572
        %v5574 = vpop.f32.mrb[0].mxu0
        %5575 = vmatprep.mubr.bf16.mxu0 0
        %5576 = vmatmul.mubr.bf16.gmra.mrb[0].mxu0 %v2952
        %v5577 = vpop.f32.mrb[0].mxu0
        %v5578 = vadd.f32 0.0, %v5577
        %v5579 = vpop.f32.mrb[0].mxu0
        %v5580 = vpop.f32.mrb[0].mxu0
        %v5581 = vadd.f32 0.0, %v5580
        %v5582 = vpop.f32.mrb[0].mxu0
        %5583 = vmatprep.mubr.bf16.mxu0 0
        %5584 = vmatmul.mubr.bf16.gmra.mrb[0].mxu0 %v2953
        %v5585 = vpop.f32.mrb[0].mxu0
        %v5586 = vadd.f32 0.0, %v5585
        %v5587 = vpop.f32.mrb[0].mxu0
        %v5588 = vpop.f32.mrb[0].mxu0
        %v5589 = vadd.f32 0.0, %v5588
        %v5590 = vpop.f32.mrb[0].mxu0
        %5591 = vmatprep.mubr.bf16.mxu0 0
        %5592 = vmatmul.mubr.bf16.gmra.mrb[0].mxu0 %v2954
        %v5593 = vpop.f32.mrb[0].mxu0
        %v5594 = vadd.f32 0.0, %v5593
        %v5595 = vpop.f32.mrb[0].mxu0
        %v5596 = vpop.f32.mrb[0].mxu0
        %v5597 = vadd.f32 0.0, %v5596
        %v5598 = vpop.f32.mrb[0].mxu0
        %5599 = vmatprep.mubr.bf16.mxu0 0
        %5600 = vmatmul.mubr.bf16.gmra.mrb[0].mxu0 %v2955
        %v5601 = vpop.f32.mrb[0].mxu0
        %v5602 = vadd.f32 0.0, %v5601
        %v5603 = vpop.f32.mrb[0].mxu0
        %v5604 = vpop.f32.mrb[0].mxu0
        %v5605 = vadd.f32 0.0, %v5604
        %v5606 = vpop.f32.mrb[0].mxu0
        %5607 = vmatprep.mubr.bf16.mxu0 0
        %5608 = vmatmul.mubr.bf16.gmra.mrb[0].mxu0 %v2956
        %v5609 = vpop.f32.mrb[0].mxu0
        %v5610 = vadd.f32 0.0, %v5609
        %v5611 = vpop.f32.mrb[0].mxu0
        %v5612 = vpop.f32.mrb[0].mxu0
        %v5613 = vadd.f32 0.0, %v5612
        %v5614 = vpop.f32.mrb[0].mxu0
        %5615 = vmatprep.mubr.bf16.mxu0 0
        %5616 = vmatmul.mubr.bf16.gmra.mrb[0].mxu0 %v2957
        %v5617 = vpop.f32.mrb[0].mxu0
        %v5618 = vadd.f32 0.0, %v5617
        %v5619 = vpop.f32.mrb[0].mxu0
        %v5620 = vpop.f32.mrb[0].mxu0
        %v5621 = vadd.f32 0.0, %v5620
        %v5622 = vpop.f32.mrb[0].mxu0
        %5623 = vmatprep.mubr.bf16.mxu0 0
        %5624 = vmatmul.mubr.bf16.gmra.mrb[0].mxu0 %v2958
        %v5625 = vpop.f32.mrb[0].mxu0
        %v5626 = vadd.f32 0.0, %v5625
        %v5627 = vpop.f32.mrb[0].mxu0
        %v5628 = vpop.f32.mrb[0].mxu0
        %v5629 = vadd.f32 0.0, %v5628
        %v5630 = vpop.f32.mrb[0].mxu0
        %5631 = vmatprep.mubr.bf16.mxu0 0
        %5632 = vmatmul.mubr.bf16.gmra.mrb[0].mxu0 %v2959
        %v5633 = vpop.f32.mrb[0].mxu0
        %v5634 = vadd.f32 0.0, %v5633
        %v5635 = vpop.f32.mrb[0].mxu0
        %v5636 = vpop.f32.mrb[0].mxu0
        %v5637 = vadd.f32 0.0, %v5636
        %v5638 = vpop.f32.mrb[0].mxu0
        %5639 = vmatprep.mubr.bf16.mxu0 0
        %5640 = vmatmul.mubr.bf16.gmra.mrb[0].mxu0 %v2960
        %v5641 = vpop.f32.mrb[0].mxu0
        %v5642 = vadd.f32 0.0, %v5641
        %v5643 = vpop.f32.mrb[0].mxu0
        %v5644 = vpop.f32.mrb[0].mxu0
        %v5645 = vadd.f32 0.0, %v5644
        %v5646 = vpop.f32.mrb[0].mxu0
        %5647 = vmatprep.mubr.bf16.mxu0 0
        %5648 = vmatmul.mubr.bf16.gmra.mrb[0].mxu0 %v2961
        %v5649 = vpop.f32.mrb[0].mxu0
        %v5650 = vadd.f32 0.0, %v5649
        %v5651 = vpop.f32.mrb[0].mxu0
        %v5652 = vpop.f32.mrb[0].mxu0
        %v5653 = vadd.f32 0.0, %v5652
        %v5654 = vpop.f32.mrb[0].mxu0
        %5655 = vmatprep.mubr.bf16.mxu0 0
        %5656 = vmatmul.mubr.bf16.gmra.mrb[0].mxu0 %v2962
        %v5657 = vpop.f32.mrb[0].mxu0
        %v5658 = vadd.f32 0.0, %v5657
        %v5659 = vpop.f32.mrb[0].mxu0
        %v5660 = vpop.f32.mrb[0].mxu0
        %v5661 = vadd.f32 0.0, %v5660
        %v5662 = vpop.f32.mrb[0].mxu0
        %5663 = vmatprep.mubr.bf16.mxu0 0
        %5664 = vmatmul.mubr.bf16.gmra.mrb[0].mxu0 %v2963
        %v5665 = vpop.f32.mrb[0].mxu0
        %v5666 = vadd.f32 0.0, %v5665
        %v5667 = vpop.f32.mrb[0].mxu0
        %v5668 = vpop.f32.mrb[0].mxu0
        %v5669 = vadd.f32 0.0, %v5668
        %v5670 = vpop.f32.mrb[0].mxu0
        %5671 = vmatprep.mubr.bf16.mxu0 0
        %5672 = vmatmul.mubr.bf16.gmra.mrb[0].mxu0 %v5091
        %v5673 = vpop.f32.mrb[0].mxu0
        %v5674 = vadd.f32 0.0, %v5673
        %v5675 = vpop.f32.mrb[0].mxu0
        %v5676 = vpop.f32.mrb[0].mxu0
        %v5677 = vadd.f32 0.0, %v5676
        %v5678 = vpop.f32.mrb[0].mxu0
        %5679 = vmatprep.mubr.bf16.mxu0 0
        %5680 = vmatmul.mubr.bf16.gmra.mrb[0].mxu0 %v5092
        %v5681 = vpop.f32.mrb[0].mxu0
        %v5682 = vadd.f32 0.0, %v5681
        %v5683 = vpop.f32.mrb[0].mxu0
        %v5684 = vpop.f32.mrb[0].mxu0
        %v5685 = vadd.f32 0.0, %v5684
        %v5686 = vpop.f32.mrb[0].mxu0
        %5687 = vdwg.mxu0
        %v5688 = vadd.f32 %v4938, %v5178
        %v5689 = vadd.f32 %v4939, %v5181
        %v5690 = vadd.f32 %v4940, %v5186
        %v5691 = vadd.f32 %v4941, %v5189
        %v5692 = vadd.f32 %v4942, %v5194
        %v5693 = vadd.f32 %v4943, %v5197
        %v5694 = vadd.f32 %v4944, %v5202
        %v5695 = vadd.f32 %v4945, %v5205
        %v5696 = vadd.f32 %v4946, %v5210
        %v5697 = vadd.f32 %v4947, %v5213
        %v5698 = vadd.f32 %v4948, %v5218
        %v5699 = vadd.f32 %v4949, %v5221
        %v5700 = vadd.f32 %v4950, %v5226
        %v5701 = vadd.f32 %v4951, %v5229
        %v5702 = vadd.f32 %v4952, %v5234
        %v5703 = vadd.f32 %v4953, %v5237
        %v5704 = vadd.f32 %v4954, %v5242
        %v5705 = vadd.f32 %v4955, %v5245
        %v5706 = vadd.f32 %v4956, %v5250
        %v5707 = vadd.f32 %v4957, %v5253
        %v5708 = vadd.f32 %v4958, %v5258
        %v5709 = vadd.f32 %v4959, %v5261
        %v5710 = vadd.f32 %v4960, %v5266
        %v5711 = vadd.f32 %v4961, %v5269
        %v5712 = vadd.f32 %v4962, %v5274
        %v5713 = vadd.f32 %v4963, %v5277
        %v5714 = vadd.f32 %v4964, %v5282
        %v5715 = vadd.f32 %v4965, %v5285
        %v5716 = vadd.f32 %v4966, %v5290
        %v5717 = vadd.f32 %v4967, %v5293
        %v5718 = vadd.f32 %v4968, %v5298
        %v5719 = vadd.f32 %v4969, %v5301
        %v5720 = vadd.f32 %v4970, %v5306
        %v5721 = vadd.f32 %v4971, %v5309
        %v5722 = vadd.f32 %v4972, %v5314
        %v5723 = vadd.f32 %v4973, %v5317
        %v5724 = vadd.f32 %v4974, %v5322
        %v5725 = vadd.f32 %v4975, %v5325
        %v5726 = vadd.f32 %v4976, %v5330
        %v5727 = vadd.f32 %v4977, %v5333
        %v5728 = vadd.f32 %v4978, %v5338
        %v5729 = vadd.f32 %v4979, %v5341
        %v5730 = vadd.f32 %v4980, %v5346
        %v5731 = vadd.f32 %v4981, %v5349
        %v5732 = vadd.f32 %v4982, %v5354
        %v5733 = vadd.f32 %v4983, %v5357
        %v5734 = vadd.f32 %v4984, %v5362
        %v5735 = vadd.f32 %v4985, %v5365
        %v5736 = vadd.f32 %v4986, %v5370
        %v5737 = vadd.f32 %v4987, %v5373
        %v5738 = vadd.f32 %v4988, %v5378
        %v5739 = vadd.f32 %v4989, %v5381
        %v5740 = vadd.f32 %v4990, %v5386
        %v5741 = vadd.f32 %v4991, %v5389
        %v5742 = vadd.f32 %v4992, %v5394
        %v5743 = vadd.f32 %v4993, %v5397
        %v5744 = vadd.f32 %v4994, %v5402
        %v5745 = vadd.f32 %v4995, %v5405
        %v5746 = vadd.f32 %v4996, %v5410
        %v5747 = vadd.f32 %v4997, %v5413
        %v5748 = vadd.f32 %v4998, %v5418
        %v5749 = vadd.f32 %v4999, %v5421
        %v5750 = vadd.f32 %v5000, %v5426
        %v5751 = vadd.f32 %v5001, %v5429
        %v5752 = vadd.f32 %v5002, %v5434
        %v5753 = vadd.f32 %v5003, %v5437
        %v5754 = vadd.f32 %v5004, %v5442
        %v5755 = vadd.f32 %v5005, %v5445
        %v5756 = vadd.f32 %v5006, %v5450
        %v5757 = vadd.f32 %v5007, %v5453
        %v5758 = vadd.f32 %v5008, %v5458
        %v5759 = vadd.f32 %v5009, %v5461
        %v5760 = vadd.f32 %v5010, %v5466
        %v5761 = vadd.f32 %v5011, %v5469
        %v5762 = vadd.f32 %v5012, %v5474
        %v5763 = vadd.f32 %v5013, %v5477
        %v5764 = vadd.f32 %v5014, %v5482
        %v5765 = vadd.f32 %v5015, %v5485
        %v5766 = vadd.f32 %v5016, %v5490
        %v5767 = vadd.f32 %v5017, %v5493
        %v5768 = vadd.f32 %v5018, %v5498
        %v5769 = vadd.f32 %v5019, %v5501
        %v5770 = vadd.f32 %v5020, %v5506
        %v5771 = vadd.f32 %v5021, %v5509
        %v5772 = vadd.f32 %v5022, %v5514
        %v5773 = vadd.f32 %v5023, %v5517
        %v5774 = vadd.f32 %v5024, %v5522
        %v5775 = vadd.f32 %v5025, %v5525
        %v5776 = vadd.f32 %v5026, %v5530
        %v5777 = vadd.f32 %v5027, %v5533
        %v5778 = vadd.f32 %v5028, %v5538
        %v5779 = vadd.f32 %v5029, %v5541
        %v5780 = vadd.f32 %v5030, %v5546
        %v5781 = vadd.f32 %v5031, %v5549
        %v5782 = vadd.f32 %v5032, %v5554
        %v5783 = vadd.f32 %v5033, %v5557
        %v5784 = vadd.f32 %v5034, %v5562
        %v5785 = vadd.f32 %v5035, %v5565
        %v5786 = vadd.f32 %v5036, %v5570
        %v5787 = vadd.f32 %v5037, %v5573
        %v5788 = vadd.f32 %v5038, %v5578
        %v5789 = vadd.f32 %v5039, %v5581
        %v5790 = vadd.f32 %v5040, %v5586
        %v5791 = vadd.f32 %v5041, %v5589
        %v5792 = vadd.f32 %v5042, %v5594
        %v5793 = vadd.f32 %v5043, %v5597
        %v5794 = vadd.f32 %v5044, %v5602
        %v5795 = vadd.f32 %v5045, %v5605
        %v5796 = vadd.f32 %v5046, %v5610
        %v5797 = vadd.f32 %v5047, %v5613
        %v5798 = vadd.f32 %v5048, %v5618
        %v5799 = vadd.f32 %v5049, %v5621
        %v5800 = vadd.f32 %v5050, %v5626
        %v5801 = vadd.f32 %v5051, %v5629
        %v5802 = vadd.f32 %v5052, %v5634
        %v5803 = vadd.f32 %v5053, %v5637
        %v5804 = vadd.f32 %v5054, %v5642
        %v5805 = vadd.f32 %v5055, %v5645
        %v5806 = vadd.f32 %v5056, %v5650
        %v5807 = vadd.f32 %v5057, %v5653
        %v5808 = vadd.f32 %v5058, %v5658
        %v5809 = vadd.f32 %v5059, %v5661
        %v5810 = vadd.f32 %v5060, %v5666
        %v5811 = vadd.f32 %v5061, %v5669
        %v5812 = vadd.f32 %v5062, %v5674
        %v5813 = vadd.f32 %v5063, %v5677
        %v5814 = vadd.f32 %v5064, %v5682
        %v5815 = vadd.f32 %v5065, %v5685
        %v5817 = vshrl.u32 %v341, 16
        %v5819 = vrot.slane %v5817, 4
        %v5820 = vshll.u32 %v341, 16
        %v5822 = vrot.slane %v5820, 5
        %v5823 = vor.u32 %v5819, %v5822
        %v5824 = vrot.slane %v5823, 4
        %v5826 = vshll.u32 %v342, 16
        %v5828 = vrot.slane %v5826, 5
        %v5829 = vsel %vm369, %v5824, %v5828
        %v5830 = vshrl.u32 %v342, 16
        %v5832 = vrot.slane %v5830, 4
        %v5833 = vor.u32 %v5832, %v5828
        %v5834 = vrot.slane %v5833, 4
        %v5836 = vshll.u32 %v343, 16
        %v5838 = vrot.slane %v5836, 5
        %v5839 = vsel %vm369, %v5834, %v5838
        %v5840 = vshrl.u32 %v343, 16
        %v5842 = vrot.slane %v5840, 4
        %v5843 = vor.u32 %v5842, %v5838
        %v5844 = vrot.slane %v5843, 4
        %v5846 = vshll.u32 %v344, 16
        %v5848 = vrot.slane %v5846, 5
        %v5849 = vsel %vm369, %v5844, %v5848
        %v5850 = vshrl.u32 %v344, 16
        %v5852 = vrot.slane %v5850, 4
        %v5853 = vor.u32 %v5852, %v5848
        %v5854 = vrot.slane %v5853, 4
        %v5856 = vshll.u32 %v345, 16
        %v5858 = vrot.slane %v5856, 5
        %v5859 = vsel %vm369, %v5854, %v5858
        %s5860 = scalar_lea.vmem %s1, 256
        %v5861 = vld [vmem:[%s5860] sm:$0xf]
        %v5862 = vld [vmem:[%s5860 + $0x4] sm:$0xf]
        %v5863 = vld [vmem:[%s5860 + $0x8] sm:$0xf]
        %v5864 = vld [vmem:[%s5860 + $0xc] sm:$0xf]
        %v5865 = vld [vmem:[%s5860 + $0x10] sm:$0xf]
        %v5866 = vld [vmem:[%s5860 + $0x14] sm:$0xf]
        %v5867 = vld [vmem:[%s5860 + $0x18] sm:$0xf]
        %v5868 = vld [vmem:[%s5860 + $0x1c] sm:$0xf]
        %v5869 = vld [vmem:[%s5860 + $0x20] sm:$0xf]
        %v5870 = vld [vmem:[%s5860 + $0x24] sm:$0xf]
        %v5871 = vld [vmem:[%s5860 + $0x28] sm:$0xf]
        %v5872 = vld [vmem:[%s5860 + $0x2c] sm:$0xf]
        %v5873 = vld [vmem:[%s5860 + $0x30] sm:$0xf]
        %v5874 = vld [vmem:[%s5860 + $0x34] sm:$0xf]
        %v5875 = vld [vmem:[%s5860 + $0x38] sm:$0xf]
        %v5876 = vld [vmem:[%s5860 + $0x3c] sm:$0xf]
        %v5877 = vunpack.c.l.b16 %v5829
        %v5878 = vunpack.c.l.b16 %v5839
        %v5879 = vunpack.c.l.b16 %v5849
        %v5880 = vunpack.c.l.b16 %v5859
        %v5881 = vpack.c.b16 %v5878, %v5877
        %v5882 = vpack.c.b16 %v5880, %v5879
        %v5901 = vunpack.c.l.b16 %v5861
        %v5902 = vunpack.c.l.b16 %v5862
        %v5903 = vunpack.c.l.b16 %v5863
        %v5904 = vunpack.c.l.b16 %v5864
        %v5905 = vunpack.c.l.b16 %v5865
        %v5906 = vunpack.c.l.b16 %v5866
        %v5907 = vunpack.c.l.b16 %v5867
        %v5908 = vunpack.c.l.b16 %v5868
        %v5909 = vunpack.c.l.b16 %v5869
        %v5910 = vunpack.c.l.b16 %v5870
        %v5911 = vunpack.c.l.b16 %v5871
        %v5912 = vunpack.c.l.b16 %v5872
        %v5913 = vunpack.c.l.b16 %v5873
        %v5914 = vunpack.c.l.b16 %v5874
        %v5915 = vunpack.c.l.b16 %v5875
        %v5916 = vunpack.c.l.b16 %v5876
        %v5917 = vpack.c.b16 %v5902, %v5901
        %v5918 = vpack.c.b16 %v5904, %v5903
        %v5919 = vpack.c.b16 %v5906, %v5905
        %v5920 = vpack.c.b16 %v5908, %v5907
        %v5921 = vpack.c.b16 %v5910, %v5909
        %v5922 = vpack.c.b16 %v5912, %v5911
        %v5923 = vpack.c.b16 %v5914, %v5913
        %v5924 = vpack.c.b16 %v5916, %v5915
        %5933 = vmatprep.subr.bf16.mxu0 0
        %5934 = vmatpush1.bf16.msra.mxu0 %v5917
        %5935 = vmatprep.subr.bf16.mxu0 0
        %5936 = vmatpush1.bf16.msra.mxu0 %v5918
        %5937 = vmatprep.subr.bf16.mxu0 0
        %5938 = vmatpush1.bf16.msra.mxu0 %v5919
        %5939 = vmatprep.subr.bf16.mxu0 0
        %5940 = vmatpush1.bf16.msra.mxu0 %v5920
        %5941 = vmatprep.subr.bf16.mxu0 0
        %5942 = vmatpush1.bf16.msra.mxu0 %v5921
        %5943 = vmatprep.subr.bf16.mxu0 0
        %5944 = vmatpush1.bf16.msra.mxu0 %v5922
        %5945 = vmatprep.subr.bf16.mxu0 0
        %5946 = vmatpush1.bf16.msra.mxu0 %v5923
        %5947 = vmatprep.subr.bf16.mxu0 0
        %5948 = vmatpush1.bf16.msra.mxu0 %v5924
        %5949 = vmatprep.subr.bf16.mxu0 0
        %5950 = vmatpush1.bf16.msra.mxu0 0
        %5951 = vmatprep.subr.bf16.mxu0 0
        %5952 = vmatpush1.bf16.msra.mxu0 0
        %5953 = vmatprep.subr.bf16.mxu0 0
        %5954 = vmatpush1.bf16.msra.mxu0 0
        %5955 = vmatprep.subr.bf16.mxu0 0
        %5956 = vmatpush1.bf16.msra.mxu0 0
        %5957 = vmatprep.subr.bf16.mxu0 0
        %5958 = vmatpush1.bf16.msra.mxu0 0
        %5959 = vmatprep.subr.bf16.mxu0 0
        %5960 = vmatpush1.bf16.msra.mxu0 0
        %5961 = vmatprep.subr.bf16.mxu0 0
        %5962 = vmatpush1.bf16.msra.mxu0 0
        %5963 = vmatprep.subr.bf16.mxu0 0
        %5964 = vmatpush1.bf16.msra.mxu0 0
        %5965 = vmatprep.mubr.bf16.mxu0 0
        %5966 = vmatmul.mubr.bf16.gmra.mrb[0].mxu0 %v1925
        %v5967 = vpop.f32.mrb[0].mxu0
        %v5968 = vadd.f32 0.0, %v5967
        %v5969 = vpop.f32.mrb[0].mxu0
        %v5970 = vpop.f32.mrb[0].mxu0
        %v5971 = vadd.f32 0.0, %v5970
        %v5972 = vpop.f32.mrb[0].mxu0
        %5973 = vmatprep.mubr.bf16.mxu0 0
        %5974 = vmatmul.mubr.bf16.gmra.mrb[0].mxu0 %v1926
        %v5975 = vpop.f32.mrb[0].mxu0
        %v5976 = vadd.f32 0.0, %v5975
        %v5977 = vpop.f32.mrb[0].mxu0
        %v5978 = vpop.f32.mrb[0].mxu0
        %v5979 = vadd.f32 0.0, %v5978
        %v5980 = vpop.f32.mrb[0].mxu0
        %5981 = vmatprep.mubr.bf16.mxu0 0
        %5982 = vmatmul.mubr.bf16.gmra.mrb[0].mxu0 %v1927
        %v5983 = vpop.f32.mrb[0].mxu0
        %v5984 = vadd.f32 0.0, %v5983
        %v5985 = vpop.f32.mrb[0].mxu0
        %v5986 = vpop.f32.mrb[0].mxu0
        %v5987 = vadd.f32 0.0, %v5986
        %v5988 = vpop.f32.mrb[0].mxu0
        %5989 = vmatprep.mubr.bf16.mxu0 0
        %5990 = vmatmul.mubr.bf16.gmra.mrb[0].mxu0 %v1928
        %v5991 = vpop.f32.mrb[0].mxu0
        %v5992 = vadd.f32 0.0, %v5991
        %v5993 = vpop.f32.mrb[0].mxu0
        %v5994 = vpop.f32.mrb[0].mxu0
        %v5995 = vadd.f32 0.0, %v5994
        %v5996 = vpop.f32.mrb[0].mxu0
        %5997 = vmatprep.mubr.bf16.mxu0 0
        %5998 = vmatmul.mubr.bf16.gmra.mrb[0].mxu0 %v1929
        %v5999 = vpop.f32.mrb[0].mxu0
        %v6000 = vadd.f32 0.0, %v5999
        %v6001 = vpop.f32.mrb[0].mxu0
        %v6002 = vpop.f32.mrb[0].mxu0
        %v6003 = vadd.f32 0.0, %v6002
        %v6004 = vpop.f32.mrb[0].mxu0
        %6005 = vmatprep.mubr.bf16.mxu0 0
        %6006 = vmatmul.mubr.bf16.gmra.mrb[0].mxu0 %v1930
        %v6007 = vpop.f32.mrb[0].mxu0
        %v6008 = vadd.f32 0.0, %v6007
        %v6009 = vpop.f32.mrb[0].mxu0
        %v6010 = vpop.f32.mrb[0].mxu0
        %v6011 = vadd.f32 0.0, %v6010
        %v6012 = vpop.f32.mrb[0].mxu0
        %6013 = vmatprep.mubr.bf16.mxu0 0
        %6014 = vmatmul.mubr.bf16.gmra.mrb[0].mxu0 %v1931
        %v6015 = vpop.f32.mrb[0].mxu0
        %v6016 = vadd.f32 0.0, %v6015
        %v6017 = vpop.f32.mrb[0].mxu0
        %v6018 = vpop.f32.mrb[0].mxu0
        %v6019 = vadd.f32 0.0, %v6018
        %v6020 = vpop.f32.mrb[0].mxu0
        %6021 = vmatprep.mubr.bf16.mxu0 0
        %6022 = vmatmul.mubr.bf16.gmra.mrb[0].mxu0 %v1932
        %v6023 = vpop.f32.mrb[0].mxu0
        %v6024 = vadd.f32 0.0, %v6023
        %v6025 = vpop.f32.mrb[0].mxu0
        %v6026 = vpop.f32.mrb[0].mxu0
        %v6027 = vadd.f32 0.0, %v6026
        %v6028 = vpop.f32.mrb[0].mxu0
        %6029 = vmatprep.mubr.bf16.mxu0 0
        %6030 = vmatmul.mubr.bf16.gmra.mrb[0].mxu0 %v1933
        %v6031 = vpop.f32.mrb[0].mxu0
        %v6032 = vadd.f32 0.0, %v6031
        %v6033 = vpop.f32.mrb[0].mxu0
        %v6034 = vpop.f32.mrb[0].mxu0
        %v6035 = vadd.f32 0.0, %v6034
        %v6036 = vpop.f32.mrb[0].mxu0
        %6037 = vmatprep.mubr.bf16.mxu0 0
        %6038 = vmatmul.mubr.bf16.gmra.mrb[0].mxu0 %v1934
        %v6039 = vpop.f32.mrb[0].mxu0
        %v6040 = vadd.f32 0.0, %v6039
        %v6041 = vpop.f32.mrb[0].mxu0
        %v6042 = vpop.f32.mrb[0].mxu0
        %v6043 = vadd.f32 0.0, %v6042
        %v6044 = vpop.f32.mrb[0].mxu0
        %6045 = vmatprep.mubr.bf16.mxu0 0
        %6046 = vmatmul.mubr.bf16.gmra.mrb[0].mxu0 %v1935
        %v6047 = vpop.f32.mrb[0].mxu0
        %v6048 = vadd.f32 0.0, %v6047
        %v6049 = vpop.f32.mrb[0].mxu0
        %v6050 = vpop.f32.mrb[0].mxu0
        %v6051 = vadd.f32 0.0, %v6050
        %v6052 = vpop.f32.mrb[0].mxu0
        %6053 = vmatprep.mubr.bf16.mxu0 0
        %6054 = vmatmul.mubr.bf16.gmra.mrb[0].mxu0 %v1936
        %v6055 = vpop.f32.mrb[0].mxu0
        %v6056 = vadd.f32 0.0, %v6055
        %v6057 = vpop.f32.mrb[0].mxu0
        %v6058 = vpop.f32.mrb[0].mxu0
        %v6059 = vadd.f32 0.0, %v6058
        %v6060 = vpop.f32.mrb[0].mxu0
        %6061 = vmatprep.mubr.bf16.mxu0 0
        %6062 = vmatmul.mubr.bf16.gmra.mrb[0].mxu0 %v1937
        %v6063 = vpop.f32.mrb[0].mxu0
        %v6064 = vadd.f32 0.0, %v6063
        %v6065 = vpop.f32.mrb[0].mxu0
        %v6066 = vpop.f32.mrb[0].mxu0
        %v6067 = vadd.f32 0.0, %v6066
        %v6068 = vpop.f32.mrb[0].mxu0
        %6069 = vmatprep.mubr.bf16.mxu0 0
        %6070 = vmatmul.mubr.bf16.gmra.mrb[0].mxu0 %v1938
        %v6071 = vpop.f32.mrb[0].mxu0
        %v6072 = vadd.f32 0.0, %v6071
        %v6073 = vpop.f32.mrb[0].mxu0
        %v6074 = vpop.f32.mrb[0].mxu0
        %v6075 = vadd.f32 0.0, %v6074
        %v6076 = vpop.f32.mrb[0].mxu0
        %6077 = vmatprep.mubr.bf16.mxu0 0
        %6078 = vmatmul.mubr.bf16.gmra.mrb[0].mxu0 %v1939
        %v6079 = vpop.f32.mrb[0].mxu0
        %v6080 = vadd.f32 0.0, %v6079
        %v6081 = vpop.f32.mrb[0].mxu0
        %v6082 = vpop.f32.mrb[0].mxu0
        %v6083 = vadd.f32 0.0, %v6082
        %v6084 = vpop.f32.mrb[0].mxu0
        %6085 = vmatprep.mubr.bf16.mxu0 0
        %6086 = vmatmul.mubr.bf16.gmra.mrb[0].mxu0 %v1940
        %v6087 = vpop.f32.mrb[0].mxu0
        %v6088 = vadd.f32 0.0, %v6087
        %v6089 = vpop.f32.mrb[0].mxu0
        %v6090 = vpop.f32.mrb[0].mxu0
        %v6091 = vadd.f32 0.0, %v6090
        %v6092 = vpop.f32.mrb[0].mxu0
        %6093 = vmatprep.mubr.bf16.mxu0 0
        %6094 = vmatmul.mubr.bf16.gmra.mrb[0].mxu0 %v1941
        %v6095 = vpop.f32.mrb[0].mxu0
        %v6096 = vadd.f32 0.0, %v6095
        %v6097 = vpop.f32.mrb[0].mxu0
        %v6098 = vpop.f32.mrb[0].mxu0
        %v6099 = vadd.f32 0.0, %v6098
        %v6100 = vpop.f32.mrb[0].mxu0
        %6101 = vmatprep.mubr.bf16.mxu0 0
        %6102 = vmatmul.mubr.bf16.gmra.mrb[0].mxu0 %v1942
        %v6103 = vpop.f32.mrb[0].mxu0
        %v6104 = vadd.f32 0.0, %v6103
        %v6105 = vpop.f32.mrb[0].mxu0
        %v6106 = vpop.f32.mrb[0].mxu0
        %v6107 = vadd.f32 0.0, %v6106
        %v6108 = vpop.f32.mrb[0].mxu0
        %6109 = vmatprep.mubr.bf16.mxu0 0
        %6110 = vmatmul.mubr.bf16.gmra.mrb[0].mxu0 %v1943
        %v6111 = vpop.f32.mrb[0].mxu0
        %v6112 = vadd.f32 0.0, %v6111
        %v6113 = vpop.f32.mrb[0].mxu0
        %v6114 = vpop.f32.mrb[0].mxu0
        %v6115 = vadd.f32 0.0, %v6114
        %v6116 = vpop.f32.mrb[0].mxu0
        %6117 = vmatprep.mubr.bf16.mxu0 0
        %6118 = vmatmul.mubr.bf16.gmra.mrb[0].mxu0 %v1944
        %v6119 = vpop.f32.mrb[0].mxu0
        %v6120 = vadd.f32 0.0, %v6119
        %v6121 = vpop.f32.mrb[0].mxu0
        %v6122 = vpop.f32.mrb[0].mxu0
        %v6123 = vadd.f32 0.0, %v6122
        %v6124 = vpop.f32.mrb[0].mxu0
        %6125 = vmatprep.mubr.bf16.mxu0 0
        %6126 = vmatmul.mubr.bf16.gmra.mrb[0].mxu0 %v1945
        %v6127 = vpop.f32.mrb[0].mxu0
        %v6128 = vadd.f32 0.0, %v6127
        %v6129 = vpop.f32.mrb[0].mxu0
        %v6130 = vpop.f32.mrb[0].mxu0
        %v6131 = vadd.f32 0.0, %v6130
        %v6132 = vpop.f32.mrb[0].mxu0
        %6133 = vmatprep.mubr.bf16.mxu0 0
        %6134 = vmatmul.mubr.bf16.gmra.mrb[0].mxu0 %v1946
        %v6135 = vpop.f32.mrb[0].mxu0
        %v6136 = vadd.f32 0.0, %v6135
        %v6137 = vpop.f32.mrb[0].mxu0
        %v6138 = vpop.f32.mrb[0].mxu0
        %v6139 = vadd.f32 0.0, %v6138
        %v6140 = vpop.f32.mrb[0].mxu0
        %6141 = vmatprep.mubr.bf16.mxu0 0
        %6142 = vmatmul.mubr.bf16.gmra.mrb[0].mxu0 %v1947
        %v6143 = vpop.f32.mrb[0].mxu0
        %v6144 = vadd.f32 0.0, %v6143
        %v6145 = vpop.f32.mrb[0].mxu0
        %v6146 = vpop.f32.mrb[0].mxu0
        %v6147 = vadd.f32 0.0, %v6146
        %v6148 = vpop.f32.mrb[0].mxu0
        %6149 = vmatprep.mubr.bf16.mxu0 0
        %6150 = vmatmul.mubr.bf16.gmra.mrb[0].mxu0 %v1948
        %v6151 = vpop.f32.mrb[0].mxu0
        %v6152 = vadd.f32 0.0, %v6151
        %v6153 = vpop.f32.mrb[0].mxu0
        %v6154 = vpop.f32.mrb[0].mxu0
        %v6155 = vadd.f32 0.0, %v6154
        %v6156 = vpop.f32.mrb[0].mxu0
        %6157 = vmatprep.mubr.bf16.mxu0 0
        %6158 = vmatmul.mubr.bf16.gmra.mrb[0].mxu0 %v1949
        %v6159 = vpop.f32.mrb[0].mxu0
        %v6160 = vadd.f32 0.0, %v6159
        %v6161 = vpop.f32.mrb[0].mxu0
        %v6162 = vpop.f32.mrb[0].mxu0
        %v6163 = vadd.f32 0.0, %v6162
        %v6164 = vpop.f32.mrb[0].mxu0
        %6165 = vmatprep.mubr.bf16.mxu0 0
        %6166 = vmatmul.mubr.bf16.gmra.mrb[0].mxu0 %v1950
        %v6167 = vpop.f32.mrb[0].mxu0
        %v6168 = vadd.f32 0.0, %v6167
        %v6169 = vpop.f32.mrb[0].mxu0
        %v6170 = vpop.f32.mrb[0].mxu0
        %v6171 = vadd.f32 0.0, %v6170
        %v6172 = vpop.f32.mrb[0].mxu0
        %6173 = vmatprep.mubr.bf16.mxu0 0
        %6174 = vmatmul.mubr.bf16.gmra.mrb[0].mxu0 %v1951
        %v6175 = vpop.f32.mrb[0].mxu0
        %v6176 = vadd.f32 0.0, %v6175
        %v6177 = vpop.f32.mrb[0].mxu0
        %v6178 = vpop.f32.mrb[0].mxu0
        %v6179 = vadd.f32 0.0, %v6178
        %v6180 = vpop.f32.mrb[0].mxu0
        %6181 = vmatprep.mubr.bf16.mxu0 0
        %6182 = vmatmul.mubr.bf16.gmra.mrb[0].mxu0 %v1952
        %v6183 = vpop.f32.mrb[0].mxu0
        %v6184 = vadd.f32 0.0, %v6183
        %v6185 = vpop.f32.mrb[0].mxu0
        %v6186 = vpop.f32.mrb[0].mxu0
        %v6187 = vadd.f32 0.0, %v6186
        %v6188 = vpop.f32.mrb[0].mxu0
        %6189 = vmatprep.mubr.bf16.mxu0 0
        %6190 = vmatmul.mubr.bf16.gmra.mrb[0].mxu0 %v1953
        %v6191 = vpop.f32.mrb[0].mxu0
        %v6192 = vadd.f32 0.0, %v6191
        %v6193 = vpop.f32.mrb[0].mxu0
        %v6194 = vpop.f32.mrb[0].mxu0
        %v6195 = vadd.f32 0.0, %v6194
        %v6196 = vpop.f32.mrb[0].mxu0
        %6197 = vmatprep.mubr.bf16.mxu0 0
        %6198 = vmatmul.mubr.bf16.gmra.mrb[0].mxu0 %v1954
        %v6199 = vpop.f32.mrb[0].mxu0
        %v6200 = vadd.f32 0.0, %v6199
        %v6201 = vpop.f32.mrb[0].mxu0
        %v6202 = vpop.f32.mrb[0].mxu0
        %v6203 = vadd.f32 0.0, %v6202
        %v6204 = vpop.f32.mrb[0].mxu0
        %6205 = vmatprep.mubr.bf16.mxu0 0
        %6206 = vmatmul.mubr.bf16.gmra.mrb[0].mxu0 %v1955
        %v6207 = vpop.f32.mrb[0].mxu0
        %v6208 = vadd.f32 0.0, %v6207
        %v6209 = vpop.f32.mrb[0].mxu0
        %v6210 = vpop.f32.mrb[0].mxu0
        %v6211 = vadd.f32 0.0, %v6210
        %v6212 = vpop.f32.mrb[0].mxu0
        %6213 = vmatprep.mubr.bf16.mxu0 0
        %6214 = vmatmul.mubr.bf16.gmra.mrb[0].mxu0 %v1956
        %v6215 = vpop.f32.mrb[0].mxu0
        %v6216 = vadd.f32 0.0, %v6215
        %v6217 = vpop.f32.mrb[0].mxu0
        %v6218 = vpop.f32.mrb[0].mxu0
        %v6219 = vadd.f32 0.0, %v6218
        %v6220 = vpop.f32.mrb[0].mxu0
        %6221 = vmatprep.mubr.bf16.mxu0 0
        %6222 = vmatmul.mubr.bf16.gmra.mrb[0].mxu0 %v1957
        %v6223 = vpop.f32.mrb[0].mxu0
        %v6224 = vadd.f32 0.0, %v6223
        %v6225 = vpop.f32.mrb[0].mxu0
        %v6226 = vpop.f32.mrb[0].mxu0
        %v6227 = vadd.f32 0.0, %v6226
        %v6228 = vpop.f32.mrb[0].mxu0
        %6229 = vmatprep.mubr.bf16.mxu0 0
        %6230 = vmatmul.mubr.bf16.gmra.mrb[0].mxu0 %v1958
        %v6231 = vpop.f32.mrb[0].mxu0
        %v6232 = vadd.f32 0.0, %v6231
        %v6233 = vpop.f32.mrb[0].mxu0
        %v6234 = vpop.f32.mrb[0].mxu0
        %v6235 = vadd.f32 0.0, %v6234
        %v6236 = vpop.f32.mrb[0].mxu0
        %6237 = vmatprep.mubr.bf16.mxu0 0
        %6238 = vmatmul.mubr.bf16.gmra.mrb[0].mxu0 %v1959
        %v6239 = vpop.f32.mrb[0].mxu0
        %v6240 = vadd.f32 0.0, %v6239
        %v6241 = vpop.f32.mrb[0].mxu0
        %v6242 = vpop.f32.mrb[0].mxu0
        %v6243 = vadd.f32 0.0, %v6242
        %v6244 = vpop.f32.mrb[0].mxu0
        %6245 = vmatprep.mubr.bf16.mxu0 0
        %6246 = vmatmul.mubr.bf16.gmra.mrb[0].mxu0 %v1960
        %v6247 = vpop.f32.mrb[0].mxu0
        %v6248 = vadd.f32 0.0, %v6247
        %v6249 = vpop.f32.mrb[0].mxu0
        %v6250 = vpop.f32.mrb[0].mxu0
        %v6251 = vadd.f32 0.0, %v6250
        %v6252 = vpop.f32.mrb[0].mxu0
        %6253 = vmatprep.mubr.bf16.mxu0 0
        %6254 = vmatmul.mubr.bf16.gmra.mrb[0].mxu0 %v1961
        %v6255 = vpop.f32.mrb[0].mxu0
        %v6256 = vadd.f32 0.0, %v6255
        %v6257 = vpop.f32.mrb[0].mxu0
        %v6258 = vpop.f32.mrb[0].mxu0
        %v6259 = vadd.f32 0.0, %v6258
        %v6260 = vpop.f32.mrb[0].mxu0
        %6261 = vmatprep.mubr.bf16.mxu0 0
        %6262 = vmatmul.mubr.bf16.gmra.mrb[0].mxu0 %v1962
        %v6263 = vpop.f32.mrb[0].mxu0
        %v6264 = vadd.f32 0.0, %v6263
        %v6265 = vpop.f32.mrb[0].mxu0
        %v6266 = vpop.f32.mrb[0].mxu0
        %v6267 = vadd.f32 0.0, %v6266
        %v6268 = vpop.f32.mrb[0].mxu0
        %6269 = vmatprep.mubr.bf16.mxu0 0
        %6270 = vmatmul.mubr.bf16.gmra.mrb[0].mxu0 %v1963
        %v6271 = vpop.f32.mrb[0].mxu0
        %v6272 = vadd.f32 0.0, %v6271
        %v6273 = vpop.f32.mrb[0].mxu0
        %v6274 = vpop.f32.mrb[0].mxu0
        %v6275 = vadd.f32 0.0, %v6274
        %v6276 = vpop.f32.mrb[0].mxu0
        %6277 = vmatprep.mubr.bf16.mxu0 0
        %6278 = vmatmul.mubr.bf16.gmra.mrb[0].mxu0 %v1964
        %v6279 = vpop.f32.mrb[0].mxu0
        %v6280 = vadd.f32 0.0, %v6279
        %v6281 = vpop.f32.mrb[0].mxu0
        %v6282 = vpop.f32.mrb[0].mxu0
        %v6283 = vadd.f32 0.0, %v6282
        %v6284 = vpop.f32.mrb[0].mxu0
        %6285 = vmatprep.mubr.bf16.mxu0 0
        %6286 = vmatmul.mubr.bf16.gmra.mrb[0].mxu0 %v1965
        %v6287 = vpop.f32.mrb[0].mxu0
        %v6288 = vadd.f32 0.0, %v6287
        %v6289 = vpop.f32.mrb[0].mxu0
        %v6290 = vpop.f32.mrb[0].mxu0
        %v6291 = vadd.f32 0.0, %v6290
        %v6292 = vpop.f32.mrb[0].mxu0
        %6293 = vmatprep.mubr.bf16.mxu0 0
        %6294 = vmatmul.mubr.bf16.gmra.mrb[0].mxu0 %v1966
        %v6295 = vpop.f32.mrb[0].mxu0
        %v6296 = vadd.f32 0.0, %v6295
        %v6297 = vpop.f32.mrb[0].mxu0
        %v6298 = vpop.f32.mrb[0].mxu0
        %v6299 = vadd.f32 0.0, %v6298
        %v6300 = vpop.f32.mrb[0].mxu0
        %6301 = vmatprep.mubr.bf16.mxu0 0
        %6302 = vmatmul.mubr.bf16.gmra.mrb[0].mxu0 %v1967
        %v6303 = vpop.f32.mrb[0].mxu0
        %v6304 = vadd.f32 0.0, %v6303
        %v6305 = vpop.f32.mrb[0].mxu0
        %v6306 = vpop.f32.mrb[0].mxu0
        %v6307 = vadd.f32 0.0, %v6306
        %v6308 = vpop.f32.mrb[0].mxu0
        %6309 = vmatprep.mubr.bf16.mxu0 0
        %6310 = vmatmul.mubr.bf16.gmra.mrb[0].mxu0 %v1968
        %v6311 = vpop.f32.mrb[0].mxu0
        %v6312 = vadd.f32 0.0, %v6311
        %v6313 = vpop.f32.mrb[0].mxu0
        %v6314 = vpop.f32.mrb[0].mxu0
        %v6315 = vadd.f32 0.0, %v6314
        %v6316 = vpop.f32.mrb[0].mxu0
        %6317 = vmatprep.mubr.bf16.mxu0 0
        %6318 = vmatmul.mubr.bf16.gmra.mrb[0].mxu0 %v1969
        %v6319 = vpop.f32.mrb[0].mxu0
        %v6320 = vadd.f32 0.0, %v6319
        %v6321 = vpop.f32.mrb[0].mxu0
        %v6322 = vpop.f32.mrb[0].mxu0
        %v6323 = vadd.f32 0.0, %v6322
        %v6324 = vpop.f32.mrb[0].mxu0
        %6325 = vmatprep.mubr.bf16.mxu0 0
        %6326 = vmatmul.mubr.bf16.gmra.mrb[0].mxu0 %v1970
        %v6327 = vpop.f32.mrb[0].mxu0
        %v6328 = vadd.f32 0.0, %v6327
        %v6329 = vpop.f32.mrb[0].mxu0
        %v6330 = vpop.f32.mrb[0].mxu0
        %v6331 = vadd.f32 0.0, %v6330
        %v6332 = vpop.f32.mrb[0].mxu0
        %6333 = vmatprep.mubr.bf16.mxu0 0
        %6334 = vmatmul.mubr.bf16.gmra.mrb[0].mxu0 %v1971
        %v6335 = vpop.f32.mrb[0].mxu0
        %v6336 = vadd.f32 0.0, %v6335
        %v6337 = vpop.f32.mrb[0].mxu0
        %v6338 = vpop.f32.mrb[0].mxu0
        %v6339 = vadd.f32 0.0, %v6338
        %v6340 = vpop.f32.mrb[0].mxu0
        %6341 = vmatprep.mubr.bf16.mxu0 0
        %6342 = vmatmul.mubr.bf16.gmra.mrb[0].mxu0 %v1972
        %v6343 = vpop.f32.mrb[0].mxu0
        %v6344 = vadd.f32 0.0, %v6343
        %v6345 = vpop.f32.mrb[0].mxu0
        %v6346 = vpop.f32.mrb[0].mxu0
        %v6347 = vadd.f32 0.0, %v6346
        %v6348 = vpop.f32.mrb[0].mxu0
        %6349 = vmatprep.mubr.bf16.mxu0 0
        %6350 = vmatmul.mubr.bf16.gmra.mrb[0].mxu0 %v1973
        %v6351 = vpop.f32.mrb[0].mxu0
        %v6352 = vadd.f32 0.0, %v6351
        %v6353 = vpop.f32.mrb[0].mxu0
        %v6354 = vpop.f32.mrb[0].mxu0
        %v6355 = vadd.f32 0.0, %v6354
        %v6356 = vpop.f32.mrb[0].mxu0
        %6357 = vmatprep.mubr.bf16.mxu0 0
        %6358 = vmatmul.mubr.bf16.gmra.mrb[0].mxu0 %v1974
        %v6359 = vpop.f32.mrb[0].mxu0
        %v6360 = vadd.f32 0.0, %v6359
        %v6361 = vpop.f32.mrb[0].mxu0
        %v6362 = vpop.f32.mrb[0].mxu0
        %v6363 = vadd.f32 0.0, %v6362
        %v6364 = vpop.f32.mrb[0].mxu0
        %6365 = vmatprep.mubr.bf16.mxu0 0
        %6366 = vmatmul.mubr.bf16.gmra.mrb[0].mxu0 %v1975
        %v6367 = vpop.f32.mrb[0].mxu0
        %v6368 = vadd.f32 0.0, %v6367
        %v6369 = vpop.f32.mrb[0].mxu0
        %v6370 = vpop.f32.mrb[0].mxu0
        %v6371 = vadd.f32 0.0, %v6370
        %v6372 = vpop.f32.mrb[0].mxu0
        %6373 = vmatprep.mubr.bf16.mxu0 0
        %6374 = vmatmul.mubr.bf16.gmra.mrb[0].mxu0 %v1976
        %v6375 = vpop.f32.mrb[0].mxu0
        %v6376 = vadd.f32 0.0, %v6375
        %v6377 = vpop.f32.mrb[0].mxu0
        %v6378 = vpop.f32.mrb[0].mxu0
        %v6379 = vadd.f32 0.0, %v6378
        %v6380 = vpop.f32.mrb[0].mxu0
        %6381 = vmatprep.mubr.bf16.mxu0 0
        %6382 = vmatmul.mubr.bf16.gmra.mrb[0].mxu0 %v1977
        %v6383 = vpop.f32.mrb[0].mxu0
        %v6384 = vadd.f32 0.0, %v6383
        %v6385 = vpop.f32.mrb[0].mxu0
        %v6386 = vpop.f32.mrb[0].mxu0
        %v6387 = vadd.f32 0.0, %v6386
        %v6388 = vpop.f32.mrb[0].mxu0
        %6389 = vmatprep.mubr.bf16.mxu0 0
        %6390 = vmatmul.mubr.bf16.gmra.mrb[0].mxu0 %v1978
        %v6391 = vpop.f32.mrb[0].mxu0
        %v6392 = vadd.f32 0.0, %v6391
        %v6393 = vpop.f32.mrb[0].mxu0
        %v6394 = vpop.f32.mrb[0].mxu0
        %v6395 = vadd.f32 0.0, %v6394
        %v6396 = vpop.f32.mrb[0].mxu0
        %6397 = vmatprep.mubr.bf16.mxu0 0
        %6398 = vmatmul.mubr.bf16.gmra.mrb[0].mxu0 %v1979
        %v6399 = vpop.f32.mrb[0].mxu0
        %v6400 = vadd.f32 0.0, %v6399
        %v6401 = vpop.f32.mrb[0].mxu0
        %v6402 = vpop.f32.mrb[0].mxu0
        %v6403 = vadd.f32 0.0, %v6402
        %v6404 = vpop.f32.mrb[0].mxu0
        %6405 = vmatprep.mubr.bf16.mxu0 0
        %6406 = vmatmul.mubr.bf16.gmra.mrb[0].mxu0 %v1980
        %v6407 = vpop.f32.mrb[0].mxu0
        %v6408 = vadd.f32 0.0, %v6407
        %v6409 = vpop.f32.mrb[0].mxu0
        %v6410 = vpop.f32.mrb[0].mxu0
        %v6411 = vadd.f32 0.0, %v6410
        %v6412 = vpop.f32.mrb[0].mxu0
        %6413 = vmatprep.mubr.bf16.mxu0 0
        %6414 = vmatmul.mubr.bf16.gmra.mrb[0].mxu0 %v1981
        %v6415 = vpop.f32.mrb[0].mxu0
        %v6416 = vadd.f32 0.0, %v6415
        %v6417 = vpop.f32.mrb[0].mxu0
        %v6418 = vpop.f32.mrb[0].mxu0
        %v6419 = vadd.f32 0.0, %v6418
        %v6420 = vpop.f32.mrb[0].mxu0
        %6421 = vmatprep.mubr.bf16.mxu0 0
        %6422 = vmatmul.mubr.bf16.gmra.mrb[0].mxu0 %v1982
        %v6423 = vpop.f32.mrb[0].mxu0
        %v6424 = vadd.f32 0.0, %v6423
        %v6425 = vpop.f32.mrb[0].mxu0
        %v6426 = vpop.f32.mrb[0].mxu0
        %v6427 = vadd.f32 0.0, %v6426
        %v6428 = vpop.f32.mrb[0].mxu0
        %6429 = vmatprep.mubr.bf16.mxu0 0
        %6430 = vmatmul.mubr.bf16.gmra.mrb[0].mxu0 %v1983
        %v6431 = vpop.f32.mrb[0].mxu0
        %v6432 = vadd.f32 0.0, %v6431
        %v6433 = vpop.f32.mrb[0].mxu0
        %v6434 = vpop.f32.mrb[0].mxu0
        %v6435 = vadd.f32 0.0, %v6434
        %v6436 = vpop.f32.mrb[0].mxu0
        %6437 = vmatprep.mubr.bf16.mxu0 0
        %6438 = vmatmul.mubr.bf16.gmra.mrb[0].mxu0 %v1984
        %v6439 = vpop.f32.mrb[0].mxu0
        %v6440 = vadd.f32 0.0, %v6439
        %v6441 = vpop.f32.mrb[0].mxu0
        %v6442 = vpop.f32.mrb[0].mxu0
        %v6443 = vadd.f32 0.0, %v6442
        %v6444 = vpop.f32.mrb[0].mxu0
        %6445 = vmatprep.mubr.bf16.mxu0 0
        %6446 = vmatmul.mubr.bf16.gmra.mrb[0].mxu0 %v1985
        %v6447 = vpop.f32.mrb[0].mxu0
        %v6448 = vadd.f32 0.0, %v6447
        %v6449 = vpop.f32.mrb[0].mxu0
        %v6450 = vpop.f32.mrb[0].mxu0
        %v6451 = vadd.f32 0.0, %v6450
        %v6452 = vpop.f32.mrb[0].mxu0
        %6453 = vmatprep.mubr.bf16.mxu0 0
        %6454 = vmatmul.mubr.bf16.gmra.mrb[0].mxu0 %v1986
        %v6455 = vpop.f32.mrb[0].mxu0
        %v6456 = vadd.f32 0.0, %v6455
        %v6457 = vpop.f32.mrb[0].mxu0
        %v6458 = vpop.f32.mrb[0].mxu0
        %v6459 = vadd.f32 0.0, %v6458
        %v6460 = vpop.f32.mrb[0].mxu0
        %6461 = vmatprep.mubr.bf16.mxu0 0
        %6462 = vmatmul.mubr.bf16.gmra.mrb[0].mxu0 %v5881
        %v6463 = vpop.f32.mrb[0].mxu0
        %v6464 = vadd.f32 0.0, %v6463
        %v6465 = vpop.f32.mrb[0].mxu0
        %v6466 = vpop.f32.mrb[0].mxu0
        %v6467 = vadd.f32 0.0, %v6466
        %v6468 = vpop.f32.mrb[0].mxu0
        %6469 = vmatprep.mubr.bf16.mxu0 0
        %6470 = vmatmul.mubr.bf16.gmra.mrb[0].mxu0 %v5882
        %v6471 = vpop.f32.mrb[0].mxu0
        %v6472 = vadd.f32 0.0, %v6471
        %v6473 = vpop.f32.mrb[0].mxu0
        %v6474 = vpop.f32.mrb[0].mxu0
        %v6475 = vadd.f32 0.0, %v6474
        %v6476 = vpop.f32.mrb[0].mxu0
        %6477 = vdwg.mxu0
        %v6478 = vadd.f32 %v5688, %v5968
        %v6479 = vadd.f32 %v5689, %v5971
        %v6480 = vadd.f32 %v5690, %v5976
        %v6481 = vadd.f32 %v5691, %v5979
        %v6482 = vadd.f32 %v5692, %v5984
        %v6483 = vadd.f32 %v5693, %v5987
        %v6484 = vadd.f32 %v5694, %v5992
        %v6485 = vadd.f32 %v5695, %v5995
        %v6486 = vadd.f32 %v5696, %v6000
        %v6487 = vadd.f32 %v5697, %v6003
        %v6488 = vadd.f32 %v5698, %v6008
        %v6489 = vadd.f32 %v5699, %v6011
        %v6490 = vadd.f32 %v5700, %v6016
        %v6491 = vadd.f32 %v5701, %v6019
        %v6492 = vadd.f32 %v5702, %v6024
        %v6493 = vadd.f32 %v5703, %v6027
        %v6494 = vadd.f32 %v5704, %v6032
        %v6495 = vadd.f32 %v5705, %v6035
        %v6496 = vadd.f32 %v5706, %v6040
        %v6497 = vadd.f32 %v5707, %v6043
        %v6498 = vadd.f32 %v5708, %v6048
        %v6499 = vadd.f32 %v5709, %v6051
        %v6500 = vadd.f32 %v5710, %v6056
        %v6501 = vadd.f32 %v5711, %v6059
        %v6502 = vadd.f32 %v5712, %v6064
        %v6503 = vadd.f32 %v5713, %v6067
        %v6504 = vadd.f32 %v5714, %v6072
        %v6505 = vadd.f32 %v5715, %v6075
        %v6506 = vadd.f32 %v5716, %v6080
        %v6507 = vadd.f32 %v5717, %v6083
        %v6508 = vadd.f32 %v5718, %v6088
        %v6509 = vadd.f32 %v5719, %v6091
        %v6510 = vadd.f32 %v5720, %v6096
        %v6511 = vadd.f32 %v5721, %v6099
        %v6512 = vadd.f32 %v5722, %v6104
        %v6513 = vadd.f32 %v5723, %v6107
        %v6514 = vadd.f32 %v5724, %v6112
        %v6515 = vadd.f32 %v5725, %v6115
        %v6516 = vadd.f32 %v5726, %v6120
        %v6517 = vadd.f32 %v5727, %v6123
        %v6518 = vadd.f32 %v5728, %v6128
        %v6519 = vadd.f32 %v5729, %v6131
        %v6520 = vadd.f32 %v5730, %v6136
        %v6521 = vadd.f32 %v5731, %v6139
        %v6522 = vadd.f32 %v5732, %v6144
        %v6523 = vadd.f32 %v5733, %v6147
        %v6524 = vadd.f32 %v5734, %v6152
        %v6525 = vadd.f32 %v5735, %v6155
        %v6526 = vadd.f32 %v5736, %v6160
        %v6527 = vadd.f32 %v5737, %v6163
        %v6528 = vadd.f32 %v5738, %v6168
        %v6529 = vadd.f32 %v5739, %v6171
        %v6530 = vadd.f32 %v5740, %v6176
        %v6531 = vadd.f32 %v5741, %v6179
        %v6532 = vadd.f32 %v5742, %v6184
        %v6533 = vadd.f32 %v5743, %v6187
        %v6534 = vadd.f32 %v5744, %v6192
        %v6535 = vadd.f32 %v5745, %v6195
        %v6536 = vadd.f32 %v5746, %v6200
        %v6537 = vadd.f32 %v5747, %v6203
        %v6538 = vadd.f32 %v5748, %v6208
        %v6539 = vadd.f32 %v5749, %v6211
        %v6540 = vadd.f32 %v5750, %v6216
        %v6541 = vadd.f32 %v5751, %v6219
        %v6542 = vadd.f32 %v5752, %v6224
        %v6543 = vadd.f32 %v5753, %v6227
        %v6544 = vadd.f32 %v5754, %v6232
        %v6545 = vadd.f32 %v5755, %v6235
        %v6546 = vadd.f32 %v5756, %v6240
        %v6547 = vadd.f32 %v5757, %v6243
        %v6548 = vadd.f32 %v5758, %v6248
        %v6549 = vadd.f32 %v5759, %v6251
        %v6550 = vadd.f32 %v5760, %v6256
        %v6551 = vadd.f32 %v5761, %v6259
        %v6552 = vadd.f32 %v5762, %v6264
        %v6553 = vadd.f32 %v5763, %v6267
        %v6554 = vadd.f32 %v5764, %v6272
        %v6555 = vadd.f32 %v5765, %v6275
        %v6556 = vadd.f32 %v5766, %v6280
        %v6557 = vadd.f32 %v5767, %v6283
        %v6558 = vadd.f32 %v5768, %v6288
        %v6559 = vadd.f32 %v5769, %v6291
        %v6560 = vadd.f32 %v5770, %v6296
        %v6561 = vadd.f32 %v5771, %v6299
        %v6562 = vadd.f32 %v5772, %v6304
        %v6563 = vadd.f32 %v5773, %v6307
        %v6564 = vadd.f32 %v5774, %v6312
        %v6565 = vadd.f32 %v5775, %v6315
        %v6566 = vadd.f32 %v5776, %v6320
        %v6567 = vadd.f32 %v5777, %v6323
        %v6568 = vadd.f32 %v5778, %v6328
        %v6569 = vadd.f32 %v5779, %v6331
        %v6570 = vadd.f32 %v5780, %v6336
        %v6571 = vadd.f32 %v5781, %v6339
        %v6572 = vadd.f32 %v5782, %v6344
        %v6573 = vadd.f32 %v5783, %v6347
        %v6574 = vadd.f32 %v5784, %v6352
        %v6575 = vadd.f32 %v5785, %v6355
        %v6576 = vadd.f32 %v5786, %v6360
        %v6577 = vadd.f32 %v5787, %v6363
        %v6578 = vadd.f32 %v5788, %v6368
        %v6579 = vadd.f32 %v5789, %v6371
        %v6580 = vadd.f32 %v5790, %v6376
        %v6581 = vadd.f32 %v5791, %v6379
        %v6582 = vadd.f32 %v5792, %v6384
        %v6583 = vadd.f32 %v5793, %v6387
        %v6584 = vadd.f32 %v5794, %v6392
        %v6585 = vadd.f32 %v5795, %v6395
        %v6586 = vadd.f32 %v5796, %v6400
        %v6587 = vadd.f32 %v5797, %v6403
        %v6588 = vadd.f32 %v5798, %v6408
        %v6589 = vadd.f32 %v5799, %v6411
        %v6590 = vadd.f32 %v5800, %v6416
        %v6591 = vadd.f32 %v5801, %v6419
        %v6592 = vadd.f32 %v5802, %v6424
        %v6593 = vadd.f32 %v5803, %v6427
        %v6594 = vadd.f32 %v5804, %v6432
        %v6595 = vadd.f32 %v5805, %v6435
        %v6596 = vadd.f32 %v5806, %v6440
        %v6597 = vadd.f32 %v5807, %v6443
        %v6598 = vadd.f32 %v5808, %v6448
        %v6599 = vadd.f32 %v5809, %v6451
        %v6600 = vadd.f32 %v5810, %v6456
        %v6601 = vadd.f32 %v5811, %v6459
        %v6602 = vadd.f32 %v5812, %v6464
        %v6603 = vadd.f32 %v5813, %v6467
        %v6604 = vadd.f32 %v5814, %v6472
        %v6605 = vadd.f32 %v5815, %v6475
        %v6607 = vrot.slane %v341, 5
        %v6608 = vrot.slane %v6607, 4
        %v6609 = vrot.slane %v342, 5
        %v6610 = vsel %vm3655, %v6608, %v6609
        %v6611 = vrot.slane %v6609, 4
        %v6612 = vrot.slane %v343, 5
        %v6613 = vsel %vm3655, %v6611, %v6612
        %v6614 = vrot.slane %v6612, 4
        %v6615 = vrot.slane %v344, 5
        %v6616 = vsel %vm3655, %v6614, %v6615
        %v6617 = vrot.slane %v6615, 4
        %v6618 = vrot.slane %v345, 5
        %v6619 = vsel %vm3655, %v6617, %v6618
        %s6620 = scalar_lea.vmem %s1, 320
        %v6621 = vld [vmem:[%s6620] sm:$0xf]
        %v6622 = vld [vmem:[%s6620 + $0x4] sm:$0xf]
        %v6623 = vld [vmem:[%s6620 + $0x8] sm:$0xf]
        %v6624 = vld [vmem:[%s6620 + $0xc] sm:$0xf]
        %v6625 = vld [vmem:[%s6620 + $0x10] sm:$0xf]
        %v6626 = vld [vmem:[%s6620 + $0x14] sm:$0xf]
        %v6627 = vld [vmem:[%s6620 + $0x18] sm:$0xf]
        %v6628 = vld [vmem:[%s6620 + $0x1c] sm:$0xf]
        %v6629 = vld [vmem:[%s6620 + $0x20] sm:$0xf]
        %v6630 = vld [vmem:[%s6620 + $0x24] sm:$0xf]
        %v6631 = vld [vmem:[%s6620 + $0x28] sm:$0xf]
        %v6632 = vld [vmem:[%s6620 + $0x2c] sm:$0xf]
        %v6633 = vld [vmem:[%s6620 + $0x30] sm:$0xf]
        %v6634 = vld [vmem:[%s6620 + $0x34] sm:$0xf]
        %v6635 = vld [vmem:[%s6620 + $0x38] sm:$0xf]
        %v6636 = vld [vmem:[%s6620 + $0x3c] sm:$0xf]
        %v6637 = vunpack.c.l.b16 %v6610
        %v6638 = vunpack.c.l.b16 %v6613
        %v6639 = vunpack.c.l.b16 %v6616
        %v6640 = vunpack.c.l.b16 %v6619
        %v6641 = vpack.c.b16 %v6638, %v6637
        %v6642 = vpack.c.b16 %v6640, %v6639
        %v6661 = vunpack.c.l.b16 %v6621
        %v6662 = vunpack.c.l.b16 %v6622
        %v6663 = vunpack.c.l.b16 %v6623
        %v6664 = vunpack.c.l.b16 %v6624
        %v6665 = vunpack.c.l.b16 %v6625
        %v6666 = vunpack.c.l.b16 %v6626
        %v6667 = vunpack.c.l.b16 %v6627
        %v6668 = vunpack.c.l.b16 %v6628
        %v6669 = vunpack.c.l.b16 %v6629
        %v6670 = vunpack.c.l.b16 %v6630
        %v6671 = vunpack.c.l.b16 %v6631
        %v6672 = vunpack.c.l.b16 %v6632
        %v6673 = vunpack.c.l.b16 %v6633
        %v6674 = vunpack.c.l.b16 %v6634
        %v6675 = vunpack.c.l.b16 %v6635
        %v6676 = vunpack.c.l.b16 %v6636
        %v6677 = vpack.c.b16 %v6662, %v6661
        %v6678 = vpack.c.b16 %v6664, %v6663
        %v6679 = vpack.c.b16 %v6666, %v6665
        %v6680 = vpack.c.b16 %v6668, %v6667
        %v6681 = vpack.c.b16 %v6670, %v6669
        %v6682 = vpack.c.b16 %v6672, %v6671
        %v6683 = vpack.c.b16 %v6674, %v6673
        %v6684 = vpack.c.b16 %v6676, %v6675
        %6693 = vmatprep.subr.bf16.mxu0 0
        %6694 = vmatpush1.bf16.msra.mxu0 %v6677
        %6695 = vmatprep.subr.bf16.mxu0 0
        %6696 = vmatpush1.bf16.msra.mxu0 %v6678
        %6697 = vmatprep.subr.bf16.mxu0 0
        %6698 = vmatpush1.bf16.msra.mxu0 %v6679
        %6699 = vmatprep.subr.bf16.mxu0 0
        %6700 = vmatpush1.bf16.msra.mxu0 %v6680
        %6701 = vmatprep.subr.bf16.mxu0 0
        %6702 = vmatpush1.bf16.msra.mxu0 %v6681
        %6703 = vmatprep.subr.bf16.mxu0 0
        %6704 = vmatpush1.bf16.msra.mxu0 %v6682
        %6705 = vmatprep.subr.bf16.mxu0 0
        %6706 = vmatpush1.bf16.msra.mxu0 %v6683
        %6707 = vmatprep.subr.bf16.mxu0 0
        %6708 = vmatpush1.bf16.msra.mxu0 %v6684
        %6709 = vmatprep.subr.bf16.mxu0 0
        %6710 = vmatpush1.bf16.msra.mxu0 0
        %6711 = vmatprep.subr.bf16.mxu0 0
        %6712 = vmatpush1.bf16.msra.mxu0 0
        %6713 = vmatprep.subr.bf16.mxu0 0
        %6714 = vmatpush1.bf16.msra.mxu0 0
        %6715 = vmatprep.subr.bf16.mxu0 0
        %6716 = vmatpush1.bf16.msra.mxu0 0
        %6717 = vmatprep.subr.bf16.mxu0 0
        %6718 = vmatpush1.bf16.msra.mxu0 0
        %6719 = vmatprep.subr.bf16.mxu0 0
        %6720 = vmatpush1.bf16.msra.mxu0 0
        %6721 = vmatprep.subr.bf16.mxu0 0
        %6722 = vmatpush1.bf16.msra.mxu0 0
        %6723 = vmatprep.subr.bf16.mxu0 0
        %6724 = vmatpush1.bf16.msra.mxu0 0
        %6725 = vmatprep.mubr.bf16.mxu0 0
        %6726 = vmatmul.mubr.bf16.gmra.mrb[0].mxu0 %v4219
        %v6727 = vpop.f32.mrb[0].mxu0
        %v6728 = vadd.f32 0.0, %v6727
        %v6729 = vpop.f32.mrb[0].mxu0
        %v6730 = vpop.f32.mrb[0].mxu0
        %v6731 = vadd.f32 0.0, %v6730
        %v6732 = vpop.f32.mrb[0].mxu0
        %6733 = vmatprep.mubr.bf16.mxu0 0
        %6734 = vmatmul.mubr.bf16.gmra.mrb[0].mxu0 %v4220
        %v6735 = vpop.f32.mrb[0].mxu0
        %v6736 = vadd.f32 0.0, %v6735
        %v6737 = vpop.f32.mrb[0].mxu0
        %v6738 = vpop.f32.mrb[0].mxu0
        %v6739 = vadd.f32 0.0, %v6738
        %v6740 = vpop.f32.mrb[0].mxu0
        %6741 = vmatprep.mubr.bf16.mxu0 0
        %6742 = vmatmul.mubr.bf16.gmra.mrb[0].mxu0 %v4221
        %v6743 = vpop.f32.mrb[0].mxu0
        %v6744 = vadd.f32 0.0, %v6743
        %v6745 = vpop.f32.mrb[0].mxu0
        %v6746 = vpop.f32.mrb[0].mxu0
        %v6747 = vadd.f32 0.0, %v6746
        %v6748 = vpop.f32.mrb[0].mxu0
        %6749 = vmatprep.mubr.bf16.mxu0 0
        %6750 = vmatmul.mubr.bf16.gmra.mrb[0].mxu0 %v4222
        %v6751 = vpop.f32.mrb[0].mxu0
        %v6752 = vadd.f32 0.0, %v6751
        %v6753 = vpop.f32.mrb[0].mxu0
        %v6754 = vpop.f32.mrb[0].mxu0
        %v6755 = vadd.f32 0.0, %v6754
        %v6756 = vpop.f32.mrb[0].mxu0
        %6757 = vmatprep.mubr.bf16.mxu0 0
        %6758 = vmatmul.mubr.bf16.gmra.mrb[0].mxu0 %v4223
        %v6759 = vpop.f32.mrb[0].mxu0
        %v6760 = vadd.f32 0.0, %v6759
        %v6761 = vpop.f32.mrb[0].mxu0
        %v6762 = vpop.f32.mrb[0].mxu0
        %v6763 = vadd.f32 0.0, %v6762
        %v6764 = vpop.f32.mrb[0].mxu0
        %6765 = vmatprep.mubr.bf16.mxu0 0
        %6766 = vmatmul.mubr.bf16.gmra.mrb[0].mxu0 %v4224
        %v6767 = vpop.f32.mrb[0].mxu0
        %v6768 = vadd.f32 0.0, %v6767
        %v6769 = vpop.f32.mrb[0].mxu0
        %v6770 = vpop.f32.mrb[0].mxu0
        %v6771 = vadd.f32 0.0, %v6770
        %v6772 = vpop.f32.mrb[0].mxu0
        %6773 = vmatprep.mubr.bf16.mxu0 0
        %6774 = vmatmul.mubr.bf16.gmra.mrb[0].mxu0 %v4225
        %v6775 = vpop.f32.mrb[0].mxu0
        %v6776 = vadd.f32 0.0, %v6775
        %v6777 = vpop.f32.mrb[0].mxu0
        %v6778 = vpop.f32.mrb[0].mxu0
        %v6779 = vadd.f32 0.0, %v6778
        %v6780 = vpop.f32.mrb[0].mxu0
        %6781 = vmatprep.mubr.bf16.mxu0 0
        %6782 = vmatmul.mubr.bf16.gmra.mrb[0].mxu0 %v4226
        %v6783 = vpop.f32.mrb[0].mxu0
        %v6784 = vadd.f32 0.0, %v6783
        %v6785 = vpop.f32.mrb[0].mxu0
        %v6786 = vpop.f32.mrb[0].mxu0
        %v6787 = vadd.f32 0.0, %v6786
        %v6788 = vpop.f32.mrb[0].mxu0
        %6789 = vmatprep.mubr.bf16.mxu0 0
        %6790 = vmatmul.mubr.bf16.gmra.mrb[0].mxu0 %v4227
        %v6791 = vpop.f32.mrb[0].mxu0
        %v6792 = vadd.f32 0.0, %v6791
        %v6793 = vpop.f32.mrb[0].mxu0
        %v6794 = vpop.f32.mrb[0].mxu0
        %v6795 = vadd.f32 0.0, %v6794
        %v6796 = vpop.f32.mrb[0].mxu0
        %6797 = vmatprep.mubr.bf16.mxu0 0
        %6798 = vmatmul.mubr.bf16.gmra.mrb[0].mxu0 %v4228
        %v6799 = vpop.f32.mrb[0].mxu0
        %v6800 = vadd.f32 0.0, %v6799
        %v6801 = vpop.f32.mrb[0].mxu0
        %v6802 = vpop.f32.mrb[0].mxu0
        %v6803 = vadd.f32 0.0, %v6802
        %v6804 = vpop.f32.mrb[0].mxu0
        %6805 = vmatprep.mubr.bf16.mxu0 0
        %6806 = vmatmul.mubr.bf16.gmra.mrb[0].mxu0 %v4229
        %v6807 = vpop.f32.mrb[0].mxu0
        %v6808 = vadd.f32 0.0, %v6807
        %v6809 = vpop.f32.mrb[0].mxu0
        %v6810 = vpop.f32.mrb[0].mxu0
        %v6811 = vadd.f32 0.0, %v6810
        %v6812 = vpop.f32.mrb[0].mxu0
        %6813 = vmatprep.mubr.bf16.mxu0 0
        %6814 = vmatmul.mubr.bf16.gmra.mrb[0].mxu0 %v4230
        %v6815 = vpop.f32.mrb[0].mxu0
        %v6816 = vadd.f32 0.0, %v6815
        %v6817 = vpop.f32.mrb[0].mxu0
        %v6818 = vpop.f32.mrb[0].mxu0
        %v6819 = vadd.f32 0.0, %v6818
        %v6820 = vpop.f32.mrb[0].mxu0
        %6821 = vmatprep.mubr.bf16.mxu0 0
        %6822 = vmatmul.mubr.bf16.gmra.mrb[0].mxu0 %v4231
        %v6823 = vpop.f32.mrb[0].mxu0
        %v6824 = vadd.f32 0.0, %v6823
        %v6825 = vpop.f32.mrb[0].mxu0
        %v6826 = vpop.f32.mrb[0].mxu0
        %v6827 = vadd.f32 0.0, %v6826
        %v6828 = vpop.f32.mrb[0].mxu0
        %6829 = vmatprep.mubr.bf16.mxu0 0
        %6830 = vmatmul.mubr.bf16.gmra.mrb[0].mxu0 %v4232
        %v6831 = vpop.f32.mrb[0].mxu0
        %v6832 = vadd.f32 0.0, %v6831
        %v6833 = vpop.f32.mrb[0].mxu0
        %v6834 = vpop.f32.mrb[0].mxu0
        %v6835 = vadd.f32 0.0, %v6834
        %v6836 = vpop.f32.mrb[0].mxu0
        %6837 = vmatprep.mubr.bf16.mxu0 0
        %6838 = vmatmul.mubr.bf16.gmra.mrb[0].mxu0 %v4233
        %v6839 = vpop.f32.mrb[0].mxu0
        %v6840 = vadd.f32 0.0, %v6839
        %v6841 = vpop.f32.mrb[0].mxu0
        %v6842 = vpop.f32.mrb[0].mxu0
        %v6843 = vadd.f32 0.0, %v6842
        %v6844 = vpop.f32.mrb[0].mxu0
        %6845 = vmatprep.mubr.bf16.mxu0 0
        %6846 = vmatmul.mubr.bf16.gmra.mrb[0].mxu0 %v4234
        %v6847 = vpop.f32.mrb[0].mxu0
        %v6848 = vadd.f32 0.0, %v6847
        %v6849 = vpop.f32.mrb[0].mxu0
        %v6850 = vpop.f32.mrb[0].mxu0
        %v6851 = vadd.f32 0.0, %v6850
        %v6852 = vpop.f32.mrb[0].mxu0
        %6853 = vmatprep.mubr.bf16.mxu0 0
        %6854 = vmatmul.mubr.bf16.gmra.mrb[0].mxu0 %v4235
        %v6855 = vpop.f32.mrb[0].mxu0
        %v6856 = vadd.f32 0.0, %v6855
        %v6857 = vpop.f32.mrb[0].mxu0
        %v6858 = vpop.f32.mrb[0].mxu0
        %v6859 = vadd.f32 0.0, %v6858
        %v6860 = vpop.f32.mrb[0].mxu0
        %6861 = vmatprep.mubr.bf16.mxu0 0
        %6862 = vmatmul.mubr.bf16.gmra.mrb[0].mxu0 %v4236
        %v6863 = vpop.f32.mrb[0].mxu0
        %v6864 = vadd.f32 0.0, %v6863
        %v6865 = vpop.f32.mrb[0].mxu0
        %v6866 = vpop.f32.mrb[0].mxu0
        %v6867 = vadd.f32 0.0, %v6866
        %v6868 = vpop.f32.mrb[0].mxu0
        %6869 = vmatprep.mubr.bf16.mxu0 0
        %6870 = vmatmul.mubr.bf16.gmra.mrb[0].mxu0 %v4237
        %v6871 = vpop.f32.mrb[0].mxu0
        %v6872 = vadd.f32 0.0, %v6871
        %v6873 = vpop.f32.mrb[0].mxu0
        %v6874 = vpop.f32.mrb[0].mxu0
        %v6875 = vadd.f32 0.0, %v6874
        %v6876 = vpop.f32.mrb[0].mxu0
        %6877 = vmatprep.mubr.bf16.mxu0 0
        %6878 = vmatmul.mubr.bf16.gmra.mrb[0].mxu0 %v4238
        %v6879 = vpop.f32.mrb[0].mxu0
        %v6880 = vadd.f32 0.0, %v6879
        %v6881 = vpop.f32.mrb[0].mxu0
        %v6882 = vpop.f32.mrb[0].mxu0
        %v6883 = vadd.f32 0.0, %v6882
        %v6884 = vpop.f32.mrb[0].mxu0
        %6885 = vmatprep.mubr.bf16.mxu0 0
        %6886 = vmatmul.mubr.bf16.gmra.mrb[0].mxu0 %v4239
        %v6887 = vpop.f32.mrb[0].mxu0
        %v6888 = vadd.f32 0.0, %v6887
        %v6889 = vpop.f32.mrb[0].mxu0
        %v6890 = vpop.f32.mrb[0].mxu0
        %v6891 = vadd.f32 0.0, %v6890
        %v6892 = vpop.f32.mrb[0].mxu0
        %6893 = vmatprep.mubr.bf16.mxu0 0
        %6894 = vmatmul.mubr.bf16.gmra.mrb[0].mxu0 %v4240
        %v6895 = vpop.f32.mrb[0].mxu0
        %v6896 = vadd.f32 0.0, %v6895
        %v6897 = vpop.f32.mrb[0].mxu0
        %v6898 = vpop.f32.mrb[0].mxu0
        %v6899 = vadd.f32 0.0, %v6898
        %v6900 = vpop.f32.mrb[0].mxu0
        %6901 = vmatprep.mubr.bf16.mxu0 0
        %6902 = vmatmul.mubr.bf16.gmra.mrb[0].mxu0 %v4241
        %v6903 = vpop.f32.mrb[0].mxu0
        %v6904 = vadd.f32 0.0, %v6903
        %v6905 = vpop.f32.mrb[0].mxu0
        %v6906 = vpop.f32.mrb[0].mxu0
        %v6907 = vadd.f32 0.0, %v6906
        %v6908 = vpop.f32.mrb[0].mxu0
        %6909 = vmatprep.mubr.bf16.mxu0 0
        %6910 = vmatmul.mubr.bf16.gmra.mrb[0].mxu0 %v4242
        %v6911 = vpop.f32.mrb[0].mxu0
        %v6912 = vadd.f32 0.0, %v6911
        %v6913 = vpop.f32.mrb[0].mxu0
        %v6914 = vpop.f32.mrb[0].mxu0
        %v6915 = vadd.f32 0.0, %v6914
        %v6916 = vpop.f32.mrb[0].mxu0
        %6917 = vmatprep.mubr.bf16.mxu0 0
        %6918 = vmatmul.mubr.bf16.gmra.mrb[0].mxu0 %v4243
        %v6919 = vpop.f32.mrb[0].mxu0
        %v6920 = vadd.f32 0.0, %v6919
        %v6921 = vpop.f32.mrb[0].mxu0
        %v6922 = vpop.f32.mrb[0].mxu0
        %v6923 = vadd.f32 0.0, %v6922
        %v6924 = vpop.f32.mrb[0].mxu0
        %6925 = vmatprep.mubr.bf16.mxu0 0
        %6926 = vmatmul.mubr.bf16.gmra.mrb[0].mxu0 %v4244
        %v6927 = vpop.f32.mrb[0].mxu0
        %v6928 = vadd.f32 0.0, %v6927
        %v6929 = vpop.f32.mrb[0].mxu0
        %v6930 = vpop.f32.mrb[0].mxu0
        %v6931 = vadd.f32 0.0, %v6930
        %v6932 = vpop.f32.mrb[0].mxu0
        %6933 = vmatprep.mubr.bf16.mxu0 0
        %6934 = vmatmul.mubr.bf16.gmra.mrb[0].mxu0 %v4245
        %v6935 = vpop.f32.mrb[0].mxu0
        %v6936 = vadd.f32 0.0, %v6935
        %v6937 = vpop.f32.mrb[0].mxu0
        %v6938 = vpop.f32.mrb[0].mxu0
        %v6939 = vadd.f32 0.0, %v6938
        %v6940 = vpop.f32.mrb[0].mxu0
        %6941 = vmatprep.mubr.bf16.mxu0 0
        %6942 = vmatmul.mubr.bf16.gmra.mrb[0].mxu0 %v4246
        %v6943 = vpop.f32.mrb[0].mxu0
        %v6944 = vadd.f32 0.0, %v6943
        %v6945 = vpop.f32.mrb[0].mxu0
        %v6946 = vpop.f32.mrb[0].mxu0
        %v6947 = vadd.f32 0.0, %v6946
        %v6948 = vpop.f32.mrb[0].mxu0
        %6949 = vmatprep.mubr.bf16.mxu0 0
        %6950 = vmatmul.mubr.bf16.gmra.mrb[0].mxu0 %v4247
        %v6951 = vpop.f32.mrb[0].mxu0
        %v6952 = vadd.f32 0.0, %v6951
        %v6953 = vpop.f32.mrb[0].mxu0
        %v6954 = vpop.f32.mrb[0].mxu0
        %v6955 = vadd.f32 0.0, %v6954
        %v6956 = vpop.f32.mrb[0].mxu0
        %6957 = vmatprep.mubr.bf16.mxu0 0
        %6958 = vmatmul.mubr.bf16.gmra.mrb[0].mxu0 %v4248
        %v6959 = vpop.f32.mrb[0].mxu0
        %v6960 = vadd.f32 0.0, %v6959
        %v6961 = vpop.f32.mrb[0].mxu0
        %v6962 = vpop.f32.mrb[0].mxu0
        %v6963 = vadd.f32 0.0, %v6962
        %v6964 = vpop.f32.mrb[0].mxu0
        %6965 = vmatprep.mubr.bf16.mxu0 0
        %6966 = vmatmul.mubr.bf16.gmra.mrb[0].mxu0 %v4249
        %v6967 = vpop.f32.mrb[0].mxu0
        %v6968 = vadd.f32 0.0, %v6967
        %v6969 = vpop.f32.mrb[0].mxu0
        %v6970 = vpop.f32.mrb[0].mxu0
        %v6971 = vadd.f32 0.0, %v6970
        %v6972 = vpop.f32.mrb[0].mxu0
        %6973 = vmatprep.mubr.bf16.mxu0 0
        %6974 = vmatmul.mubr.bf16.gmra.mrb[0].mxu0 %v4250
        %v6975 = vpop.f32.mrb[0].mxu0
        %v6976 = vadd.f32 0.0, %v6975
        %v6977 = vpop.f32.mrb[0].mxu0
        %v6978 = vpop.f32.mrb[0].mxu0
        %v6979 = vadd.f32 0.0, %v6978
        %v6980 = vpop.f32.mrb[0].mxu0
        %6981 = vmatprep.mubr.bf16.mxu0 0
        %6982 = vmatmul.mubr.bf16.gmra.mrb[0].mxu0 %v4251
        %v6983 = vpop.f32.mrb[0].mxu0
        %v6984 = vadd.f32 0.0, %v6983
        %v6985 = vpop.f32.mrb[0].mxu0
        %v6986 = vpop.f32.mrb[0].mxu0
        %v6987 = vadd.f32 0.0, %v6986
        %v6988 = vpop.f32.mrb[0].mxu0
        %6989 = vmatprep.mubr.bf16.mxu0 0
        %6990 = vmatmul.mubr.bf16.gmra.mrb[0].mxu0 %v4252
        %v6991 = vpop.f32.mrb[0].mxu0
        %v6992 = vadd.f32 0.0, %v6991
        %v6993 = vpop.f32.mrb[0].mxu0
        %v6994 = vpop.f32.mrb[0].mxu0
        %v6995 = vadd.f32 0.0, %v6994
        %v6996 = vpop.f32.mrb[0].mxu0
        %6997 = vmatprep.mubr.bf16.mxu0 0
        %6998 = vmatmul.mubr.bf16.gmra.mrb[0].mxu0 %v4253
        %v6999 = vpop.f32.mrb[0].mxu0
        %v7000 = vadd.f32 0.0, %v6999
        %v7001 = vpop.f32.mrb[0].mxu0
        %v7002 = vpop.f32.mrb[0].mxu0
        %v7003 = vadd.f32 0.0, %v7002
        %v7004 = vpop.f32.mrb[0].mxu0
        %7005 = vmatprep.mubr.bf16.mxu0 0
        %7006 = vmatmul.mubr.bf16.gmra.mrb[0].mxu0 %v4254
        %v7007 = vpop.f32.mrb[0].mxu0
        %v7008 = vadd.f32 0.0, %v7007
        %v7009 = vpop.f32.mrb[0].mxu0
        %v7010 = vpop.f32.mrb[0].mxu0
        %v7011 = vadd.f32 0.0, %v7010
        %v7012 = vpop.f32.mrb[0].mxu0
        %7013 = vmatprep.mubr.bf16.mxu0 0
        %7014 = vmatmul.mubr.bf16.gmra.mrb[0].mxu0 %v4255
        %v7015 = vpop.f32.mrb[0].mxu0
        %v7016 = vadd.f32 0.0, %v7015
        %v7017 = vpop.f32.mrb[0].mxu0
        %v7018 = vpop.f32.mrb[0].mxu0
        %v7019 = vadd.f32 0.0, %v7018
        %v7020 = vpop.f32.mrb[0].mxu0
        %7021 = vmatprep.mubr.bf16.mxu0 0
        %7022 = vmatmul.mubr.bf16.gmra.mrb[0].mxu0 %v4256
        %v7023 = vpop.f32.mrb[0].mxu0
        %v7024 = vadd.f32 0.0, %v7023
        %v7025 = vpop.f32.mrb[0].mxu0
        %v7026 = vpop.f32.mrb[0].mxu0
        %v7027 = vadd.f32 0.0, %v7026
        %v7028 = vpop.f32.mrb[0].mxu0
        %7029 = vmatprep.mubr.bf16.mxu0 0
        %7030 = vmatmul.mubr.bf16.gmra.mrb[0].mxu0 %v4257
        %v7031 = vpop.f32.mrb[0].mxu0
        %v7032 = vadd.f32 0.0, %v7031
        %v7033 = vpop.f32.mrb[0].mxu0
        %v7034 = vpop.f32.mrb[0].mxu0
        %v7035 = vadd.f32 0.0, %v7034
        %v7036 = vpop.f32.mrb[0].mxu0
        %7037 = vmatprep.mubr.bf16.mxu0 0
        %7038 = vmatmul.mubr.bf16.gmra.mrb[0].mxu0 %v4258
        %v7039 = vpop.f32.mrb[0].mxu0
        %v7040 = vadd.f32 0.0, %v7039
        %v7041 = vpop.f32.mrb[0].mxu0
        %v7042 = vpop.f32.mrb[0].mxu0
        %v7043 = vadd.f32 0.0, %v7042
        %v7044 = vpop.f32.mrb[0].mxu0
        %7045 = vmatprep.mubr.bf16.mxu0 0
        %7046 = vmatmul.mubr.bf16.gmra.mrb[0].mxu0 %v4259
        %v7047 = vpop.f32.mrb[0].mxu0
        %v7048 = vadd.f32 0.0, %v7047
        %v7049 = vpop.f32.mrb[0].mxu0
        %v7050 = vpop.f32.mrb[0].mxu0
        %v7051 = vadd.f32 0.0, %v7050
        %v7052 = vpop.f32.mrb[0].mxu0
        %7053 = vmatprep.mubr.bf16.mxu0 0
        %7054 = vmatmul.mubr.bf16.gmra.mrb[0].mxu0 %v4260
        %v7055 = vpop.f32.mrb[0].mxu0
        %v7056 = vadd.f32 0.0, %v7055
        %v7057 = vpop.f32.mrb[0].mxu0
        %v7058 = vpop.f32.mrb[0].mxu0
        %v7059 = vadd.f32 0.0, %v7058
        %v7060 = vpop.f32.mrb[0].mxu0
        %7061 = vmatprep.mubr.bf16.mxu0 0
        %7062 = vmatmul.mubr.bf16.gmra.mrb[0].mxu0 %v4261
        %v7063 = vpop.f32.mrb[0].mxu0
        %v7064 = vadd.f32 0.0, %v7063
        %v7065 = vpop.f32.mrb[0].mxu0
        %v7066 = vpop.f32.mrb[0].mxu0
        %v7067 = vadd.f32 0.0, %v7066
        %v7068 = vpop.f32.mrb[0].mxu0
        %7069 = vmatprep.mubr.bf16.mxu0 0
        %7070 = vmatmul.mubr.bf16.gmra.mrb[0].mxu0 %v4262
        %v7071 = vpop.f32.mrb[0].mxu0
        %v7072 = vadd.f32 0.0, %v7071
        %v7073 = vpop.f32.mrb[0].mxu0
        %v7074 = vpop.f32.mrb[0].mxu0
        %v7075 = vadd.f32 0.0, %v7074
        %v7076 = vpop.f32.mrb[0].mxu0
        %7077 = vmatprep.mubr.bf16.mxu0 0
        %7078 = vmatmul.mubr.bf16.gmra.mrb[0].mxu0 %v4263
        %v7079 = vpop.f32.mrb[0].mxu0
        %v7080 = vadd.f32 0.0, %v7079
        %v7081 = vpop.f32.mrb[0].mxu0
        %v7082 = vpop.f32.mrb[0].mxu0
        %v7083 = vadd.f32 0.0, %v7082
        %v7084 = vpop.f32.mrb[0].mxu0
        %7085 = vmatprep.mubr.bf16.mxu0 0
        %7086 = vmatmul.mubr.bf16.gmra.mrb[0].mxu0 %v4264
        %v7087 = vpop.f32.mrb[0].mxu0
        %v7088 = vadd.f32 0.0, %v7087
        %v7089 = vpop.f32.mrb[0].mxu0
        %v7090 = vpop.f32.mrb[0].mxu0
        %v7091 = vadd.f32 0.0, %v7090
        %v7092 = vpop.f32.mrb[0].mxu0
        %7093 = vmatprep.mubr.bf16.mxu0 0
        %7094 = vmatmul.mubr.bf16.gmra.mrb[0].mxu0 %v4265
        %v7095 = vpop.f32.mrb[0].mxu0
        %v7096 = vadd.f32 0.0, %v7095
        %v7097 = vpop.f32.mrb[0].mxu0
        %v7098 = vpop.f32.mrb[0].mxu0
        %v7099 = vadd.f32 0.0, %v7098
        %v7100 = vpop.f32.mrb[0].mxu0
        %7101 = vmatprep.mubr.bf16.mxu0 0
        %7102 = vmatmul.mubr.bf16.gmra.mrb[0].mxu0 %v4266
        %v7103 = vpop.f32.mrb[0].mxu0
        %v7104 = vadd.f32 0.0, %v7103
        %v7105 = vpop.f32.mrb[0].mxu0
        %v7106 = vpop.f32.mrb[0].mxu0
        %v7107 = vadd.f32 0.0, %v7106
        %v7108 = vpop.f32.mrb[0].mxu0
        %7109 = vmatprep.mubr.bf16.mxu0 0
        %7110 = vmatmul.mubr.bf16.gmra.mrb[0].mxu0 %v4267
        %v7111 = vpop.f32.mrb[0].mxu0
        %v7112 = vadd.f32 0.0, %v7111
        %v7113 = vpop.f32.mrb[0].mxu0
        %v7114 = vpop.f32.mrb[0].mxu0
        %v7115 = vadd.f32 0.0, %v7114
        %v7116 = vpop.f32.mrb[0].mxu0
        %7117 = vmatprep.mubr.bf16.mxu0 0
        %7118 = vmatmul.mubr.bf16.gmra.mrb[0].mxu0 %v4268
        %v7119 = vpop.f32.mrb[0].mxu0
        %v7120 = vadd.f32 0.0, %v7119
        %v7121 = vpop.f32.mrb[0].mxu0
        %v7122 = vpop.f32.mrb[0].mxu0
        %v7123 = vadd.f32 0.0, %v7122
        %v7124 = vpop.f32.mrb[0].mxu0
        %7125 = vmatprep.mubr.bf16.mxu0 0
        %7126 = vmatmul.mubr.bf16.gmra.mrb[0].mxu0 %v4269
        %v7127 = vpop.f32.mrb[0].mxu0
        %v7128 = vadd.f32 0.0, %v7127
        %v7129 = vpop.f32.mrb[0].mxu0
        %v7130 = vpop.f32.mrb[0].mxu0
        %v7131 = vadd.f32 0.0, %v7130
        %v7132 = vpop.f32.mrb[0].mxu0
        %7133 = vmatprep.mubr.bf16.mxu0 0
        %7134 = vmatmul.mubr.bf16.gmra.mrb[0].mxu0 %v4270
        %v7135 = vpop.f32.mrb[0].mxu0
        %v7136 = vadd.f32 0.0, %v7135
        %v7137 = vpop.f32.mrb[0].mxu0
        %v7138 = vpop.f32.mrb[0].mxu0
        %v7139 = vadd.f32 0.0, %v7138
        %v7140 = vpop.f32.mrb[0].mxu0
        %7141 = vmatprep.mubr.bf16.mxu0 0
        %7142 = vmatmul.mubr.bf16.gmra.mrb[0].mxu0 %v4271
        %v7143 = vpop.f32.mrb[0].mxu0
        %v7144 = vadd.f32 0.0, %v7143
        %v7145 = vpop.f32.mrb[0].mxu0
        %v7146 = vpop.f32.mrb[0].mxu0
        %v7147 = vadd.f32 0.0, %v7146
        %v7148 = vpop.f32.mrb[0].mxu0
        %7149 = vmatprep.mubr.bf16.mxu0 0
        %7150 = vmatmul.mubr.bf16.gmra.mrb[0].mxu0 %v4272
        %v7151 = vpop.f32.mrb[0].mxu0
        %v7152 = vadd.f32 0.0, %v7151
        %v7153 = vpop.f32.mrb[0].mxu0
        %v7154 = vpop.f32.mrb[0].mxu0
        %v7155 = vadd.f32 0.0, %v7154
        %v7156 = vpop.f32.mrb[0].mxu0
        %7157 = vmatprep.mubr.bf16.mxu0 0
        %7158 = vmatmul.mubr.bf16.gmra.mrb[0].mxu0 %v4273
        %v7159 = vpop.f32.mrb[0].mxu0
        %v7160 = vadd.f32 0.0, %v7159
        %v7161 = vpop.f32.mrb[0].mxu0
        %v7162 = vpop.f32.mrb[0].mxu0
        %v7163 = vadd.f32 0.0, %v7162
        %v7164 = vpop.f32.mrb[0].mxu0
        %7165 = vmatprep.mubr.bf16.mxu0 0
        %7166 = vmatmul.mubr.bf16.gmra.mrb[0].mxu0 %v4274
        %v7167 = vpop.f32.mrb[0].mxu0
        %v7168 = vadd.f32 0.0, %v7167
        %v7169 = vpop.f32.mrb[0].mxu0
        %v7170 = vpop.f32.mrb[0].mxu0
        %v7171 = vadd.f32 0.0, %v7170
        %v7172 = vpop.f32.mrb[0].mxu0
        %7173 = vmatprep.mubr.bf16.mxu0 0
        %7174 = vmatmul.mubr.bf16.gmra.mrb[0].mxu0 %v4275
        %v7175 = vpop.f32.mrb[0].mxu0
        %v7176 = vadd.f32 0.0, %v7175
        %v7177 = vpop.f32.mrb[0].mxu0
        %v7178 = vpop.f32.mrb[0].mxu0
        %v7179 = vadd.f32 0.0, %v7178
        %v7180 = vpop.f32.mrb[0].mxu0
        %7181 = vmatprep.mubr.bf16.mxu0 0
        %7182 = vmatmul.mubr.bf16.gmra.mrb[0].mxu0 %v4276
        %v7183 = vpop.f32.mrb[0].mxu0
        %v7184 = vadd.f32 0.0, %v7183
        %v7185 = vpop.f32.mrb[0].mxu0
        %v7186 = vpop.f32.mrb[0].mxu0
        %v7187 = vadd.f32 0.0, %v7186
        %v7188 = vpop.f32.mrb[0].mxu0
        %7189 = vmatprep.mubr.bf16.mxu0 0
        %7190 = vmatmul.mubr.bf16.gmra.mrb[0].mxu0 %v4277
        %v7191 = vpop.f32.mrb[0].mxu0
        %v7192 = vadd.f32 0.0, %v7191
        %v7193 = vpop.f32.mrb[0].mxu0
        %v7194 = vpop.f32.mrb[0].mxu0
        %v7195 = vadd.f32 0.0, %v7194
        %v7196 = vpop.f32.mrb[0].mxu0
        %7197 = vmatprep.mubr.bf16.mxu0 0
        %7198 = vmatmul.mubr.bf16.gmra.mrb[0].mxu0 %v4278
        %v7199 = vpop.f32.mrb[0].mxu0
        %v7200 = vadd.f32 0.0, %v7199
        %v7201 = vpop.f32.mrb[0].mxu0
        %v7202 = vpop.f32.mrb[0].mxu0
        %v7203 = vadd.f32 0.0, %v7202
        %v7204 = vpop.f32.mrb[0].mxu0
        %7205 = vmatprep.mubr.bf16.mxu0 0
        %7206 = vmatmul.mubr.bf16.gmra.mrb[0].mxu0 %v4279
        %v7207 = vpop.f32.mrb[0].mxu0
        %v7208 = vadd.f32 0.0, %v7207
        %v7209 = vpop.f32.mrb[0].mxu0
        %v7210 = vpop.f32.mrb[0].mxu0
        %v7211 = vadd.f32 0.0, %v7210
        %v7212 = vpop.f32.mrb[0].mxu0
        %7213 = vmatprep.mubr.bf16.mxu0 0
        %7214 = vmatmul.mubr.bf16.gmra.mrb[0].mxu0 %v4280
        %v7215 = vpop.f32.mrb[0].mxu0
        %v7216 = vadd.f32 0.0, %v7215
        %v7217 = vpop.f32.mrb[0].mxu0
        %v7218 = vpop.f32.mrb[0].mxu0
        %v7219 = vadd.f32 0.0, %v7218
        %v7220 = vpop.f32.mrb[0].mxu0
        %7221 = vmatprep.mubr.bf16.mxu0 0
        %7222 = vmatmul.mubr.bf16.gmra.mrb[0].mxu0 %v6641
        %v7223 = vpop.f32.mrb[0].mxu0
        %v7224 = vadd.f32 0.0, %v7223
        %v7225 = vpop.f32.mrb[0].mxu0
        %v7226 = vpop.f32.mrb[0].mxu0
        %v7227 = vadd.f32 0.0, %v7226
        %v7228 = vpop.f32.mrb[0].mxu0
        %7229 = vmatprep.mubr.bf16.mxu0 0
        %7230 = vmatmul.mubr.bf16.gmra.mrb[0].mxu0 %v6642
        %v7231 = vpop.f32.mrb[0].mxu0
        %v7232 = vadd.f32 0.0, %v7231
        %v7233 = vpop.f32.mrb[0].mxu0
        %v7234 = vpop.f32.mrb[0].mxu0
        %v7235 = vadd.f32 0.0, %v7234
        %v7236 = vpop.f32.mrb[0].mxu0
        %7237 = vdwg.mxu0
        %v7238 = vadd.f32 %v6478, %v6728
        %v7239 = vadd.f32 %v6479, %v6731
        %v7240 = vadd.f32 %v6480, %v6736
        %v7241 = vadd.f32 %v6481, %v6739
        %v7242 = vadd.f32 %v6482, %v6744
        %v7243 = vadd.f32 %v6483, %v6747
        %v7244 = vadd.f32 %v6484, %v6752
        %v7245 = vadd.f32 %v6485, %v6755
        %v7246 = vadd.f32 %v6486, %v6760
        %v7247 = vadd.f32 %v6487, %v6763
        %v7248 = vadd.f32 %v6488, %v6768
        %v7249 = vadd.f32 %v6489, %v6771
        %v7250 = vadd.f32 %v6490, %v6776
        %v7251 = vadd.f32 %v6491, %v6779
        %v7252 = vadd.f32 %v6492, %v6784
        %v7253 = vadd.f32 %v6493, %v6787
        %v7254 = vadd.f32 %v6494, %v6792
        %v7255 = vadd.f32 %v6495, %v6795
        %v7256 = vadd.f32 %v6496, %v6800
        %v7257 = vadd.f32 %v6497, %v6803
        %v7258 = vadd.f32 %v6498, %v6808
        %v7259 = vadd.f32 %v6499, %v6811
        %v7260 = vadd.f32 %v6500, %v6816
        %v7261 = vadd.f32 %v6501, %v6819
        %v7262 = vadd.f32 %v6502, %v6824
        %v7263 = vadd.f32 %v6503, %v6827
        %v7264 = vadd.f32 %v6504, %v6832
        %v7265 = vadd.f32 %v6505, %v6835
        %v7266 = vadd.f32 %v6506, %v6840
        %v7267 = vadd.f32 %v6507, %v6843
        %v7268 = vadd.f32 %v6508, %v6848
        %v7269 = vadd.f32 %v6509, %v6851
        %v7270 = vadd.f32 %v6510, %v6856
        %v7271 = vadd.f32 %v6511, %v6859
        %v7272 = vadd.f32 %v6512, %v6864
        %v7273 = vadd.f32 %v6513, %v6867
        %v7274 = vadd.f32 %v6514, %v6872
        %v7275 = vadd.f32 %v6515, %v6875
        %v7276 = vadd.f32 %v6516, %v6880
        %v7277 = vadd.f32 %v6517, %v6883
        %v7278 = vadd.f32 %v6518, %v6888
        %v7279 = vadd.f32 %v6519, %v6891
        %v7280 = vadd.f32 %v6520, %v6896
        %v7281 = vadd.f32 %v6521, %v6899
        %v7282 = vadd.f32 %v6522, %v6904
        %v7283 = vadd.f32 %v6523, %v6907
        %v7284 = vadd.f32 %v6524, %v6912
        %v7285 = vadd.f32 %v6525, %v6915
        %v7286 = vadd.f32 %v6526, %v6920
        %v7287 = vadd.f32 %v6527, %v6923
        %v7288 = vadd.f32 %v6528, %v6928
        %v7289 = vadd.f32 %v6529, %v6931
        %v7290 = vadd.f32 %v6530, %v6936
        %v7291 = vadd.f32 %v6531, %v6939
        %v7292 = vadd.f32 %v6532, %v6944
        %v7293 = vadd.f32 %v6533, %v6947
        %v7294 = vadd.f32 %v6534, %v6952
        %v7295 = vadd.f32 %v6535, %v6955
        %v7296 = vadd.f32 %v6536, %v6960
        %v7297 = vadd.f32 %v6537, %v6963
        %v7298 = vadd.f32 %v6538, %v6968
        %v7299 = vadd.f32 %v6539, %v6971
        %v7300 = vadd.f32 %v6540, %v6976
        %v7301 = vadd.f32 %v6541, %v6979
        %v7302 = vadd.f32 %v6542, %v6984
        %v7303 = vadd.f32 %v6543, %v6987
        %v7304 = vadd.f32 %v6544, %v6992
        %v7305 = vadd.f32 %v6545, %v6995
        %v7306 = vadd.f32 %v6546, %v7000
        %v7307 = vadd.f32 %v6547, %v7003
        %v7308 = vadd.f32 %v6548, %v7008
        %v7309 = vadd.f32 %v6549, %v7011
        %v7310 = vadd.f32 %v6550, %v7016
        %v7311 = vadd.f32 %v6551, %v7019
        %v7312 = vadd.f32 %v6552, %v7024
        %v7313 = vadd.f32 %v6553, %v7027
        %v7314 = vadd.f32 %v6554, %v7032
        %v7315 = vadd.f32 %v6555, %v7035
        %v7316 = vadd.f32 %v6556, %v7040
        %v7317 = vadd.f32 %v6557, %v7043
        %v7318 = vadd.f32 %v6558, %v7048
        %v7319 = vadd.f32 %v6559, %v7051
        %v7320 = vadd.f32 %v6560, %v7056
        %v7321 = vadd.f32 %v6561, %v7059
        %v7322 = vadd.f32 %v6562, %v7064
        %v7323 = vadd.f32 %v6563, %v7067
        %v7324 = vadd.f32 %v6564, %v7072
        %v7325 = vadd.f32 %v6565, %v7075
        %v7326 = vadd.f32 %v6566, %v7080
        %v7327 = vadd.f32 %v6567, %v7083
        %v7328 = vadd.f32 %v6568, %v7088
        %v7329 = vadd.f32 %v6569, %v7091
        %v7330 = vadd.f32 %v6570, %v7096
        %v7331 = vadd.f32 %v6571, %v7099
        %v7332 = vadd.f32 %v6572, %v7104
        %v7333 = vadd.f32 %v6573, %v7107
        %v7334 = vadd.f32 %v6574, %v7112
        %v7335 = vadd.f32 %v6575, %v7115
        %v7336 = vadd.f32 %v6576, %v7120
        %v7337 = vadd.f32 %v6577, %v7123
        %v7338 = vadd.f32 %v6578, %v7128
        %v7339 = vadd.f32 %v6579, %v7131
        %v7340 = vadd.f32 %v6580, %v7136
        %v7341 = vadd.f32 %v6581, %v7139
        %v7342 = vadd.f32 %v6582, %v7144
        %v7343 = vadd.f32 %v6583, %v7147
        %v7344 = vadd.f32 %v6584, %v7152
        %v7345 = vadd.f32 %v6585, %v7155
        %v7346 = vadd.f32 %v6586, %v7160
        %v7347 = vadd.f32 %v6587, %v7163
        %v7348 = vadd.f32 %v6588, %v7168
        %v7349 = vadd.f32 %v6589, %v7171
        %v7350 = vadd.f32 %v6590, %v7176
        %v7351 = vadd.f32 %v6591, %v7179
        %v7352 = vadd.f32 %v6592, %v7184
        %v7353 = vadd.f32 %v6593, %v7187
        %v7354 = vadd.f32 %v6594, %v7192
        %v7355 = vadd.f32 %v6595, %v7195
        %v7356 = vadd.f32 %v6596, %v7200
        %v7357 = vadd.f32 %v6597, %v7203
        %v7358 = vadd.f32 %v6598, %v7208
        %v7359 = vadd.f32 %v6599, %v7211
        %v7360 = vadd.f32 %v6600, %v7216
        %v7361 = vadd.f32 %v6601, %v7219
        %v7362 = vadd.f32 %v6602, %v7224
        %v7363 = vadd.f32 %v6603, %v7227
        %v7364 = vadd.f32 %v6604, %v7232
        %v7365 = vadd.f32 %v6605, %v7235
        %s7366 = scalar_lea.vmem %s1, 384
        %v7367 = vld [vmem:[%s7366] sm:$0xf]
        %v7368 = vld [vmem:[%s7366 + $0x4] sm:$0xf]
        %v7369 = vld [vmem:[%s7366 + $0x8] sm:$0xf]
        %v7370 = vld [vmem:[%s7366 + $0xc] sm:$0xf]
        %v7371 = vld [vmem:[%s7366 + $0x10] sm:$0xf]
        %v7372 = vld [vmem:[%s7366 + $0x14] sm:$0xf]
        %v7373 = vld [vmem:[%s7366 + $0x18] sm:$0xf]
        %v7374 = vld [vmem:[%s7366 + $0x1c] sm:$0xf]
        %v7375 = vld [vmem:[%s7366 + $0x20] sm:$0xf]
        %v7376 = vld [vmem:[%s7366 + $0x24] sm:$0xf]
        %v7377 = vld [vmem:[%s7366 + $0x28] sm:$0xf]
        %v7378 = vld [vmem:[%s7366 + $0x2c] sm:$0xf]
        %v7379 = vld [vmem:[%s7366 + $0x30] sm:$0xf]
        %v7380 = vld [vmem:[%s7366 + $0x34] sm:$0xf]
        %v7381 = vld [vmem:[%s7366 + $0x38] sm:$0xf]
        %v7382 = vld [vmem:[%s7366 + $0x3c] sm:$0xf]
        %v7387 = vunpack.c.l.b16 %v346
        %v7388 = vunpack.c.l.b16 %v347
        %v7389 = vunpack.c.l.b16 %v348
        %v7390 = vunpack.c.l.b16 %v349
        %v7391 = vpack.c.b16 %v7388, %v7387
        %v7392 = vpack.c.b16 %v7390, %v7389
        %v7411 = vunpack.c.l.b16 %v7367
        %v7412 = vunpack.c.l.b16 %v7368
        %v7413 = vunpack.c.l.b16 %v7369
        %v7414 = vunpack.c.l.b16 %v7370
        %v7415 = vunpack.c.l.b16 %v7371
        %v7416 = vunpack.c.l.b16 %v7372
        %v7417 = vunpack.c.l.b16 %v7373
        %v7418 = vunpack.c.l.b16 %v7374
        %v7419 = vunpack.c.l.b16 %v7375
        %v7420 = vunpack.c.l.b16 %v7376
        %v7421 = vunpack.c.l.b16 %v7377
        %v7422 = vunpack.c.l.b16 %v7378
        %v7423 = vunpack.c.l.b16 %v7379
        %v7424 = vunpack.c.l.b16 %v7380
        %v7425 = vunpack.c.l.b16 %v7381
        %v7426 = vunpack.c.l.b16 %v7382
        %v7427 = vpack.c.b16 %v7412, %v7411
        %v7428 = vpack.c.b16 %v7414, %v7413
        %v7429 = vpack.c.b16 %v7416, %v7415
        %v7430 = vpack.c.b16 %v7418, %v7417
        %v7431 = vpack.c.b16 %v7420, %v7419
        %v7432 = vpack.c.b16 %v7422, %v7421
        %v7433 = vpack.c.b16 %v7424, %v7423
        %v7434 = vpack.c.b16 %v7426, %v7425
        %7443 = vmatprep.subr.bf16.mxu0 0
        %7444 = vmatpush1.bf16.msra.mxu0 %v7427
        %7445 = vmatprep.subr.bf16.mxu0 0
        %7446 = vmatpush1.bf16.msra.mxu0 %v7428
        %7447 = vmatprep.subr.bf16.mxu0 0
        %7448 = vmatpush1.bf16.msra.mxu0 %v7429
        %7449 = vmatprep.subr.bf16.mxu0 0
        %7450 = vmatpush1.bf16.msra.mxu0 %v7430
        %7451 = vmatprep.subr.bf16.mxu0 0
        %7452 = vmatpush1.bf16.msra.mxu0 %v7431
        %7453 = vmatprep.subr.bf16.mxu0 0
        %7454 = vmatpush1.bf16.msra.mxu0 %v7432
        %7455 = vmatprep.subr.bf16.mxu0 0
        %7456 = vmatpush1.bf16.msra.mxu0 %v7433
        %7457 = vmatprep.subr.bf16.mxu0 0
        %7458 = vmatpush1.bf16.msra.mxu0 %v7434
        %7459 = vmatprep.subr.bf16.mxu0 0
        %7460 = vmatpush1.bf16.msra.mxu0 0
        %7461 = vmatprep.subr.bf16.mxu0 0
        %7462 = vmatpush1.bf16.msra.mxu0 0
        %7463 = vmatprep.subr.bf16.mxu0 0
        %7464 = vmatpush1.bf16.msra.mxu0 0
        %7465 = vmatprep.subr.bf16.mxu0 0
        %7466 = vmatpush1.bf16.msra.mxu0 0
        %7467 = vmatprep.subr.bf16.mxu0 0
        %7468 = vmatpush1.bf16.msra.mxu0 0
        %7469 = vmatprep.subr.bf16.mxu0 0
        %7470 = vmatpush1.bf16.msra.mxu0 0
        %7471 = vmatprep.subr.bf16.mxu0 0
        %7472 = vmatpush1.bf16.msra.mxu0 0
        %7473 = vmatprep.subr.bf16.mxu0 0
        %7474 = vmatpush1.bf16.msra.mxu0 0
        %7475 = vmatprep.mubr.bf16.mxu0 0
        %7476 = vmatmul.mubr.bf16.gmra.mrb[0].mxu0 %v2904
        %v7477 = vpop.f32.mrb[0].mxu0
        %v7478 = vadd.f32 0.0, %v7477
        %v7479 = vpop.f32.mrb[0].mxu0
        %v7480 = vpop.f32.mrb[0].mxu0
        %v7481 = vadd.f32 0.0, %v7480
        %v7482 = vpop.f32.mrb[0].mxu0
        %7483 = vmatprep.mubr.bf16.mxu0 0
        %7484 = vmatmul.mubr.bf16.gmra.mrb[0].mxu0 %v2905
        %v7485 = vpop.f32.mrb[0].mxu0
        %v7486 = vadd.f32 0.0, %v7485
        %v7487 = vpop.f32.mrb[0].mxu0
        %v7488 = vpop.f32.mrb[0].mxu0
        %v7489 = vadd.f32 0.0, %v7488
        %v7490 = vpop.f32.mrb[0].mxu0
        %7491 = vmatprep.mubr.bf16.mxu0 0
        %7492 = vmatmul.mubr.bf16.gmra.mrb[0].mxu0 %v2906
        %v7493 = vpop.f32.mrb[0].mxu0
        %v7494 = vadd.f32 0.0, %v7493
        %v7495 = vpop.f32.mrb[0].mxu0
        %v7496 = vpop.f32.mrb[0].mxu0
        %v7497 = vadd.f32 0.0, %v7496
        %v7498 = vpop.f32.mrb[0].mxu0
        %7499 = vmatprep.mubr.bf16.mxu0 0
        %7500 = vmatmul.mubr.bf16.gmra.mrb[0].mxu0 %v2907
        %v7501 = vpop.f32.mrb[0].mxu0
        %v7502 = vadd.f32 0.0, %v7501
        %v7503 = vpop.f32.mrb[0].mxu0
        %v7504 = vpop.f32.mrb[0].mxu0
        %v7505 = vadd.f32 0.0, %v7504
        %v7506 = vpop.f32.mrb[0].mxu0
        %7507 = vmatprep.mubr.bf16.mxu0 0
        %7508 = vmatmul.mubr.bf16.gmra.mrb[0].mxu0 %v2908
        %v7509 = vpop.f32.mrb[0].mxu0
        %v7510 = vadd.f32 0.0, %v7509
        %v7511 = vpop.f32.mrb[0].mxu0
        %v7512 = vpop.f32.mrb[0].mxu0
        %v7513 = vadd.f32 0.0, %v7512
        %v7514 = vpop.f32.mrb[0].mxu0
        %7515 = vmatprep.mubr.bf16.mxu0 0
        %7516 = vmatmul.mubr.bf16.gmra.mrb[0].mxu0 %v2909
        %v7517 = vpop.f32.mrb[0].mxu0
        %v7518 = vadd.f32 0.0, %v7517
        %v7519 = vpop.f32.mrb[0].mxu0
        %v7520 = vpop.f32.mrb[0].mxu0
        %v7521 = vadd.f32 0.0, %v7520
        %v7522 = vpop.f32.mrb[0].mxu0
        %7523 = vmatprep.mubr.bf16.mxu0 0
        %7524 = vmatmul.mubr.bf16.gmra.mrb[0].mxu0 %v2910
        %v7525 = vpop.f32.mrb[0].mxu0
        %v7526 = vadd.f32 0.0, %v7525
        %v7527 = vpop.f32.mrb[0].mxu0
        %v7528 = vpop.f32.mrb[0].mxu0
        %v7529 = vadd.f32 0.0, %v7528
        %v7530 = vpop.f32.mrb[0].mxu0
        %7531 = vmatprep.mubr.bf16.mxu0 0
        %7532 = vmatmul.mubr.bf16.gmra.mrb[0].mxu0 %v2911
        %v7533 = vpop.f32.mrb[0].mxu0
        %v7534 = vadd.f32 0.0, %v7533
        %v7535 = vpop.f32.mrb[0].mxu0
        %v7536 = vpop.f32.mrb[0].mxu0
        %v7537 = vadd.f32 0.0, %v7536
        %v7538 = vpop.f32.mrb[0].mxu0
        %7539 = vmatprep.mubr.bf16.mxu0 0
        %7540 = vmatmul.mubr.bf16.gmra.mrb[0].mxu0 %v2912
        %v7541 = vpop.f32.mrb[0].mxu0
        %v7542 = vadd.f32 0.0, %v7541
        %v7543 = vpop.f32.mrb[0].mxu0
        %v7544 = vpop.f32.mrb[0].mxu0
        %v7545 = vadd.f32 0.0, %v7544
        %v7546 = vpop.f32.mrb[0].mxu0
        %7547 = vmatprep.mubr.bf16.mxu0 0
        %7548 = vmatmul.mubr.bf16.gmra.mrb[0].mxu0 %v2913
        %v7549 = vpop.f32.mrb[0].mxu0
        %v7550 = vadd.f32 0.0, %v7549
        %v7551 = vpop.f32.mrb[0].mxu0
        %v7552 = vpop.f32.mrb[0].mxu0
        %v7553 = vadd.f32 0.0, %v7552
        %v7554 = vpop.f32.mrb[0].mxu0
        %7555 = vmatprep.mubr.bf16.mxu0 0
        %7556 = vmatmul.mubr.bf16.gmra.mrb[0].mxu0 %v2914
        %v7557 = vpop.f32.mrb[0].mxu0
        %v7558 = vadd.f32 0.0, %v7557
        %v7559 = vpop.f32.mrb[0].mxu0
        %v7560 = vpop.f32.mrb[0].mxu0
        %v7561 = vadd.f32 0.0, %v7560
        %v7562 = vpop.f32.mrb[0].mxu0
        %7563 = vmatprep.mubr.bf16.mxu0 0
        %7564 = vmatmul.mubr.bf16.gmra.mrb[0].mxu0 %v2915
        %v7565 = vpop.f32.mrb[0].mxu0
        %v7566 = vadd.f32 0.0, %v7565
        %v7567 = vpop.f32.mrb[0].mxu0
        %v7568 = vpop.f32.mrb[0].mxu0
        %v7569 = vadd.f32 0.0, %v7568
        %v7570 = vpop.f32.mrb[0].mxu0
        %7571 = vmatprep.mubr.bf16.mxu0 0
        %7572 = vmatmul.mubr.bf16.gmra.mrb[0].mxu0 %v2916
        %v7573 = vpop.f32.mrb[0].mxu0
        %v7574 = vadd.f32 0.0, %v7573
        %v7575 = vpop.f32.mrb[0].mxu0
        %v7576 = vpop.f32.mrb[0].mxu0
        %v7577 = vadd.f32 0.0, %v7576
        %v7578 = vpop.f32.mrb[0].mxu0
        %7579 = vmatprep.mubr.bf16.mxu0 0
        %7580 = vmatmul.mubr.bf16.gmra.mrb[0].mxu0 %v2917
        %v7581 = vpop.f32.mrb[0].mxu0
        %v7582 = vadd.f32 0.0, %v7581
        %v7583 = vpop.f32.mrb[0].mxu0
        %v7584 = vpop.f32.mrb[0].mxu0
        %v7585 = vadd.f32 0.0, %v7584
        %v7586 = vpop.f32.mrb[0].mxu0
        %7587 = vmatprep.mubr.bf16.mxu0 0
        %7588 = vmatmul.mubr.bf16.gmra.mrb[0].mxu0 %v2918
        %v7589 = vpop.f32.mrb[0].mxu0
        %v7590 = vadd.f32 0.0, %v7589
        %v7591 = vpop.f32.mrb[0].mxu0
        %v7592 = vpop.f32.mrb[0].mxu0
        %v7593 = vadd.f32 0.0, %v7592
        %v7594 = vpop.f32.mrb[0].mxu0
        %7595 = vmatprep.mubr.bf16.mxu0 0
        %7596 = vmatmul.mubr.bf16.gmra.mrb[0].mxu0 %v2919
        %v7597 = vpop.f32.mrb[0].mxu0
        %v7598 = vadd.f32 0.0, %v7597
        %v7599 = vpop.f32.mrb[0].mxu0
        %v7600 = vpop.f32.mrb[0].mxu0
        %v7601 = vadd.f32 0.0, %v7600
        %v7602 = vpop.f32.mrb[0].mxu0
        %7603 = vmatprep.mubr.bf16.mxu0 0
        %7604 = vmatmul.mubr.bf16.gmra.mrb[0].mxu0 %v2920
        %v7605 = vpop.f32.mrb[0].mxu0
        %v7606 = vadd.f32 0.0, %v7605
        %v7607 = vpop.f32.mrb[0].mxu0
        %v7608 = vpop.f32.mrb[0].mxu0
        %v7609 = vadd.f32 0.0, %v7608
        %v7610 = vpop.f32.mrb[0].mxu0
        %7611 = vmatprep.mubr.bf16.mxu0 0
        %7612 = vmatmul.mubr.bf16.gmra.mrb[0].mxu0 %v2921
        %v7613 = vpop.f32.mrb[0].mxu0
        %v7614 = vadd.f32 0.0, %v7613
        %v7615 = vpop.f32.mrb[0].mxu0
        %v7616 = vpop.f32.mrb[0].mxu0
        %v7617 = vadd.f32 0.0, %v7616
        %v7618 = vpop.f32.mrb[0].mxu0
        %7619 = vmatprep.mubr.bf16.mxu0 0
        %7620 = vmatmul.mubr.bf16.gmra.mrb[0].mxu0 %v2922
        %v7621 = vpop.f32.mrb[0].mxu0
        %v7622 = vadd.f32 0.0, %v7621
        %v7623 = vpop.f32.mrb[0].mxu0
        %v7624 = vpop.f32.mrb[0].mxu0
        %v7625 = vadd.f32 0.0, %v7624
        %v7626 = vpop.f32.mrb[0].mxu0
        %7627 = vmatprep.mubr.bf16.mxu0 0
        %7628 = vmatmul.mubr.bf16.gmra.mrb[0].mxu0 %v2923
        %v7629 = vpop.f32.mrb[0].mxu0
        %v7630 = vadd.f32 0.0, %v7629
        %v7631 = vpop.f32.mrb[0].mxu0
        %v7632 = vpop.f32.mrb[0].mxu0
        %v7633 = vadd.f32 0.0, %v7632
        %v7634 = vpop.f32.mrb[0].mxu0
        %7635 = vmatprep.mubr.bf16.mxu0 0
        %7636 = vmatmul.mubr.bf16.gmra.mrb[0].mxu0 %v2924
        %v7637 = vpop.f32.mrb[0].mxu0
        %v7638 = vadd.f32 0.0, %v7637
        %v7639 = vpop.f32.mrb[0].mxu0
        %v7640 = vpop.f32.mrb[0].mxu0
        %v7641 = vadd.f32 0.0, %v7640
        %v7642 = vpop.f32.mrb[0].mxu0
        %7643 = vmatprep.mubr.bf16.mxu0 0
        %7644 = vmatmul.mubr.bf16.gmra.mrb[0].mxu0 %v2925
        %v7645 = vpop.f32.mrb[0].mxu0
        %v7646 = vadd.f32 0.0, %v7645
        %v7647 = vpop.f32.mrb[0].mxu0
        %v7648 = vpop.f32.mrb[0].mxu0
        %v7649 = vadd.f32 0.0, %v7648
        %v7650 = vpop.f32.mrb[0].mxu0
        %7651 = vmatprep.mubr.bf16.mxu0 0
        %7652 = vmatmul.mubr.bf16.gmra.mrb[0].mxu0 %v2926
        %v7653 = vpop.f32.mrb[0].mxu0
        %v7654 = vadd.f32 0.0, %v7653
        %v7655 = vpop.f32.mrb[0].mxu0
        %v7656 = vpop.f32.mrb[0].mxu0
        %v7657 = vadd.f32 0.0, %v7656
        %v7658 = vpop.f32.mrb[0].mxu0
        %7659 = vmatprep.mubr.bf16.mxu0 0
        %7660 = vmatmul.mubr.bf16.gmra.mrb[0].mxu0 %v2927
        %v7661 = vpop.f32.mrb[0].mxu0
        %v7662 = vadd.f32 0.0, %v7661
        %v7663 = vpop.f32.mrb[0].mxu0
        %v7664 = vpop.f32.mrb[0].mxu0
        %v7665 = vadd.f32 0.0, %v7664
        %v7666 = vpop.f32.mrb[0].mxu0
        %7667 = vmatprep.mubr.bf16.mxu0 0
        %7668 = vmatmul.mubr.bf16.gmra.mrb[0].mxu0 %v2928
        %v7669 = vpop.f32.mrb[0].mxu0
        %v7670 = vadd.f32 0.0, %v7669
        %v7671 = vpop.f32.mrb[0].mxu0
        %v7672 = vpop.f32.mrb[0].mxu0
        %v7673 = vadd.f32 0.0, %v7672
        %v7674 = vpop.f32.mrb[0].mxu0
        %7675 = vmatprep.mubr.bf16.mxu0 0
        %7676 = vmatmul.mubr.bf16.gmra.mrb[0].mxu0 %v2929
        %v7677 = vpop.f32.mrb[0].mxu0
        %v7678 = vadd.f32 0.0, %v7677
        %v7679 = vpop.f32.mrb[0].mxu0
        %v7680 = vpop.f32.mrb[0].mxu0
        %v7681 = vadd.f32 0.0, %v7680
        %v7682 = vpop.f32.mrb[0].mxu0
        %7683 = vmatprep.mubr.bf16.mxu0 0
        %7684 = vmatmul.mubr.bf16.gmra.mrb[0].mxu0 %v2930
        %v7685 = vpop.f32.mrb[0].mxu0
        %v7686 = vadd.f32 0.0, %v7685
        %v7687 = vpop.f32.mrb[0].mxu0
        %v7688 = vpop.f32.mrb[0].mxu0
        %v7689 = vadd.f32 0.0, %v7688
        %v7690 = vpop.f32.mrb[0].mxu0
        %7691 = vmatprep.mubr.bf16.mxu0 0
        %7692 = vmatmul.mubr.bf16.gmra.mrb[0].mxu0 %v2931
        %v7693 = vpop.f32.mrb[0].mxu0
        %v7694 = vadd.f32 0.0, %v7693
        %v7695 = vpop.f32.mrb[0].mxu0
        %v7696 = vpop.f32.mrb[0].mxu0
        %v7697 = vadd.f32 0.0, %v7696
        %v7698 = vpop.f32.mrb[0].mxu0
        %7699 = vmatprep.mubr.bf16.mxu0 0
        %7700 = vmatmul.mubr.bf16.gmra.mrb[0].mxu0 %v2932
        %v7701 = vpop.f32.mrb[0].mxu0
        %v7702 = vadd.f32 0.0, %v7701
        %v7703 = vpop.f32.mrb[0].mxu0
        %v7704 = vpop.f32.mrb[0].mxu0
        %v7705 = vadd.f32 0.0, %v7704
        %v7706 = vpop.f32.mrb[0].mxu0
        %7707 = vmatprep.mubr.bf16.mxu0 0
        %7708 = vmatmul.mubr.bf16.gmra.mrb[0].mxu0 %v2933
        %v7709 = vpop.f32.mrb[0].mxu0
        %v7710 = vadd.f32 0.0, %v7709
        %v7711 = vpop.f32.mrb[0].mxu0
        %v7712 = vpop.f32.mrb[0].mxu0
        %v7713 = vadd.f32 0.0, %v7712
        %v7714 = vpop.f32.mrb[0].mxu0
        %7715 = vmatprep.mubr.bf16.mxu0 0
        %7716 = vmatmul.mubr.bf16.gmra.mrb[0].mxu0 %v2934
        %v7717 = vpop.f32.mrb[0].mxu0
        %v7718 = vadd.f32 0.0, %v7717
        %v7719 = vpop.f32.mrb[0].mxu0
        %v7720 = vpop.f32.mrb[0].mxu0
        %v7721 = vadd.f32 0.0, %v7720
        %v7722 = vpop.f32.mrb[0].mxu0
        %7723 = vmatprep.mubr.bf16.mxu0 0
        %7724 = vmatmul.mubr.bf16.gmra.mrb[0].mxu0 %v2935
        %v7725 = vpop.f32.mrb[0].mxu0
        %v7726 = vadd.f32 0.0, %v7725
        %v7727 = vpop.f32.mrb[0].mxu0
        %v7728 = vpop.f32.mrb[0].mxu0
        %v7729 = vadd.f32 0.0, %v7728
        %v7730 = vpop.f32.mrb[0].mxu0
        %7731 = vmatprep.mubr.bf16.mxu0 0
        %7732 = vmatmul.mubr.bf16.gmra.mrb[0].mxu0 %v2936
        %v7733 = vpop.f32.mrb[0].mxu0
        %v7734 = vadd.f32 0.0, %v7733
        %v7735 = vpop.f32.mrb[0].mxu0
        %v7736 = vpop.f32.mrb[0].mxu0
        %v7737 = vadd.f32 0.0, %v7736
        %v7738 = vpop.f32.mrb[0].mxu0
        %7739 = vmatprep.mubr.bf16.mxu0 0
        %7740 = vmatmul.mubr.bf16.gmra.mrb[0].mxu0 %v2937
        %v7741 = vpop.f32.mrb[0].mxu0
        %v7742 = vadd.f32 0.0, %v7741
        %v7743 = vpop.f32.mrb[0].mxu0
        %v7744 = vpop.f32.mrb[0].mxu0
        %v7745 = vadd.f32 0.0, %v7744
        %v7746 = vpop.f32.mrb[0].mxu0
        %7747 = vmatprep.mubr.bf16.mxu0 0
        %7748 = vmatmul.mubr.bf16.gmra.mrb[0].mxu0 %v2938
        %v7749 = vpop.f32.mrb[0].mxu0
        %v7750 = vadd.f32 0.0, %v7749
        %v7751 = vpop.f32.mrb[0].mxu0
        %v7752 = vpop.f32.mrb[0].mxu0
        %v7753 = vadd.f32 0.0, %v7752
        %v7754 = vpop.f32.mrb[0].mxu0
        %7755 = vmatprep.mubr.bf16.mxu0 0
        %7756 = vmatmul.mubr.bf16.gmra.mrb[0].mxu0 %v2939
        %v7757 = vpop.f32.mrb[0].mxu0
        %v7758 = vadd.f32 0.0, %v7757
        %v7759 = vpop.f32.mrb[0].mxu0
        %v7760 = vpop.f32.mrb[0].mxu0
        %v7761 = vadd.f32 0.0, %v7760
        %v7762 = vpop.f32.mrb[0].mxu0
        %7763 = vmatprep.mubr.bf16.mxu0 0
        %7764 = vmatmul.mubr.bf16.gmra.mrb[0].mxu0 %v2940
        %v7765 = vpop.f32.mrb[0].mxu0
        %v7766 = vadd.f32 0.0, %v7765
        %v7767 = vpop.f32.mrb[0].mxu0
        %v7768 = vpop.f32.mrb[0].mxu0
        %v7769 = vadd.f32 0.0, %v7768
        %v7770 = vpop.f32.mrb[0].mxu0
        %7771 = vmatprep.mubr.bf16.mxu0 0
        %7772 = vmatmul.mubr.bf16.gmra.mrb[0].mxu0 %v2941
        %v7773 = vpop.f32.mrb[0].mxu0
        %v7774 = vadd.f32 0.0, %v7773
        %v7775 = vpop.f32.mrb[0].mxu0
        %v7776 = vpop.f32.mrb[0].mxu0
        %v7777 = vadd.f32 0.0, %v7776
        %v7778 = vpop.f32.mrb[0].mxu0
        %7779 = vmatprep.mubr.bf16.mxu0 0
        %7780 = vmatmul.mubr.bf16.gmra.mrb[0].mxu0 %v2942
        %v7781 = vpop.f32.mrb[0].mxu0
        %v7782 = vadd.f32 0.0, %v7781
        %v7783 = vpop.f32.mrb[0].mxu0
        %v7784 = vpop.f32.mrb[0].mxu0
        %v7785 = vadd.f32 0.0, %v7784
        %v7786 = vpop.f32.mrb[0].mxu0
        %7787 = vmatprep.mubr.bf16.mxu0 0
        %7788 = vmatmul.mubr.bf16.gmra.mrb[0].mxu0 %v2943
        %v7789 = vpop.f32.mrb[0].mxu0
        %v7790 = vadd.f32 0.0, %v7789
        %v7791 = vpop.f32.mrb[0].mxu0
        %v7792 = vpop.f32.mrb[0].mxu0
        %v7793 = vadd.f32 0.0, %v7792
        %v7794 = vpop.f32.mrb[0].mxu0
        %7795 = vmatprep.mubr.bf16.mxu0 0
        %7796 = vmatmul.mubr.bf16.gmra.mrb[0].mxu0 %v2944
        %v7797 = vpop.f32.mrb[0].mxu0
        %v7798 = vadd.f32 0.0, %v7797
        %v7799 = vpop.f32.mrb[0].mxu0
        %v7800 = vpop.f32.mrb[0].mxu0
        %v7801 = vadd.f32 0.0, %v7800
        %v7802 = vpop.f32.mrb[0].mxu0
        %7803 = vmatprep.mubr.bf16.mxu0 0
        %7804 = vmatmul.mubr.bf16.gmra.mrb[0].mxu0 %v2945
        %v7805 = vpop.f32.mrb[0].mxu0
        %v7806 = vadd.f32 0.0, %v7805
        %v7807 = vpop.f32.mrb[0].mxu0
        %v7808 = vpop.f32.mrb[0].mxu0
        %v7809 = vadd.f32 0.0, %v7808
        %v7810 = vpop.f32.mrb[0].mxu0
        %7811 = vmatprep.mubr.bf16.mxu0 0
        %7812 = vmatmul.mubr.bf16.gmra.mrb[0].mxu0 %v2946
        %v7813 = vpop.f32.mrb[0].mxu0
        %v7814 = vadd.f32 0.0, %v7813
        %v7815 = vpop.f32.mrb[0].mxu0
        %v7816 = vpop.f32.mrb[0].mxu0
        %v7817 = vadd.f32 0.0, %v7816
        %v7818 = vpop.f32.mrb[0].mxu0
        %7819 = vmatprep.mubr.bf16.mxu0 0
        %7820 = vmatmul.mubr.bf16.gmra.mrb[0].mxu0 %v2947
        %v7821 = vpop.f32.mrb[0].mxu0
        %v7822 = vadd.f32 0.0, %v7821
        %v7823 = vpop.f32.mrb[0].mxu0
        %v7824 = vpop.f32.mrb[0].mxu0
        %v7825 = vadd.f32 0.0, %v7824
        %v7826 = vpop.f32.mrb[0].mxu0
        %7827 = vmatprep.mubr.bf16.mxu0 0
        %7828 = vmatmul.mubr.bf16.gmra.mrb[0].mxu0 %v2948
        %v7829 = vpop.f32.mrb[0].mxu0
        %v7830 = vadd.f32 0.0, %v7829
        %v7831 = vpop.f32.mrb[0].mxu0
        %v7832 = vpop.f32.mrb[0].mxu0
        %v7833 = vadd.f32 0.0, %v7832
        %v7834 = vpop.f32.mrb[0].mxu0
        %7835 = vmatprep.mubr.bf16.mxu0 0
        %7836 = vmatmul.mubr.bf16.gmra.mrb[0].mxu0 %v2949
        %v7837 = vpop.f32.mrb[0].mxu0
        %v7838 = vadd.f32 0.0, %v7837
        %v7839 = vpop.f32.mrb[0].mxu0
        %v7840 = vpop.f32.mrb[0].mxu0
        %v7841 = vadd.f32 0.0, %v7840
        %v7842 = vpop.f32.mrb[0].mxu0
        %7843 = vmatprep.mubr.bf16.mxu0 0
        %7844 = vmatmul.mubr.bf16.gmra.mrb[0].mxu0 %v2950
        %v7845 = vpop.f32.mrb[0].mxu0
        %v7846 = vadd.f32 0.0, %v7845
        %v7847 = vpop.f32.mrb[0].mxu0
        %v7848 = vpop.f32.mrb[0].mxu0
        %v7849 = vadd.f32 0.0, %v7848
        %v7850 = vpop.f32.mrb[0].mxu0
        %7851 = vmatprep.mubr.bf16.mxu0 0
        %7852 = vmatmul.mubr.bf16.gmra.mrb[0].mxu0 %v2951
        %v7853 = vpop.f32.mrb[0].mxu0
        %v7854 = vadd.f32 0.0, %v7853
        %v7855 = vpop.f32.mrb[0].mxu0
        %v7856 = vpop.f32.mrb[0].mxu0
        %v7857 = vadd.f32 0.0, %v7856
        %v7858 = vpop.f32.mrb[0].mxu0
        %7859 = vmatprep.mubr.bf16.mxu0 0
        %7860 = vmatmul.mubr.bf16.gmra.mrb[0].mxu0 %v2952
        %v7861 = vpop.f32.mrb[0].mxu0
        %v7862 = vadd.f32 0.0, %v7861
        %v7863 = vpop.f32.mrb[0].mxu0
        %v7864 = vpop.f32.mrb[0].mxu0
        %v7865 = vadd.f32 0.0, %v7864
        %v7866 = vpop.f32.mrb[0].mxu0
        %7867 = vmatprep.mubr.bf16.mxu0 0
        %7868 = vmatmul.mubr.bf16.gmra.mrb[0].mxu0 %v2953
        %v7869 = vpop.f32.mrb[0].mxu0
        %v7870 = vadd.f32 0.0, %v7869
        %v7871 = vpop.f32.mrb[0].mxu0
        %v7872 = vpop.f32.mrb[0].mxu0
        %v7873 = vadd.f32 0.0, %v7872
        %v7874 = vpop.f32.mrb[0].mxu0
        %7875 = vmatprep.mubr.bf16.mxu0 0
        %7876 = vmatmul.mubr.bf16.gmra.mrb[0].mxu0 %v2954
        %v7877 = vpop.f32.mrb[0].mxu0
        %v7878 = vadd.f32 0.0, %v7877
        %v7879 = vpop.f32.mrb[0].mxu0
        %v7880 = vpop.f32.mrb[0].mxu0
        %v7881 = vadd.f32 0.0, %v7880
        %v7882 = vpop.f32.mrb[0].mxu0
        %7883 = vmatprep.mubr.bf16.mxu0 0
        %7884 = vmatmul.mubr.bf16.gmra.mrb[0].mxu0 %v2955
        %v7885 = vpop.f32.mrb[0].mxu0
        %v7886 = vadd.f32 0.0, %v7885
        %v7887 = vpop.f32.mrb[0].mxu0
        %v7888 = vpop.f32.mrb[0].mxu0
        %v7889 = vadd.f32 0.0, %v7888
        %v7890 = vpop.f32.mrb[0].mxu0
        %7891 = vmatprep.mubr.bf16.mxu0 0
        %7892 = vmatmul.mubr.bf16.gmra.mrb[0].mxu0 %v2956
        %v7893 = vpop.f32.mrb[0].mxu0
        %v7894 = vadd.f32 0.0, %v7893
        %v7895 = vpop.f32.mrb[0].mxu0
        %v7896 = vpop.f32.mrb[0].mxu0
        %v7897 = vadd.f32 0.0, %v7896
        %v7898 = vpop.f32.mrb[0].mxu0
        %7899 = vmatprep.mubr.bf16.mxu0 0
        %7900 = vmatmul.mubr.bf16.gmra.mrb[0].mxu0 %v2957
        %v7901 = vpop.f32.mrb[0].mxu0
        %v7902 = vadd.f32 0.0, %v7901
        %v7903 = vpop.f32.mrb[0].mxu0
        %v7904 = vpop.f32.mrb[0].mxu0
        %v7905 = vadd.f32 0.0, %v7904
        %v7906 = vpop.f32.mrb[0].mxu0
        %7907 = vmatprep.mubr.bf16.mxu0 0
        %7908 = vmatmul.mubr.bf16.gmra.mrb[0].mxu0 %v2958
        %v7909 = vpop.f32.mrb[0].mxu0
        %v7910 = vadd.f32 0.0, %v7909
        %v7911 = vpop.f32.mrb[0].mxu0
        %v7912 = vpop.f32.mrb[0].mxu0
        %v7913 = vadd.f32 0.0, %v7912
        %v7914 = vpop.f32.mrb[0].mxu0
        %7915 = vmatprep.mubr.bf16.mxu0 0
        %7916 = vmatmul.mubr.bf16.gmra.mrb[0].mxu0 %v2959
        %v7917 = vpop.f32.mrb[0].mxu0
        %v7918 = vadd.f32 0.0, %v7917
        %v7919 = vpop.f32.mrb[0].mxu0
        %v7920 = vpop.f32.mrb[0].mxu0
        %v7921 = vadd.f32 0.0, %v7920
        %v7922 = vpop.f32.mrb[0].mxu0
        %7923 = vmatprep.mubr.bf16.mxu0 0
        %7924 = vmatmul.mubr.bf16.gmra.mrb[0].mxu0 %v2960
        %v7925 = vpop.f32.mrb[0].mxu0
        %v7926 = vadd.f32 0.0, %v7925
        %v7927 = vpop.f32.mrb[0].mxu0
        %v7928 = vpop.f32.mrb[0].mxu0
        %v7929 = vadd.f32 0.0, %v7928
        %v7930 = vpop.f32.mrb[0].mxu0
        %7931 = vmatprep.mubr.bf16.mxu0 0
        %7932 = vmatmul.mubr.bf16.gmra.mrb[0].mxu0 %v2961
        %v7933 = vpop.f32.mrb[0].mxu0
        %v7934 = vadd.f32 0.0, %v7933
        %v7935 = vpop.f32.mrb[0].mxu0
        %v7936 = vpop.f32.mrb[0].mxu0
        %v7937 = vadd.f32 0.0, %v7936
        %v7938 = vpop.f32.mrb[0].mxu0
        %7939 = vmatprep.mubr.bf16.mxu0 0
        %7940 = vmatmul.mubr.bf16.gmra.mrb[0].mxu0 %v2962
        %v7941 = vpop.f32.mrb[0].mxu0
        %v7942 = vadd.f32 0.0, %v7941
        %v7943 = vpop.f32.mrb[0].mxu0
        %v7944 = vpop.f32.mrb[0].mxu0
        %v7945 = vadd.f32 0.0, %v7944
        %v7946 = vpop.f32.mrb[0].mxu0
        %7947 = vmatprep.mubr.bf16.mxu0 0
        %7948 = vmatmul.mubr.bf16.gmra.mrb[0].mxu0 %v2963
        %v7949 = vpop.f32.mrb[0].mxu0
        %v7950 = vadd.f32 0.0, %v7949
        %v7951 = vpop.f32.mrb[0].mxu0
        %v7952 = vpop.f32.mrb[0].mxu0
        %v7953 = vadd.f32 0.0, %v7952
        %v7954 = vpop.f32.mrb[0].mxu0
        %7955 = vmatprep.mubr.bf16.mxu0 0
        %7956 = vmatmul.mubr.bf16.gmra.mrb[0].mxu0 %v5091
        %v7957 = vpop.f32.mrb[0].mxu0
        %v7958 = vadd.f32 0.0, %v7957
        %v7959 = vpop.f32.mrb[0].mxu0
        %v7960 = vpop.f32.mrb[0].mxu0
        %v7961 = vadd.f32 0.0, %v7960
        %v7962 = vpop.f32.mrb[0].mxu0
        %7963 = vmatprep.mubr.bf16.mxu0 0
        %7964 = vmatmul.mubr.bf16.gmra.mrb[0].mxu0 %v5092
        %v7965 = vpop.f32.mrb[0].mxu0
        %v7966 = vadd.f32 0.0, %v7965
        %v7967 = vpop.f32.mrb[0].mxu0
        %v7968 = vpop.f32.mrb[0].mxu0
        %v7969 = vadd.f32 0.0, %v7968
        %v7970 = vpop.f32.mrb[0].mxu0
        %7971 = vmatprep.mubr.bf16.mxu0 0
        %7972 = vmatmul.mubr.bf16.gmra.mrb[0].mxu0 %v7391
        %v7973 = vpop.f32.mrb[0].mxu0
        %v7974 = vadd.f32 0.0, %v7973
        %v7975 = vpop.f32.mrb[0].mxu0
        %v7976 = vpop.f32.mrb[0].mxu0
        %v7977 = vadd.f32 0.0, %v7976
        %v7978 = vpop.f32.mrb[0].mxu0
        %7979 = vmatprep.mubr.bf16.mxu0 0
        %7980 = vmatmul.mubr.bf16.gmra.mrb[0].mxu0 %v7392
        %v7981 = vpop.f32.mrb[0].mxu0
        %v7982 = vadd.f32 0.0, %v7981
        %v7983 = vpop.f32.mrb[0].mxu0
        %v7984 = vpop.f32.mrb[0].mxu0
        %v7985 = vadd.f32 0.0, %v7984
        %v7986 = vpop.f32.mrb[0].mxu0
        %7987 = vdwg.mxu0
        %v7988 = vadd.f32 %v7238, %v7478
        %v7989 = vadd.f32 %v7239, %v7481
        %v7990 = vadd.f32 %v7240, %v7486
        %v7991 = vadd.f32 %v7241, %v7489
        %v7992 = vadd.f32 %v7242, %v7494
        %v7993 = vadd.f32 %v7243, %v7497
        %v7994 = vadd.f32 %v7244, %v7502
        %v7995 = vadd.f32 %v7245, %v7505
        %v7996 = vadd.f32 %v7246, %v7510
        %v7997 = vadd.f32 %v7247, %v7513
        %v7998 = vadd.f32 %v7248, %v7518
        %v7999 = vadd.f32 %v7249, %v7521
        %v8000 = vadd.f32 %v7250, %v7526
        %v8001 = vadd.f32 %v7251, %v7529
        %v8002 = vadd.f32 %v7252, %v7534
        %v8003 = vadd.f32 %v7253, %v7537
        %v8004 = vadd.f32 %v7254, %v7542
        %v8005 = vadd.f32 %v7255, %v7545
        %v8006 = vadd.f32 %v7256, %v7550
        %v8007 = vadd.f32 %v7257, %v7553
        %v8008 = vadd.f32 %v7258, %v7558
        %v8009 = vadd.f32 %v7259, %v7561
        %v8010 = vadd.f32 %v7260, %v7566
        %v8011 = vadd.f32 %v7261, %v7569
        %v8012 = vadd.f32 %v7262, %v7574
        %v8013 = vadd.f32 %v7263, %v7577
        %v8014 = vadd.f32 %v7264, %v7582
        %v8015 = vadd.f32 %v7265, %v7585
        %v8016 = vadd.f32 %v7266, %v7590
        %v8017 = vadd.f32 %v7267, %v7593
        %v8018 = vadd.f32 %v7268, %v7598
        %v8019 = vadd.f32 %v7269, %v7601
        %v8020 = vadd.f32 %v7270, %v7606
        %v8021 = vadd.f32 %v7271, %v7609
        %v8022 = vadd.f32 %v7272, %v7614
        %v8023 = vadd.f32 %v7273, %v7617
        %v8024 = vadd.f32 %v7274, %v7622
        %v8025 = vadd.f32 %v7275, %v7625
        %v8026 = vadd.f32 %v7276, %v7630
        %v8027 = vadd.f32 %v7277, %v7633
        %v8028 = vadd.f32 %v7278, %v7638
        %v8029 = vadd.f32 %v7279, %v7641
        %v8030 = vadd.f32 %v7280, %v7646
        %v8031 = vadd.f32 %v7281, %v7649
        %v8032 = vadd.f32 %v7282, %v7654
        %v8033 = vadd.f32 %v7283, %v7657
        %v8034 = vadd.f32 %v7284, %v7662
        %v8035 = vadd.f32 %v7285, %v7665
        %v8036 = vadd.f32 %v7286, %v7670
        %v8037 = vadd.f32 %v7287, %v7673
        %v8038 = vadd.f32 %v7288, %v7678
        %v8039 = vadd.f32 %v7289, %v7681
        %v8040 = vadd.f32 %v7290, %v7686
        %v8041 = vadd.f32 %v7291, %v7689
        %v8042 = vadd.f32 %v7292, %v7694
        %v8043 = vadd.f32 %v7293, %v7697
        %v8044 = vadd.f32 %v7294, %v7702
        %v8045 = vadd.f32 %v7295, %v7705
        %v8046 = vadd.f32 %v7296, %v7710
        %v8047 = vadd.f32 %v7297, %v7713
        %v8048 = vadd.f32 %v7298, %v7718
        %v8049 = vadd.f32 %v7299, %v7721
        %v8050 = vadd.f32 %v7300, %v7726
        %v8051 = vadd.f32 %v7301, %v7729
        %v8052 = vadd.f32 %v7302, %v7734
        %v8053 = vadd.f32 %v7303, %v7737
        %v8054 = vadd.f32 %v7304, %v7742
        %v8055 = vadd.f32 %v7305, %v7745
        %v8056 = vadd.f32 %v7306, %v7750
        %v8057 = vadd.f32 %v7307, %v7753
        %v8058 = vadd.f32 %v7308, %v7758
        %v8059 = vadd.f32 %v7309, %v7761
        %v8060 = vadd.f32 %v7310, %v7766
        %v8061 = vadd.f32 %v7311, %v7769
        %v8062 = vadd.f32 %v7312, %v7774
        %v8063 = vadd.f32 %v7313, %v7777
        %v8064 = vadd.f32 %v7314, %v7782
        %v8065 = vadd.f32 %v7315, %v7785
        %v8066 = vadd.f32 %v7316, %v7790
        %v8067 = vadd.f32 %v7317, %v7793
        %v8068 = vadd.f32 %v7318, %v7798
        %v8069 = vadd.f32 %v7319, %v7801
        %v8070 = vadd.f32 %v7320, %v7806
        %v8071 = vadd.f32 %v7321, %v7809
        %v8072 = vadd.f32 %v7322, %v7814
        %v8073 = vadd.f32 %v7323, %v7817
        %v8074 = vadd.f32 %v7324, %v7822
        %v8075 = vadd.f32 %v7325, %v7825
        %v8076 = vadd.f32 %v7326, %v7830
        %v8077 = vadd.f32 %v7327, %v7833
        %v8078 = vadd.f32 %v7328, %v7838
        %v8079 = vadd.f32 %v7329, %v7841
        %v8080 = vadd.f32 %v7330, %v7846
        %v8081 = vadd.f32 %v7331, %v7849
        %v8082 = vadd.f32 %v7332, %v7854
        %v8083 = vadd.f32 %v7333, %v7857
        %v8084 = vadd.f32 %v7334, %v7862
        %v8085 = vadd.f32 %v7335, %v7865
        %v8086 = vadd.f32 %v7336, %v7870
        %v8087 = vadd.f32 %v7337, %v7873
        %v8088 = vadd.f32 %v7338, %v7878
        %v8089 = vadd.f32 %v7339, %v7881
        %v8090 = vadd.f32 %v7340, %v7886
        %v8091 = vadd.f32 %v7341, %v7889
        %v8092 = vadd.f32 %v7342, %v7894
        %v8093 = vadd.f32 %v7343, %v7897
        %v8094 = vadd.f32 %v7344, %v7902
        %v8095 = vadd.f32 %v7345, %v7905
        %v8096 = vadd.f32 %v7346, %v7910
        %v8097 = vadd.f32 %v7347, %v7913
        %v8098 = vadd.f32 %v7348, %v7918
        %v8099 = vadd.f32 %v7349, %v7921
        %v8100 = vadd.f32 %v7350, %v7926
        %v8101 = vadd.f32 %v7351, %v7929
        %v8102 = vadd.f32 %v7352, %v7934
        %v8103 = vadd.f32 %v7353, %v7937
        %v8104 = vadd.f32 %v7354, %v7942
        %v8105 = vadd.f32 %v7355, %v7945
        %v8106 = vadd.f32 %v7356, %v7950
        %v8107 = vadd.f32 %v7357, %v7953
        %v8108 = vadd.f32 %v7358, %v7958
        %v8109 = vadd.f32 %v7359, %v7961
        %v8110 = vadd.f32 %v7360, %v7966
        %v8111 = vadd.f32 %v7361, %v7969
        %v8112 = vadd.f32 %v7362, %v7974
        %v8113 = vadd.f32 %v7363, %v7977
        %v8114 = vadd.f32 %v7364, %v7982
        %v8115 = vadd.f32 %v7365, %v7985
        %v8117 = vshrl.u32 %v346, 16
        %v8119 = vrot.slane %v8117, 4
        %v8120 = vshll.u32 %v346, 16
        %v8122 = vrot.slane %v8120, 5
        %v8123 = vor.u32 %v8119, %v8122
        %v8124 = vrot.slane %v8123, 4
        %v8126 = vshll.u32 %v347, 16
        %v8128 = vrot.slane %v8126, 5
        %v8129 = vsel %vm369, %v8124, %v8128
        %v8130 = vshrl.u32 %v347, 16
        %v8132 = vrot.slane %v8130, 4
        %v8133 = vor.u32 %v8132, %v8128
        %v8134 = vrot.slane %v8133, 4
        %v8136 = vshll.u32 %v348, 16
        %v8138 = vrot.slane %v8136, 5
        %v8139 = vsel %vm369, %v8134, %v8138
        %v8140 = vshrl.u32 %v348, 16
        %v8142 = vrot.slane %v8140, 4
        %v8143 = vor.u32 %v8142, %v8138
        %v8144 = vrot.slane %v8143, 4
        %v8146 = vshll.u32 %v349, 16
        %v8148 = vrot.slane %v8146, 5
        %v8149 = vsel %vm369, %v8144, %v8148
        %v8150 = vshrl.u32 %v349, 16
        %v8152 = vrot.slane %v8150, 4
        %v8153 = vor.u32 %v8152, %v8148
        %v8154 = vrot.slane %v8153, 4
        %v8156 = vshll.u32 %v350, 16
        %v8158 = vrot.slane %v8156, 5
        %v8159 = vsel %vm369, %v8154, %v8158
        %s8160 = scalar_lea.vmem %s1, 448
        %v8161 = vld [vmem:[%s8160] sm:$0xf]
        %v8162 = vld [vmem:[%s8160 + $0x4] sm:$0xf]
        %v8163 = vld [vmem:[%s8160 + $0x8] sm:$0xf]
        %v8164 = vld [vmem:[%s8160 + $0xc] sm:$0xf]
        %v8165 = vld [vmem:[%s8160 + $0x10] sm:$0xf]
        %v8166 = vld [vmem:[%s8160 + $0x14] sm:$0xf]
        %v8167 = vld [vmem:[%s8160 + $0x18] sm:$0xf]
        %v8168 = vld [vmem:[%s8160 + $0x1c] sm:$0xf]
        %v8169 = vld [vmem:[%s8160 + $0x20] sm:$0xf]
        %v8170 = vld [vmem:[%s8160 + $0x24] sm:$0xf]
        %v8171 = vld [vmem:[%s8160 + $0x28] sm:$0xf]
        %v8172 = vld [vmem:[%s8160 + $0x2c] sm:$0xf]
        %v8173 = vld [vmem:[%s8160 + $0x30] sm:$0xf]
        %v8174 = vld [vmem:[%s8160 + $0x34] sm:$0xf]
        %v8175 = vld [vmem:[%s8160 + $0x38] sm:$0xf]
        %v8176 = vld [vmem:[%s8160 + $0x3c] sm:$0xf]
        %v8177 = vunpack.c.l.b16 %v8129
        %v8178 = vunpack.c.l.b16 %v8139
        %v8179 = vunpack.c.l.b16 %v8149
        %v8180 = vunpack.c.l.b16 %v8159
        %v8181 = vpack.c.b16 %v8178, %v8177
        %v8182 = vpack.c.b16 %v8180, %v8179
        %v8201 = vunpack.c.l.b16 %v8161
        %v8202 = vunpack.c.l.b16 %v8162
        %v8203 = vunpack.c.l.b16 %v8163
        %v8204 = vunpack.c.l.b16 %v8164
        %v8205 = vunpack.c.l.b16 %v8165
        %v8206 = vunpack.c.l.b16 %v8166
        %v8207 = vunpack.c.l.b16 %v8167
        %v8208 = vunpack.c.l.b16 %v8168
        %v8209 = vunpack.c.l.b16 %v8169
        %v8210 = vunpack.c.l.b16 %v8170
        %v8211 = vunpack.c.l.b16 %v8171
        %v8212 = vunpack.c.l.b16 %v8172
        %v8213 = vunpack.c.l.b16 %v8173
        %v8214 = vunpack.c.l.b16 %v8174
        %v8215 = vunpack.c.l.b16 %v8175
        %v8216 = vunpack.c.l.b16 %v8176
        %v8217 = vpack.c.b16 %v8202, %v8201
        %v8218 = vpack.c.b16 %v8204, %v8203
        %v8219 = vpack.c.b16 %v8206, %v8205
        %v8220 = vpack.c.b16 %v8208, %v8207
        %v8221 = vpack.c.b16 %v8210, %v8209
        %v8222 = vpack.c.b16 %v8212, %v8211
        %v8223 = vpack.c.b16 %v8214, %v8213
        %v8224 = vpack.c.b16 %v8216, %v8215
        %8233 = vmatprep.subr.bf16.mxu0 0
        %8234 = vmatpush1.bf16.msra.mxu0 %v8217
        %8235 = vmatprep.subr.bf16.mxu0 0
        %8236 = vmatpush1.bf16.msra.mxu0 %v8218
        %8237 = vmatprep.subr.bf16.mxu0 0
        %8238 = vmatpush1.bf16.msra.mxu0 %v8219
        %8239 = vmatprep.subr.bf16.mxu0 0
        %8240 = vmatpush1.bf16.msra.mxu0 %v8220
        %8241 = vmatprep.subr.bf16.mxu0 0
        %8242 = vmatpush1.bf16.msra.mxu0 %v8221
        %8243 = vmatprep.subr.bf16.mxu0 0
        %8244 = vmatpush1.bf16.msra.mxu0 %v8222
        %8245 = vmatprep.subr.bf16.mxu0 0
        %8246 = vmatpush1.bf16.msra.mxu0 %v8223
        %8247 = vmatprep.subr.bf16.mxu0 0
        %8248 = vmatpush1.bf16.msra.mxu0 %v8224
        %8249 = vmatprep.subr.bf16.mxu0 0
        %8250 = vmatpush1.bf16.msra.mxu0 0
        %8251 = vmatprep.subr.bf16.mxu0 0
        %8252 = vmatpush1.bf16.msra.mxu0 0
        %8253 = vmatprep.subr.bf16.mxu0 0
        %8254 = vmatpush1.bf16.msra.mxu0 0
        %8255 = vmatprep.subr.bf16.mxu0 0
        %8256 = vmatpush1.bf16.msra.mxu0 0
        %8257 = vmatprep.subr.bf16.mxu0 0
        %8258 = vmatpush1.bf16.msra.mxu0 0
        %8259 = vmatprep.subr.bf16.mxu0 0
        %8260 = vmatpush1.bf16.msra.mxu0 0
        %8261 = vmatprep.subr.bf16.mxu0 0
        %8262 = vmatpush1.bf16.msra.mxu0 0
        %8263 = vmatprep.subr.bf16.mxu0 0
        %8264 = vmatpush1.bf16.msra.mxu0 0
        %8265 = vmatprep.mubr.bf16.mxu0 0
        %8266 = vmatmul.mubr.bf16.gmra.mrb[0].mxu0 %v1927
        %v8267 = vpop.f32.mrb[0].mxu0
        %v8268 = vadd.f32 0.0, %v8267
        %v8269 = vpop.f32.mrb[0].mxu0
        %v8270 = vpop.f32.mrb[0].mxu0
        %v8271 = vadd.f32 0.0, %v8270
        %v8272 = vpop.f32.mrb[0].mxu0
        %8273 = vmatprep.mubr.bf16.mxu0 0
        %8274 = vmatmul.mubr.bf16.gmra.mrb[0].mxu0 %v1928
        %v8275 = vpop.f32.mrb[0].mxu0
        %v8276 = vadd.f32 0.0, %v8275
        %v8277 = vpop.f32.mrb[0].mxu0
        %v8278 = vpop.f32.mrb[0].mxu0
        %v8279 = vadd.f32 0.0, %v8278
        %v8280 = vpop.f32.mrb[0].mxu0
        %8281 = vmatprep.mubr.bf16.mxu0 0
        %8282 = vmatmul.mubr.bf16.gmra.mrb[0].mxu0 %v1929
        %v8283 = vpop.f32.mrb[0].mxu0
        %v8284 = vadd.f32 0.0, %v8283
        %v8285 = vpop.f32.mrb[0].mxu0
        %v8286 = vpop.f32.mrb[0].mxu0
        %v8287 = vadd.f32 0.0, %v8286
        %v8288 = vpop.f32.mrb[0].mxu0
        %8289 = vmatprep.mubr.bf16.mxu0 0
        %8290 = vmatmul.mubr.bf16.gmra.mrb[0].mxu0 %v1930
        %v8291 = vpop.f32.mrb[0].mxu0
        %v8292 = vadd.f32 0.0, %v8291
        %v8293 = vpop.f32.mrb[0].mxu0
        %v8294 = vpop.f32.mrb[0].mxu0
        %v8295 = vadd.f32 0.0, %v8294
        %v8296 = vpop.f32.mrb[0].mxu0
        %8297 = vmatprep.mubr.bf16.mxu0 0
        %8298 = vmatmul.mubr.bf16.gmra.mrb[0].mxu0 %v1931
        %v8299 = vpop.f32.mrb[0].mxu0
        %v8300 = vadd.f32 0.0, %v8299
        %v8301 = vpop.f32.mrb[0].mxu0
        %v8302 = vpop.f32.mrb[0].mxu0
        %v8303 = vadd.f32 0.0, %v8302
        %v8304 = vpop.f32.mrb[0].mxu0
        %8305 = vmatprep.mubr.bf16.mxu0 0
        %8306 = vmatmul.mubr.bf16.gmra.mrb[0].mxu0 %v1932
        %v8307 = vpop.f32.mrb[0].mxu0
        %v8308 = vadd.f32 0.0, %v8307
        %v8309 = vpop.f32.mrb[0].mxu0
        %v8310 = vpop.f32.mrb[0].mxu0
        %v8311 = vadd.f32 0.0, %v8310
        %v8312 = vpop.f32.mrb[0].mxu0
        %8313 = vmatprep.mubr.bf16.mxu0 0
        %8314 = vmatmul.mubr.bf16.gmra.mrb[0].mxu0 %v1933
        %v8315 = vpop.f32.mrb[0].mxu0
        %v8316 = vadd.f32 0.0, %v8315
        %v8317 = vpop.f32.mrb[0].mxu0
        %v8318 = vpop.f32.mrb[0].mxu0
        %v8319 = vadd.f32 0.0, %v8318
        %v8320 = vpop.f32.mrb[0].mxu0
        %8321 = vmatprep.mubr.bf16.mxu0 0
        %8322 = vmatmul.mubr.bf16.gmra.mrb[0].mxu0 %v1934
        %v8323 = vpop.f32.mrb[0].mxu0
        %v8324 = vadd.f32 0.0, %v8323
        %v8325 = vpop.f32.mrb[0].mxu0
        %v8326 = vpop.f32.mrb[0].mxu0
        %v8327 = vadd.f32 0.0, %v8326
        %v8328 = vpop.f32.mrb[0].mxu0
        %8329 = vmatprep.mubr.bf16.mxu0 0
        %8330 = vmatmul.mubr.bf16.gmra.mrb[0].mxu0 %v1935
        %v8331 = vpop.f32.mrb[0].mxu0
        %v8332 = vadd.f32 0.0, %v8331
        %v8333 = vpop.f32.mrb[0].mxu0
        %v8334 = vpop.f32.mrb[0].mxu0
        %v8335 = vadd.f32 0.0, %v8334
        %v8336 = vpop.f32.mrb[0].mxu0
        %8337 = vmatprep.mubr.bf16.mxu0 0
        %8338 = vmatmul.mubr.bf16.gmra.mrb[0].mxu0 %v1936
        %v8339 = vpop.f32.mrb[0].mxu0
        %v8340 = vadd.f32 0.0, %v8339
        %v8341 = vpop.f32.mrb[0].mxu0
        %v8342 = vpop.f32.mrb[0].mxu0
        %v8343 = vadd.f32 0.0, %v8342
        %v8344 = vpop.f32.mrb[0].mxu0
        %8345 = vmatprep.mubr.bf16.mxu0 0
        %8346 = vmatmul.mubr.bf16.gmra.mrb[0].mxu0 %v1937
        %v8347 = vpop.f32.mrb[0].mxu0
        %v8348 = vadd.f32 0.0, %v8347
        %v8349 = vpop.f32.mrb[0].mxu0
        %v8350 = vpop.f32.mrb[0].mxu0
        %v8351 = vadd.f32 0.0, %v8350
        %v8352 = vpop.f32.mrb[0].mxu0
        %8353 = vmatprep.mubr.bf16.mxu0 0
        %8354 = vmatmul.mubr.bf16.gmra.mrb[0].mxu0 %v1938
        %v8355 = vpop.f32.mrb[0].mxu0
        %v8356 = vadd.f32 0.0, %v8355
        %v8357 = vpop.f32.mrb[0].mxu0
        %v8358 = vpop.f32.mrb[0].mxu0
        %v8359 = vadd.f32 0.0, %v8358
        %v8360 = vpop.f32.mrb[0].mxu0
        %8361 = vmatprep.mubr.bf16.mxu0 0
        %8362 = vmatmul.mubr.bf16.gmra.mrb[0].mxu0 %v1939
        %v8363 = vpop.f32.mrb[0].mxu0
        %v8364 = vadd.f32 0.0, %v8363
        %v8365 = vpop.f32.mrb[0].mxu0
        %v8366 = vpop.f32.mrb[0].mxu0
        %v8367 = vadd.f32 0.0, %v8366
        %v8368 = vpop.f32.mrb[0].mxu0
        %8369 = vmatprep.mubr.bf16.mxu0 0
        %8370 = vmatmul.mubr.bf16.gmra.mrb[0].mxu0 %v1940
        %v8371 = vpop.f32.mrb[0].mxu0
        %v8372 = vadd.f32 0.0, %v8371
        %v8373 = vpop.f32.mrb[0].mxu0
        %v8374 = vpop.f32.mrb[0].mxu0
        %v8375 = vadd.f32 0.0, %v8374
        %v8376 = vpop.f32.mrb[0].mxu0
        %8377 = vmatprep.mubr.bf16.mxu0 0
        %8378 = vmatmul.mubr.bf16.gmra.mrb[0].mxu0 %v1941
        %v8379 = vpop.f32.mrb[0].mxu0
        %v8380 = vadd.f32 0.0, %v8379
        %v8381 = vpop.f32.mrb[0].mxu0
        %v8382 = vpop.f32.mrb[0].mxu0
        %v8383 = vadd.f32 0.0, %v8382
        %v8384 = vpop.f32.mrb[0].mxu0
        %8385 = vmatprep.mubr.bf16.mxu0 0
        %8386 = vmatmul.mubr.bf16.gmra.mrb[0].mxu0 %v1942
        %v8387 = vpop.f32.mrb[0].mxu0
        %v8388 = vadd.f32 0.0, %v8387
        %v8389 = vpop.f32.mrb[0].mxu0
        %v8390 = vpop.f32.mrb[0].mxu0
        %v8391 = vadd.f32 0.0, %v8390
        %v8392 = vpop.f32.mrb[0].mxu0
        %8393 = vmatprep.mubr.bf16.mxu0 0
        %8394 = vmatmul.mubr.bf16.gmra.mrb[0].mxu0 %v1943
        %v8395 = vpop.f32.mrb[0].mxu0
        %v8396 = vadd.f32 0.0, %v8395
        %v8397 = vpop.f32.mrb[0].mxu0
        %v8398 = vpop.f32.mrb[0].mxu0
        %v8399 = vadd.f32 0.0, %v8398
        %v8400 = vpop.f32.mrb[0].mxu0
        %8401 = vmatprep.mubr.bf16.mxu0 0
        %8402 = vmatmul.mubr.bf16.gmra.mrb[0].mxu0 %v1944
        %v8403 = vpop.f32.mrb[0].mxu0
        %v8404 = vadd.f32 0.0, %v8403
        %v8405 = vpop.f32.mrb[0].mxu0
        %v8406 = vpop.f32.mrb[0].mxu0
        %v8407 = vadd.f32 0.0, %v8406
        %v8408 = vpop.f32.mrb[0].mxu0
        %8409 = vmatprep.mubr.bf16.mxu0 0
        %8410 = vmatmul.mubr.bf16.gmra.mrb[0].mxu0 %v1945
        %v8411 = vpop.f32.mrb[0].mxu0
        %v8412 = vadd.f32 0.0, %v8411
        %v8413 = vpop.f32.mrb[0].mxu0
        %v8414 = vpop.f32.mrb[0].mxu0
        %v8415 = vadd.f32 0.0, %v8414
        %v8416 = vpop.f32.mrb[0].mxu0
        %8417 = vmatprep.mubr.bf16.mxu0 0
        %8418 = vmatmul.mubr.bf16.gmra.mrb[0].mxu0 %v1946
        %v8419 = vpop.f32.mrb[0].mxu0
        %v8420 = vadd.f32 0.0, %v8419
        %v8421 = vpop.f32.mrb[0].mxu0
        %v8422 = vpop.f32.mrb[0].mxu0
        %v8423 = vadd.f32 0.0, %v8422
        %v8424 = vpop.f32.mrb[0].mxu0
        %8425 = vmatprep.mubr.bf16.mxu0 0
        %8426 = vmatmul.mubr.bf16.gmra.mrb[0].mxu0 %v1947
        %v8427 = vpop.f32.mrb[0].mxu0
        %v8428 = vadd.f32 0.0, %v8427
        %v8429 = vpop.f32.mrb[0].mxu0
        %v8430 = vpop.f32.mrb[0].mxu0
        %v8431 = vadd.f32 0.0, %v8430
        %v8432 = vpop.f32.mrb[0].mxu0
        %8433 = vmatprep.mubr.bf16.mxu0 0
        %8434 = vmatmul.mubr.bf16.gmra.mrb[0].mxu0 %v1948
        %v8435 = vpop.f32.mrb[0].mxu0
        %v8436 = vadd.f32 0.0, %v8435
        %v8437 = vpop.f32.mrb[0].mxu0
        %v8438 = vpop.f32.mrb[0].mxu0
        %v8439 = vadd.f32 0.0, %v8438
        %v8440 = vpop.f32.mrb[0].mxu0
        %8441 = vmatprep.mubr.bf16.mxu0 0
        %8442 = vmatmul.mubr.bf16.gmra.mrb[0].mxu0 %v1949
        %v8443 = vpop.f32.mrb[0].mxu0
        %v8444 = vadd.f32 0.0, %v8443
        %v8445 = vpop.f32.mrb[0].mxu0
        %v8446 = vpop.f32.mrb[0].mxu0
        %v8447 = vadd.f32 0.0, %v8446
        %v8448 = vpop.f32.mrb[0].mxu0
        %8449 = vmatprep.mubr.bf16.mxu0 0
        %8450 = vmatmul.mubr.bf16.gmra.mrb[0].mxu0 %v1950
        %v8451 = vpop.f32.mrb[0].mxu0
        %v8452 = vadd.f32 0.0, %v8451
        %v8453 = vpop.f32.mrb[0].mxu0
        %v8454 = vpop.f32.mrb[0].mxu0
        %v8455 = vadd.f32 0.0, %v8454
        %v8456 = vpop.f32.mrb[0].mxu0
        %8457 = vmatprep.mubr.bf16.mxu0 0
        %8458 = vmatmul.mubr.bf16.gmra.mrb[0].mxu0 %v1951
        %v8459 = vpop.f32.mrb[0].mxu0
        %v8460 = vadd.f32 0.0, %v8459
        %v8461 = vpop.f32.mrb[0].mxu0
        %v8462 = vpop.f32.mrb[0].mxu0
        %v8463 = vadd.f32 0.0, %v8462
        %v8464 = vpop.f32.mrb[0].mxu0
        %8465 = vmatprep.mubr.bf16.mxu0 0
        %8466 = vmatmul.mubr.bf16.gmra.mrb[0].mxu0 %v1952
        %v8467 = vpop.f32.mrb[0].mxu0
        %v8468 = vadd.f32 0.0, %v8467
        %v8469 = vpop.f32.mrb[0].mxu0
        %v8470 = vpop.f32.mrb[0].mxu0
        %v8471 = vadd.f32 0.0, %v8470
        %v8472 = vpop.f32.mrb[0].mxu0
        %8473 = vmatprep.mubr.bf16.mxu0 0
        %8474 = vmatmul.mubr.bf16.gmra.mrb[0].mxu0 %v1953
        %v8475 = vpop.f32.mrb[0].mxu0
        %v8476 = vadd.f32 0.0, %v8475
        %v8477 = vpop.f32.mrb[0].mxu0
        %v8478 = vpop.f32.mrb[0].mxu0
        %v8479 = vadd.f32 0.0, %v8478
        %v8480 = vpop.f32.mrb[0].mxu0
        %8481 = vmatprep.mubr.bf16.mxu0 0
        %8482 = vmatmul.mubr.bf16.gmra.mrb[0].mxu0 %v1954
        %v8483 = vpop.f32.mrb[0].mxu0
        %v8484 = vadd.f32 0.0, %v8483
        %v8485 = vpop.f32.mrb[0].mxu0
        %v8486 = vpop.f32.mrb[0].mxu0
        %v8487 = vadd.f32 0.0, %v8486
        %v8488 = vpop.f32.mrb[0].mxu0
        %8489 = vmatprep.mubr.bf16.mxu0 0
        %8490 = vmatmul.mubr.bf16.gmra.mrb[0].mxu0 %v1955
        %v8491 = vpop.f32.mrb[0].mxu0
        %v8492 = vadd.f32 0.0, %v8491
        %v8493 = vpop.f32.mrb[0].mxu0
        %v8494 = vpop.f32.mrb[0].mxu0
        %v8495 = vadd.f32 0.0, %v8494
        %v8496 = vpop.f32.mrb[0].mxu0
        %8497 = vmatprep.mubr.bf16.mxu0 0
        %8498 = vmatmul.mubr.bf16.gmra.mrb[0].mxu0 %v1956
        %v8499 = vpop.f32.mrb[0].mxu0
        %v8500 = vadd.f32 0.0, %v8499
        %v8501 = vpop.f32.mrb[0].mxu0
        %v8502 = vpop.f32.mrb[0].mxu0
        %v8503 = vadd.f32 0.0, %v8502
        %v8504 = vpop.f32.mrb[0].mxu0
        %8505 = vmatprep.mubr.bf16.mxu0 0
        %8506 = vmatmul.mubr.bf16.gmra.mrb[0].mxu0 %v1957
        %v8507 = vpop.f32.mrb[0].mxu0
        %v8508 = vadd.f32 0.0, %v8507
        %v8509 = vpop.f32.mrb[0].mxu0
        %v8510 = vpop.f32.mrb[0].mxu0
        %v8511 = vadd.f32 0.0, %v8510
        %v8512 = vpop.f32.mrb[0].mxu0
        %8513 = vmatprep.mubr.bf16.mxu0 0
        %8514 = vmatmul.mubr.bf16.gmra.mrb[0].mxu0 %v1958
        %v8515 = vpop.f32.mrb[0].mxu0
        %v8516 = vadd.f32 0.0, %v8515
        %v8517 = vpop.f32.mrb[0].mxu0
        %v8518 = vpop.f32.mrb[0].mxu0
        %v8519 = vadd.f32 0.0, %v8518
        %v8520 = vpop.f32.mrb[0].mxu0
        %8521 = vmatprep.mubr.bf16.mxu0 0
        %8522 = vmatmul.mubr.bf16.gmra.mrb[0].mxu0 %v1959
        %v8523 = vpop.f32.mrb[0].mxu0
        %v8524 = vadd.f32 0.0, %v8523
        %v8525 = vpop.f32.mrb[0].mxu0
        %v8526 = vpop.f32.mrb[0].mxu0
        %v8527 = vadd.f32 0.0, %v8526
        %v8528 = vpop.f32.mrb[0].mxu0
        %8529 = vmatprep.mubr.bf16.mxu0 0
        %8530 = vmatmul.mubr.bf16.gmra.mrb[0].mxu0 %v1960
        %v8531 = vpop.f32.mrb[0].mxu0
        %v8532 = vadd.f32 0.0, %v8531
        %v8533 = vpop.f32.mrb[0].mxu0
        %v8534 = vpop.f32.mrb[0].mxu0
        %v8535 = vadd.f32 0.0, %v8534
        %v8536 = vpop.f32.mrb[0].mxu0
        %8537 = vmatprep.mubr.bf16.mxu0 0
        %8538 = vmatmul.mubr.bf16.gmra.mrb[0].mxu0 %v1961
        %v8539 = vpop.f32.mrb[0].mxu0
        %v8540 = vadd.f32 0.0, %v8539
        %v8541 = vpop.f32.mrb[0].mxu0
        %v8542 = vpop.f32.mrb[0].mxu0
        %v8543 = vadd.f32 0.0, %v8542
        %v8544 = vpop.f32.mrb[0].mxu0
        %8545 = vmatprep.mubr.bf16.mxu0 0
        %8546 = vmatmul.mubr.bf16.gmra.mrb[0].mxu0 %v1962
        %v8547 = vpop.f32.mrb[0].mxu0
        %v8548 = vadd.f32 0.0, %v8547
        %v8549 = vpop.f32.mrb[0].mxu0
        %v8550 = vpop.f32.mrb[0].mxu0
        %v8551 = vadd.f32 0.0, %v8550
        %v8552 = vpop.f32.mrb[0].mxu0
        %8553 = vmatprep.mubr.bf16.mxu0 0
        %8554 = vmatmul.mubr.bf16.gmra.mrb[0].mxu0 %v1963
        %v8555 = vpop.f32.mrb[0].mxu0
        %v8556 = vadd.f32 0.0, %v8555
        %v8557 = vpop.f32.mrb[0].mxu0
        %v8558 = vpop.f32.mrb[0].mxu0
        %v8559 = vadd.f32 0.0, %v8558
        %v8560 = vpop.f32.mrb[0].mxu0
        %8561 = vmatprep.mubr.bf16.mxu0 0
        %8562 = vmatmul.mubr.bf16.gmra.mrb[0].mxu0 %v1964
        %v8563 = vpop.f32.mrb[0].mxu0
        %v8564 = vadd.f32 0.0, %v8563
        %v8565 = vpop.f32.mrb[0].mxu0
        %v8566 = vpop.f32.mrb[0].mxu0
        %v8567 = vadd.f32 0.0, %v8566
        %v8568 = vpop.f32.mrb[0].mxu0
        %8569 = vmatprep.mubr.bf16.mxu0 0
        %8570 = vmatmul.mubr.bf16.gmra.mrb[0].mxu0 %v1965
        %v8571 = vpop.f32.mrb[0].mxu0
        %v8572 = vadd.f32 0.0, %v8571
        %v8573 = vpop.f32.mrb[0].mxu0
        %v8574 = vpop.f32.mrb[0].mxu0
        %v8575 = vadd.f32 0.0, %v8574
        %v8576 = vpop.f32.mrb[0].mxu0
        %8577 = vmatprep.mubr.bf16.mxu0 0
        %8578 = vmatmul.mubr.bf16.gmra.mrb[0].mxu0 %v1966
        %v8579 = vpop.f32.mrb[0].mxu0
        %v8580 = vadd.f32 0.0, %v8579
        %v8581 = vpop.f32.mrb[0].mxu0
        %v8582 = vpop.f32.mrb[0].mxu0
        %v8583 = vadd.f32 0.0, %v8582
        %v8584 = vpop.f32.mrb[0].mxu0
        %8585 = vmatprep.mubr.bf16.mxu0 0
        %8586 = vmatmul.mubr.bf16.gmra.mrb[0].mxu0 %v1967
        %v8587 = vpop.f32.mrb[0].mxu0
        %v8588 = vadd.f32 0.0, %v8587
        %v8589 = vpop.f32.mrb[0].mxu0
        %v8590 = vpop.f32.mrb[0].mxu0
        %v8591 = vadd.f32 0.0, %v8590
        %v8592 = vpop.f32.mrb[0].mxu0
        %8593 = vmatprep.mubr.bf16.mxu0 0
        %8594 = vmatmul.mubr.bf16.gmra.mrb[0].mxu0 %v1968
        %v8595 = vpop.f32.mrb[0].mxu0
        %v8596 = vadd.f32 0.0, %v8595
        %v8597 = vpop.f32.mrb[0].mxu0
        %v8598 = vpop.f32.mrb[0].mxu0
        %v8599 = vadd.f32 0.0, %v8598
        %v8600 = vpop.f32.mrb[0].mxu0
        %8601 = vmatprep.mubr.bf16.mxu0 0
        %8602 = vmatmul.mubr.bf16.gmra.mrb[0].mxu0 %v1969
        %v8603 = vpop.f32.mrb[0].mxu0
        %v8604 = vadd.f32 0.0, %v8603
        %v8605 = vpop.f32.mrb[0].mxu0
        %v8606 = vpop.f32.mrb[0].mxu0
        %v8607 = vadd.f32 0.0, %v8606
        %v8608 = vpop.f32.mrb[0].mxu0
        %8609 = vmatprep.mubr.bf16.mxu0 0
        %8610 = vmatmul.mubr.bf16.gmra.mrb[0].mxu0 %v1970
        %v8611 = vpop.f32.mrb[0].mxu0
        %v8612 = vadd.f32 0.0, %v8611
        %v8613 = vpop.f32.mrb[0].mxu0
        %v8614 = vpop.f32.mrb[0].mxu0
        %v8615 = vadd.f32 0.0, %v8614
        %v8616 = vpop.f32.mrb[0].mxu0
        %8617 = vmatprep.mubr.bf16.mxu0 0
        %8618 = vmatmul.mubr.bf16.gmra.mrb[0].mxu0 %v1971
        %v8619 = vpop.f32.mrb[0].mxu0
        %v8620 = vadd.f32 0.0, %v8619
        %v8621 = vpop.f32.mrb[0].mxu0
        %v8622 = vpop.f32.mrb[0].mxu0
        %v8623 = vadd.f32 0.0, %v8622
        %v8624 = vpop.f32.mrb[0].mxu0
        %8625 = vmatprep.mubr.bf16.mxu0 0
        %8626 = vmatmul.mubr.bf16.gmra.mrb[0].mxu0 %v1972
        %v8627 = vpop.f32.mrb[0].mxu0
        %v8628 = vadd.f32 0.0, %v8627
        %v8629 = vpop.f32.mrb[0].mxu0
        %v8630 = vpop.f32.mrb[0].mxu0
        %v8631 = vadd.f32 0.0, %v8630
        %v8632 = vpop.f32.mrb[0].mxu0
        %8633 = vmatprep.mubr.bf16.mxu0 0
        %8634 = vmatmul.mubr.bf16.gmra.mrb[0].mxu0 %v1973
        %v8635 = vpop.f32.mrb[0].mxu0
        %v8636 = vadd.f32 0.0, %v8635
        %v8637 = vpop.f32.mrb[0].mxu0
        %v8638 = vpop.f32.mrb[0].mxu0
        %v8639 = vadd.f32 0.0, %v8638
        %v8640 = vpop.f32.mrb[0].mxu0
        %8641 = vmatprep.mubr.bf16.mxu0 0
        %8642 = vmatmul.mubr.bf16.gmra.mrb[0].mxu0 %v1974
        %v8643 = vpop.f32.mrb[0].mxu0
        %v8644 = vadd.f32 0.0, %v8643
        %v8645 = vpop.f32.mrb[0].mxu0
        %v8646 = vpop.f32.mrb[0].mxu0
        %v8647 = vadd.f32 0.0, %v8646
        %v8648 = vpop.f32.mrb[0].mxu0
        %8649 = vmatprep.mubr.bf16.mxu0 0
        %8650 = vmatmul.mubr.bf16.gmra.mrb[0].mxu0 %v1975
        %v8651 = vpop.f32.mrb[0].mxu0
        %v8652 = vadd.f32 0.0, %v8651
        %v8653 = vpop.f32.mrb[0].mxu0
        %v8654 = vpop.f32.mrb[0].mxu0
        %v8655 = vadd.f32 0.0, %v8654
        %v8656 = vpop.f32.mrb[0].mxu0
        %8657 = vmatprep.mubr.bf16.mxu0 0
        %8658 = vmatmul.mubr.bf16.gmra.mrb[0].mxu0 %v1976
        %v8659 = vpop.f32.mrb[0].mxu0
        %v8660 = vadd.f32 0.0, %v8659
        %v8661 = vpop.f32.mrb[0].mxu0
        %v8662 = vpop.f32.mrb[0].mxu0
        %v8663 = vadd.f32 0.0, %v8662
        %v8664 = vpop.f32.mrb[0].mxu0
        %8665 = vmatprep.mubr.bf16.mxu0 0
        %8666 = vmatmul.mubr.bf16.gmra.mrb[0].mxu0 %v1977
        %v8667 = vpop.f32.mrb[0].mxu0
        %v8668 = vadd.f32 0.0, %v8667
        %v8669 = vpop.f32.mrb[0].mxu0
        %v8670 = vpop.f32.mrb[0].mxu0
        %v8671 = vadd.f32 0.0, %v8670
        %v8672 = vpop.f32.mrb[0].mxu0
        %8673 = vmatprep.mubr.bf16.mxu0 0
        %8674 = vmatmul.mubr.bf16.gmra.mrb[0].mxu0 %v1978
        %v8675 = vpop.f32.mrb[0].mxu0
        %v8676 = vadd.f32 0.0, %v8675
        %v8677 = vpop.f32.mrb[0].mxu0
        %v8678 = vpop.f32.mrb[0].mxu0
        %v8679 = vadd.f32 0.0, %v8678
        %v8680 = vpop.f32.mrb[0].mxu0
        %8681 = vmatprep.mubr.bf16.mxu0 0
        %8682 = vmatmul.mubr.bf16.gmra.mrb[0].mxu0 %v1979
        %v8683 = vpop.f32.mrb[0].mxu0
        %v8684 = vadd.f32 0.0, %v8683
        %v8685 = vpop.f32.mrb[0].mxu0
        %v8686 = vpop.f32.mrb[0].mxu0
        %v8687 = vadd.f32 0.0, %v8686
        %v8688 = vpop.f32.mrb[0].mxu0
        %8689 = vmatprep.mubr.bf16.mxu0 0
        %8690 = vmatmul.mubr.bf16.gmra.mrb[0].mxu0 %v1980
        %v8691 = vpop.f32.mrb[0].mxu0
        %v8692 = vadd.f32 0.0, %v8691
        %v8693 = vpop.f32.mrb[0].mxu0
        %v8694 = vpop.f32.mrb[0].mxu0
        %v8695 = vadd.f32 0.0, %v8694
        %v8696 = vpop.f32.mrb[0].mxu0
        %8697 = vmatprep.mubr.bf16.mxu0 0
        %8698 = vmatmul.mubr.bf16.gmra.mrb[0].mxu0 %v1981
        %v8699 = vpop.f32.mrb[0].mxu0
        %v8700 = vadd.f32 0.0, %v8699
        %v8701 = vpop.f32.mrb[0].mxu0
        %v8702 = vpop.f32.mrb[0].mxu0
        %v8703 = vadd.f32 0.0, %v8702
        %v8704 = vpop.f32.mrb[0].mxu0
        %8705 = vmatprep.mubr.bf16.mxu0 0
        %8706 = vmatmul.mubr.bf16.gmra.mrb[0].mxu0 %v1982
        %v8707 = vpop.f32.mrb[0].mxu0
        %v8708 = vadd.f32 0.0, %v8707
        %v8709 = vpop.f32.mrb[0].mxu0
        %v8710 = vpop.f32.mrb[0].mxu0
        %v8711 = vadd.f32 0.0, %v8710
        %v8712 = vpop.f32.mrb[0].mxu0
        %8713 = vmatprep.mubr.bf16.mxu0 0
        %8714 = vmatmul.mubr.bf16.gmra.mrb[0].mxu0 %v1983
        %v8715 = vpop.f32.mrb[0].mxu0
        %v8716 = vadd.f32 0.0, %v8715
        %v8717 = vpop.f32.mrb[0].mxu0
        %v8718 = vpop.f32.mrb[0].mxu0
        %v8719 = vadd.f32 0.0, %v8718
        %v8720 = vpop.f32.mrb[0].mxu0
        %8721 = vmatprep.mubr.bf16.mxu0 0
        %8722 = vmatmul.mubr.bf16.gmra.mrb[0].mxu0 %v1984
        %v8723 = vpop.f32.mrb[0].mxu0
        %v8724 = vadd.f32 0.0, %v8723
        %v8725 = vpop.f32.mrb[0].mxu0
        %v8726 = vpop.f32.mrb[0].mxu0
        %v8727 = vadd.f32 0.0, %v8726
        %v8728 = vpop.f32.mrb[0].mxu0
        %8729 = vmatprep.mubr.bf16.mxu0 0
        %8730 = vmatmul.mubr.bf16.gmra.mrb[0].mxu0 %v1985
        %v8731 = vpop.f32.mrb[0].mxu0
        %v8732 = vadd.f32 0.0, %v8731
        %v8733 = vpop.f32.mrb[0].mxu0
        %v8734 = vpop.f32.mrb[0].mxu0
        %v8735 = vadd.f32 0.0, %v8734
        %v8736 = vpop.f32.mrb[0].mxu0
        %8737 = vmatprep.mubr.bf16.mxu0 0
        %8738 = vmatmul.mubr.bf16.gmra.mrb[0].mxu0 %v1986
        %v8739 = vpop.f32.mrb[0].mxu0
        %v8740 = vadd.f32 0.0, %v8739
        %v8741 = vpop.f32.mrb[0].mxu0
        %v8742 = vpop.f32.mrb[0].mxu0
        %v8743 = vadd.f32 0.0, %v8742
        %v8744 = vpop.f32.mrb[0].mxu0
        %8745 = vmatprep.mubr.bf16.mxu0 0
        %8746 = vmatmul.mubr.bf16.gmra.mrb[0].mxu0 %v5881
        %v8747 = vpop.f32.mrb[0].mxu0
        %v8748 = vadd.f32 0.0, %v8747
        %v8749 = vpop.f32.mrb[0].mxu0
        %v8750 = vpop.f32.mrb[0].mxu0
        %v8751 = vadd.f32 0.0, %v8750
        %v8752 = vpop.f32.mrb[0].mxu0
        %8753 = vmatprep.mubr.bf16.mxu0 0
        %8754 = vmatmul.mubr.bf16.gmra.mrb[0].mxu0 %v5882
        %v8755 = vpop.f32.mrb[0].mxu0
        %v8756 = vadd.f32 0.0, %v8755
        %v8757 = vpop.f32.mrb[0].mxu0
        %v8758 = vpop.f32.mrb[0].mxu0
        %v8759 = vadd.f32 0.0, %v8758
        %v8760 = vpop.f32.mrb[0].mxu0
        %8761 = vmatprep.mubr.bf16.mxu0 0
        %8762 = vmatmul.mubr.bf16.gmra.mrb[0].mxu0 %v8181
        %v8763 = vpop.f32.mrb[0].mxu0
        %v8764 = vadd.f32 0.0, %v8763
        %v8765 = vpop.f32.mrb[0].mxu0
        %v8766 = vpop.f32.mrb[0].mxu0
        %v8767 = vadd.f32 0.0, %v8766
        %v8768 = vpop.f32.mrb[0].mxu0
        %8769 = vmatprep.mubr.bf16.mxu0 0
        %8770 = vmatmul.mubr.bf16.gmra.mrb[0].mxu0 %v8182
        %v8771 = vpop.f32.mrb[0].mxu0
        %v8772 = vadd.f32 0.0, %v8771
        %v8773 = vpop.f32.mrb[0].mxu0
        %v8774 = vpop.f32.mrb[0].mxu0
        %v8775 = vadd.f32 0.0, %v8774
        %v8776 = vpop.f32.mrb[0].mxu0
        %8777 = vdwg.mxu0
        %v8778 = vadd.f32 %v7988, %v8268
        %v8779 = vadd.f32 %v7989, %v8271
        %v8780 = vadd.f32 %v7990, %v8276
        %v8781 = vadd.f32 %v7991, %v8279
        %v8782 = vadd.f32 %v7992, %v8284
        %v8783 = vadd.f32 %v7993, %v8287
        %v8784 = vadd.f32 %v7994, %v8292
        %v8785 = vadd.f32 %v7995, %v8295
        %v8786 = vadd.f32 %v7996, %v8300
        %v8787 = vadd.f32 %v7997, %v8303
        %v8788 = vadd.f32 %v7998, %v8308
        %v8789 = vadd.f32 %v7999, %v8311
        %v8790 = vadd.f32 %v8000, %v8316
        %v8791 = vadd.f32 %v8001, %v8319
        %v8792 = vadd.f32 %v8002, %v8324
        %v8793 = vadd.f32 %v8003, %v8327
        %v8794 = vadd.f32 %v8004, %v8332
        %v8795 = vadd.f32 %v8005, %v8335
        %v8796 = vadd.f32 %v8006, %v8340
        %v8797 = vadd.f32 %v8007, %v8343
        %v8798 = vadd.f32 %v8008, %v8348
        %v8799 = vadd.f32 %v8009, %v8351
        %v8800 = vadd.f32 %v8010, %v8356
        %v8801 = vadd.f32 %v8011, %v8359
        %v8802 = vadd.f32 %v8012, %v8364
        %v8803 = vadd.f32 %v8013, %v8367
        %v8804 = vadd.f32 %v8014, %v8372
        %v8805 = vadd.f32 %v8015, %v8375
        %v8806 = vadd.f32 %v8016, %v8380
        %v8807 = vadd.f32 %v8017, %v8383
        %v8808 = vadd.f32 %v8018, %v8388
        %v8809 = vadd.f32 %v8019, %v8391
        %v8810 = vadd.f32 %v8020, %v8396
        %v8811 = vadd.f32 %v8021, %v8399
        %v8812 = vadd.f32 %v8022, %v8404
        %v8813 = vadd.f32 %v8023, %v8407
        %v8814 = vadd.f32 %v8024, %v8412
        %v8815 = vadd.f32 %v8025, %v8415
        %v8816 = vadd.f32 %v8026, %v8420
        %v8817 = vadd.f32 %v8027, %v8423
        %v8818 = vadd.f32 %v8028, %v8428
        %v8819 = vadd.f32 %v8029, %v8431
        %v8820 = vadd.f32 %v8030, %v8436
        %v8821 = vadd.f32 %v8031, %v8439
        %v8822 = vadd.f32 %v8032, %v8444
        %v8823 = vadd.f32 %v8033, %v8447
        %v8824 = vadd.f32 %v8034, %v8452
        %v8825 = vadd.f32 %v8035, %v8455
        %v8826 = vadd.f32 %v8036, %v8460
        %v8827 = vadd.f32 %v8037, %v8463
        %v8828 = vadd.f32 %v8038, %v8468
        %v8829 = vadd.f32 %v8039, %v8471
        %v8830 = vadd.f32 %v8040, %v8476
        %v8831 = vadd.f32 %v8041, %v8479
        %v8832 = vadd.f32 %v8042, %v8484
        %v8833 = vadd.f32 %v8043, %v8487
        %v8834 = vadd.f32 %v8044, %v8492
        %v8835 = vadd.f32 %v8045, %v8495
        %v8836 = vadd.f32 %v8046, %v8500
        %v8837 = vadd.f32 %v8047, %v8503
        %v8838 = vadd.f32 %v8048, %v8508
        %v8839 = vadd.f32 %v8049, %v8511
        %v8840 = vadd.f32 %v8050, %v8516
        %v8841 = vadd.f32 %v8051, %v8519
        %v8842 = vadd.f32 %v8052, %v8524
        %v8843 = vadd.f32 %v8053, %v8527
        %v8844 = vadd.f32 %v8054, %v8532
        %v8845 = vadd.f32 %v8055, %v8535
        %v8846 = vadd.f32 %v8056, %v8540
        %v8847 = vadd.f32 %v8057, %v8543
        %v8848 = vadd.f32 %v8058, %v8548
        %v8849 = vadd.f32 %v8059, %v8551
        %v8850 = vadd.f32 %v8060, %v8556
        %v8851 = vadd.f32 %v8061, %v8559
        %v8852 = vadd.f32 %v8062, %v8564
        %v8853 = vadd.f32 %v8063, %v8567
        %v8854 = vadd.f32 %v8064, %v8572
        %v8855 = vadd.f32 %v8065, %v8575
        %v8856 = vadd.f32 %v8066, %v8580
        %v8857 = vadd.f32 %v8067, %v8583
        %v8858 = vadd.f32 %v8068, %v8588
        %v8859 = vadd.f32 %v8069, %v8591
        %v8860 = vadd.f32 %v8070, %v8596
        %v8861 = vadd.f32 %v8071, %v8599
        %v8862 = vadd.f32 %v8072, %v8604
        %v8863 = vadd.f32 %v8073, %v8607
        %v8864 = vadd.f32 %v8074, %v8612
        %v8865 = vadd.f32 %v8075, %v8615
        %v8866 = vadd.f32 %v8076, %v8620
        %v8867 = vadd.f32 %v8077, %v8623
        %v8868 = vadd.f32 %v8078, %v8628
        %v8869 = vadd.f32 %v8079, %v8631
        %v8870 = vadd.f32 %v8080, %v8636
        %v8871 = vadd.f32 %v8081, %v8639
        %v8872 = vadd.f32 %v8082, %v8644
        %v8873 = vadd.f32 %v8083, %v8647
        %v8874 = vadd.f32 %v8084, %v8652
        %v8875 = vadd.f32 %v8085, %v8655
        %v8876 = vadd.f32 %v8086, %v8660
        %v8877 = vadd.f32 %v8087, %v8663
        %v8878 = vadd.f32 %v8088, %v8668
        %v8879 = vadd.f32 %v8089, %v8671
        %v8880 = vadd.f32 %v8090, %v8676
        %v8881 = vadd.f32 %v8091, %v8679
        %v8882 = vadd.f32 %v8092, %v8684
        %v8883 = vadd.f32 %v8093, %v8687
        %v8884 = vadd.f32 %v8094, %v8692
        %v8885 = vadd.f32 %v8095, %v8695
        %v8886 = vadd.f32 %v8096, %v8700
        %v8887 = vadd.f32 %v8097, %v8703
        %v8888 = vadd.f32 %v8098, %v8708
        %v8889 = vadd.f32 %v8099, %v8711
        %v8890 = vadd.f32 %v8100, %v8716
        %v8891 = vadd.f32 %v8101, %v8719
        %v8892 = vadd.f32 %v8102, %v8724
        %v8893 = vadd.f32 %v8103, %v8727
        %v8894 = vadd.f32 %v8104, %v8732
        %v8895 = vadd.f32 %v8105, %v8735
        %v8896 = vadd.f32 %v8106, %v8740
        %v8897 = vadd.f32 %v8107, %v8743
        %v8898 = vadd.f32 %v8108, %v8748
        %v8899 = vadd.f32 %v8109, %v8751
        %v8900 = vadd.f32 %v8110, %v8756
        %v8901 = vadd.f32 %v8111, %v8759
        %v8902 = vadd.f32 %v8112, %v8764
        %v8903 = vadd.f32 %v8113, %v8767
        %v8904 = vadd.f32 %v8114, %v8772
        %v8905 = vadd.f32 %v8115, %v8775
        %v8907 = vrot.slane %v346, 5
        %v8908 = vrot.slane %v8907, 4
        %v8909 = vrot.slane %v347, 5
        %v8910 = vsel %vm3655, %v8908, %v8909
        %v8911 = vrot.slane %v8909, 4
        %v8912 = vrot.slane %v348, 5
        %v8913 = vsel %vm3655, %v8911, %v8912
        %v8914 = vrot.slane %v8912, 4
        %v8915 = vrot.slane %v349, 5
        %v8916 = vsel %vm3655, %v8914, %v8915
        %v8917 = vrot.slane %v8915, 4
        %v8918 = vrot.slane %v350, 5
        %v8919 = vsel %vm3655, %v8917, %v8918
        %s8920 = scalar_lea.vmem %s1, 512
        %v8921 = vld [vmem:[%s8920] sm:$0xf]
        %v8922 = vld [vmem:[%s8920 + $0x4] sm:$0xf]
        %v8923 = vld [vmem:[%s8920 + $0x8] sm:$0xf]
        %v8924 = vld [vmem:[%s8920 + $0xc] sm:$0xf]
        %v8925 = vld [vmem:[%s8920 + $0x10] sm:$0xf]
        %v8926 = vld [vmem:[%s8920 + $0x14] sm:$0xf]
        %v8927 = vld [vmem:[%s8920 + $0x18] sm:$0xf]
        %v8928 = vld [vmem:[%s8920 + $0x1c] sm:$0xf]
        %v8929 = vld [vmem:[%s8920 + $0x20] sm:$0xf]
        %v8930 = vld [vmem:[%s8920 + $0x24] sm:$0xf]
        %v8931 = vld [vmem:[%s8920 + $0x28] sm:$0xf]
        %v8932 = vld [vmem:[%s8920 + $0x2c] sm:$0xf]
        %v8933 = vld [vmem:[%s8920 + $0x30] sm:$0xf]
        %v8934 = vld [vmem:[%s8920 + $0x34] sm:$0xf]
        %v8935 = vld [vmem:[%s8920 + $0x38] sm:$0xf]
        %v8936 = vld [vmem:[%s8920 + $0x3c] sm:$0xf]
        %v8937 = vunpack.c.l.b16 %v8910
        %v8938 = vunpack.c.l.b16 %v8913
        %v8939 = vunpack.c.l.b16 %v8916
        %v8940 = vunpack.c.l.b16 %v8919
        %v8941 = vpack.c.b16 %v8938, %v8937
        %v8942 = vpack.c.b16 %v8940, %v8939
        %v8961 = vunpack.c.l.b16 %v8921
        %v8962 = vunpack.c.l.b16 %v8922
        %v8963 = vunpack.c.l.b16 %v8923
        %v8964 = vunpack.c.l.b16 %v8924
        %v8965 = vunpack.c.l.b16 %v8925
        %v8966 = vunpack.c.l.b16 %v8926
        %v8967 = vunpack.c.l.b16 %v8927
        %v8968 = vunpack.c.l.b16 %v8928
        %v8969 = vunpack.c.l.b16 %v8929
        %v8970 = vunpack.c.l.b16 %v8930
        %v8971 = vunpack.c.l.b16 %v8931
        %v8972 = vunpack.c.l.b16 %v8932
        %v8973 = vunpack.c.l.b16 %v8933
        %v8974 = vunpack.c.l.b16 %v8934
        %v8975 = vunpack.c.l.b16 %v8935
        %v8976 = vunpack.c.l.b16 %v8936
        %v8977 = vpack.c.b16 %v8962, %v8961
        %v8978 = vpack.c.b16 %v8964, %v8963
        %v8979 = vpack.c.b16 %v8966, %v8965
        %v8980 = vpack.c.b16 %v8968, %v8967
        %v8981 = vpack.c.b16 %v8970, %v8969
        %v8982 = vpack.c.b16 %v8972, %v8971
        %v8983 = vpack.c.b16 %v8974, %v8973
        %v8984 = vpack.c.b16 %v8976, %v8975
        %8993 = vmatprep.subr.bf16.mxu0 0
        %8994 = vmatpush1.bf16.msra.mxu0 %v8977
        %8995 = vmatprep.subr.bf16.mxu0 0
        %8996 = vmatpush1.bf16.msra.mxu0 %v8978
        %8997 = vmatprep.subr.bf16.mxu0 0
        %8998 = vmatpush1.bf16.msra.mxu0 %v8979
        %8999 = vmatprep.subr.bf16.mxu0 0
        %9000 = vmatpush1.bf16.msra.mxu0 %v8980
        %9001 = vmatprep.subr.bf16.mxu0 0
        %9002 = vmatpush1.bf16.msra.mxu0 %v8981
        %9003 = vmatprep.subr.bf16.mxu0 0
        %9004 = vmatpush1.bf16.msra.mxu0 %v8982
        %9005 = vmatprep.subr.bf16.mxu0 0
        %9006 = vmatpush1.bf16.msra.mxu0 %v8983
        %9007 = vmatprep.subr.bf16.mxu0 0
        %9008 = vmatpush1.bf16.msra.mxu0 %v8984
        %9009 = vmatprep.subr.bf16.mxu0 0
        %9010 = vmatpush1.bf16.msra.mxu0 0
        %9011 = vmatprep.subr.bf16.mxu0 0
        %9012 = vmatpush1.bf16.msra.mxu0 0
        %9013 = vmatprep.subr.bf16.mxu0 0
        %9014 = vmatpush1.bf16.msra.mxu0 0
        %9015 = vmatprep.subr.bf16.mxu0 0
        %9016 = vmatpush1.bf16.msra.mxu0 0
        %9017 = vmatprep.subr.bf16.mxu0 0
        %9018 = vmatpush1.bf16.msra.mxu0 0
        %9019 = vmatprep.subr.bf16.mxu0 0
        %9020 = vmatpush1.bf16.msra.mxu0 0
        %9021 = vmatprep.subr.bf16.mxu0 0
        %9022 = vmatpush1.bf16.msra.mxu0 0
        %9023 = vmatprep.subr.bf16.mxu0 0
        %9024 = vmatpush1.bf16.msra.mxu0 0
        %9025 = vmatprep.mubr.bf16.mxu0 0
        %9026 = vmatmul.mubr.bf16.gmra.mrb[0].mxu0 %v4221
        %v9027 = vpop.f32.mrb[0].mxu0
        %v9028 = vadd.f32 0.0, %v9027
        %v9029 = vpop.f32.mrb[0].mxu0
        %v9030 = vpop.f32.mrb[0].mxu0
        %v9031 = vadd.f32 0.0, %v9030
        %v9032 = vpop.f32.mrb[0].mxu0
        %9033 = vmatprep.mubr.bf16.mxu0 0
        %9034 = vmatmul.mubr.bf16.gmra.mrb[0].mxu0 %v4222
        %v9035 = vpop.f32.mrb[0].mxu0
        %v9036 = vadd.f32 0.0, %v9035
        %v9037 = vpop.f32.mrb[0].mxu0
        %v9038 = vpop.f32.mrb[0].mxu0
        %v9039 = vadd.f32 0.0, %v9038
        %v9040 = vpop.f32.mrb[0].mxu0
        %9041 = vmatprep.mubr.bf16.mxu0 0
        %9042 = vmatmul.mubr.bf16.gmra.mrb[0].mxu0 %v4223
        %v9043 = vpop.f32.mrb[0].mxu0
        %v9044 = vadd.f32 0.0, %v9043
        %v9045 = vpop.f32.mrb[0].mxu0
        %v9046 = vpop.f32.mrb[0].mxu0
        %v9047 = vadd.f32 0.0, %v9046
        %v9048 = vpop.f32.mrb[0].mxu0
        %9049 = vmatprep.mubr.bf16.mxu0 0
        %9050 = vmatmul.mubr.bf16.gmra.mrb[0].mxu0 %v4224
        %v9051 = vpop.f32.mrb[0].mxu0
        %v9052 = vadd.f32 0.0, %v9051
        %v9053 = vpop.f32.mrb[0].mxu0
        %v9054 = vpop.f32.mrb[0].mxu0
        %v9055 = vadd.f32 0.0, %v9054
        %v9056 = vpop.f32.mrb[0].mxu0
        %9057 = vmatprep.mubr.bf16.mxu0 0
        %9058 = vmatmul.mubr.bf16.gmra.mrb[0].mxu0 %v4225
        %v9059 = vpop.f32.mrb[0].mxu0
        %v9060 = vadd.f32 0.0, %v9059
        %v9061 = vpop.f32.mrb[0].mxu0
        %v9062 = vpop.f32.mrb[0].mxu0
        %v9063 = vadd.f32 0.0, %v9062
        %v9064 = vpop.f32.mrb[0].mxu0
        %9065 = vmatprep.mubr.bf16.mxu0 0
        %9066 = vmatmul.mubr.bf16.gmra.mrb[0].mxu0 %v4226
        %v9067 = vpop.f32.mrb[0].mxu0
        %v9068 = vadd.f32 0.0, %v9067
        %v9069 = vpop.f32.mrb[0].mxu0
        %v9070 = vpop.f32.mrb[0].mxu0
        %v9071 = vadd.f32 0.0, %v9070
        %v9072 = vpop.f32.mrb[0].mxu0
        %9073 = vmatprep.mubr.bf16.mxu0 0
        %9074 = vmatmul.mubr.bf16.gmra.mrb[0].mxu0 %v4227
        %v9075 = vpop.f32.mrb[0].mxu0
        %v9076 = vadd.f32 0.0, %v9075
        %v9077 = vpop.f32.mrb[0].mxu0
        %v9078 = vpop.f32.mrb[0].mxu0
        %v9079 = vadd.f32 0.0, %v9078
        %v9080 = vpop.f32.mrb[0].mxu0
        %9081 = vmatprep.mubr.bf16.mxu0 0
        %9082 = vmatmul.mubr.bf16.gmra.mrb[0].mxu0 %v4228
        %v9083 = vpop.f32.mrb[0].mxu0
        %v9084 = vadd.f32 0.0, %v9083
        %v9085 = vpop.f32.mrb[0].mxu0
        %v9086 = vpop.f32.mrb[0].mxu0
        %v9087 = vadd.f32 0.0, %v9086
        %v9088 = vpop.f32.mrb[0].mxu0
        %9089 = vmatprep.mubr.bf16.mxu0 0
        %9090 = vmatmul.mubr.bf16.gmra.mrb[0].mxu0 %v4229
        %v9091 = vpop.f32.mrb[0].mxu0
        %v9092 = vadd.f32 0.0, %v9091
        %v9093 = vpop.f32.mrb[0].mxu0
        %v9094 = vpop.f32.mrb[0].mxu0
        %v9095 = vadd.f32 0.0, %v9094
        %v9096 = vpop.f32.mrb[0].mxu0
        %9097 = vmatprep.mubr.bf16.mxu0 0
        %9098 = vmatmul.mubr.bf16.gmra.mrb[0].mxu0 %v4230
        %v9099 = vpop.f32.mrb[0].mxu0
        %v9100 = vadd.f32 0.0, %v9099
        %v9101 = vpop.f32.mrb[0].mxu0
        %v9102 = vpop.f32.mrb[0].mxu0
        %v9103 = vadd.f32 0.0, %v9102
        %v9104 = vpop.f32.mrb[0].mxu0
        %9105 = vmatprep.mubr.bf16.mxu0 0
        %9106 = vmatmul.mubr.bf16.gmra.mrb[0].mxu0 %v4231
        %v9107 = vpop.f32.mrb[0].mxu0
        %v9108 = vadd.f32 0.0, %v9107
        %v9109 = vpop.f32.mrb[0].mxu0
        %v9110 = vpop.f32.mrb[0].mxu0
        %v9111 = vadd.f32 0.0, %v9110
        %v9112 = vpop.f32.mrb[0].mxu0
        %9113 = vmatprep.mubr.bf16.mxu0 0
        %9114 = vmatmul.mubr.bf16.gmra.mrb[0].mxu0 %v4232
        %v9115 = vpop.f32.mrb[0].mxu0
        %v9116 = vadd.f32 0.0, %v9115
        %v9117 = vpop.f32.mrb[0].mxu0
        %v9118 = vpop.f32.mrb[0].mxu0
        %v9119 = vadd.f32 0.0, %v9118
        %v9120 = vpop.f32.mrb[0].mxu0
        %9121 = vmatprep.mubr.bf16.mxu0 0
        %9122 = vmatmul.mubr.bf16.gmra.mrb[0].mxu0 %v4233
        %v9123 = vpop.f32.mrb[0].mxu0
        %v9124 = vadd.f32 0.0, %v9123
        %v9125 = vpop.f32.mrb[0].mxu0
        %v9126 = vpop.f32.mrb[0].mxu0
        %v9127 = vadd.f32 0.0, %v9126
        %v9128 = vpop.f32.mrb[0].mxu0
        %9129 = vmatprep.mubr.bf16.mxu0 0
        %9130 = vmatmul.mubr.bf16.gmra.mrb[0].mxu0 %v4234
        %v9131 = vpop.f32.mrb[0].mxu0
        %v9132 = vadd.f32 0.0, %v9131
        %v9133 = vpop.f32.mrb[0].mxu0
        %v9134 = vpop.f32.mrb[0].mxu0
        %v9135 = vadd.f32 0.0, %v9134
        %v9136 = vpop.f32.mrb[0].mxu0
        %9137 = vmatprep.mubr.bf16.mxu0 0
        %9138 = vmatmul.mubr.bf16.gmra.mrb[0].mxu0 %v4235
        %v9139 = vpop.f32.mrb[0].mxu0
        %v9140 = vadd.f32 0.0, %v9139
        %v9141 = vpop.f32.mrb[0].mxu0
        %v9142 = vpop.f32.mrb[0].mxu0
        %v9143 = vadd.f32 0.0, %v9142
        %v9144 = vpop.f32.mrb[0].mxu0
        %9145 = vmatprep.mubr.bf16.mxu0 0
        %9146 = vmatmul.mubr.bf16.gmra.mrb[0].mxu0 %v4236
        %v9147 = vpop.f32.mrb[0].mxu0
        %v9148 = vadd.f32 0.0, %v9147
        %v9149 = vpop.f32.mrb[0].mxu0
        %v9150 = vpop.f32.mrb[0].mxu0
        %v9151 = vadd.f32 0.0, %v9150
        %v9152 = vpop.f32.mrb[0].mxu0
        %9153 = vmatprep.mubr.bf16.mxu0 0
        %9154 = vmatmul.mubr.bf16.gmra.mrb[0].mxu0 %v4237
        %v9155 = vpop.f32.mrb[0].mxu0
        %v9156 = vadd.f32 0.0, %v9155
        %v9157 = vpop.f32.mrb[0].mxu0
        %v9158 = vpop.f32.mrb[0].mxu0
        %v9159 = vadd.f32 0.0, %v9158
        %v9160 = vpop.f32.mrb[0].mxu0
        %9161 = vmatprep.mubr.bf16.mxu0 0
        %9162 = vmatmul.mubr.bf16.gmra.mrb[0].mxu0 %v4238
        %v9163 = vpop.f32.mrb[0].mxu0
        %v9164 = vadd.f32 0.0, %v9163
        %v9165 = vpop.f32.mrb[0].mxu0
        %v9166 = vpop.f32.mrb[0].mxu0
        %v9167 = vadd.f32 0.0, %v9166
        %v9168 = vpop.f32.mrb[0].mxu0
        %9169 = vmatprep.mubr.bf16.mxu0 0
        %9170 = vmatmul.mubr.bf16.gmra.mrb[0].mxu0 %v4239
        %v9171 = vpop.f32.mrb[0].mxu0
        %v9172 = vadd.f32 0.0, %v9171
        %v9173 = vpop.f32.mrb[0].mxu0
        %v9174 = vpop.f32.mrb[0].mxu0
        %v9175 = vadd.f32 0.0, %v9174
        %v9176 = vpop.f32.mrb[0].mxu0
        %9177 = vmatprep.mubr.bf16.mxu0 0
        %9178 = vmatmul.mubr.bf16.gmra.mrb[0].mxu0 %v4240
        %v9179 = vpop.f32.mrb[0].mxu0
        %v9180 = vadd.f32 0.0, %v9179
        %v9181 = vpop.f32.mrb[0].mxu0
        %v9182 = vpop.f32.mrb[0].mxu0
        %v9183 = vadd.f32 0.0, %v9182
        %v9184 = vpop.f32.mrb[0].mxu0
        %9185 = vmatprep.mubr.bf16.mxu0 0
        %9186 = vmatmul.mubr.bf16.gmra.mrb[0].mxu0 %v4241
        %v9187 = vpop.f32.mrb[0].mxu0
        %v9188 = vadd.f32 0.0, %v9187
        %v9189 = vpop.f32.mrb[0].mxu0
        %v9190 = vpop.f32.mrb[0].mxu0
        %v9191 = vadd.f32 0.0, %v9190
        %v9192 = vpop.f32.mrb[0].mxu0
        %9193 = vmatprep.mubr.bf16.mxu0 0
        %9194 = vmatmul.mubr.bf16.gmra.mrb[0].mxu0 %v4242
        %v9195 = vpop.f32.mrb[0].mxu0
        %v9196 = vadd.f32 0.0, %v9195
        %v9197 = vpop.f32.mrb[0].mxu0
        %v9198 = vpop.f32.mrb[0].mxu0
        %v9199 = vadd.f32 0.0, %v9198
        %v9200 = vpop.f32.mrb[0].mxu0
        %9201 = vmatprep.mubr.bf16.mxu0 0
        %9202 = vmatmul.mubr.bf16.gmra.mrb[0].mxu0 %v4243
        %v9203 = vpop.f32.mrb[0].mxu0
        %v9204 = vadd.f32 0.0, %v9203
        %v9205 = vpop.f32.mrb[0].mxu0
        %v9206 = vpop.f32.mrb[0].mxu0
        %v9207 = vadd.f32 0.0, %v9206
        %v9208 = vpop.f32.mrb[0].mxu0
        %9209 = vmatprep.mubr.bf16.mxu0 0
        %9210 = vmatmul.mubr.bf16.gmra.mrb[0].mxu0 %v4244
        %v9211 = vpop.f32.mrb[0].mxu0
        %v9212 = vadd.f32 0.0, %v9211
        %v9213 = vpop.f32.mrb[0].mxu0
        %v9214 = vpop.f32.mrb[0].mxu0
        %v9215 = vadd.f32 0.0, %v9214
        %v9216 = vpop.f32.mrb[0].mxu0
        %9217 = vmatprep.mubr.bf16.mxu0 0
        %9218 = vmatmul.mubr.bf16.gmra.mrb[0].mxu0 %v4245
        %v9219 = vpop.f32.mrb[0].mxu0
        %v9220 = vadd.f32 0.0, %v9219
        %v9221 = vpop.f32.mrb[0].mxu0
        %v9222 = vpop.f32.mrb[0].mxu0
        %v9223 = vadd.f32 0.0, %v9222
        %v9224 = vpop.f32.mrb[0].mxu0
        %9225 = vmatprep.mubr.bf16.mxu0 0
        %9226 = vmatmul.mubr.bf16.gmra.mrb[0].mxu0 %v4246
        %v9227 = vpop.f32.mrb[0].mxu0
        %v9228 = vadd.f32 0.0, %v9227
        %v9229 = vpop.f32.mrb[0].mxu0
        %v9230 = vpop.f32.mrb[0].mxu0
        %v9231 = vadd.f32 0.0, %v9230
        %v9232 = vpop.f32.mrb[0].mxu0
        %9233 = vmatprep.mubr.bf16.mxu0 0
        %9234 = vmatmul.mubr.bf16.gmra.mrb[0].mxu0 %v4247
        %v9235 = vpop.f32.mrb[0].mxu0
        %v9236 = vadd.f32 0.0, %v9235
        %v9237 = vpop.f32.mrb[0].mxu0
        %v9238 = vpop.f32.mrb[0].mxu0
        %v9239 = vadd.f32 0.0, %v9238
        %v9240 = vpop.f32.mrb[0].mxu0
        %9241 = vmatprep.mubr.bf16.mxu0 0
        %9242 = vmatmul.mubr.bf16.gmra.mrb[0].mxu0 %v4248
        %v9243 = vpop.f32.mrb[0].mxu0
        %v9244 = vadd.f32 0.0, %v9243
        %v9245 = vpop.f32.mrb[0].mxu0
        %v9246 = vpop.f32.mrb[0].mxu0
        %v9247 = vadd.f32 0.0, %v9246
        %v9248 = vpop.f32.mrb[0].mxu0
        %9249 = vmatprep.mubr.bf16.mxu0 0
        %9250 = vmatmul.mubr.bf16.gmra.mrb[0].mxu0 %v4249
        %v9251 = vpop.f32.mrb[0].mxu0
        %v9252 = vadd.f32 0.0, %v9251
        %v9253 = vpop.f32.mrb[0].mxu0
        %v9254 = vpop.f32.mrb[0].mxu0
        %v9255 = vadd.f32 0.0, %v9254
        %v9256 = vpop.f32.mrb[0].mxu0
        %9257 = vmatprep.mubr.bf16.mxu0 0
        %9258 = vmatmul.mubr.bf16.gmra.mrb[0].mxu0 %v4250
        %v9259 = vpop.f32.mrb[0].mxu0
        %v9260 = vadd.f32 0.0, %v9259
        %v9261 = vpop.f32.mrb[0].mxu0
        %v9262 = vpop.f32.mrb[0].mxu0
        %v9263 = vadd.f32 0.0, %v9262
        %v9264 = vpop.f32.mrb[0].mxu0
        %9265 = vmatprep.mubr.bf16.mxu0 0
        %9266 = vmatmul.mubr.bf16.gmra.mrb[0].mxu0 %v4251
        %v9267 = vpop.f32.mrb[0].mxu0
        %v9268 = vadd.f32 0.0, %v9267
        %v9269 = vpop.f32.mrb[0].mxu0
        %v9270 = vpop.f32.mrb[0].mxu0
        %v9271 = vadd.f32 0.0, %v9270
        %v9272 = vpop.f32.mrb[0].mxu0
        %9273 = vmatprep.mubr.bf16.mxu0 0
        %9274 = vmatmul.mubr.bf16.gmra.mrb[0].mxu0 %v4252
        %v9275 = vpop.f32.mrb[0].mxu0
        %v9276 = vadd.f32 0.0, %v9275
        %v9277 = vpop.f32.mrb[0].mxu0
        %v9278 = vpop.f32.mrb[0].mxu0
        %v9279 = vadd.f32 0.0, %v9278
        %v9280 = vpop.f32.mrb[0].mxu0
        %9281 = vmatprep.mubr.bf16.mxu0 0
        %9282 = vmatmul.mubr.bf16.gmra.mrb[0].mxu0 %v4253
        %v9283 = vpop.f32.mrb[0].mxu0
        %v9284 = vadd.f32 0.0, %v9283
        %v9285 = vpop.f32.mrb[0].mxu0
        %v9286 = vpop.f32.mrb[0].mxu0
        %v9287 = vadd.f32 0.0, %v9286
        %v9288 = vpop.f32.mrb[0].mxu0
        %9289 = vmatprep.mubr.bf16.mxu0 0
        %9290 = vmatmul.mubr.bf16.gmra.mrb[0].mxu0 %v4254
        %v9291 = vpop.f32.mrb[0].mxu0
        %v9292 = vadd.f32 0.0, %v9291
        %v9293 = vpop.f32.mrb[0].mxu0
        %v9294 = vpop.f32.mrb[0].mxu0
        %v9295 = vadd.f32 0.0, %v9294
        %v9296 = vpop.f32.mrb[0].mxu0
        %9297 = vmatprep.mubr.bf16.mxu0 0
        %9298 = vmatmul.mubr.bf16.gmra.mrb[0].mxu0 %v4255
        %v9299 = vpop.f32.mrb[0].mxu0
        %v9300 = vadd.f32 0.0, %v9299
        %v9301 = vpop.f32.mrb[0].mxu0
        %v9302 = vpop.f32.mrb[0].mxu0
        %v9303 = vadd.f32 0.0, %v9302
        %v9304 = vpop.f32.mrb[0].mxu0
        %9305 = vmatprep.mubr.bf16.mxu0 0
        %9306 = vmatmul.mubr.bf16.gmra.mrb[0].mxu0 %v4256
        %v9307 = vpop.f32.mrb[0].mxu0
        %v9308 = vadd.f32 0.0, %v9307
        %v9309 = vpop.f32.mrb[0].mxu0
        %v9310 = vpop.f32.mrb[0].mxu0
        %v9311 = vadd.f32 0.0, %v9310
        %v9312 = vpop.f32.mrb[0].mxu0
        %9313 = vmatprep.mubr.bf16.mxu0 0
        %9314 = vmatmul.mubr.bf16.gmra.mrb[0].mxu0 %v4257
        %v9315 = vpop.f32.mrb[0].mxu0
        %v9316 = vadd.f32 0.0, %v9315
        %v9317 = vpop.f32.mrb[0].mxu0
        %v9318 = vpop.f32.mrb[0].mxu0
        %v9319 = vadd.f32 0.0, %v9318
        %v9320 = vpop.f32.mrb[0].mxu0
        %9321 = vmatprep.mubr.bf16.mxu0 0
        %9322 = vmatmul.mubr.bf16.gmra.mrb[0].mxu0 %v4258
        %v9323 = vpop.f32.mrb[0].mxu0
        %v9324 = vadd.f32 0.0, %v9323
        %v9325 = vpop.f32.mrb[0].mxu0
        %v9326 = vpop.f32.mrb[0].mxu0
        %v9327 = vadd.f32 0.0, %v9326
        %v9328 = vpop.f32.mrb[0].mxu0
        %9329 = vmatprep.mubr.bf16.mxu0 0
        %9330 = vmatmul.mubr.bf16.gmra.mrb[0].mxu0 %v4259
        %v9331 = vpop.f32.mrb[0].mxu0
        %v9332 = vadd.f32 0.0, %v9331
        %v9333 = vpop.f32.mrb[0].mxu0
        %v9334 = vpop.f32.mrb[0].mxu0
        %v9335 = vadd.f32 0.0, %v9334
        %v9336 = vpop.f32.mrb[0].mxu0
        %9337 = vmatprep.mubr.bf16.mxu0 0
        %9338 = vmatmul.mubr.bf16.gmra.mrb[0].mxu0 %v4260
        %v9339 = vpop.f32.mrb[0].mxu0
        %v9340 = vadd.f32 0.0, %v9339
        %v9341 = vpop.f32.mrb[0].mxu0
        %v9342 = vpop.f32.mrb[0].mxu0
        %v9343 = vadd.f32 0.0, %v9342
        %v9344 = vpop.f32.mrb[0].mxu0
        %9345 = vmatprep.mubr.bf16.mxu0 0
        %9346 = vmatmul.mubr.bf16.gmra.mrb[0].mxu0 %v4261
        %v9347 = vpop.f32.mrb[0].mxu0
        %v9348 = vadd.f32 0.0, %v9347
        %v9349 = vpop.f32.mrb[0].mxu0
        %v9350 = vpop.f32.mrb[0].mxu0
        %v9351 = vadd.f32 0.0, %v9350
        %v9352 = vpop.f32.mrb[0].mxu0
        %9353 = vmatprep.mubr.bf16.mxu0 0
        %9354 = vmatmul.mubr.bf16.gmra.mrb[0].mxu0 %v4262
        %v9355 = vpop.f32.mrb[0].mxu0
        %v9356 = vadd.f32 0.0, %v9355
        %v9357 = vpop.f32.mrb[0].mxu0
        %v9358 = vpop.f32.mrb[0].mxu0
        %v9359 = vadd.f32 0.0, %v9358
        %v9360 = vpop.f32.mrb[0].mxu0
        %9361 = vmatprep.mubr.bf16.mxu0 0
        %9362 = vmatmul.mubr.bf16.gmra.mrb[0].mxu0 %v4263
        %v9363 = vpop.f32.mrb[0].mxu0
        %v9364 = vadd.f32 0.0, %v9363
        %v9365 = vpop.f32.mrb[0].mxu0
        %v9366 = vpop.f32.mrb[0].mxu0
        %v9367 = vadd.f32 0.0, %v9366
        %v9368 = vpop.f32.mrb[0].mxu0
        %9369 = vmatprep.mubr.bf16.mxu0 0
        %9370 = vmatmul.mubr.bf16.gmra.mrb[0].mxu0 %v4264
        %v9371 = vpop.f32.mrb[0].mxu0
        %v9372 = vadd.f32 0.0, %v9371
        %v9373 = vpop.f32.mrb[0].mxu0
        %v9374 = vpop.f32.mrb[0].mxu0
        %v9375 = vadd.f32 0.0, %v9374
        %v9376 = vpop.f32.mrb[0].mxu0
        %9377 = vmatprep.mubr.bf16.mxu0 0
        %9378 = vmatmul.mubr.bf16.gmra.mrb[0].mxu0 %v4265
        %v9379 = vpop.f32.mrb[0].mxu0
        %v9380 = vadd.f32 0.0, %v9379
        %v9381 = vpop.f32.mrb[0].mxu0
        %v9382 = vpop.f32.mrb[0].mxu0
        %v9383 = vadd.f32 0.0, %v9382
        %v9384 = vpop.f32.mrb[0].mxu0
        %9385 = vmatprep.mubr.bf16.mxu0 0
        %9386 = vmatmul.mubr.bf16.gmra.mrb[0].mxu0 %v4266
        %v9387 = vpop.f32.mrb[0].mxu0
        %v9388 = vadd.f32 0.0, %v9387
        %v9389 = vpop.f32.mrb[0].mxu0
        %v9390 = vpop.f32.mrb[0].mxu0
        %v9391 = vadd.f32 0.0, %v9390
        %v9392 = vpop.f32.mrb[0].mxu0
        %9393 = vmatprep.mubr.bf16.mxu0 0
        %9394 = vmatmul.mubr.bf16.gmra.mrb[0].mxu0 %v4267
        %v9395 = vpop.f32.mrb[0].mxu0
        %v9396 = vadd.f32 0.0, %v9395
        %v9397 = vpop.f32.mrb[0].mxu0
        %v9398 = vpop.f32.mrb[0].mxu0
        %v9399 = vadd.f32 0.0, %v9398
        %v9400 = vpop.f32.mrb[0].mxu0
        %9401 = vmatprep.mubr.bf16.mxu0 0
        %9402 = vmatmul.mubr.bf16.gmra.mrb[0].mxu0 %v4268
        %v9403 = vpop.f32.mrb[0].mxu0
        %v9404 = vadd.f32 0.0, %v9403
        %v9405 = vpop.f32.mrb[0].mxu0
        %v9406 = vpop.f32.mrb[0].mxu0
        %v9407 = vadd.f32 0.0, %v9406
        %v9408 = vpop.f32.mrb[0].mxu0
        %9409 = vmatprep.mubr.bf16.mxu0 0
        %9410 = vmatmul.mubr.bf16.gmra.mrb[0].mxu0 %v4269
        %v9411 = vpop.f32.mrb[0].mxu0
        %v9412 = vadd.f32 0.0, %v9411
        %v9413 = vpop.f32.mrb[0].mxu0
        %v9414 = vpop.f32.mrb[0].mxu0
        %v9415 = vadd.f32 0.0, %v9414
        %v9416 = vpop.f32.mrb[0].mxu0
        %9417 = vmatprep.mubr.bf16.mxu0 0
        %9418 = vmatmul.mubr.bf16.gmra.mrb[0].mxu0 %v4270
        %v9419 = vpop.f32.mrb[0].mxu0
        %v9420 = vadd.f32 0.0, %v9419
        %v9421 = vpop.f32.mrb[0].mxu0
        %v9422 = vpop.f32.mrb[0].mxu0
        %v9423 = vadd.f32 0.0, %v9422
        %v9424 = vpop.f32.mrb[0].mxu0
        %9425 = vmatprep.mubr.bf16.mxu0 0
        %9426 = vmatmul.mubr.bf16.gmra.mrb[0].mxu0 %v4271
        %v9427 = vpop.f32.mrb[0].mxu0
        %v9428 = vadd.f32 0.0, %v9427
        %v9429 = vpop.f32.mrb[0].mxu0
        %v9430 = vpop.f32.mrb[0].mxu0
        %v9431 = vadd.f32 0.0, %v9430
        %v9432 = vpop.f32.mrb[0].mxu0
        %9433 = vmatprep.mubr.bf16.mxu0 0
        %9434 = vmatmul.mubr.bf16.gmra.mrb[0].mxu0 %v4272
        %v9435 = vpop.f32.mrb[0].mxu0
        %v9436 = vadd.f32 0.0, %v9435
        %v9437 = vpop.f32.mrb[0].mxu0
        %v9438 = vpop.f32.mrb[0].mxu0
        %v9439 = vadd.f32 0.0, %v9438
        %v9440 = vpop.f32.mrb[0].mxu0
        %9441 = vmatprep.mubr.bf16.mxu0 0
        %9442 = vmatmul.mubr.bf16.gmra.mrb[0].mxu0 %v4273
        %v9443 = vpop.f32.mrb[0].mxu0
        %v9444 = vadd.f32 0.0, %v9443
        %v9445 = vpop.f32.mrb[0].mxu0
        %v9446 = vpop.f32.mrb[0].mxu0
        %v9447 = vadd.f32 0.0, %v9446
        %v9448 = vpop.f32.mrb[0].mxu0
        %9449 = vmatprep.mubr.bf16.mxu0 0
        %9450 = vmatmul.mubr.bf16.gmra.mrb[0].mxu0 %v4274
        %v9451 = vpop.f32.mrb[0].mxu0
        %v9452 = vadd.f32 0.0, %v9451
        %v9453 = vpop.f32.mrb[0].mxu0
        %v9454 = vpop.f32.mrb[0].mxu0
        %v9455 = vadd.f32 0.0, %v9454
        %v9456 = vpop.f32.mrb[0].mxu0
        %9457 = vmatprep.mubr.bf16.mxu0 0
        %9458 = vmatmul.mubr.bf16.gmra.mrb[0].mxu0 %v4275
        %v9459 = vpop.f32.mrb[0].mxu0
        %v9460 = vadd.f32 0.0, %v9459
        %v9461 = vpop.f32.mrb[0].mxu0
        %v9462 = vpop.f32.mrb[0].mxu0
        %v9463 = vadd.f32 0.0, %v9462
        %v9464 = vpop.f32.mrb[0].mxu0
        %9465 = vmatprep.mubr.bf16.mxu0 0
        %9466 = vmatmul.mubr.bf16.gmra.mrb[0].mxu0 %v4276
        %v9467 = vpop.f32.mrb[0].mxu0
        %v9468 = vadd.f32 0.0, %v9467
        %v9469 = vpop.f32.mrb[0].mxu0
        %v9470 = vpop.f32.mrb[0].mxu0
        %v9471 = vadd.f32 0.0, %v9470
        %v9472 = vpop.f32.mrb[0].mxu0
        %9473 = vmatprep.mubr.bf16.mxu0 0
        %9474 = vmatmul.mubr.bf16.gmra.mrb[0].mxu0 %v4277
        %v9475 = vpop.f32.mrb[0].mxu0
        %v9476 = vadd.f32 0.0, %v9475
        %v9477 = vpop.f32.mrb[0].mxu0
        %v9478 = vpop.f32.mrb[0].mxu0
        %v9479 = vadd.f32 0.0, %v9478
        %v9480 = vpop.f32.mrb[0].mxu0
        %9481 = vmatprep.mubr.bf16.mxu0 0
        %9482 = vmatmul.mubr.bf16.gmra.mrb[0].mxu0 %v4278
        %v9483 = vpop.f32.mrb[0].mxu0
        %v9484 = vadd.f32 0.0, %v9483
        %v9485 = vpop.f32.mrb[0].mxu0
        %v9486 = vpop.f32.mrb[0].mxu0
        %v9487 = vadd.f32 0.0, %v9486
        %v9488 = vpop.f32.mrb[0].mxu0
        %9489 = vmatprep.mubr.bf16.mxu0 0
        %9490 = vmatmul.mubr.bf16.gmra.mrb[0].mxu0 %v4279
        %v9491 = vpop.f32.mrb[0].mxu0
        %v9492 = vadd.f32 0.0, %v9491
        %v9493 = vpop.f32.mrb[0].mxu0
        %v9494 = vpop.f32.mrb[0].mxu0
        %v9495 = vadd.f32 0.0, %v9494
        %v9496 = vpop.f32.mrb[0].mxu0
        %9497 = vmatprep.mubr.bf16.mxu0 0
        %9498 = vmatmul.mubr.bf16.gmra.mrb[0].mxu0 %v4280
        %v9499 = vpop.f32.mrb[0].mxu0
        %v9500 = vadd.f32 0.0, %v9499
        %v9501 = vpop.f32.mrb[0].mxu0
        %v9502 = vpop.f32.mrb[0].mxu0
        %v9503 = vadd.f32 0.0, %v9502
        %v9504 = vpop.f32.mrb[0].mxu0
        %9505 = vmatprep.mubr.bf16.mxu0 0
        %9506 = vmatmul.mubr.bf16.gmra.mrb[0].mxu0 %v6641
        %v9507 = vpop.f32.mrb[0].mxu0
        %v9508 = vadd.f32 0.0, %v9507
        %v9509 = vpop.f32.mrb[0].mxu0
        %v9510 = vpop.f32.mrb[0].mxu0
        %v9511 = vadd.f32 0.0, %v9510
        %v9512 = vpop.f32.mrb[0].mxu0
        %9513 = vmatprep.mubr.bf16.mxu0 0
        %9514 = vmatmul.mubr.bf16.gmra.mrb[0].mxu0 %v6642
        %v9515 = vpop.f32.mrb[0].mxu0
        %v9516 = vadd.f32 0.0, %v9515
        %v9517 = vpop.f32.mrb[0].mxu0
        %v9518 = vpop.f32.mrb[0].mxu0
        %v9519 = vadd.f32 0.0, %v9518
        %v9520 = vpop.f32.mrb[0].mxu0
        %9521 = vmatprep.mubr.bf16.mxu0 0
        %9522 = vmatmul.mubr.bf16.gmra.mrb[0].mxu0 %v8941
        %v9523 = vpop.f32.mrb[0].mxu0
        %v9524 = vadd.f32 0.0, %v9523
        %v9525 = vpop.f32.mrb[0].mxu0
        %v9526 = vpop.f32.mrb[0].mxu0
        %v9527 = vadd.f32 0.0, %v9526
        %v9528 = vpop.f32.mrb[0].mxu0
        %9529 = vmatprep.mubr.bf16.mxu0 0
        %9530 = vmatmul.mubr.bf16.gmra.mrb[0].mxu0 %v8942
        %v9531 = vpop.f32.mrb[0].mxu0
        %v9532 = vadd.f32 0.0, %v9531
        %v9533 = vpop.f32.mrb[0].mxu0
        %v9534 = vpop.f32.mrb[0].mxu0
        %v9535 = vadd.f32 0.0, %v9534
        %v9536 = vpop.f32.mrb[0].mxu0
        %9537 = vdwg.mxu0
        %v9538 = vadd.f32 %v8778, %v9028
        %v9539 = vadd.f32 %v8779, %v9031
        %v9540 = vadd.f32 %v8780, %v9036
        %v9541 = vadd.f32 %v8781, %v9039
        %v9542 = vadd.f32 %v8782, %v9044
        %v9543 = vadd.f32 %v8783, %v9047
        %v9544 = vadd.f32 %v8784, %v9052
        %v9545 = vadd.f32 %v8785, %v9055
        %v9546 = vadd.f32 %v8786, %v9060
        %v9547 = vadd.f32 %v8787, %v9063
        %v9548 = vadd.f32 %v8788, %v9068
        %v9549 = vadd.f32 %v8789, %v9071
        %v9550 = vadd.f32 %v8790, %v9076
        %v9551 = vadd.f32 %v8791, %v9079
        %v9552 = vadd.f32 %v8792, %v9084
        %v9553 = vadd.f32 %v8793, %v9087
        %v9554 = vadd.f32 %v8794, %v9092
        %v9555 = vadd.f32 %v8795, %v9095
        %v9556 = vadd.f32 %v8796, %v9100
        %v9557 = vadd.f32 %v8797, %v9103
        %v9558 = vadd.f32 %v8798, %v9108
        %v9559 = vadd.f32 %v8799, %v9111
        %v9560 = vadd.f32 %v8800, %v9116
        %v9561 = vadd.f32 %v8801, %v9119
        %v9562 = vadd.f32 %v8802, %v9124
        %v9563 = vadd.f32 %v8803, %v9127
        %v9564 = vadd.f32 %v8804, %v9132
        %v9565 = vadd.f32 %v8805, %v9135
        %v9566 = vadd.f32 %v8806, %v9140
        %v9567 = vadd.f32 %v8807, %v9143
        %v9568 = vadd.f32 %v8808, %v9148
        %v9569 = vadd.f32 %v8809, %v9151
        %v9570 = vadd.f32 %v8810, %v9156
        %v9571 = vadd.f32 %v8811, %v9159
        %v9572 = vadd.f32 %v8812, %v9164
        %v9573 = vadd.f32 %v8813, %v9167
        %v9574 = vadd.f32 %v8814, %v9172
        %v9575 = vadd.f32 %v8815, %v9175
        %v9576 = vadd.f32 %v8816, %v9180
        %v9577 = vadd.f32 %v8817, %v9183
        %v9578 = vadd.f32 %v8818, %v9188
        %v9579 = vadd.f32 %v8819, %v9191
        %v9580 = vadd.f32 %v8820, %v9196
        %v9581 = vadd.f32 %v8821, %v9199
        %v9582 = vadd.f32 %v8822, %v9204
        %v9583 = vadd.f32 %v8823, %v9207
        %v9584 = vadd.f32 %v8824, %v9212
        %v9585 = vadd.f32 %v8825, %v9215
        %v9586 = vadd.f32 %v8826, %v9220
        %v9587 = vadd.f32 %v8827, %v9223
        %v9588 = vadd.f32 %v8828, %v9228
        %v9589 = vadd.f32 %v8829, %v9231
        %v9590 = vadd.f32 %v8830, %v9236
        %v9591 = vadd.f32 %v8831, %v9239
        %v9592 = vadd.f32 %v8832, %v9244
        %v9593 = vadd.f32 %v8833, %v9247
        %v9594 = vadd.f32 %v8834, %v9252
        %v9595 = vadd.f32 %v8835, %v9255
        %v9596 = vadd.f32 %v8836, %v9260
        %v9597 = vadd.f32 %v8837, %v9263
        %v9598 = vadd.f32 %v8838, %v9268
        %v9599 = vadd.f32 %v8839, %v9271
        %v9600 = vadd.f32 %v8840, %v9276
        %v9601 = vadd.f32 %v8841, %v9279
        %v9602 = vadd.f32 %v8842, %v9284
        %v9603 = vadd.f32 %v8843, %v9287
        %v9604 = vadd.f32 %v8844, %v9292
        %v9605 = vadd.f32 %v8845, %v9295
        %v9606 = vadd.f32 %v8846, %v9300
        %v9607 = vadd.f32 %v8847, %v9303
        %v9608 = vadd.f32 %v8848, %v9308
        %v9609 = vadd.f32 %v8849, %v9311
        %v9610 = vadd.f32 %v8850, %v9316
        %v9611 = vadd.f32 %v8851, %v9319
        %v9612 = vadd.f32 %v8852, %v9324
        %v9613 = vadd.f32 %v8853, %v9327
        %v9614 = vadd.f32 %v8854, %v9332
        %v9615 = vadd.f32 %v8855, %v9335
        %v9616 = vadd.f32 %v8856, %v9340
        %v9617 = vadd.f32 %v8857, %v9343
        %v9618 = vadd.f32 %v8858, %v9348
        %v9619 = vadd.f32 %v8859, %v9351
        %v9620 = vadd.f32 %v8860, %v9356
        %v9621 = vadd.f32 %v8861, %v9359
        %v9622 = vadd.f32 %v8862, %v9364
        %v9623 = vadd.f32 %v8863, %v9367
        %v9624 = vadd.f32 %v8864, %v9372
        %v9625 = vadd.f32 %v8865, %v9375
        %v9626 = vadd.f32 %v8866, %v9380
        %v9627 = vadd.f32 %v8867, %v9383
        %v9628 = vadd.f32 %v8868, %v9388
        %v9629 = vadd.f32 %v8869, %v9391
        %v9630 = vadd.f32 %v8870, %v9396
        %v9631 = vadd.f32 %v8871, %v9399
        %v9632 = vadd.f32 %v8872, %v9404
        %v9633 = vadd.f32 %v8873, %v9407
        %v9634 = vadd.f32 %v8874, %v9412
        %v9635 = vadd.f32 %v8875, %v9415
        %v9636 = vadd.f32 %v8876, %v9420
        %v9637 = vadd.f32 %v8877, %v9423
        %v9638 = vadd.f32 %v8878, %v9428
        %v9639 = vadd.f32 %v8879, %v9431
        %v9640 = vadd.f32 %v8880, %v9436
        %v9641 = vadd.f32 %v8881, %v9439
        %v9642 = vadd.f32 %v8882, %v9444
        %v9643 = vadd.f32 %v8883, %v9447
        %v9644 = vadd.f32 %v8884, %v9452
        %v9645 = vadd.f32 %v8885, %v9455
        %v9646 = vadd.f32 %v8886, %v9460
        %v9647 = vadd.f32 %v8887, %v9463
        %v9648 = vadd.f32 %v8888, %v9468
        %v9649 = vadd.f32 %v8889, %v9471
        %v9650 = vadd.f32 %v8890, %v9476
        %v9651 = vadd.f32 %v8891, %v9479
        %v9652 = vadd.f32 %v8892, %v9484
        %v9653 = vadd.f32 %v8893, %v9487
        %v9654 = vadd.f32 %v8894, %v9492
        %v9655 = vadd.f32 %v8895, %v9495
        %v9656 = vadd.f32 %v8896, %v9500
        %v9657 = vadd.f32 %v8897, %v9503
        %v9658 = vadd.f32 %v8898, %v9508
        %v9659 = vadd.f32 %v8899, %v9511
        %v9660 = vadd.f32 %v8900, %v9516
        %v9661 = vadd.f32 %v8901, %v9519
        %v9662 = vadd.f32 %v8902, %v9524
        %v9663 = vadd.f32 %v8903, %v9527
        %v9664 = vadd.f32 %v8904, %v9532
        %v9665 = vadd.f32 %v8905, %v9535
        %9666 = vst [vmem:[%s167] sm:$0xff] %v9538
        %9667 = vst [vmem:[%s167 + $0x8] sm:$0xff] %v9539
        %9668 = vst [vmem:[%s167 + $0x10] sm:$0xff] %v9540
        %9669 = vst [vmem:[%s167 + $0x18] sm:$0xff] %v9541
        %9670 = vst [vmem:[%s167 + $0x20] sm:$0xff] %v9542
        %9671 = vst [vmem:[%s167 + $0x28] sm:$0xff] %v9543
        %9672 = vst [vmem:[%s167 + $0x30] sm:$0xff] %v9544
        %9673 = vst [vmem:[%s167 + $0x38] sm:$0xff] %v9545
        %9674 = vst [vmem:[%s167 + $0x40] sm:$0xff] %v9546
        %9675 = vst [vmem:[%s167 + $0x48] sm:$0xff] %v9547
        %9676 = vst [vmem:[%s167 + $0x50] sm:$0xff] %v9548
        %9677 = vst [vmem:[%s167 + $0x58] sm:$0xff] %v9549
        %9678 = vst [vmem:[%s167 + $0x60] sm:$0xff] %v9550
        %9679 = vst [vmem:[%s167 + $0x68] sm:$0xff] %v9551
        %9680 = vst [vmem:[%s167 + $0x70] sm:$0xff] %v9552
        %9681 = vst [vmem:[%s167 + $0x78] sm:$0xff] %v9553
        %9682 = vst [vmem:[%s167 + $0x80] sm:$0xff] %v9554
        %9683 = vst [vmem:[%s167 + $0x88] sm:$0xff] %v9555
        %9684 = vst [vmem:[%s167 + $0x90] sm:$0xff] %v9556
        %9685 = vst [vmem:[%s167 + $0x98] sm:$0xff] %v9557
        %9686 = vst [vmem:[%s167 + $0xa0] sm:$0xff] %v9558
        %9687 = vst [vmem:[%s167 + $0xa8] sm:$0xff] %v9559
        %9688 = vst [vmem:[%s167 + $0xb0] sm:$0xff] %v9560
        %9689 = vst [vmem:[%s167 + $0xb8] sm:$0xff] %v9561
        %9690 = vst [vmem:[%s167 + $0xc0] sm:$0xff] %v9562
        %9691 = vst [vmem:[%s167 + $0xc8] sm:$0xff] %v9563
        %9692 = vst [vmem:[%s167 + $0xd0] sm:$0xff] %v9564
        %9693 = vst [vmem:[%s167 + $0xd8] sm:$0xff] %v9565
        %9694 = vst [vmem:[%s167 + $0xe0] sm:$0xff] %v9566
        %9695 = vst [vmem:[%s167 + $0xe8] sm:$0xff] %v9567
        %9696 = vst [vmem:[%s167 + $0xf0] sm:$0xff] %v9568
        %9697 = vst [vmem:[%s167 + $0xf8] sm:$0xff] %v9569
        %9698 = vst [vmem:[%s167 + $0x100] sm:$0xff] %v9570
        %9699 = vst [vmem:[%s167 + $0x108] sm:$0xff] %v9571
        %9700 = vst [vmem:[%s167 + $0x110] sm:$0xff] %v9572
        %9701 = vst [vmem:[%s167 + $0x118] sm:$0xff] %v9573
        %9702 = vst [vmem:[%s167 + $0x120] sm:$0xff] %v9574
        %9703 = vst [vmem:[%s167 + $0x128] sm:$0xff] %v9575
        %9704 = vst [vmem:[%s167 + $0x130] sm:$0xff] %v9576
        %9705 = vst [vmem:[%s167 + $0x138] sm:$0xff] %v9577
        %9706 = vst [vmem:[%s167 + $0x140] sm:$0xff] %v9578
        %9707 = vst [vmem:[%s167 + $0x148] sm:$0xff] %v9579
        %9708 = vst [vmem:[%s167 + $0x150] sm:$0xff] %v9580
        %9709 = vst [vmem:[%s167 + $0x158] sm:$0xff] %v9581
        %9710 = vst [vmem:[%s167 + $0x160] sm:$0xff] %v9582
        %9711 = vst [vmem:[%s167 + $0x168] sm:$0xff] %v9583
        %9712 = vst [vmem:[%s167 + $0x170] sm:$0xff] %v9584
        %9713 = vst [vmem:[%s167 + $0x178] sm:$0xff] %v9585
        %9714 = vst [vmem:[%s167 + $0x180] sm:$0xff] %v9586
        %9715 = vst [vmem:[%s167 + $0x188] sm:$0xff] %v9587
        %9716 = vst [vmem:[%s167 + $0x190] sm:$0xff] %v9588
        %9717 = vst [vmem:[%s167 + $0x198] sm:$0xff] %v9589
        %9718 = vst [vmem:[%s167 + $0x1a0] sm:$0xff] %v9590
        %9719 = vst [vmem:[%s167 + $0x1a8] sm:$0xff] %v9591
        %9720 = vst [vmem:[%s167 + $0x1b0] sm:$0xff] %v9592
        %9721 = vst [vmem:[%s167 + $0x1b8] sm:$0xff] %v9593
        %9722 = vst [vmem:[%s167 + $0x1c0] sm:$0xff] %v9594
        %9723 = vst [vmem:[%s167 + $0x1c8] sm:$0xff] %v9595
        %9724 = vst [vmem:[%s167 + $0x1d0] sm:$0xff] %v9596
        %9725 = vst [vmem:[%s167 + $0x1d8] sm:$0xff] %v9597
        %9726 = vst [vmem:[%s167 + $0x1e0] sm:$0xff] %v9598
        %9727 = vst [vmem:[%s167 + $0x1e8] sm:$0xff] %v9599
        %9728 = vst [vmem:[%s167 + $0x1f0] sm:$0xff] %v9600
        %9729 = vst [vmem:[%s167 + $0x1f8] sm:$0xff] %v9601
        %9730 = vst [vmem:[%s167 + $0x200] sm:$0xff] %v9602
        %9731 = vst [vmem:[%s167 + $0x208] sm:$0xff] %v9603
        %9732 = vst [vmem:[%s167 + $0x210] sm:$0xff] %v9604
        %9733 = vst [vmem:[%s167 + $0x218] sm:$0xff] %v9605
        %9734 = vst [vmem:[%s167 + $0x220] sm:$0xff] %v9606
        %9735 = vst [vmem:[%s167 + $0x228] sm:$0xff] %v9607
        %9736 = vst [vmem:[%s167 + $0x230] sm:$0xff] %v9608
        %9737 = vst [vmem:[%s167 + $0x238] sm:$0xff] %v9609
        %9738 = vst [vmem:[%s167 + $0x240] sm:$0xff] %v9610
        %9739 = vst [vmem:[%s167 + $0x248] sm:$0xff] %v9611
        %9740 = vst [vmem:[%s167 + $0x250] sm:$0xff] %v9612
        %9741 = vst [vmem:[%s167 + $0x258] sm:$0xff] %v9613
        %9742 = vst [vmem:[%s167 + $0x260] sm:$0xff] %v9614
        %9743 = vst [vmem:[%s167 + $0x268] sm:$0xff] %v9615
        %9744 = vst [vmem:[%s167 + $0x270] sm:$0xff] %v9616
        %9745 = vst [vmem:[%s167 + $0x278] sm:$0xff] %v9617
        %9746 = vst [vmem:[%s167 + $0x280] sm:$0xff] %v9618
        %9747 = vst [vmem:[%s167 + $0x288] sm:$0xff] %v9619
        %9748 = vst [vmem:[%s167 + $0x290] sm:$0xff] %v9620
        %9749 = vst [vmem:[%s167 + $0x298] sm:$0xff] %v9621
        %9750 = vst [vmem:[%s167 + $0x2a0] sm:$0xff] %v9622
        %9751 = vst [vmem:[%s167 + $0x2a8] sm:$0xff] %v9623
        %9752 = vst [vmem:[%s167 + $0x2b0] sm:$0xff] %v9624
        %9753 = vst [vmem:[%s167 + $0x2b8] sm:$0xff] %v9625
        %9754 = vst [vmem:[%s167 + $0x2c0] sm:$0xff] %v9626
        %9755 = vst [vmem:[%s167 + $0x2c8] sm:$0xff] %v9627
        %9756 = vst [vmem:[%s167 + $0x2d0] sm:$0xff] %v9628
        %9757 = vst [vmem:[%s167 + $0x2d8] sm:$0xff] %v9629
        %9758 = vst [vmem:[%s167 + $0x2e0] sm:$0xff] %v9630
        %9759 = vst [vmem:[%s167 + $0x2e8] sm:$0xff] %v9631
        %9760 = vst [vmem:[%s167 + $0x2f0] sm:$0xff] %v9632
        %9761 = vst [vmem:[%s167 + $0x2f8] sm:$0xff] %v9633
        %9762 = vst [vmem:[%s167 + $0x300] sm:$0xff] %v9634
        %9763 = vst [vmem:[%s167 + $0x308] sm:$0xff] %v9635
        %9764 = vst [vmem:[%s167 + $0x310] sm:$0xff] %v9636
        %9765 = vst [vmem:[%s167 + $0x318] sm:$0xff] %v9637
        %9766 = vst [vmem:[%s167 + $0x320] sm:$0xff] %v9638
        %9767 = vst [vmem:[%s167 + $0x328] sm:$0xff] %v9639
        %9768 = vst [vmem:[%s167 + $0x330] sm:$0xff] %v9640
        %9769 = vst [vmem:[%s167 + $0x338] sm:$0xff] %v9641
        %9770 = vst [vmem:[%s167 + $0x340] sm:$0xff] %v9642
        %9771 = vst [vmem:[%s167 + $0x348] sm:$0xff] %v9643
        %9772 = vst [vmem:[%s167 + $0x350] sm:$0xff] %v9644
        %9773 = vst [vmem:[%s167 + $0x358] sm:$0xff] %v9645
        %9774 = vst [vmem:[%s167 + $0x360] sm:$0xff] %v9646
        %9775 = vst [vmem:[%s167 + $0x368] sm:$0xff] %v9647
        %9776 = vst [vmem:[%s167 + $0x370] sm:$0xff] %v9648
        %9777 = vst [vmem:[%s167 + $0x378] sm:$0xff] %v9649
        %9778 = vst [vmem:[%s167 + $0x380] sm:$0xff] %v9650
        %9779 = vst [vmem:[%s167 + $0x388] sm:$0xff] %v9651
        %9780 = vst [vmem:[%s167 + $0x390] sm:$0xff] %v9652
        %9781 = vst [vmem:[%s167 + $0x398] sm:$0xff] %v9653
        %9782 = vst [vmem:[%s167 + $0x3a0] sm:$0xff] %v9654
        %9783 = vst [vmem:[%s167 + $0x3a8] sm:$0xff] %v9655
        %9784 = vst [vmem:[%s167 + $0x3b0] sm:$0xff] %v9656
        %9785 = vst [vmem:[%s167 + $0x3b8] sm:$0xff] %v9657
        %9786 = vst [vmem:[%s167 + $0x3c0] sm:$0xff] %v9658
        %9787 = vst [vmem:[%s167 + $0x3c8] sm:$0xff] %v9659
        %9788 = vst [vmem:[%s167 + $0x3d0] sm:$0xff] %v9660
        %9789 = vst [vmem:[%s167 + $0x3d8] sm:$0xff] %v9661
        %9790 = vst [vmem:[%s167 + $0x3e0] sm:$0xff] %v9662
        %9791 = vst [vmem:[%s167 + $0x3e8] sm:$0xff] %v9663
        %9792 = vst [vmem:[%s167 + $0x3f0] sm:$0xff] %v9664
        %9793 = vst [vmem:[%s167 + $0x3f8] sm:$0xff] %v9665
        %v9794 = vadd.f32 %v9538, %v9539
        %v9795 = vadd.f32 %v9794, %v9540
        %v9796 = vadd.f32 %v9795, %v9541
        %v9797 = vadd.f32 %v9796, %v9542
        %v9798 = vadd.f32 %v9797, %v9543
        %v9799 = vadd.f32 %v9798, %v9544
        %v9800 = vadd.f32 %v9799, %v9545
        %v9801 = vadd.f32 %v9800, %v9546
        %v9802 = vadd.f32 %v9801, %v9547
        %v9803 = vadd.f32 %v9802, %v9548
        %v9804 = vadd.f32 %v9803, %v9549
        %v9805 = vadd.f32 %v9804, %v9550
        %v9806 = vadd.f32 %v9805, %v9551
        %v9807 = vadd.f32 %v9806, %v9552
        %v9808 = vadd.f32 %v9807, %v9553
        %v9809 = vadd.f32 %v9808, %v9554
        %v9810 = vadd.f32 %v9809, %v9555
        %v9811 = vadd.f32 %v9810, %v9556
        %v9812 = vadd.f32 %v9811, %v9557
        %v9813 = vadd.f32 %v9812, %v9558
        %v9814 = vadd.f32 %v9813, %v9559
        %v9815 = vadd.f32 %v9814, %v9560
        %v9816 = vadd.f32 %v9815, %v9561
        %v9817 = vadd.f32 %v9816, %v9562
        %v9818 = vadd.f32 %v9817, %v9563
        %v9819 = vadd.f32 %v9818, %v9564
        %v9820 = vadd.f32 %v9819, %v9565
        %v9821 = vadd.f32 %v9820, %v9566
        %v9822 = vadd.f32 %v9821, %v9567
        %v9823 = vadd.f32 %v9822, %v9568
        %v9824 = vadd.f32 %v9823, %v9569
        %v9825 = vadd.f32 %v9824, %v9570
        %v9826 = vadd.f32 %v9825, %v9571
        %v9827 = vadd.f32 %v9826, %v9572
        %v9828 = vadd.f32 %v9827, %v9573
        %v9829 = vadd.f32 %v9828, %v9574
        %v9830 = vadd.f32 %v9829, %v9575
        %v9831 = vadd.f32 %v9830, %v9576
        %v9832 = vadd.f32 %v9831, %v9577
        %v9833 = vadd.f32 %v9832, %v9578
        %v9834 = vadd.f32 %v9833, %v9579
        %v9835 = vadd.f32 %v9834, %v9580
        %v9836 = vadd.f32 %v9835, %v9581
        %v9837 = vadd.f32 %v9836, %v9582
        %v9838 = vadd.f32 %v9837, %v9583
        %v9839 = vadd.f32 %v9838, %v9584
        %v9840 = vadd.f32 %v9839, %v9585
        %v9841 = vadd.f32 %v9840, %v9586
        %v9842 = vadd.f32 %v9841, %v9587
        %v9843 = vadd.f32 %v9842, %v9588
        %v9844 = vadd.f32 %v9843, %v9589
        %v9845 = vadd.f32 %v9844, %v9590
        %v9846 = vadd.f32 %v9845, %v9591
        %v9847 = vadd.f32 %v9846, %v9592
        %v9848 = vadd.f32 %v9847, %v9593
        %v9849 = vadd.f32 %v9848, %v9594
        %v9850 = vadd.f32 %v9849, %v9595
        %v9851 = vadd.f32 %v9850, %v9596
        %v9852 = vadd.f32 %v9851, %v9597
        %v9853 = vadd.f32 %v9852, %v9598
        %v9854 = vadd.f32 %v9853, %v9599
        %v9855 = vadd.f32 %v9854, %v9600
        %v9856 = vadd.f32 %v9855, %v9601
        %v9857 = vadd.f32 %v9856, %v9602
        %v9858 = vadd.f32 %v9857, %v9603
        %v9859 = vadd.f32 %v9858, %v9604
        %v9860 = vadd.f32 %v9859, %v9605
        %v9861 = vadd.f32 %v9860, %v9606
        %v9862 = vadd.f32 %v9861, %v9607
        %v9863 = vadd.f32 %v9862, %v9608
        %v9864 = vadd.f32 %v9863, %v9609
        %v9865 = vadd.f32 %v9864, %v9610
        %v9866 = vadd.f32 %v9865, %v9611
        %v9867 = vadd.f32 %v9866, %v9612
        %v9868 = vadd.f32 %v9867, %v9613
        %v9869 = vadd.f32 %v9868, %v9614
        %v9870 = vadd.f32 %v9869, %v9615
        %v9871 = vadd.f32 %v9870, %v9616
        %v9872 = vadd.f32 %v9871, %v9617
        %v9873 = vadd.f32 %v9872, %v9618
        %v9874 = vadd.f32 %v9873, %v9619
        %v9875 = vadd.f32 %v9874, %v9620
        %v9876 = vadd.f32 %v9875, %v9621
        %v9877 = vadd.f32 %v9876, %v9622
        %v9878 = vadd.f32 %v9877, %v9623
        %v9879 = vadd.f32 %v9878, %v9624
        %v9880 = vadd.f32 %v9879, %v9625
        %v9881 = vadd.f32 %v9880, %v9626
        %v9882 = vadd.f32 %v9881, %v9627
        %v9883 = vadd.f32 %v9882, %v9628
        %v9884 = vadd.f32 %v9883, %v9629
        %v9885 = vadd.f32 %v9884, %v9630
        %v9886 = vadd.f32 %v9885, %v9631
        %v9887 = vadd.f32 %v9886, %v9632
        %v9888 = vadd.f32 %v9887, %v9633
        %v9889 = vadd.f32 %v9888, %v9634
        %v9890 = vadd.f32 %v9889, %v9635
        %v9891 = vadd.f32 %v9890, %v9636
        %v9892 = vadd.f32 %v9891, %v9637
        %v9893 = vadd.f32 %v9892, %v9638
        %v9894 = vadd.f32 %v9893, %v9639
        %v9895 = vadd.f32 %v9894, %v9640
        %v9896 = vadd.f32 %v9895, %v9641
        %v9897 = vadd.f32 %v9896, %v9642
        %v9898 = vadd.f32 %v9897, %v9643
        %v9899 = vadd.f32 %v9898, %v9644
        %v9900 = vadd.f32 %v9899, %v9645
        %v9901 = vadd.f32 %v9900, %v9646
        %v9902 = vadd.f32 %v9901, %v9647
        %v9903 = vadd.f32 %v9902, %v9648
        %v9904 = vadd.f32 %v9903, %v9649
        %v9905 = vadd.f32 %v9904, %v9650
        %v9906 = vadd.f32 %v9905, %v9651
        %v9907 = vadd.f32 %v9906, %v9652
        %v9908 = vadd.f32 %v9907, %v9653
        %v9909 = vadd.f32 %v9908, %v9654
        %v9910 = vadd.f32 %v9909, %v9655
        %v9911 = vadd.f32 %v9910, %v9656
        %v9912 = vadd.f32 %v9911, %v9657
        %v9913 = vadd.f32 %v9912, %v9658
        %v9914 = vadd.f32 %v9913, %v9659
        %v9915 = vadd.f32 %v9914, %v9660
        %v9916 = vadd.f32 %v9915, %v9661
        %v9917 = vadd.f32 %v9916, %v9662
        %v9918 = vadd.f32 %v9917, %v9663
        %v9919 = vadd.f32 %v9918, %v9664
        %v9920 = vadd.f32 %v9919, %v9665
        %v9921 = vrot.slane %v9920, 4
        %v9922 = vadd.f32 %v9920, %v9921
        %v9923 = vrot.slane %v9922, 2
        %v9924 = vadd.f32 %v9922, %v9923
        %v9925 = vrot.slane %v9924, 1
        %v9926 = vadd.f32 %v9924, %v9925
        %v9927 = vmul.f32 %v9538, %v9538
        %v9928 = vmul.f32 %v9539, %v9539
        %v9929 = vmul.f32 %v9540, %v9540
        %v9930 = vmul.f32 %v9541, %v9541
        %v9931 = vmul.f32 %v9542, %v9542
        %v9932 = vmul.f32 %v9543, %v9543
        %v9933 = vmul.f32 %v9544, %v9544
        %v9934 = vmul.f32 %v9545, %v9545
        %v9935 = vmul.f32 %v9546, %v9546
        %v9936 = vmul.f32 %v9547, %v9547
        %v9937 = vmul.f32 %v9548, %v9548
        %v9938 = vmul.f32 %v9549, %v9549
        %v9939 = vmul.f32 %v9550, %v9550
        %v9940 = vmul.f32 %v9551, %v9551
        %v9941 = vmul.f32 %v9552, %v9552
        %v9942 = vmul.f32 %v9553, %v9553
        %v9943 = vmul.f32 %v9554, %v9554
        %v9944 = vmul.f32 %v9555, %v9555
        %v9945 = vmul.f32 %v9556, %v9556
        %v9946 = vmul.f32 %v9557, %v9557
        %v9947 = vmul.f32 %v9558, %v9558
        %v9948 = vmul.f32 %v9559, %v9559
        %v9949 = vmul.f32 %v9560, %v9560
        %v9950 = vmul.f32 %v9561, %v9561
        %v9951 = vmul.f32 %v9562, %v9562
        %v9952 = vmul.f32 %v9563, %v9563
        %v9953 = vmul.f32 %v9564, %v9564
        %v9954 = vmul.f32 %v9565, %v9565
        %v9955 = vmul.f32 %v9566, %v9566
        %v9956 = vmul.f32 %v9567, %v9567
        %v9957 = vmul.f32 %v9568, %v9568
        %v9958 = vmul.f32 %v9569, %v9569
        %v9959 = vmul.f32 %v9570, %v9570
        %v9960 = vmul.f32 %v9571, %v9571
        %v9961 = vmul.f32 %v9572, %v9572
        %v9962 = vmul.f32 %v9573, %v9573
        %v9963 = vmul.f32 %v9574, %v9574
        %v9964 = vmul.f32 %v9575, %v9575
        %v9965 = vmul.f32 %v9576, %v9576
        %v9966 = vmul.f32 %v9577, %v9577
        %v9967 = vmul.f32 %v9578, %v9578
        %v9968 = vmul.f32 %v9579, %v9579
        %v9969 = vmul.f32 %v9580, %v9580
        %v9970 = vmul.f32 %v9581, %v9581
        %v9971 = vmul.f32 %v9582, %v9582
        %v9972 = vmul.f32 %v9583, %v9583
        %v9973 = vmul.f32 %v9584, %v9584
        %v9974 = vmul.f32 %v9585, %v9585
        %v9975 = vmul.f32 %v9586, %v9586
        %v9976 = vmul.f32 %v9587, %v9587
        %v9977 = vmul.f32 %v9588, %v9588
        %v9978 = vmul.f32 %v9589, %v9589
        %v9979 = vmul.f32 %v9590, %v9590
        %v9980 = vmul.f32 %v9591, %v9591
        %v9981 = vmul.f32 %v9592, %v9592
        %v9982 = vmul.f32 %v9593, %v9593
        %v9983 = vmul.f32 %v9594, %v9594
        %v9984 = vmul.f32 %v9595, %v9595
        %v9985 = vmul.f32 %v9596, %v9596
        %v9986 = vmul.f32 %v9597, %v9597
        %v9987 = vmul.f32 %v9598, %v9598
        %v9988 = vmul.f32 %v9599, %v9599
        %v9989 = vmul.f32 %v9600, %v9600
        %v9990 = vmul.f32 %v9601, %v9601
        %v9991 = vmul.f32 %v9602, %v9602
        %v9992 = vmul.f32 %v9603, %v9603
        %v9993 = vmul.f32 %v9604, %v9604
        %v9994 = vmul.f32 %v9605, %v9605
        %v9995 = vmul.f32 %v9606, %v9606
        %v9996 = vmul.f32 %v9607, %v9607
        %v9997 = vmul.f32 %v9608, %v9608
        %v9998 = vmul.f32 %v9609, %v9609
        %v9999 = vmul.f32 %v9610, %v9610
        %v10000 = vmul.f32 %v9611, %v9611
        %v10001 = vmul.f32 %v9612, %v9612
        %v10002 = vmul.f32 %v9613, %v9613
        %v10003 = vmul.f32 %v9614, %v9614
        %v10004 = vmul.f32 %v9615, %v9615
        %v10005 = vmul.f32 %v9616, %v9616
        %v10006 = vmul.f32 %v9617, %v9617
        %v10007 = vmul.f32 %v9618, %v9618
        %v10008 = vmul.f32 %v9619, %v9619
        %v10009 = vmul.f32 %v9620, %v9620
        %v10010 = vmul.f32 %v9621, %v9621
        %v10011 = vmul.f32 %v9622, %v9622
        %v10012 = vmul.f32 %v9623, %v9623
        %v10013 = vmul.f32 %v9624, %v9624
        %v10014 = vmul.f32 %v9625, %v9625
        %v10015 = vmul.f32 %v9626, %v9626
        %v10016 = vmul.f32 %v9627, %v9627
        %v10017 = vmul.f32 %v9628, %v9628
        %v10018 = vmul.f32 %v9629, %v9629
        %v10019 = vmul.f32 %v9630, %v9630
        %v10020 = vmul.f32 %v9631, %v9631
        %v10021 = vmul.f32 %v9632, %v9632
        %v10022 = vmul.f32 %v9633, %v9633
        %v10023 = vmul.f32 %v9634, %v9634
        %v10024 = vmul.f32 %v9635, %v9635
        %v10025 = vmul.f32 %v9636, %v9636
        %v10026 = vmul.f32 %v9637, %v9637
        %v10027 = vmul.f32 %v9638, %v9638
        %v10028 = vmul.f32 %v9639, %v9639
        %v10029 = vmul.f32 %v9640, %v9640
        %v10030 = vmul.f32 %v9641, %v9641
        %v10031 = vmul.f32 %v9642, %v9642
        %v10032 = vmul.f32 %v9643, %v9643
        %v10033 = vmul.f32 %v9644, %v9644
        %v10034 = vmul.f32 %v9645, %v9645
        %v10035 = vmul.f32 %v9646, %v9646
        %v10036 = vmul.f32 %v9647, %v9647
        %v10037 = vmul.f32 %v9648, %v9648
        %v10038 = vmul.f32 %v9649, %v9649
        %v10039 = vmul.f32 %v9650, %v9650
        %v10040 = vmul.f32 %v9651, %v9651
        %v10041 = vmul.f32 %v9652, %v9652
        %v10042 = vmul.f32 %v9653, %v9653
        %v10043 = vmul.f32 %v9654, %v9654
        %v10044 = vmul.f32 %v9655, %v9655
        %v10045 = vmul.f32 %v9656, %v9656
        %v10046 = vmul.f32 %v9657, %v9657
        %v10047 = vmul.f32 %v9658, %v9658
        %v10048 = vmul.f32 %v9659, %v9659
        %v10049 = vmul.f32 %v9660, %v9660
        %v10050 = vmul.f32 %v9661, %v9661
        %v10051 = vmul.f32 %v9662, %v9662
        %v10052 = vmul.f32 %v9663, %v9663
        %v10053 = vmul.f32 %v9664, %v9664
        %v10054 = vmul.f32 %v9665, %v9665
        %v10055 = vadd.f32 %v9927, %v9928
        %v10056 = vadd.f32 %v10055, %v9929
        %v10057 = vadd.f32 %v10056, %v9930
        %v10058 = vadd.f32 %v10057, %v9931
        %v10059 = vadd.f32 %v10058, %v9932
        %v10060 = vadd.f32 %v10059, %v9933
        %v10061 = vadd.f32 %v10060, %v9934
        %v10062 = vadd.f32 %v10061, %v9935
        %v10063 = vadd.f32 %v10062, %v9936
        %v10064 = vadd.f32 %v10063, %v9937
        %v10065 = vadd.f32 %v10064, %v9938
        %v10066 = vadd.f32 %v10065, %v9939
        %v10067 = vadd.f32 %v10066, %v9940
        %v10068 = vadd.f32 %v10067, %v9941
        %v10069 = vadd.f32 %v10068, %v9942
        %v10070 = vadd.f32 %v10069, %v9943
        %v10071 = vadd.f32 %v10070, %v9944
        %v10072 = vadd.f32 %v10071, %v9945
        %v10073 = vadd.f32 %v10072, %v9946
        %v10074 = vadd.f32 %v10073, %v9947
        %v10075 = vadd.f32 %v10074, %v9948
        %v10076 = vadd.f32 %v10075, %v9949
        %v10077 = vadd.f32 %v10076, %v9950
        %v10078 = vadd.f32 %v10077, %v9951
        %v10079 = vadd.f32 %v10078, %v9952
        %v10080 = vadd.f32 %v10079, %v9953
        %v10081 = vadd.f32 %v10080, %v9954
        %v10082 = vadd.f32 %v10081, %v9955
        %v10083 = vadd.f32 %v10082, %v9956
        %v10084 = vadd.f32 %v10083, %v9957
        %v10085 = vadd.f32 %v10084, %v9958
        %v10086 = vadd.f32 %v10085, %v9959
        %v10087 = vadd.f32 %v10086, %v9960
        %v10088 = vadd.f32 %v10087, %v9961
        %v10089 = vadd.f32 %v10088, %v9962
        %v10090 = vadd.f32 %v10089, %v9963
        %v10091 = vadd.f32 %v10090, %v9964
        %v10092 = vadd.f32 %v10091, %v9965
        %v10093 = vadd.f32 %v10092, %v9966
        %v10094 = vadd.f32 %v10093, %v9967
        %v10095 = vadd.f32 %v10094, %v9968
        %v10096 = vadd.f32 %v10095, %v9969
        %v10097 = vadd.f32 %v10096, %v9970
        %v10098 = vadd.f32 %v10097, %v9971
        %v10099 = vadd.f32 %v10098, %v9972
        %v10100 = vadd.f32 %v10099, %v9973
        %v10101 = vadd.f32 %v10100, %v9974
        %v10102 = vadd.f32 %v10101, %v9975
        %v10103 = vadd.f32 %v10102, %v9976
        %v10104 = vadd.f32 %v10103, %v9977
        %v10105 = vadd.f32 %v10104, %v9978
        %v10106 = vadd.f32 %v10105, %v9979
        %v10107 = vadd.f32 %v10106, %v9980
        %v10108 = vadd.f32 %v10107, %v9981
        %v10109 = vadd.f32 %v10108, %v9982
        %v10110 = vadd.f32 %v10109, %v9983
        %v10111 = vadd.f32 %v10110, %v9984
        %v10112 = vadd.f32 %v10111, %v9985
        %v10113 = vadd.f32 %v10112, %v9986
        %v10114 = vadd.f32 %v10113, %v9987
        %v10115 = vadd.f32 %v10114, %v9988
        %v10116 = vadd.f32 %v10115, %v9989
        %v10117 = vadd.f32 %v10116, %v9990
        %v10118 = vadd.f32 %v10117, %v9991
        %v10119 = vadd.f32 %v10118, %v9992
        %v10120 = vadd.f32 %v10119, %v9993
        %v10121 = vadd.f32 %v10120, %v9994
        %v10122 = vadd.f32 %v10121, %v9995
        %v10123 = vadd.f32 %v10122, %v9996
        %v10124 = vadd.f32 %v10123, %v9997
        %v10125 = vadd.f32 %v10124, %v9998
        %v10126 = vadd.f32 %v10125, %v9999
        %v10127 = vadd.f32 %v10126, %v10000
        %v10128 = vadd.f32 %v10127, %v10001
        %v10129 = vadd.f32 %v10128, %v10002
        %v10130 = vadd.f32 %v10129, %v10003
        %v10131 = vadd.f32 %v10130, %v10004
        %v10132 = vadd.f32 %v10131, %v10005
        %v10133 = vadd.f32 %v10132, %v10006
        %v10134 = vadd.f32 %v10133, %v10007
        %v10135 = vadd.f32 %v10134, %v10008
        %v10136 = vadd.f32 %v10135, %v10009
        %v10137 = vadd.f32 %v10136, %v10010
        %v10138 = vadd.f32 %v10137, %v10011
        %v10139 = vadd.f32 %v10138, %v10012
        %v10140 = vadd.f32 %v10139, %v10013
        %v10141 = vadd.f32 %v10140, %v10014
        %v10142 = vadd.f32 %v10141, %v10015
        %v10143 = vadd.f32 %v10142, %v10016
        %v10144 = vadd.f32 %v10143, %v10017
        %v10145 = vadd.f32 %v10144, %v10018
        %v10146 = vadd.f32 %v10145, %v10019
        %v10147 = vadd.f32 %v10146, %v10020
        %v10148 = vadd.f32 %v10147, %v10021
        %v10149 = vadd.f32 %v10148, %v10022
        %v10150 = vadd.f32 %v10149, %v10023
        %v10151 = vadd.f32 %v10150, %v10024
        %v10152 = vadd.f32 %v10151, %v10025
        %v10153 = vadd.f32 %v10152, %v10026
        %v10154 = vadd.f32 %v10153, %v10027
        %v10155 = vadd.f32 %v10154, %v10028
        %v10156 = vadd.f32 %v10155, %v10029
        %v10157 = vadd.f32 %v10156, %v10030
        %v10158 = vadd.f32 %v10157, %v10031
        %v10159 = vadd.f32 %v10158, %v10032
        %v10160 = vadd.f32 %v10159, %v10033
        %v10161 = vadd.f32 %v10160, %v10034
        %v10162 = vadd.f32 %v10161, %v10035
        %v10163 = vadd.f32 %v10162, %v10036
        %v10164 = vadd.f32 %v10163, %v10037
        %v10165 = vadd.f32 %v10164, %v10038
        %v10166 = vadd.f32 %v10165, %v10039
        %v10167 = vadd.f32 %v10166, %v10040
        %v10168 = vadd.f32 %v10167, %v10041
        %v10169 = vadd.f32 %v10168, %v10042
        %v10170 = vadd.f32 %v10169, %v10043
        %v10171 = vadd.f32 %v10170, %v10044
        %v10172 = vadd.f32 %v10171, %v10045
        %v10173 = vadd.f32 %v10172, %v10046
        %v10174 = vadd.f32 %v10173, %v10047
        %v10175 = vadd.f32 %v10174, %v10048
        %v10176 = vadd.f32 %v10175, %v10049
        %v10177 = vadd.f32 %v10176, %v10050
        %v10178 = vadd.f32 %v10177, %v10051
        %v10179 = vadd.f32 %v10178, %v10052
        %v10180 = vadd.f32 %v10179, %v10053
        %v10181 = vadd.f32 %v10180, %v10054
        %v10182 = vrot.slane %v10181, 4
        %v10183 = vadd.f32 %v10181, %v10182
        %v10184 = vrot.slane %v10183, 2
        %v10185 = vadd.f32 %v10183, %v10184
        %v10186 = vrot.slane %v10185, 1
        %v10187 = vadd.f32 %v10185, %v10186
        %vm10188 = vcmask 1040384
        %v10189 = vsel %vm10188, %v9926, %v10187
        %10190 = vst [vmem:[%s174] sm:$0x3] %v10189
        %s10191 = sand.u32 %s76, 1
        %s10192 = scalar_lea.sflag [#allocation3], %s10191
        %s10193 = sand.u32 %s76, 1
        %s10194 = smul.addr %s10193, 1024
        %s10195 = scalar_lea.vmem [#allocation2], %s10194
        %s10196 = sand.u32 %s102, 1
        %s10197 = scalar_lea.sflag [#allocation5], %s10196
        %s10198 = sand.u32 %s102, 1
        %s10199 = smul.addr %s10198, 2
        %s10200 = scalar_lea.vmem [#allocation4], %s10199
        // Predicated region
        $region29: #{tpu_custom_call.1} parent=27 // pred_check
          %p10201 = pneg %p86
        $region30: #{tpu_custom_call.1} parent=27 // pred_check_branch
          %10203 = sbr.rel (%p10201) target = $region32
        $region31: #{tpu_custom_call.1} parent=27 // pred_region
          %s10205 = ssub.s32 16384, 16384
          %10206 = vsyncadd %s10192, %s10205
          %s10207 = smul.addr %s21, 128
          %s10208 = smul.addr %s10207, 128
          %s10209 = scalar_lea.hbm %s2, %s10208
          %s10210 = sshll.u32 %s10195, 4
          %s10211 = int_to_ptr.vmem [resolvable:$true] %s10210
          %10216 = dma.vmem_to_hbm [thread:$0]  %s10211, 16384, %s10209, %s10192, 128, 128, 8
        $region32: #{tpu_custom_call.1} parent=27 // pred_fallthru
          _
        // Predicated region
        $region33: #{tpu_custom_call.1} parent=27 // pred_check
          %p10217 = pneg %p112
        $region34: #{tpu_custom_call.1} parent=27 // pred_check_branch
          %10219 = sbr.rel (%p10217) target = $region36
        $region35: #{tpu_custom_call.1} parent=27 // pred_region
          %s10221 = ssub.s32 32, 32
          %10222 = vsyncadd %s10197, %s10221
          %s10223 = smul.addr %s21, 32
          %s10224 = scalar_lea.hbm %s3, %s10223
          %s10226 = sshll.u32 %s10200, 4
          %s10227 = int_to_ptr.vmem [resolvable:$true] %s10226
          %10229 = dma.vmem_to_hbm [thread:$0]  %s10227, 32, %s10224, %s10197
        $region36: #{tpu_custom_call.1} parent=27 // pred_fallthru
          _
      $region28: #{tpu_custom_call.1} parent=5 // pred_fallthru
        _
      %p10230 = scmp.le.s32.totalorder 2, %s16
      // Predicated region
      $region37: #{tpu_custom_call.1} parent=5 // pred_check
        %p10231 = pneg %p10230
      $region38: #{tpu_custom_call.1} parent=5 // pred_check_branch
        %10233 = sbr.rel (%p10231) target = $region40
      $region39: #{tpu_custom_call.1} parent=5 // pred_region
        %s10234 = ssub.s32 %s16, 2
        // Predicated region
        $region41: #{tpu_custom_call.1} parent=39 // pred_check
          %p10235 = pneg %p92
        $region42: #{tpu_custom_call.1} parent=39 // pred_check_branch
          %10237 = sbr.rel (%p10235) target = $region44
        $region43: #{tpu_custom_call.1} parent=39 // pred_region
          %s10238 = sand.u32 %s77, 1
          %s10239 = scalar_lea.sflag [#allocation3], %s10238
          %s10240 = sand.u32 %s77, 1
          %s10241 = smul.addr %s10240, 1024
          %s10242 = scalar_lea.vmem [#allocation2], %s10241
          %10243 = dma.done %s10239, 16384
        $region44: #{tpu_custom_call.1} parent=39 // pred_fallthru
          _
        // Predicated region
        $region45: #{tpu_custom_call.1} parent=39 // pred_check
          %p10244 = pneg %p118
        $region46: #{tpu_custom_call.1} parent=39 // pred_check_branch
          %10246 = sbr.rel (%p10244) target = $region48
        $region47: #{tpu_custom_call.1} parent=39 // pred_region
          %s10247 = sand.u32 %s103, 1
          %s10248 = scalar_lea.sflag [#allocation5], %s10247
          %s10249 = sand.u32 %s103, 1
          %s10250 = smul.addr %s10249, 2
          %s10251 = scalar_lea.vmem [#allocation4], %s10250
          %10252 = dma.done %s10248, 32
        $region48: #{tpu_custom_call.1} parent=39 // pred_fallthru
          _
      $region40: #{tpu_custom_call.1} parent=5 // pred_fallthru
        _
    $region6: #{tpu_custom_call.1} parent=1 // loop_footer
      %s20 = sadd.s32 1, %s16
    $region7: #{tpu_custom_call.1} parent=1 // loop_footer_branch
      %15 = sbr.rel target = $region3
    $region8: #{tpu_custom_call.1} parent=1 // loop_exit
      _
    %10253 = vsyncpa [#allocation3], 1
    %s10254 = scalar_lea.sflag [#allocation3], 1
    %10255 = vsyncpa %s10254, 1
    %10256 = vsyncpa [#allocation5], 1
    %s10257 = scalar_lea.sflag [#allocation5], 1
    %10258 = vsyncpa %s10257, 1

</llo_original>
